<compile_context>
chip_gen: v6e
topology: v6e:2x2x1
jax: 0.10.0
libtpu: 0.0.40
codegen_flags: <defaults>
</compile_context>

<pallas_src>
import functools

import jax
import jax.numpy as jnp
import numpy as np
from jax.experimental import pallas as pl
from jax.experimental.pallas import tpu as pltpu


# ----------------------------- config ("args") ------------------------------
IMAGE_SIZE = 128          # -> spatial H = W = image_size // 32 = 4
NFEATURES = 32            # C_in for the ConvLSTM, hidden = NFEATURES // 4 = 8
NCLASSES = 10
BATCH = 2
SEQ = 8

H = W = IMAGE_SIZE // 32
CIN = NFEATURES
CH = NFEATURES // 4       # hidden_dim of both ConvLSTM layers


# ------------------------------ kernel body ---------------------------------
def _gates_update(gates, c_cur, ch):
    """LSTM gate math; gates (P, 4*ch) in gate order [i | f | o | g]."""
    ifo = jax.nn.sigmoid(gates[:, :3 * ch])          # one EUP pass for i,f,o
    g = jnp.tanh(gates[:, 3 * ch:])
    i = ifo[:, 0 * ch:1 * ch]
    f = ifo[:, 1 * ch:2 * ch]
    o = ifo[:, 2 * ch:3 * ch]
    c_next = f * c_cur + i * g
    h_next = o * jnp.tanh(c_next)
    return h_next, c_next


def conv_decoder_kernel(xp_ref,                       # (T, H, W, 9*CIN) patches
                        w0_ref, b0_ref,               # (9*(CIN+CH), 4CH), (1, 4CH)
                        w1_ref, b1_ref,               # (18*CH, 4CH), (1, 4CH)
                        wfc_ref, bfc_ref,             # (CH, NC) pre-scaled, (1, NC)
                        out_ref,                      # (T, NC)
                        h0_pad, h1_pad,               # VMEM (H+2, W+2, CH)
                        *, t_steps, hh, ww, ch):
    hw = hh * ww

    # Zero the padded recurrent-state scratch once; only the interior is
    # rewritten below, so the 1-pixel border stays zero ("same" padding).
    h0_pad[...] = jnp.zeros_like(h0_pad)
    h1_pad[...] = jnp.zeros_like(h1_pad)

    c0 = jnp.zeros((hw, ch), jnp.float32)
    c1 = jnp.zeros((hw, ch), jnp.float32)

    def h_taps(h_ref):
        # 9 shifted (hh, ww, ch) windows of the padded hidden state (im2col).
        return [h_ref[ky:ky + hh, kx:kx + ww, :]
                for ky in range(3) for kx in range(3)]

    pooled = []
    for t in range(t_steps):                # recurrence unrolled in-kernel
        # ---- layer 0: x-conv + h-conv fused into a single im2col matmul ----
        lhs0 = jnp.concatenate([xp_ref[t]] + h_taps(h0_pad), axis=-1)
        gates0 = jnp.dot(lhs0.reshape(hw, -1), w0_ref[...],
                         preferred_element_type=jnp.float32) + b0_ref[...]
        h0, c0 = _gates_update(gates0, c0, ch)
        h0_pad[1:1 + hh, 1:1 + ww, :] = h0.reshape(hh, ww, ch)

        # ---- layer 1: consumes layer-0 output at the same timestep ----
        lhs1 = jnp.concatenate(h_taps(h0_pad) + h_taps(h1_pad), axis=-1)
        gates1 = jnp.dot(lhs1.reshape(hw, -1), w1_ref[...],
                         preferred_element_type=jnp.float32) + b1_ref[...]
        h1, c1 = _gates_update(gates1, c1, ch)
        h1_pad[1:1 + hh, 1:1 + ww, :] = h1.reshape(hh, ww, ch)

        # spatial sum; the mean's 1/(H*W) is folded into wfc in the wrapper
        pooled.append(jnp.sum(h1, axis=0, keepdims=True))     # (1, ch)

    # Deferred classifier: one matmul + one output store for all timesteps.
    pooled_all = jnp.concatenate(pooled, axis=0)               # (T, ch)
    logits = jnp.dot(pooled_all, wfc_ref[...],
                     preferred_element_type=jnp.float32) + bfc_ref[...]
    out_ref[...] = logits                                      # (T, NCLASSES)


# ------------------------------- wrapper -------------------------------------
@jax.jit
def conv_decoder(x_btchw, params):
    """x_btchw: (B, T, CIN, H, W) float32 -> (B, T, NCLASSES) float32."""
    b, t, cin, h, w = x_btchw.shape
    assert (cin, h, w) == (CIN, H, W)
    (wx0, wh0, b0, wx1, wh1, b1, wfc, bfc) = params

    # Trace-time weight repacking to flat 2-D matmul layouts (K-concat of the
    # x-conv and h-conv weights of each cell).
    w0_cat = jnp.concatenate([wx0.reshape(9 * CIN, 4 * CH),
                              wh0.reshape(9 * CH, 4 * CH)], axis=0)  # (360, 32)
    w1_cat = jnp.concatenate([wx1.reshape(9 * CH, 4 * CH),
                              wh1.reshape(9 * CH, 4 * CH)], axis=0)  # (144, 32)
    wfc_s = wfc * (1.0 / float(H * W))     # fold spatial mean into classifier

    # Hoist the im2col (pad + patch extraction) of the non-recurrent input x.
    x_nhwc = jnp.transpose(x_btchw, (0, 1, 3, 4, 2))          # (B, T, H, W, CIN)
    xp = jnp.pad(x_nhwc, ((0, 0), (0, 0), (1, 1), (1, 1), (0, 0)))
    x_patch = jnp.concatenate(
        [xp[:, :, ky:ky + H, kx:kx + W, :]
         for ky in range(3) for kx in range(3)],
        axis=-1)                                              # (B, T, H, W, 9*CIN)

    kernel = functools.partial(conv_decoder_kernel,
                               t_steps=t, hh=H, ww=W, ch=CH)
    full = lambda a: pl.BlockSpec(a.shape, lambda bi: (0,) * a.ndim)

    out = pl.pallas_call(
        kernel,
        out_shape=jax.ShapeDtypeStruct((b, t, NCLASSES), jnp.float32),
        grid_spec=pltpu.PrefetchScalarGridSpec(
            num_scalar_prefetch=0,
            grid=(b,),                       # batch-parallel (v7x megacore)
            in_specs=[
                pl.BlockSpec((None, t, H, W, 9 * CIN),
                             lambda bi: (bi, 0, 0, 0, 0)),
                full(w0_cat), full(b0),
                full(w1_cat), full(b1),
                full(wfc_s), full(bfc),
            ],
            out_specs=pl.BlockSpec((None, t, NCLASSES), lambda bi: (bi, 0, 0)),
            scratch_shapes=[
                pltpu.VMEM((H + 2, W + 2, CH), jnp.float32),   # padded h0
                pltpu.VMEM((H + 2, W + 2, CH), jnp.float32),   # padded h1
            ],
        ),
        compiler_params=pltpu.CompilerParams(
            dimension_semantics=("parallel",)),    # batch elems are independent
    )(x_patch, w0_cat, b0, w1_cat, b1, wfc_s, bfc)

    return out                                               # (B, T, NCLASSES)


# --------------------------- pure-JAX reference ------------------------------
def _conv3x3_ref(x, w):
    return jax.lax.conv_general_dilated(
        x, w, window_strides=(1, 1), padding="SAME",
        dimension_numbers=("NHWC", "HWIO", "NHWC"))


def conv_decoder_ref(x_btchw, params):
    (wx0, wh0, b0, wx1, wh1, b1, wfc, bfc) = params
    b, t, cin, h, w = x_btchw.shape
    x = jnp.transpose(x_btchw, (1, 0, 3, 4, 2))          # (T,B,H,W,CIN)

    def cell(inp, hc, cc, wx, wh, bias):
        gates = _conv3x3_ref(inp, wx) + _conv3x3_ref(hc, wh) + bias
        i, f, o, g = jnp.split(gates, 4, axis=-1)
        c_n = jax.nn.sigmoid(f) * cc + jax.nn.sigmoid(i) * jnp.tanh(g)
        h_n = jax.nn.sigmoid(o) * jnp.tanh(c_n)
        return h_n, c_n

    h0 = jnp.zeros((b, h, w, CH), jnp.float32)
    c0 = jnp.zeros_like(h0)
    h1 = jnp.zeros_like(h0)
    c1 = jnp.zeros_like(h0)
    outs = []
    for ti in range(t):
        h0, c0 = cell(x[ti], h0, c0, wx0, wh0, b0)
        h1, c1 = cell(h0, h1, c1, wx1, wh1, b1)
        pooled = jnp.mean(h1, axis=(1, 2))
        outs.append(pooled @ wfc + bfc)
    return jnp.stack(outs, axis=1)                       # (B,T,NCLASSES)


# --------------------------------- main --------------------------------------
if __name__ == "__main__":
    key = jax.random.PRNGKey(0)
    ks = jax.random.split(key, 9)

    # Deterministic synthetic parameters (PyTorch conv weight (4Ch, Cin+Ch, 3, 3)
    # is represented split along the input-channel axis and stored as HWIO).
    scale = 0.1
    wx0 = scale * jax.random.normal(ks[0], (3, 3, CIN, 4 * CH), jnp.float32)
    wh0 = scale * jax.random.normal(ks[1], (3, 3, CH, 4 * CH), jnp.float32)
    b0 = scale * jax.random.normal(ks[2], (1, 4 * CH), jnp.float32)
    wx1 = scale * jax.random.normal(ks[3], (3, 3, CH, 4 * CH), jnp.float32)
    wh1 = scale * jax.random.normal(ks[4], (3, 3, CH, 4 * CH), jnp.float32)
    b1 = scale * jax.random.normal(ks[5], (1, 4 * CH), jnp.float32)
    wfc = scale * jax.random.normal(ks[6], (CH, NCLASSES), jnp.float32)
    bfc = scale * jax.random.normal(ks[7], (1, NCLASSES), jnp.float32)
    params = (wx0, wh0, b0, wx1, wh1, b1, wfc, bfc)

    # Input in the PyTorch layout (B, T, C, H, W).
    x = jax.random.normal(ks[8], (BATCH, SEQ, CIN, H, W), jnp.float32)

    out = jax.block_until_ready(conv_decoder(x, params))
    ref = jax.block_until_ready(conv_decoder_ref(x, params))

    np.testing.assert_allclose(np.asarray(out), np.asarray(ref),
                               rtol=1e-4, atol=1e-4)
    assert out.shape == (BATCH, SEQ, NCLASSES)
    print("KERNEL_OK")
</pallas_src>

<mosaic_0001>
module attributes {stable_mosaic.version = 11 : i64} {
  func.func @conv_decoder_kernel(%arg0: i32, %arg1: memref<1x8x4x4x288xf32, #tpu.memory_space<vmem>>, %arg2: memref<360x32xf32, #tpu.memory_space<vmem>>, %arg3: memref<1x32xf32, #tpu.memory_space<vmem>>, %arg4: memref<144x32xf32, #tpu.memory_space<vmem>>, %arg5: memref<1x32xf32, #tpu.memory_space<vmem>>, %arg6: memref<8x10xf32, #tpu.memory_space<vmem>>, %arg7: memref<1x10xf32, #tpu.memory_space<vmem>>, %arg8: memref<1x8x10xf32, #tpu.memory_space<vmem>>, %arg9: memref<6x6x8xf32, #tpu.memory_space<vmem>>, %arg10: memref<6x6x8xf32, #tpu.memory_space<vmem>>) attributes {dimension_semantics = [#tpu.dimension_semantics<parallel>], iteration_bounds = array<i64: 2>, scalar_prefetch = 0 : i64, scratch_operands = 2 : i64, tpu.core_type = #tpu.core_type<tc>, window_params = [{transform_indices = @transform_0, window_bounds = array<i64: 1, 8, 4, 4, 288>}, {pipeline_mode = #tpu.pipeline_mode<synchronous>, transform_indices = @transform_1, window_bounds = array<i64: 360, 32>}, {pipeline_mode = #tpu.pipeline_mode<synchronous>, transform_indices = @transform_2, window_bounds = array<i64: 1, 32>}, {pipeline_mode = #tpu.pipeline_mode<synchronous>, transform_indices = @transform_3, window_bounds = array<i64: 144, 32>}, {pipeline_mode = #tpu.pipeline_mode<synchronous>, transform_indices = @transform_4, window_bounds = array<i64: 1, 32>}, {pipeline_mode = #tpu.pipeline_mode<synchronous>, transform_indices = @transform_5, window_bounds = array<i64: 8, 10>}, {pipeline_mode = #tpu.pipeline_mode<synchronous>, transform_indices = @transform_6, window_bounds = array<i64: 1, 10>}, {transform_indices = @transform_7, window_bounds = array<i64: 1, 8, 10>}]} {
    %cst = arith.constant 0.000000e+00 : f32
    %0 = vector.broadcast %cst : f32 to vector<6x6x8xf32>
    %c0 = arith.constant 0 : index
    %c0_0 = arith.constant 0 : index
    %c0_1 = arith.constant 0 : index
    %1 = vector.load %arg9[%c0, %c0_0, %c0_1] : memref<6x6x8xf32, #tpu.memory_space<vmem>>, vector<6x6x8xf32>
    tpu.vector_store %arg9[%c0, %c0_0, %c0_1], %0 {strides = array<i32>} : memref<6x6x8xf32, #tpu.memory_space<vmem>>, vector<6x6x8xf32>,
    %cst_2 = arith.constant 0.000000e+00 : f32
    %2 = vector.broadcast %cst_2 : f32 to vector<6x6x8xf32>
    %c0_3 = arith.constant 0 : index
    %c0_4 = arith.constant 0 : index
    %c0_5 = arith.constant 0 : index
    %3 = vector.load %arg10[%c0_3, %c0_4, %c0_5] : memref<6x6x8xf32, #tpu.memory_space<vmem>>, vector<6x6x8xf32>
    tpu.vector_store %arg10[%c0_3, %c0_4, %c0_5], %2 {strides = array<i32>} : memref<6x6x8xf32, #tpu.memory_space<vmem>>, vector<6x6x8xf32>,
    %cst_6 = arith.constant 0.000000e+00 : f32
    %4 = vector.broadcast %cst_6 : f32 to vector<16x8xf32>
    %cst_7 = arith.constant 0.000000e+00 : f32
    %5 = vector.broadcast %cst_7 : f32 to vector<16x8xf32>
    %c0_8 = arith.constant 0 : index
    %c0_9 = arith.constant 0 : index
    %c0_10 = arith.constant 0 : index
    %c0_11 = arith.constant 0 : index
    %c0_12 = arith.constant 0 : index
    %6 = vector.load %arg1[%c0_8, %c0_9, %c0_10, %c0_11, %c0_12] : memref<1x8x4x4x288xf32, #tpu.memory_space<vmem>>, vector<1x1x4x4x288xf32>
    %7 = vector.shape_cast %6 : vector<1x1x4x4x288xf32> to vector<4x4x288xf32>
    %c0_13 = arith.constant 0 : index
    %c0_14 = arith.constant 0 : index
    %c0_15 = arith.constant 0 : index
    %8 = vector.load %arg9[%c0_13, %c0_14, %c0_15] : memref<6x6x8xf32, #tpu.memory_space<vmem>>, vector<4x4x8xf32>
    %c0_16 = arith.constant 0 : index
    %c1 = arith.constant 1 : index
    %c0_17 = arith.constant 0 : index
    %9 = vector.load %arg9[%c0_16, %c1, %c0_17] : memref<6x6x8xf32, #tpu.memory_space<vmem>>, vector<4x4x8xf32>
    %c0_18 = arith.constant 0 : index
    %c2 = arith.constant 2 : index
    %c0_19 = arith.constant 0 : index
    %10 = vector.load %arg9[%c0_18, %c2, %c0_19] : memref<6x6x8xf32, #tpu.memory_space<vmem>>, vector<4x4x8xf32>
    %c1_20 = arith.constant 1 : index
    %c0_21 = arith.constant 0 : index
    %c0_22 = arith.constant 0 : index
    %11 = vector.load %arg9[%c1_20, %c0_21, %c0_22] : memref<6x6x8xf32, #tpu.memory_space<vmem>>, vector<4x4x8xf32>
    %c1_23 = arith.constant 1 : index
    %c1_24 = arith.constant 1 : index
    %c0_25 = arith.constant 0 : index
    %12 = vector.load %arg9[%c1_23, %c1_24, %c0_25] : memref<6x6x8xf32, #tpu.memory_space<vmem>>, vector<4x4x8xf32>
    %c1_26 = arith.constant 1 : index
    %c2_27 = arith.constant 2 : index
    %c0_28 = arith.constant 0 : index
    %13 = vector.load %arg9[%c1_26, %c2_27, %c0_28] : memref<6x6x8xf32, #tpu.memory_space<vmem>>, vector<4x4x8xf32>
    %c2_29 = arith.constant 2 : index
    %c0_30 = arith.constant 0 : index
    %c0_31 = arith.constant 0 : index
    %14 = vector.load %arg9[%c2_29, %c0_30, %c0_31] : memref<6x6x8xf32, #tpu.memory_space<vmem>>, vector<4x4x8xf32>
    %c2_32 = arith.constant 2 : index
    %c1_33 = arith.constant 1 : index
    %c0_34 = arith.constant 0 : index
    %15 = vector.load %arg9[%c2_32, %c1_33, %c0_34] : memref<6x6x8xf32, #tpu.memory_space<vmem>>, vector<4x4x8xf32>
    %c2_35 = arith.constant 2 : index
    %c2_36 = arith.constant 2 : index
    %c0_37 = arith.constant 0 : index
    %16 = vector.load %arg9[%c2_35, %c2_36, %c0_37] : memref<6x6x8xf32, #tpu.memory_space<vmem>>, vector<4x4x8xf32>
    %17 = tpu.concatenate %7, %8, %9, %10, %11, %12, %13, %14, %15, %16 in 2 : vector<4x4x288xf32>, vector<4x4x8xf32>, vector<4x4x8xf32>, vector<4x4x8xf32>, vector<4x4x8xf32>, vector<4x4x8xf32>, vector<4x4x8xf32>, vector<4x4x8xf32>, vector<4x4x8xf32>, vector<4x4x8xf32> -> vector<4x4x360xf32>
    %18 = vector.shape_cast %17 : vector<4x4x360xf32> to vector<16x360xf32>
    %c0_38 = arith.constant 0 : index
    %c0_39 = arith.constant 0 : index
    %19 = vector.load %arg2[%c0_38, %c0_39] : memref<360x32xf32, #tpu.memory_space<vmem>>, vector<360x32xf32>
    %cst_40 = arith.constant dense<0.000000e+00> : vector<16x32xf32>
    %20 = tpu.matmul %18, %19, %cst_40 {dimension_numbers = #tpu.dot_dimension_numbers<[1], [0], [0], [1], [0, 0, 1, 1], [], []>} : vector<16x360xf32>, vector<360x32xf32>, vector<16x32xf32> -> vector<16x32xf32>
    %c0_41 = arith.constant 0 : index
    %c0_42 = arith.constant 0 : index
    %21 = vector.load %arg3[%c0_41, %c0_42] : memref<1x32xf32, #tpu.memory_space<vmem>>, vector<1x32xf32>
    %22 = vector.broadcast %21 : vector<1x32xf32> to vector<16x32xf32>
    %23 = arith.addf %20, %22 : vector<16x32xf32>
    %24 = vector.extract_strided_slice %23 {offsets = [0, 0], sizes = [16, 24], strides = [1, 1]} : vector<16x32xf32> to vector<16x24xf32>
    %25 = arith.negf %24 : vector<16x24xf32>
    %26 = math.exp %25 : vector<16x24xf32>
    %cst_43 = arith.constant 1.000000e+00 : f32
    %27 = vector.broadcast %cst_43 : f32 to vector<16x24xf32>
    %28 = arith.addf %27, %26 : vector<16x24xf32>
    %29 = arith.divf %27, %28 : vector<16x24xf32>
    %30 = vector.extract_strided_slice %23 {offsets = [0, 24], sizes = [16, 8], strides = [1, 1]} : vector<16x32xf32> to vector<16x8xf32>
    %31 = math.tanh %30 : vector<16x8xf32>
    %32 = vector.extract_strided_slice %29 {offsets = [0, 0], sizes = [16, 8], strides = [1, 1]} : vector<16x24xf32> to vector<16x8xf32>
    %33 = vector.extract_strided_slice %29 {offsets = [0, 8], sizes = [16, 8], strides = [1, 1]} : vector<16x24xf32> to vector<16x8xf32>
    %34 = vector.extract_strided_slice %29 {offsets = [0, 16], sizes = [16, 8], strides = [1, 1]} : vector<16x24xf32> to vector<16x8xf32>
    %35 = arith.mulf %33, %4 : vector<16x8xf32>
    %36 = arith.mulf %32, %31 : vector<16x8xf32>
    %37 = arith.addf %35, %36 : vector<16x8xf32>
    %38 = math.tanh %37 : vector<16x8xf32>
    %39 = arith.mulf %34, %38 : vector<16x8xf32>
    %40 = vector.shape_cast %39 : vector<16x8xf32> to vector<4x4x8xf32>
    %c1_44 = arith.constant 1 : index
    %c1_45 = arith.constant 1 : index
    %c0_46 = arith.constant 0 : index
    %41 = vector.load %arg9[%c1_44, %c1_45, %c0_46] : memref<6x6x8xf32, #tpu.memory_space<vmem>>, vector<4x4x8xf32>
    tpu.vector_store %arg9[%c1_44, %c1_45, %c0_46], %40 {strides = array<i32>} : memref<6x6x8xf32, #tpu.memory_space<vmem>>, vector<4x4x8xf32>,
    %c0_47 = arith.constant 0 : index
    %c0_48 = arith.constant 0 : index
    %c0_49 = arith.constant 0 : index
    %42 = vector.load %arg9[%c0_47, %c0_48, %c0_49] : memref<6x6x8xf32, #tpu.memory_space<vmem>>, vector<4x4x8xf32>
    %c0_50 = arith.constant 0 : index
    %c1_51 = arith.constant 1 : index
    %c0_52 = arith.constant 0 : index
    %43 = vector.load %arg9[%c0_50, %c1_51, %c0_52] : memref<6x6x8xf32, #tpu.memory_space<vmem>>, vector<4x4x8xf32>
    %c0_53 = arith.constant 0 : index
    %c2_54 = arith.constant 2 : index
    %c0_55 = arith.constant 0 : index
    %44 = vector.load %arg9[%c0_53, %c2_54, %c0_55] : memref<6x6x8xf32, #tpu.memory_space<vmem>>, vector<4x4x8xf32>
    %c1_56 = arith.constant 1 : index
    %c0_57 = arith.constant 0 : index
    %c0_58 = arith.constant 0 : index
    %45 = vector.load %arg9[%c1_56, %c0_57, %c0_58] : memref<6x6x8xf32, #tpu.memory_space<vmem>>, vector<4x4x8xf32>
    %c1_59 = arith.constant 1 : index
    %c1_60 = arith.constant 1 : index
    %c0_61 = arith.constant 0 : index
    %46 = vector.load %arg9[%c1_59, %c1_60, %c0_61] : memref<6x6x8xf32, #tpu.memory_space<vmem>>, vector<4x4x8xf32>
    %c1_62 = arith.constant 1 : index
    %c2_63 = arith.constant 2 : index
    %c0_64 = arith.constant 0 : index
    %47 = vector.load %arg9[%c1_62, %c2_63, %c0_64] : memref<6x6x8xf32, #tpu.memory_space<vmem>>, vector<4x4x8xf32>
    %c2_65 = arith.constant 2 : index
    %c0_66 = arith.constant 0 : index
    %c0_67 = arith.constant 0 : index
    %48 = vector.load %arg9[%c2_65, %c0_66, %c0_67] : memref<6x6x8xf32, #tpu.memory_space<vmem>>, vector<4x4x8xf32>
    %c2_68 = arith.constant 2 : index
    %c1_69 = arith.constant 1 : index
    %c0_70 = arith.constant 0 : index
    %49 = vector.load %arg9[%c2_68, %c1_69, %c0_70] : memref<6x6x8xf32, #tpu.memory_space<vmem>>, vector<4x4x8xf32>
    %c2_71 = arith.constant 2 : index
    %c2_72 = arith.constant 2 : index
    %c0_73 = arith.constant 0 : index
    %50 = vector.load %arg9[%c2_71, %c2_72, %c0_73] : memref<6x6x8xf32, #tpu.memory_space<vmem>>, vector<4x4x8xf32>
    %c0_74 = arith.constant 0 : index
    %c0_75 = arith.constant 0 : index
    %c0_76 = arith.constant 0 : index
    %51 = vector.load %arg10[%c0_74, %c0_75, %c0_76] : memref<6x6x8xf32, #tpu.memory_space<vmem>>, vector<4x4x8xf32>
    %c0_77 = arith.constant 0 : index
    %c1_78 = arith.constant 1 : index
    %c0_79 = arith.constant 0 : index
    %52 = vector.load %arg10[%c0_77, %c1_78, %c0_79] : memref<6x6x8xf32, #tpu.memory_space<vmem>>, vector<4x4x8xf32>
    %c0_80 = arith.constant 0 : index
    %c2_81 = arith.constant 2 : index
    %c0_82 = arith.constant 0 : index
    %53 = vector.load %arg10[%c0_80, %c2_81, %c0_82] : memref<6x6x8xf32, #tpu.memory_space<vmem>>, vector<4x4x8xf32>
    %c1_83 = arith.constant 1 : index
    %c0_84 = arith.constant 0 : index
    %c0_85 = arith.constant 0 : index
    %54 = vector.load %arg10[%c1_83, %c0_84, %c0_85] : memref<6x6x8xf32, #tpu.memory_space<vmem>>, vector<4x4x8xf32>
    %c1_86 = arith.constant 1 : index
    %c1_87 = arith.constant 1 : index
    %c0_88 = arith.constant 0 : index
    %55 = vector.load %arg10[%c1_86, %c1_87, %c0_88] : memref<6x6x8xf32, #tpu.memory_space<vmem>>, vector<4x4x8xf32>
    %c1_89 = arith.constant 1 : index
    %c2_90 = arith.constant 2 : index
    %c0_91 = arith.constant 0 : index
    %56 = vector.load %arg10[%c1_89, %c2_90, %c0_91] : memref<6x6x8xf32, #tpu.memory_space<vmem>>, vector<4x4x8xf32>
    %c2_92 = arith.constant 2 : index
    %c0_93 = arith.constant 0 : index
    %c0_94 = arith.constant 0 : index
    %57 = vector.load %arg10[%c2_92, %c0_93, %c0_94] : memref<6x6x8xf32, #tpu.memory_space<vmem>>, vector<4x4x8xf32>
    %c2_95 = arith.constant 2 : index
    %c1_96 = arith.constant 1 : index
    %c0_97 = arith.constant 0 : index
    %58 = vector.load %arg10[%c2_95, %c1_96, %c0_97] : memref<6x6x8xf32, #tpu.memory_space<vmem>>, vector<4x4x8xf32>
    %c2_98 = arith.constant 2 : index
    %c2_99 = arith.constant 2 : index
    %c0_100 = arith.constant 0 : index
    %59 = vector.load %arg10[%c2_98, %c2_99, %c0_100] : memref<6x6x8xf32, #tpu.memory_space<vmem>>, vector<4x4x8xf32>
    %60 = tpu.concatenate %42, %43, %44, %45, %46, %47, %48, %49, %50, %51, %52, %53, %54, %55, %56, %57 in 2 : vector<4x4x8xf32>, vector<4x4x8xf32>, vector<4x4x8xf32>, vector<4x4x8xf32>, vector<4x4x8xf32>, vector<4x4x8xf32>, vector<4x4x8xf32>, vector<4x4x8xf32>, vector<4x4x8xf32>, vector<4x4x8xf32>, vector<4x4x8xf32>, vector<4x4x8xf32>, vector<4x4x8xf32>, vector<4x4x8xf32>, vector<4x4x8xf32>, vector<4x4x8xf32> -> vector<4x4x128xf32>
    %61 = tpu.concatenate %58, %59 in 2 : vector<4x4x8xf32>, vector<4x4x8xf32> -> vector<4x4x16xf32>
    %62 = tpu.concatenate %60, %61 in 2 : vector<4x4x128xf32>, vector<4x4x16xf32> -> vector<4x4x144xf32>
    %63 = vector.shape_cast %62 : vector<4x4x144xf32> to vector<16x144xf32>
    %c0_101 = arith.constant 0 : index
    %c0_102 = arith.constant 0 : index
    %64 = vector.load %arg4[%c0_101, %c0_102] : memref<144x32xf32, #tpu.memory_space<vmem>>, vector<144x32xf32>
    %cst_103 = arith.constant dense<0.000000e+00> : vector<16x32xf32>
    %65 = tpu.matmul %63, %64, %cst_103 {dimension_numbers = #tpu.dot_dimension_numbers<[1], [0], [0], [1], [0, 0, 1, 1], [], []>} : vector<16x144xf32>, vector<144x32xf32>, vector<16x32xf32> -> vector<16x32xf32>
    %c0_104 = arith.constant 0 : index
    %c0_105 = arith.constant 0 : index
    %66 = vector.load %arg5[%c0_104, %c0_105] : memref<1x32xf32, #tpu.memory_space<vmem>>, vector<1x32xf32>
    %67 = vector.broadcast %66 : vector<1x32xf32> to vector<16x32xf32>
    %68 = arith.addf %65, %67 : vector<16x32xf32>
    %69 = vector.extract_strided_slice %68 {offsets = [0, 0], sizes = [16, 24], strides = [1, 1]} : vector<16x32xf32> to vector<16x24xf32>
    %70 = arith.negf %69 : vector<16x24xf32>
    %71 = math.exp %70 : vector<16x24xf32>
    %cst_106 = arith.constant 1.000000e+00 : f32
    %72 = vector.broadcast %cst_106 : f32 to vector<16x24xf32>
    %73 = arith.addf %72, %71 : vector<16x24xf32>
    %74 = arith.divf %72, %73 : vector<16x24xf32>
    %75 = vector.extract_strided_slice %68 {offsets = [0, 24], sizes = [16, 8], strides = [1, 1]} : vector<16x32xf32> to vector<16x8xf32>
    %76 = math.tanh %75 : vector<16x8xf32>
    %77 = vector.extract_strided_slice %74 {offsets = [0, 0], sizes = [16, 8], strides = [1, 1]} : vector<16x24xf32> to vector<16x8xf32>
    %78 = vector.extract_strided_slice %74 {offsets = [0, 8], sizes = [16, 8], strides = [1, 1]} : vector<16x24xf32> to vector<16x8xf32>
    %79 = vector.extract_strided_slice %74 {offsets = [0, 16], sizes = [16, 8], strides = [1, 1]} : vector<16x24xf32> to vector<16x8xf32>
    %80 = arith.mulf %78, %5 : vector<16x8xf32>
    %81 = arith.mulf %77, %76 : vector<16x8xf32>
    %82 = arith.addf %80, %81 : vector<16x8xf32>
    %83 = math.tanh %82 : vector<16x8xf32>
    %84 = arith.mulf %79, %83 : vector<16x8xf32>
    %85 = vector.shape_cast %84 : vector<16x8xf32> to vector<4x4x8xf32>
    %c1_107 = arith.constant 1 : index
    %c1_108 = arith.constant 1 : index
    %c0_109 = arith.constant 0 : index
    %86 = vector.load %arg10[%c1_107, %c1_108, %c0_109] : memref<6x6x8xf32, #tpu.memory_space<vmem>>, vector<4x4x8xf32>
    tpu.vector_store %arg10[%c1_107, %c1_108, %c0_109], %85 {strides = array<i32>} : memref<6x6x8xf32, #tpu.memory_space<vmem>>, vector<4x4x8xf32>,
    %cst_110 = arith.constant dense<0.000000e+00> : vector<8xf32>
    %87 = vector.multi_reduction <add>, %84, %cst_110 [0] : vector<16x8xf32> to vector<8xf32>
    %88 = vector.shape_cast %87 : vector<8xf32> to vector<1x8xf32>
    %c0_111 = arith.constant 0 : index
    %c1_112 = arith.constant 1 : index
    %c0_113 = arith.constant 0 : index
    %c0_114 = arith.constant 0 : index
    %c0_115 = arith.constant 0 : index
    %89 = vector.load %arg1[%c0_111, %c1_112, %c0_113, %c0_114, %c0_115] : memref<1x8x4x4x288xf32, #tpu.memory_space<vmem>>, vector<1x1x4x4x288xf32>
    %90 = vector.shape_cast %89 : vector<1x1x4x4x288xf32> to vector<4x4x288xf32>
    %c0_116 = arith.constant 0 : index
    %c0_117 = arith.constant 0 : index
    %c0_118 = arith.constant 0 : index
    %91 = vector.load %arg9[%c0_116, %c0_117, %c0_118] : memref<6x6x8xf32, #tpu.memory_space<vmem>>, vector<4x4x8xf32>
    %c0_119 = arith.constant 0 : index
    %c1_120 = arith.constant 1 : index
    %c0_121 = arith.constant 0 : index
    %92 = vector.load %arg9[%c0_119, %c1_120, %c0_121] : memref<6x6x8xf32, #tpu.memory_space<vmem>>, vector<4x4x8xf32>
    %c0_122 = arith.constant 0 : index
    %c2_123 = arith.constant 2 : index
    %c0_124 = arith.constant 0 : index
    %93 = vector.load %arg9[%c0_122, %c2_123, %c0_124] : memref<6x6x8xf32, #tpu.memory_space<vmem>>, vector<4x4x8xf32>
    %c1_125 = arith.constant 1 : index
    %c0_126 = arith.constant 0 : index
    %c0_127 = arith.constant 0 : index
    %94 = vector.load %arg9[%c1_125, %c0_126, %c0_127] : memref<6x6x8xf32, #tpu.memory_space<vmem>>, vector<4x4x8xf32>
    %c1_128 = arith.constant 1 : index
    %c1_129 = arith.constant 1 : index
    %c0_130 = arith.constant 0 : index
    %95 = vector.load %arg9[%c1_128, %c1_129, %c0_130] : memref<6x6x8xf32, #tpu.memory_space<vmem>>, vector<4x4x8xf32>
    %c1_131 = arith.constant 1 : index
    %c2_132 = arith.constant 2 : index
    %c0_133 = arith.constant 0 : index
    %96 = vector.load %arg9[%c1_131, %c2_132, %c0_133] : memref<6x6x8xf32, #tpu.memory_space<vmem>>, vector<4x4x8xf32>
    %c2_134 = arith.constant 2 : index
    %c0_135 = arith.constant 0 : index
    %c0_136 = arith.constant 0 : index
    %97 = vector.load %arg9[%c2_134, %c0_135, %c0_136] : memref<6x6x8xf32, #tpu.memory_space<vmem>>, vector<4x4x8xf32>
    %c2_137 = arith.constant 2 : index
    %c1_138 = arith.constant 1 : index
    %c0_139 = arith.constant 0 : index
    %98 = vector.load %arg9[%c2_137, %c1_138, %c0_139] : memref<6x6x8xf32, #tpu.memory_space<vmem>>, vector<4x4x8xf32>
    %c2_140 = arith.constant 2 : index
    %c2_141 = arith.constant 2 : index
    %c0_142 = arith.constant 0 : index
    %99 = vector.load %arg9[%c2_140, %c2_141, %c0_142] : memref<6x6x8xf32, #tpu.memory_space<vmem>>, vector<4x4x8xf32>
    %100 = tpu.concatenate %90, %91, %92, %93, %94, %95, %96, %97, %98, %99 in 2 : vector<4x4x288xf32>, vector<4x4x8xf32>, vector<4x4x8xf32>, vector<4x4x8xf32>, vector<4x4x8xf32>, vector<4x4x8xf32>, vector<4x4x8xf32>, vector<4x4x8xf32>, vector<4x4x8xf32>, vector<4x4x8xf32> -> vector<4x4x360xf32>
    %101 = vector.shape_cast %100 : vector<4x4x360xf32> to vector<16x360xf32>
    %c0_143 = arith.constant 0 : index
    %c0_144 = arith.constant 0 : index
    %102 = vector.load %arg2[%c0_143, %c0_144] : memref<360x32xf32, #tpu.memory_space<vmem>>, vector<360x32xf32>
    %cst_145 = arith.constant dense<0.000000e+00> : vector<16x32xf32>
    %103 = tpu.matmul %101, %102, %cst_145 {dimension_numbers = #tpu.dot_dimension_numbers<[1], [0], [0], [1], [0, 0, 1, 1], [], []>} : vector<16x360xf32>, vector<360x32xf32>, vector<16x32xf32> -> vector<16x32xf32>
    %c0_146 = arith.constant 0 : index
    %c0_147 = arith.constant 0 : index
    %104 = vector.load %arg3[%c0_146, %c0_147] : memref<1x32xf32, #tpu.memory_space<vmem>>, vector<1x32xf32>
    %105 = vector.broadcast %104 : vector<1x32xf32> to vector<16x32xf32>
    %106 = arith.addf %103, %105 : vector<16x32xf32>
    %107 = vector.extract_strided_slice %106 {offsets = [0, 0], sizes = [16, 24], strides = [1, 1]} : vector<16x32xf32> to vector<16x24xf32>
    %108 = arith.negf %107 : vector<16x24xf32>
    %109 = math.exp %108 : vector<16x24xf32>
    %cst_148 = arith.constant 1.000000e+00 : f32
    %110 = vector.broadcast %cst_148 : f32 to vector<16x24xf32>
    %111 = arith.addf %110, %109 : vector<16x24xf32>
    %112 = arith.divf %110, %111 : vector<16x24xf32>
    %113 = vector.extract_strided_slice %106 {offsets = [0, 24], sizes = [16, 8], strides = [1, 1]} : vector<16x32xf32> to vector<16x8xf32>
    %114 = math.tanh %113 : vector<16x8xf32>
    %115 = vector.extract_strided_slice %112 {offsets = [0, 0], sizes = [16, 8], strides = [1, 1]} : vector<16x24xf32> to vector<16x8xf32>
    %116 = vector.extract_strided_slice %112 {offsets = [0, 8], sizes = [16, 8], strides = [1, 1]} : vector<16x24xf32> to vector<16x8xf32>
    %117 = vector.extract_strided_slice %112 {offsets = [0, 16], sizes = [16, 8], strides = [1, 1]} : vector<16x24xf32> to vector<16x8xf32>
    %118 = arith.mulf %116, %37 : vector<16x8xf32>
    %119 = arith.mulf %115, %114 : vector<16x8xf32>
    %120 = arith.addf %118, %119 : vector<16x8xf32>
    %121 = math.tanh %120 : vector<16x8xf32>
    %122 = arith.mulf %117, %121 : vector<16x8xf32>
    %123 = vector.shape_cast %122 : vector<16x8xf32> to vector<4x4x8xf32>
    %c1_149 = arith.constant 1 : index
    %c1_150 = arith.constant 1 : index
    %c0_151 = arith.constant 0 : index
    %124 = vector.load %arg9[%c1_149, %c1_150, %c0_151] : memref<6x6x8xf32, #tpu.memory_space<vmem>>, vector<4x4x8xf32>
    tpu.vector_store %arg9[%c1_149, %c1_150, %c0_151], %123 {strides = array<i32>} : memref<6x6x8xf32, #tpu.memory_space<vmem>>, vector<4x4x8xf32>,
    %c0_152 = arith.constant 0 : index
    %c0_153 = arith.constant 0 : index
    %c0_154 = arith.constant 0 : index
    %125 = vector.load %arg9[%c0_152, %c0_153, %c0_154] : memref<6x6x8xf32, #tpu.memory_space<vmem>>, vector<4x4x8xf32>
    %c0_155 = arith.constant 0 : index
    %c1_156 = arith.constant 1 : index
    %c0_157 = arith.constant 0 : index
    %126 = vector.load %arg9[%c0_155, %c1_156, %c0_157] : memref<6x6x8xf32, #tpu.memory_space<vmem>>, vector<4x4x8xf32>
    %c0_158 = arith.constant 0 : index
    %c2_159 = arith.constant 2 : index
    %c0_160 = arith.constant 0 : index
    %127 = vector.load %arg9[%c0_158, %c2_159, %c0_160] : memref<6x6x8xf32, #tpu.memory_space<vmem>>, vector<4x4x8xf32>
    %c1_161 = arith.constant 1 : index
    %c0_162 = arith.constant 0 : index
    %c0_163 = arith.constant 0 : index
    %128 = vector.load %arg9[%c1_161, %c0_162, %c0_163] : memref<6x6x8xf32, #tpu.memory_space<vmem>>, vector<4x4x8xf32>
    %c1_164 = arith.constant 1 : index
    %c1_165 = arith.constant 1 : index
    %c0_166 = arith.constant 0 : index
    %129 = vector.load %arg9[%c1_164, %c1_165, %c0_166] : memref<6x6x8xf32, #tpu.memory_space<vmem>>, vector<4x4x8xf32>
    %c1_167 = arith.constant 1 : index
    %c2_168 = arith.constant 2 : index
    %c0_169 = arith.constant 0 : index
    %130 = vector.load %arg9[%c1_167, %c2_168, %c0_169] : memref<6x6x8xf32, #tpu.memory_space<vmem>>, vector<4x4x8xf32>
    %c2_170 = arith.constant 2 : index
    %c0_171 = arith.constant 0 : index
    %c0_172 = arith.constant 0 : index
    %131 = vector.load %arg9[%c2_170, %c0_171, %c0_172] : memref<6x6x8xf32, #tpu.memory_space<vmem>>, vector<4x4x8xf32>
    %c2_173 = arith.constant 2 : index
    %c1_174 = arith.constant 1 : index
    %c0_175 = arith.constant 0 : index
    %132 = vector.load %arg9[%c2_173, %c1_174, %c0_175] : memref<6x6x8xf32, #tpu.memory_space<vmem>>, vector<4x4x8xf32>
    %c2_176 = arith.constant 2 : index
    %c2_177 = arith.constant 2 : index
    %c0_178 = arith.constant 0 : index
    %133 = vector.load %arg9[%c2_176, %c2_177, %c0_178] : memref<6x6x8xf32, #tpu.memory_space<vmem>>, vector<4x4x8xf32>
    %c0_179 = arith.constant 0 : index
    %c0_180 = arith.constant 0 : index
    %c0_181 = arith.constant 0 : index
    %134 = vector.load %arg10[%c0_179, %c0_180, %c0_181] : memref<6x6x8xf32, #tpu.memory_space<vmem>>, vector<4x4x8xf32>
    %c0_182 = arith.constant 0 : index
    %c1_183 = arith.constant 1 : index
    %c0_184 = arith.constant 0 : index
    %135 = vector.load %arg10[%c0_182, %c1_183, %c0_184] : memref<6x6x8xf32, #tpu.memory_space<vmem>>, vector<4x4x8xf32>
    %c0_185 = arith.constant 0 : index
    %c2_186 = arith.constant 2 : index
    %c0_187 = arith.constant 0 : index
    %136 = vector.load %arg10[%c0_185, %c2_186, %c0_187] : memref<6x6x8xf32, #tpu.memory_space<vmem>>, vector<4x4x8xf32>
    %c1_188 = arith.constant 1 : index
    %c0_189 = arith.constant 0 : index
    %c0_190 = arith.constant 0 : index
    %137 = vector.load %arg10[%c1_188, %c0_189, %c0_190] : memref<6x6x8xf32, #tpu.memory_space<vmem>>, vector<4x4x8xf32>
    %c1_191 = arith.constant 1 : index
    %c1_192 = arith.constant 1 : index
    %c0_193 = arith.constant 0 : index
    %138 = vector.load %arg10[%c1_191, %c1_192, %c0_193] : memref<6x6x8xf32, #tpu.memory_space<vmem>>, vector<4x4x8xf32>
    %c1_194 = arith.constant 1 : index
    %c2_195 = arith.constant 2 : index
    %c0_196 = arith.constant 0 : index
    %139 = vector.load %arg10[%c1_194, %c2_195, %c0_196] : memref<6x6x8xf32, #tpu.memory_space<vmem>>, vector<4x4x8xf32>
    %c2_197 = arith.constant 2 : index
    %c0_198 = arith.constant 0 : index
    %c0_199 = arith.constant 0 : index
    %140 = vector.load %arg10[%c2_197, %c0_198, %c0_199] : memref<6x6x8xf32, #tpu.memory_space<vmem>>, vector<4x4x8xf32>
    %c2_200 = arith.constant 2 : index
    %c1_201 = arith.constant 1 : index
    %c0_202 = arith.constant 0 : index
    %141 = vector.load %arg10[%c2_200, %c1_201, %c0_202] : memref<6x6x8xf32, #tpu.memory_space<vmem>>, vector<4x4x8xf32>
    %c2_203 = arith.constant 2 : index
    %c2_204 = arith.constant 2 : index
    %c0_205 = arith.constant 0 : index
    %142 = vector.load %arg10[%c2_203, %c2_204, %c0_205] : memref<6x6x8xf32, #tpu.memory_space<vmem>>, vector<4x4x8xf32>
    %143 = tpu.concatenate %125, %126, %127, %128, %129, %130, %131, %132, %133, %134, %135, %136, %137, %138, %139, %140 in 2 : vector<4x4x8xf32>, vector<4x4x8xf32>, vector<4x4x8xf32>, vector<4x4x8xf32>, vector<4x4x8xf32>, vector<4x4x8xf32>, vector<4x4x8xf32>, vector<4x4x8xf32>, vector<4x4x8xf32>, vector<4x4x8xf32>, vector<4x4x8xf32>, vector<4x4x8xf32>, vector<4x4x8xf32>, vector<4x4x8xf32>, vector<4x4x8xf32>, vector<4x4x8xf32> -> vector<4x4x128xf32>
    %144 = tpu.concatenate %141, %142 in 2 : vector<4x4x8xf32>, vector<4x4x8xf32> -> vector<4x4x16xf32>
    %145 = tpu.concatenate %143, %144 in 2 : vector<4x4x128xf32>, vector<4x4x16xf32> -> vector<4x4x144xf32>
    %146 = vector.shape_cast %145 : vector<4x4x144xf32> to vector<16x144xf32>
    %c0_206 = arith.constant 0 : index
    %c0_207 = arith.constant 0 : index
    %147 = vector.load %arg4[%c0_206, %c0_207] : memref<144x32xf32, #tpu.memory_space<vmem>>, vector<144x32xf32>
    %cst_208 = arith.constant dense<0.000000e+00> : vector<16x32xf32>
    %148 = tpu.matmul %146, %147, %cst_208 {dimension_numbers = #tpu.dot_dimension_numbers<[1], [0], [0], [1], [0, 0, 1, 1], [], []>} : vector<16x144xf32>, vector<144x32xf32>, vector<16x32xf32> -> vector<16x32xf32>
    %c0_209 = arith.constant 0 : index
    %c0_210 = arith.constant 0 : index
    %149 = vector.load %arg5[%c0_209, %c0_210] : memref<1x32xf32, #tpu.memory_space<vmem>>, vector<1x32xf32>
    %150 = vector.broadcast %149 : vector<1x32xf32> to vector<16x32xf32>
    %151 = arith.addf %148, %150 : vector<16x32xf32>
    %152 = vector.extract_strided_slice %151 {offsets = [0, 0], sizes = [16, 24], strides = [1, 1]} : vector<16x32xf32> to vector<16x24xf32>
    %153 = arith.negf %152 : vector<16x24xf32>
    %154 = math.exp %153 : vector<16x24xf32>
    %cst_211 = arith.constant 1.000000e+00 : f32
    %155 = vector.broadcast %cst_211 : f32 to vector<16x24xf32>
    %156 = arith.addf %155, %154 : vector<16x24xf32>
    %157 = arith.divf %155, %156 : vector<16x24xf32>
    %158 = vector.extract_strided_slice %151 {offsets = [0, 24], sizes = [16, 8], strides = [1, 1]} : vector<16x32xf32> to vector<16x8xf32>
    %159 = math.tanh %158 : vector<16x8xf32>
    %160 = vector.extract_strided_slice %157 {offsets = [0, 0], sizes = [16, 8], strides = [1, 1]} : vector<16x24xf32> to vector<16x8xf32>
    %161 = vector.extract_strided_slice %157 {offsets = [0, 8], sizes = [16, 8], strides = [1, 1]} : vector<16x24xf32> to vector<16x8xf32>
    %162 = vector.extract_strided_slice %157 {offsets = [0, 16], sizes = [16, 8], strides = [1, 1]} : vector<16x24xf32> to vector<16x8xf32>
    %163 = arith.mulf %161, %82 : vector<16x8xf32>
    %164 = arith.mulf %160, %159 : vector<16x8xf32>
    %165 = arith.addf %163, %164 : vector<16x8xf32>
    %166 = math.tanh %165 : vector<16x8xf32>
    %167 = arith.mulf %162, %166 : vector<16x8xf32>
    %168 = vector.shape_cast %167 : vector<16x8xf32> to vector<4x4x8xf32>
    %c1_212 = arith.constant 1 : index
    %c1_213 = arith.constant 1 : index
    %c0_214 = arith.constant 0 : index
    %169 = vector.load %arg10[%c1_212, %c1_213, %c0_214] : memref<6x6x8xf32, #tpu.memory_space<vmem>>, vector<4x4x8xf32>
    tpu.vector_store %arg10[%c1_212, %c1_213, %c0_214], %168 {strides = array<i32>} : memref<6x6x8xf32, #tpu.memory_space<vmem>>, vector<4x4x8xf32>,
    %cst_215 = arith.constant dense<0.000000e+00> : vector<8xf32>
    %170 = vector.multi_reduction <add>, %167, %cst_215 [0] : vector<16x8xf32> to vector<8xf32>
    %171 = vector.shape_cast %170 : vector<8xf32> to vector<1x8xf32>
    %c0_216 = arith.constant 0 : index
    %c2_217 = arith.constant 2 : index
    %c0_218 = arith.constant 0 : index
    %c0_219 = arith.constant 0 : index
    %c0_220 = arith.constant 0 : index
    %172 = vector.load %arg1[%c0_216, %c2_217, %c0_218, %c0_219, %c0_220] : memref<1x8x4x4x288xf32, #tpu.memory_space<vmem>>, vector<1x1x4x4x288xf32>
    %173 = vector.shape_cast %172 : vector<1x1x4x4x288xf32> to vector<4x4x288xf32>
    %c0_221 = arith.constant 0 : index
    %c0_222 = arith.constant 0 : index
    %c0_223 = arith.constant 0 : index
    %174 = vector.load %arg9[%c0_221, %c0_222, %c0_223] : memref<6x6x8xf32, #tpu.memory_space<vmem>>, vector<4x4x8xf32>
    %c0_224 = arith.constant 0 : index
    %c1_225 = arith.constant 1 : index
    %c0_226 = arith.constant 0 : index
    %175 = vector.load %arg9[%c0_224, %c1_225, %c0_226] : memref<6x6x8xf32, #tpu.memory_space<vmem>>, vector<4x4x8xf32>
    %c0_227 = arith.constant 0 : index
    %c2_228 = arith.constant 2 : index
    %c0_229 = arith.constant 0 : index
    %176 = vector.load %arg9[%c0_227, %c2_228, %c0_229] : memref<6x6x8xf32, #tpu.memory_space<vmem>>, vector<4x4x8xf32>
    %c1_230 = arith.constant 1 : index
    %c0_231 = arith.constant 0 : index
    %c0_232 = arith.constant 0 : index
    %177 = vector.load %arg9[%c1_230, %c0_231, %c0_232] : memref<6x6x8xf32, #tpu.memory_space<vmem>>, vector<4x4x8xf32>
    %c1_233 = arith.constant 1 : index
    %c1_234 = arith.constant 1 : index
    %c0_235 = arith.constant 0 : index
    %178 = vector.load %arg9[%c1_233, %c1_234, %c0_235] : memref<6x6x8xf32, #tpu.memory_space<vmem>>, vector<4x4x8xf32>
    %c1_236 = arith.constant 1 : index
    %c2_237 = arith.constant 2 : index
    %c0_238 = arith.constant 0 : index
    %179 = vector.load %arg9[%c1_236, %c2_237, %c0_238] : memref<6x6x8xf32, #tpu.memory_space<vmem>>, vector<4x4x8xf32>
    %c2_239 = arith.constant 2 : index
    %c0_240 = arith.constant 0 : index
    %c0_241 = arith.constant 0 : index
    %180 = vector.load %arg9[%c2_239, %c0_240, %c0_241] : memref<6x6x8xf32, #tpu.memory_space<vmem>>, vector<4x4x8xf32>
    %c2_242 = arith.constant 2 : index
    %c1_243 = arith.constant 1 : index
    %c0_244 = arith.constant 0 : index
    %181 = vector.load %arg9[%c2_242, %c1_243, %c0_244] : memref<6x6x8xf32, #tpu.memory_space<vmem>>, vector<4x4x8xf32>
    %c2_245 = arith.constant 2 : index
    %c2_246 = arith.constant 2 : index
    %c0_247 = arith.constant 0 : index
    %182 = vector.load %arg9[%c2_245, %c2_246, %c0_247] : memref<6x6x8xf32, #tpu.memory_space<vmem>>, vector<4x4x8xf32>
    %183 = tpu.concatenate %173, %174, %175, %176, %177, %178, %179, %180, %181, %182 in 2 : vector<4x4x288xf32>, vector<4x4x8xf32>, vector<4x4x8xf32>, vector<4x4x8xf32>, vector<4x4x8xf32>, vector<4x4x8xf32>, vector<4x4x8xf32>, vector<4x4x8xf32>, vector<4x4x8xf32>, vector<4x4x8xf32> -> vector<4x4x360xf32>
    %184 = vector.shape_cast %183 : vector<4x4x360xf32> to vector<16x360xf32>
    %c0_248 = arith.constant 0 : index
    %c0_249 = arith.constant 0 : index
    %185 = vector.load %arg2[%c0_248, %c0_249] : memref<360x32xf32, #tpu.memory_space<vmem>>, vector<360x32xf32>
    %cst_250 = arith.constant dense<0.000000e+00> : vector<16x32xf32>
    %186 = tpu.matmul %184, %185, %cst_250 {dimension_numbers = #tpu.dot_dimension_numbers<[1], [0], [0], [1], [0, 0, 1, 1], [], []>} : vector<16x360xf32>, vector<360x32xf32>, vector<16x32xf32> -> vector<16x32xf32>
    %c0_251 = arith.constant 0 : index
    %c0_252 = arith.constant 0 : index
    %187 = vector.load %arg3[%c0_251, %c0_252] : memref<1x32xf32, #tpu.memory_space<vmem>>, vector<1x32xf32>
    %188 = vector.broadcast %187 : vector<1x32xf32> to vector<16x32xf32>
    %189 = arith.addf %186, %188 : vector<16x32xf32>
    %190 = vector.extract_strided_slice %189 {offsets = [0, 0], sizes = [16, 24], strides = [1, 1]} : vector<16x32xf32> to vector<16x24xf32>
    %191 = arith.negf %190 : vector<16x24xf32>
    %192 = math.exp %191 : vector<16x24xf32>
    %cst_253 = arith.constant 1.000000e+00 : f32
    %193 = vector.broadcast %cst_253 : f32 to vector<16x24xf32>
    %194 = arith.addf %193, %192 : vector<16x24xf32>
    %195 = arith.divf %193, %194 : vector<16x24xf32>
    %196 = vector.extract_strided_slice %189 {offsets = [0, 24], sizes = [16, 8], strides = [1, 1]} : vector<16x32xf32> to vector<16x8xf32>
    %197 = math.tanh %196 : vector<16x8xf32>
    %198 = vector.extract_strided_slice %195 {offsets = [0, 0], sizes = [16, 8], strides = [1, 1]} : vector<16x24xf32> to vector<16x8xf32>
    %199 = vector.extract_strided_slice %195 {offsets = [0, 8], sizes = [16, 8], strides = [1, 1]} : vector<16x24xf32> to vector<16x8xf32>
    %200 = vector.extract_strided_slice %195 {offsets = [0, 16], sizes = [16, 8], strides = [1, 1]} : vector<16x24xf32> to vector<16x8xf32>
    %201 = arith.mulf %199, %120 : vector<16x8xf32>
    %202 = arith.mulf %198, %197 : vector<16x8xf32>
    %203 = arith.addf %201, %202 : vector<16x8xf32>
    %204 = math.tanh %203 : vector<16x8xf32>
    %205 = arith.mulf %200, %204 : vector<16x8xf32>
    %206 = vector.shape_cast %205 : vector<16x8xf32> to vector<4x4x8xf32>
    %c1_254 = arith.constant 1 : index
    %c1_255 = arith.constant 1 : index
    %c0_256 = arith.constant 0 : index
    %207 = vector.load %arg9[%c1_254, %c1_255, %c0_256] : memref<6x6x8xf32, #tpu.memory_space<vmem>>, vector<4x4x8xf32>
    tpu.vector_store %arg9[%c1_254, %c1_255, %c0_256], %206 {strides = array<i32>} : memref<6x6x8xf32, #tpu.memory_space<vmem>>, vector<4x4x8xf32>,
    %c0_257 = arith.constant 0 : index
    %c0_258 = arith.constant 0 : index
    %c0_259 = arith.constant 0 : index
    %208 = vector.load %arg9[%c0_257, %c0_258, %c0_259] : memref<6x6x8xf32, #tpu.memory_space<vmem>>, vector<4x4x8xf32>
    %c0_260 = arith.constant 0 : index
    %c1_261 = arith.constant 1 : index
    %c0_262 = arith.constant 0 : index
    %209 = vector.load %arg9[%c0_260, %c1_261, %c0_262] : memref<6x6x8xf32, #tpu.memory_space<vmem>>, vector<4x4x8xf32>
    %c0_263 = arith.constant 0 : index
    %c2_264 = arith.constant 2 : index
    %c0_265 = arith.constant 0 : index
    %210 = vector.load %arg9[%c0_263, %c2_264, %c0_265] : memref<6x6x8xf32, #tpu.memory_space<vmem>>, vector<4x4x8xf32>
    %c1_266 = arith.constant 1 : index
    %c0_267 = arith.constant 0 : index
    %c0_268 = arith.constant 0 : index
    %211 = vector.load %arg9[%c1_266, %c0_267, %c0_268] : memref<6x6x8xf32, #tpu.memory_space<vmem>>, vector<4x4x8xf32>
    %c1_269 = arith.constant 1 : index
    %c1_270 = arith.constant 1 : index
    %c0_271 = arith.constant 0 : index
    %212 = vector.load %arg9[%c1_269, %c1_270, %c0_271] : memref<6x6x8xf32, #tpu.memory_space<vmem>>, vector<4x4x8xf32>
    %c1_272 = arith.constant 1 : index
    %c2_273 = arith.constant 2 : index
    %c0_274 = arith.constant 0 : index
    %213 = vector.load %arg9[%c1_272, %c2_273, %c0_274] : memref<6x6x8xf32, #tpu.memory_space<vmem>>, vector<4x4x8xf32>
    %c2_275 = arith.constant 2 : index
    %c0_276 = arith.constant 0 : index
    %c0_277 = arith.constant 0 : index
    %214 = vector.load %arg9[%c2_275, %c0_276, %c0_277] : memref<6x6x8xf32, #tpu.memory_space<vmem>>, vector<4x4x8xf32>
    %c2_278 = arith.constant 2 : index
    %c1_279 = arith.constant 1 : index
    %c0_280 = arith.constant 0 : index
    %215 = vector.load %arg9[%c2_278, %c1_279, %c0_280] : memref<6x6x8xf32, #tpu.memory_space<vmem>>, vector<4x4x8xf32>
    %c2_281 = arith.constant 2 : index
    %c2_282 = arith.constant 2 : index
    %c0_283 = arith.constant 0 : index
    %216 = vector.load %arg9[%c2_281, %c2_282, %c0_283] : memref<6x6x8xf32, #tpu.memory_space<vmem>>, vector<4x4x8xf32>
    %c0_284 = arith.constant 0 : index
    %c0_285 = arith.constant 0 : index
    %c0_286 = arith.constant 0 : index
    %217 = vector.load %arg10[%c0_284, %c0_285, %c0_286] : memref<6x6x8xf32, #tpu.memory_space<vmem>>, vector<4x4x8xf32>
    %c0_287 = arith.constant 0 : index
    %c1_288 = arith.constant 1 : index
    %c0_289 = arith.constant 0 : index
    %218 = vector.load %arg10[%c0_287, %c1_288, %c0_289] : memref<6x6x8xf32, #tpu.memory_space<vmem>>, vector<4x4x8xf32>
    %c0_290 = arith.constant 0 : index
    %c2_291 = arith.constant 2 : index
    %c0_292 = arith.constant 0 : index
    %219 = vector.load %arg10[%c0_290, %c2_291, %c0_292] : memref<6x6x8xf32, #tpu.memory_space<vmem>>, vector<4x4x8xf32>
    %c1_293 = arith.constant 1 : index
    %c0_294 = arith.constant 0 : index
    %c0_295 = arith.constant 0 : index
    %220 = vector.load %arg10[%c1_293, %c0_294, %c0_295] : memref<6x6x8xf32, #tpu.memory_space<vmem>>, vector<4x4x8xf32>
    %c1_296 = arith.constant 1 : index
    %c1_297 = arith.constant 1 : index
    %c0_298 = arith.constant 0 : index
    %221 = vector.load %arg10[%c1_296, %c1_297, %c0_298] : memref<6x6x8xf32, #tpu.memory_space<vmem>>, vector<4x4x8xf32>
    %c1_299 = arith.constant 1 : index
    %c2_300 = arith.constant 2 : index
    %c0_301 = arith.constant 0 : index
    %222 = vector.load %arg10[%c1_299, %c2_300, %c0_301] : memref<6x6x8xf32, #tpu.memory_space<vmem>>, vector<4x4x8xf32>
    %c2_302 = arith.constant 2 : index
    %c0_303 = arith.constant 0 : index
    %c0_304 = arith.constant 0 : index
    %223 = vector.load %arg10[%c2_302, %c0_303, %c0_304] : memref<6x6x8xf32, #tpu.memory_space<vmem>>, vector<4x4x8xf32>
    %c2_305 = arith.constant 2 : index
    %c1_306 = arith.constant 1 : index
    %c0_307 = arith.constant 0 : index
    %224 = vector.load %arg10[%c2_305, %c1_306, %c0_307] : memref<6x6x8xf32, #tpu.memory_space<vmem>>, vector<4x4x8xf32>
    %c2_308 = arith.constant 2 : index
    %c2_309 = arith.constant 2 : index
    %c0_310 = arith.constant 0 : index
    %225 = vector.load %arg10[%c2_308, %c2_309, %c0_310] : memref<6x6x8xf32, #tpu.memory_space<vmem>>, vector<4x4x8xf32>
    %226 = tpu.concatenate %208, %209, %210, %211, %212, %213, %214, %215, %216, %217, %218, %219, %220, %221, %222, %223 in 2 : vector<4x4x8xf32>, vector<4x4x8xf32>, vector<4x4x8xf32>, vector<4x4x8xf32>, vector<4x4x8xf32>, vector<4x4x8xf32>, vector<4x4x8xf32>, vector<4x4x8xf32>, vector<4x4x8xf32>, vector<4x4x8xf32>, vector<4x4x8xf32>, vector<4x4x8xf32>, vector<4x4x8xf32>, vector<4x4x8xf32>, vector<4x4x8xf32>, vector<4x4x8xf32> -> vector<4x4x128xf32>
    %227 = tpu.concatenate %224, %225 in 2 : vector<4x4x8xf32>, vector<4x4x8xf32> -> vector<4x4x16xf32>
    %228 = tpu.concatenate %226, %227 in 2 : vector<4x4x128xf32>, vector<4x4x16xf32> -> vector<4x4x144xf32>
    %229 = vector.shape_cast %228 : vector<4x4x144xf32> to vector<16x144xf32>
    %c0_311 = arith.constant 0 : index
    %c0_312 = arith.constant 0 : index
    %230 = vector.load %arg4[%c0_311, %c0_312] : memref<144x32xf32, #tpu.memory_space<vmem>>, vector<144x32xf32>
    %cst_313 = arith.constant dense<0.000000e+00> : vector<16x32xf32>
    %231 = tpu.matmul %229, %230, %cst_313 {dimension_numbers = #tpu.dot_dimension_numbers<[1], [0], [0], [1], [0, 0, 1, 1], [], []>} : vector<16x144xf32>, vector<144x32xf32>, vector<16x32xf32> -> vector<16x32xf32>
    %c0_314 = arith.constant 0 : index
    %c0_315 = arith.constant 0 : index
    %232 = vector.load %arg5[%c0_314, %c0_315] : memref<1x32xf32, #tpu.memory_space<vmem>>, vector<1x32xf32>
    %233 = vector.broadcast %232 : vector<1x32xf32> to vector<16x32xf32>
    %234 = arith.addf %231, %233 : vector<16x32xf32>
    %235 = vector.extract_strided_slice %234 {offsets = [0, 0], sizes = [16, 24], strides = [1, 1]} : vector<16x32xf32> to vector<16x24xf32>
    %236 = arith.negf %235 : vector<16x24xf32>
    %237 = math.exp %236 : vector<16x24xf32>
    %cst_316 = arith.constant 1.000000e+00 : f32
    %238 = vector.broadcast %cst_316 : f32 to vector<16x24xf32>
    %239 = arith.addf %238, %237 : vector<16x24xf32>
    %240 = arith.divf %238, %239 : vector<16x24xf32>
    %241 = vector.extract_strided_slice %234 {offsets = [0, 24], sizes = [16, 8], strides = [1, 1]} : vector<16x32xf32> to vector<16x8xf32>
    %242 = math.tanh %241 : vector<16x8xf32>
    %243 = vector.extract_strided_slice %240 {offsets = [0, 0], sizes = [16, 8], strides = [1, 1]} : vector<16x24xf32> to vector<16x8xf32>
    %244 = vector.extract_strided_slice %240 {offsets = [0, 8], sizes = [16, 8], strides = [1, 1]} : vector<16x24xf32> to vector<16x8xf32>
    %245 = vector.extract_strided_slice %240 {offsets = [0, 16], sizes = [16, 8], strides = [1, 1]} : vector<16x24xf32> to vector<16x8xf32>
    %246 = arith.mulf %244, %165 : vector<16x8xf32>
    %247 = arith.mulf %243, %242 : vector<16x8xf32>
    %248 = arith.addf %246, %247 : vector<16x8xf32>
    %249 = math.tanh %248 : vector<16x8xf32>
    %250 = arith.mulf %245, %249 : vector<16x8xf32>
    %251 = vector.shape_cast %250 : vector<16x8xf32> to vector<4x4x8xf32>
    %c1_317 = arith.constant 1 : index
    %c1_318 = arith.constant 1 : index
    %c0_319 = arith.constant 0 : index
    %252 = vector.load %arg10[%c1_317, %c1_318, %c0_319] : memref<6x6x8xf32, #tpu.memory_space<vmem>>, vector<4x4x8xf32>
    tpu.vector_store %arg10[%c1_317, %c1_318, %c0_319], %251 {strides = array<i32>} : memref<6x6x8xf32, #tpu.memory_space<vmem>>, vector<4x4x8xf32>,
    %cst_320 = arith.constant dense<0.000000e+00> : vector<8xf32>
    %253 = vector.multi_reduction <add>, %250, %cst_320 [0] : vector<16x8xf32> to vector<8xf32>
    %254 = vector.shape_cast %253 : vector<8xf32> to vector<1x8xf32>
    %c0_321 = arith.constant 0 : index
    %c3 = arith.constant 3 : index
    %c0_322 = arith.constant 0 : index
    %c0_323 = arith.constant 0 : index
    %c0_324 = arith.constant 0 : index
    %255 = vector.load %arg1[%c0_321, %c3, %c0_322, %c0_323, %c0_324] : memref<1x8x4x4x288xf32, #tpu.memory_space<vmem>>, vector<1x1x4x4x288xf32>
    %256 = vector.shape_cast %255 : vector<1x1x4x4x288xf32> to vector<4x4x288xf32>
    %c0_325 = arith.constant 0 : index
    %c0_326 = arith.constant 0 : index
    %c0_327 = arith.constant 0 : index
    %257 = vector.load %arg9[%c0_325, %c0_326, %c0_327] : memref<6x6x8xf32, #tpu.memory_space<vmem>>, vector<4x4x8xf32>
    %c0_328 = arith.constant 0 : index
    %c1_329 = arith.constant 1 : index
    %c0_330 = arith.constant 0 : index
    %258 = vector.load %arg9[%c0_328, %c1_329, %c0_330] : memref<6x6x8xf32, #tpu.memory_space<vmem>>, vector<4x4x8xf32>
    %c0_331 = arith.constant 0 : index
    %c2_332 = arith.constant 2 : index
    %c0_333 = arith.constant 0 : index
    %259 = vector.load %arg9[%c0_331, %c2_332, %c0_333] : memref<6x6x8xf32, #tpu.memory_space<vmem>>, vector<4x4x8xf32>
    %c1_334 = arith.constant 1 : index
    %c0_335 = arith.constant 0 : index
    %c0_336 = arith.constant 0 : index
    %260 = vector.load %arg9[%c1_334, %c0_335, %c0_336] : memref<6x6x8xf32, #tpu.memory_space<vmem>>, vector<4x4x8xf32>
    %c1_337 = arith.constant 1 : index
    %c1_338 = arith.constant 1 : index
    %c0_339 = arith.constant 0 : index
    %261 = vector.load %arg9[%c1_337, %c1_338, %c0_339] : memref<6x6x8xf32, #tpu.memory_space<vmem>>, vector<4x4x8xf32>
    %c1_340 = arith.constant 1 : index
    %c2_341 = arith.constant 2 : index
    %c0_342 = arith.constant 0 : index
    %262 = vector.load %arg9[%c1_340, %c2_341, %c0_342] : memref<6x6x8xf32, #tpu.memory_space<vmem>>, vector<4x4x8xf32>
    %c2_343 = arith.constant 2 : index
    %c0_344 = arith.constant 0 : index
    %c0_345 = arith.constant 0 : index
    %263 = vector.load %arg9[%c2_343, %c0_344, %c0_345] : memref<6x6x8xf32, #tpu.memory_space<vmem>>, vector<4x4x8xf32>
    %c2_346 = arith.constant 2 : index
    %c1_347 = arith.constant 1 : index
    %c0_348 = arith.constant 0 : index
    %264 = vector.load %arg9[%c2_346, %c1_347, %c0_348] : memref<6x6x8xf32, #tpu.memory_space<vmem>>, vector<4x4x8xf32>
    %c2_349 = arith.constant 2 : index
    %c2_350 = arith.constant 2 : index
    %c0_351 = arith.constant 0 : index
    %265 = vector.load %arg9[%c2_349, %c2_350, %c0_351] : memref<6x6x8xf32, #tpu.memory_space<vmem>>, vector<4x4x8xf32>
    %266 = tpu.concatenate %256, %257, %258, %259, %260, %261, %262, %263, %264, %265 in 2 : vector<4x4x288xf32>, vector<4x4x8xf32>, vector<4x4x8xf32>, vector<4x4x8xf32>, vector<4x4x8xf32>, vector<4x4x8xf32>, vector<4x4x8xf32>, vector<4x4x8xf32>, vector<4x4x8xf32>, vector<4x4x8xf32> -> vector<4x4x360xf32>
    %267 = vector.shape_cast %266 : vector<4x4x360xf32> to vector<16x360xf32>
    %c0_352 = arith.constant 0 : index
    %c0_353 = arith.constant 0 : index
    %268 = vector.load %arg2[%c0_352, %c0_353] : memref<360x32xf32, #tpu.memory_space<vmem>>, vector<360x32xf32>
    %cst_354 = arith.constant dense<0.000000e+00> : vector<16x32xf32>
    %269 = tpu.matmul %267, %268, %cst_354 {dimension_numbers = #tpu.dot_dimension_numbers<[1], [0], [0], [1], [0, 0, 1, 1], [], []>} : vector<16x360xf32>, vector<360x32xf32>, vector<16x32xf32> -> vector<16x32xf32>
    %c0_355 = arith.constant 0 : index
    %c0_356 = arith.constant 0 : index
    %270 = vector.load %arg3[%c0_355, %c0_356] : memref<1x32xf32, #tpu.memory_space<vmem>>, vector<1x32xf32>
    %271 = vector.broadcast %270 : vector<1x32xf32> to vector<16x32xf32>
    %272 = arith.addf %269, %271 : vector<16x32xf32>
    %273 = vector.extract_strided_slice %272 {offsets = [0, 0], sizes = [16, 24], strides = [1, 1]} : vector<16x32xf32> to vector<16x24xf32>
    %274 = arith.negf %273 : vector<16x24xf32>
    %275 = math.exp %274 : vector<16x24xf32>
    %cst_357 = arith.constant 1.000000e+00 : f32
    %276 = vector.broadcast %cst_357 : f32 to vector<16x24xf32>
    %277 = arith.addf %276, %275 : vector<16x24xf32>
    %278 = arith.divf %276, %277 : vector<16x24xf32>
    %279 = vector.extract_strided_slice %272 {offsets = [0, 24], sizes = [16, 8], strides = [1, 1]} : vector<16x32xf32> to vector<16x8xf32>
    %280 = math.tanh %279 : vector<16x8xf32>
    %281 = vector.extract_strided_slice %278 {offsets = [0, 0], sizes = [16, 8], strides = [1, 1]} : vector<16x24xf32> to vector<16x8xf32>
    %282 = vector.extract_strided_slice %278 {offsets = [0, 8], sizes = [16, 8], strides = [1, 1]} : vector<16x24xf32> to vector<16x8xf32>
    %283 = vector.extract_strided_slice %278 {offsets = [0, 16], sizes = [16, 8], strides = [1, 1]} : vector<16x24xf32> to vector<16x8xf32>
    %284 = arith.mulf %282, %203 : vector<16x8xf32>
    %285 = arith.mulf %281, %280 : vector<16x8xf32>
    %286 = arith.addf %284, %285 : vector<16x8xf32>
    %287 = math.tanh %286 : vector<16x8xf32>
    %288 = arith.mulf %283, %287 : vector<16x8xf32>
    %289 = vector.shape_cast %288 : vector<16x8xf32> to vector<4x4x8xf32>
    %c1_358 = arith.constant 1 : index
    %c1_359 = arith.constant 1 : index
    %c0_360 = arith.constant 0 : index
    %290 = vector.load %arg9[%c1_358, %c1_359, %c0_360] : memref<6x6x8xf32, #tpu.memory_space<vmem>>, vector<4x4x8xf32>
    tpu.vector_store %arg9[%c1_358, %c1_359, %c0_360], %289 {strides = array<i32>} : memref<6x6x8xf32, #tpu.memory_space<vmem>>, vector<4x4x8xf32>,
    %c0_361 = arith.constant 0 : index
    %c0_362 = arith.constant 0 : index
    %c0_363 = arith.constant 0 : index
    %291 = vector.load %arg9[%c0_361, %c0_362, %c0_363] : memref<6x6x8xf32, #tpu.memory_space<vmem>>, vector<4x4x8xf32>
    %c0_364 = arith.constant 0 : index
    %c1_365 = arith.constant 1 : index
    %c0_366 = arith.constant 0 : index
    %292 = vector.load %arg9[%c0_364, %c1_365, %c0_366] : memref<6x6x8xf32, #tpu.memory_space<vmem>>, vector<4x4x8xf32>
    %c0_367 = arith.constant 0 : index
    %c2_368 = arith.constant 2 : index
    %c0_369 = arith.constant 0 : index
    %293 = vector.load %arg9[%c0_367, %c2_368, %c0_369] : memref<6x6x8xf32, #tpu.memory_space<vmem>>, vector<4x4x8xf32>
    %c1_370 = arith.constant 1 : index
    %c0_371 = arith.constant 0 : index
    %c0_372 = arith.constant 0 : index
    %294 = vector.load %arg9[%c1_370, %c0_371, %c0_372] : memref<6x6x8xf32, #tpu.memory_space<vmem>>, vector<4x4x8xf32>
    %c1_373 = arith.constant 1 : index
    %c1_374 = arith.constant 1 : index
    %c0_375 = arith.constant 0 : index
    %295 = vector.load %arg9[%c1_373, %c1_374, %c0_375] : memref<6x6x8xf32, #tpu.memory_space<vmem>>, vector<4x4x8xf32>
    %c1_376 = arith.constant 1 : index
    %c2_377 = arith.constant 2 : index
    %c0_378 = arith.constant 0 : index
    %296 = vector.load %arg9[%c1_376, %c2_377, %c0_378] : memref<6x6x8xf32, #tpu.memory_space<vmem>>, vector<4x4x8xf32>
    %c2_379 = arith.constant 2 : index
    %c0_380 = arith.constant 0 : index
    %c0_381 = arith.constant 0 : index
    %297 = vector.load %arg9[%c2_379, %c0_380, %c0_381] : memref<6x6x8xf32, #tpu.memory_space<vmem>>, vector<4x4x8xf32>
    %c2_382 = arith.constant 2 : index
    %c1_383 = arith.constant 1 : index
    %c0_384 = arith.constant 0 : index
    %298 = vector.load %arg9[%c2_382, %c1_383, %c0_384] : memref<6x6x8xf32, #tpu.memory_space<vmem>>, vector<4x4x8xf32>
    %c2_385 = arith.constant 2 : index
    %c2_386 = arith.constant 2 : index
    %c0_387 = arith.constant 0 : index
    %299 = vector.load %arg9[%c2_385, %c2_386, %c0_387] : memref<6x6x8xf32, #tpu.memory_space<vmem>>, vector<4x4x8xf32>
    %c0_388 = arith.constant 0 : index
    %c0_389 = arith.constant 0 : index
    %c0_390 = arith.constant 0 : index
    %300 = vector.load %arg10[%c0_388, %c0_389, %c0_390] : memref<6x6x8xf32, #tpu.memory_space<vmem>>, vector<4x4x8xf32>
    %c0_391 = arith.constant 0 : index
    %c1_392 = arith.constant 1 : index
    %c0_393 = arith.constant 0 : index
    %301 = vector.load %arg10[%c0_391, %c1_392, %c0_393] : memref<6x6x8xf32, #tpu.memory_space<vmem>>, vector<4x4x8xf32>
    %c0_394 = arith.constant 0 : index
    %c2_395 = arith.constant 2 : index
    %c0_396 = arith.constant 0 : index
    %302 = vector.load %arg10[%c0_394, %c2_395, %c0_396] : memref<6x6x8xf32, #tpu.memory_space<vmem>>, vector<4x4x8xf32>
    %c1_397 = arith.constant 1 : index
    %c0_398 = arith.constant 0 : index
    %c0_399 = arith.constant 0 : index
    %303 = vector.load %arg10[%c1_397, %c0_398, %c0_399] : memref<6x6x8xf32, #tpu.memory_space<vmem>>, vector<4x4x8xf32>
    %c1_400 = arith.constant 1 : index
    %c1_401 = arith.constant 1 : index
    %c0_402 = arith.constant 0 : index
    %304 = vector.load %arg10[%c1_400, %c1_401, %c0_402] : memref<6x6x8xf32, #tpu.memory_space<vmem>>, vector<4x4x8xf32>
    %c1_403 = arith.constant 1 : index
    %c2_404 = arith.constant 2 : index
    %c0_405 = arith.constant 0 : index
    %305 = vector.load %arg10[%c1_403, %c2_404, %c0_405] : memref<6x6x8xf32, #tpu.memory_space<vmem>>, vector<4x4x8xf32>
    %c2_406 = arith.constant 2 : index
    %c0_407 = arith.constant 0 : index
    %c0_408 = arith.constant 0 : index
    %306 = vector.load %arg10[%c2_406, %c0_407, %c0_408] : memref<6x6x8xf32, #tpu.memory_space<vmem>>, vector<4x4x8xf32>
    %c2_409 = arith.constant 2 : index
    %c1_410 = arith.constant 1 : index
    %c0_411 = arith.constant 0 : index
    %307 = vector.load %arg10[%c2_409, %c1_410, %c0_411] : memref<6x6x8xf32, #tpu.memory_space<vmem>>, vector<4x4x8xf32>
    %c2_412 = arith.constant 2 : index
    %c2_413 = arith.constant 2 : index
    %c0_414 = arith.constant 0 : index
    %308 = vector.load %arg10[%c2_412, %c2_413, %c0_414] : memref<6x6x8xf32, #tpu.memory_space<vmem>>, vector<4x4x8xf32>
    %309 = tpu.concatenate %291, %292, %293, %294, %295, %296, %297, %298, %299, %300, %301, %302, %303, %304, %305, %306 in 2 : vector<4x4x8xf32>, vector<4x4x8xf32>, vector<4x4x8xf32>, vector<4x4x8xf32>, vector<4x4x8xf32>, vector<4x4x8xf32>, vector<4x4x8xf32>, vector<4x4x8xf32>, vector<4x4x8xf32>, vector<4x4x8xf32>, vector<4x4x8xf32>, vector<4x4x8xf32>, vector<4x4x8xf32>, vector<4x4x8xf32>, vector<4x4x8xf32>, vector<4x4x8xf32> -> vector<4x4x128xf32>
    %310 = tpu.concatenate %307, %308 in 2 : vector<4x4x8xf32>, vector<4x4x8xf32> -> vector<4x4x16xf32>
    %311 = tpu.concatenate %309, %310 in 2 : vector<4x4x128xf32>, vector<4x4x16xf32> -> vector<4x4x144xf32>
    %312 = vector.shape_cast %311 : vector<4x4x144xf32> to vector<16x144xf32>
    %c0_415 = arith.constant 0 : index
    %c0_416 = arith.constant 0 : index
    %313 = vector.load %arg4[%c0_415, %c0_416] : memref<144x32xf32, #tpu.memory_space<vmem>>, vector<144x32xf32>
    %cst_417 = arith.constant dense<0.000000e+00> : vector<16x32xf32>
    %314 = tpu.matmul %312, %313, %cst_417 {dimension_numbers = #tpu.dot_dimension_numbers<[1], [0], [0], [1], [0, 0, 1, 1], [], []>} : vector<16x144xf32>, vector<144x32xf32>, vector<16x32xf32> -> vector<16x32xf32>
    %c0_418 = arith.constant 0 : index
    %c0_419 = arith.constant 0 : index
    %315 = vector.load %arg5[%c0_418, %c0_419] : memref<1x32xf32, #tpu.memory_space<vmem>>, vector<1x32xf32>
    %316 = vector.broadcast %315 : vector<1x32xf32> to vector<16x32xf32>
    %317 = arith.addf %314, %316 : vector<16x32xf32>
    %318 = vector.extract_strided_slice %317 {offsets = [0, 0], sizes = [16, 24], strides = [1, 1]} : vector<16x32xf32> to vector<16x24xf32>
    %319 = arith.negf %318 : vector<16x24xf32>
    %320 = math.exp %319 : vector<16x24xf32>
    %cst_420 = arith.constant 1.000000e+00 : f32
    %321 = vector.broadcast %cst_420 : f32 to vector<16x24xf32>
    %322 = arith.addf %321, %320 : vector<16x24xf32>
    %323 = arith.divf %321, %322 : vector<16x24xf32>
    %324 = vector.extract_strided_slice %317 {offsets = [0, 24], sizes = [16, 8], strides = [1, 1]} : vector<16x32xf32> to vector<16x8xf32>
    %325 = math.tanh %324 : vector<16x8xf32>
    %326 = vector.extract_strided_slice %323 {offsets = [0, 0], sizes = [16, 8], strides = [1, 1]} : vector<16x24xf32> to vector<16x8xf32>
    %327 = vector.extract_strided_slice %323 {offsets = [0, 8], sizes = [16, 8], strides = [1, 1]} : vector<16x24xf32> to vector<16x8xf32>
    %328 = vector.extract_strided_slice %323 {offsets = [0, 16], sizes = [16, 8], strides = [1, 1]} : vector<16x24xf32> to vector<16x8xf32>
    %329 = arith.mulf %327, %248 : vector<16x8xf32>
    %330 = arith.mulf %326, %325 : vector<16x8xf32>
    %331 = arith.addf %329, %330 : vector<16x8xf32>
    %332 = math.tanh %331 : vector<16x8xf32>
    %333 = arith.mulf %328, %332 : vector<16x8xf32>
    %334 = vector.shape_cast %333 : vector<16x8xf32> to vector<4x4x8xf32>
    %c1_421 = arith.constant 1 : index
    %c1_422 = arith.constant 1 : index
    %c0_423 = arith.constant 0 : index
    %335 = vector.load %arg10[%c1_421, %c1_422, %c0_423] : memref<6x6x8xf32, #tpu.memory_space<vmem>>, vector<4x4x8xf32>
    tpu.vector_store %arg10[%c1_421, %c1_422, %c0_423], %334 {strides = array<i32>} : memref<6x6x8xf32, #tpu.memory_space<vmem>>, vector<4x4x8xf32>,
    %cst_424 = arith.constant dense<0.000000e+00> : vector<8xf32>
    %336 = vector.multi_reduction <add>, %333, %cst_424 [0] : vector<16x8xf32> to vector<8xf32>
    %337 = vector.shape_cast %336 : vector<8xf32> to vector<1x8xf32>
    %c0_425 = arith.constant 0 : index
    %c4 = arith.constant 4 : index
    %c0_426 = arith.constant 0 : index
    %c0_427 = arith.constant 0 : index
    %c0_428 = arith.constant 0 : index
    %338 = vector.load %arg1[%c0_425, %c4, %c0_426, %c0_427, %c0_428] : memref<1x8x4x4x288xf32, #tpu.memory_space<vmem>>, vector<1x1x4x4x288xf32>
    %339 = vector.shape_cast %338 : vector<1x1x4x4x288xf32> to vector<4x4x288xf32>
    %c0_429 = arith.constant 0 : index
    %c0_430 = arith.constant 0 : index
    %c0_431 = arith.constant 0 : index
    %340 = vector.load %arg9[%c0_429, %c0_430, %c0_431] : memref<6x6x8xf32, #tpu.memory_space<vmem>>, vector<4x4x8xf32>
    %c0_432 = arith.constant 0 : index
    %c1_433 = arith.constant 1 : index
    %c0_434 = arith.constant 0 : index
    %341 = vector.load %arg9[%c0_432, %c1_433, %c0_434] : memref<6x6x8xf32, #tpu.memory_space<vmem>>, vector<4x4x8xf32>
    %c0_435 = arith.constant 0 : index
    %c2_436 = arith.constant 2 : index
    %c0_437 = arith.constant 0 : index
    %342 = vector.load %arg9[%c0_435, %c2_436, %c0_437] : memref<6x6x8xf32, #tpu.memory_space<vmem>>, vector<4x4x8xf32>
    %c1_438 = arith.constant 1 : index
    %c0_439 = arith.constant 0 : index
    %c0_440 = arith.constant 0 : index
    %343 = vector.load %arg9[%c1_438, %c0_439, %c0_440] : memref<6x6x8xf32, #tpu.memory_space<vmem>>, vector<4x4x8xf32>
    %c1_441 = arith.constant 1 : index
    %c1_442 = arith.constant 1 : index
    %c0_443 = arith.constant 0 : index
    %344 = vector.load %arg9[%c1_441, %c1_442, %c0_443] : memref<6x6x8xf32, #tpu.memory_space<vmem>>, vector<4x4x8xf32>
    %c1_444 = arith.constant 1 : index
    %c2_445 = arith.constant 2 : index
    %c0_446 = arith.constant 0 : index
    %345 = vector.load %arg9[%c1_444, %c2_445, %c0_446] : memref<6x6x8xf32, #tpu.memory_space<vmem>>, vector<4x4x8xf32>
    %c2_447 = arith.constant 2 : index
    %c0_448 = arith.constant 0 : index
    %c0_449 = arith.constant 0 : index
    %346 = vector.load %arg9[%c2_447, %c0_448, %c0_449] : memref<6x6x8xf32, #tpu.memory_space<vmem>>, vector<4x4x8xf32>
    %c2_450 = arith.constant 2 : index
    %c1_451 = arith.constant 1 : index
    %c0_452 = arith.constant 0 : index
    %347 = vector.load %arg9[%c2_450, %c1_451, %c0_452] : memref<6x6x8xf32, #tpu.memory_space<vmem>>, vector<4x4x8xf32>
    %c2_453 = arith.constant 2 : index
    %c2_454 = arith.constant 2 : index
    %c0_455 = arith.constant 0 : index
    %348 = vector.load %arg9[%c2_453, %c2_454, %c0_455] : memref<6x6x8xf32, #tpu.memory_space<vmem>>, vector<4x4x8xf32>
    %349 = tpu.concatenate %339, %340, %341, %342, %343, %344, %345, %346, %347, %348 in 2 : vector<4x4x288xf32>, vector<4x4x8xf32>, vector<4x4x8xf32>, vector<4x4x8xf32>, vector<4x4x8xf32>, vector<4x4x8xf32>, vector<4x4x8xf32>, vector<4x4x8xf32>, vector<4x4x8xf32>, vector<4x4x8xf32> -> vector<4x4x360xf32>
    %350 = vector.shape_cast %349 : vector<4x4x360xf32> to vector<16x360xf32>
    %c0_456 = arith.constant 0 : index
    %c0_457 = arith.constant 0 : index
    %351 = vector.load %arg2[%c0_456, %c0_457] : memref<360x32xf32, #tpu.memory_space<vmem>>, vector<360x32xf32>
    %cst_458 = arith.constant dense<0.000000e+00> : vector<16x32xf32>
    %352 = tpu.matmul %350, %351, %cst_458 {dimension_numbers = #tpu.dot_dimension_numbers<[1], [0], [0], [1], [0, 0, 1, 1], [], []>} : vector<16x360xf32>, vector<360x32xf32>, vector<16x32xf32> -> vector<16x32xf32>
    %c0_459 = arith.constant 0 : index
    %c0_460 = arith.constant 0 : index
    %353 = vector.load %arg3[%c0_459, %c0_460] : memref<1x32xf32, #tpu.memory_space<vmem>>, vector<1x32xf32>
    %354 = vector.broadcast %353 : vector<1x32xf32> to vector<16x32xf32>
    %355 = arith.addf %352, %354 : vector<16x32xf32>
    %356 = vector.extract_strided_slice %355 {offsets = [0, 0], sizes = [16, 24], strides = [1, 1]} : vector<16x32xf32> to vector<16x24xf32>
    %357 = arith.negf %356 : vector<16x24xf32>
    %358 = math.exp %357 : vector<16x24xf32>
    %cst_461 = arith.constant 1.000000e+00 : f32
    %359 = vector.broadcast %cst_461 : f32 to vector<16x24xf32>
    %360 = arith.addf %359, %358 : vector<16x24xf32>
    %361 = arith.divf %359, %360 : vector<16x24xf32>
    %362 = vector.extract_strided_slice %355 {offsets = [0, 24], sizes = [16, 8], strides = [1, 1]} : vector<16x32xf32> to vector<16x8xf32>
    %363 = math.tanh %362 : vector<16x8xf32>
    %364 = vector.extract_strided_slice %361 {offsets = [0, 0], sizes = [16, 8], strides = [1, 1]} : vector<16x24xf32> to vector<16x8xf32>
    %365 = vector.extract_strided_slice %361 {offsets = [0, 8], sizes = [16, 8], strides = [1, 1]} : vector<16x24xf32> to vector<16x8xf32>
    %366 = vector.extract_strided_slice %361 {offsets = [0, 16], sizes = [16, 8], strides = [1, 1]} : vector<16x24xf32> to vector<16x8xf32>
    %367 = arith.mulf %365, %286 : vector<16x8xf32>
    %368 = arith.mulf %364, %363 : vector<16x8xf32>
    %369 = arith.addf %367, %368 : vector<16x8xf32>
    %370 = math.tanh %369 : vector<16x8xf32>
    %371 = arith.mulf %366, %370 : vector<16x8xf32>
    %372 = vector.shape_cast %371 : vector<16x8xf32> to vector<4x4x8xf32>
    %c1_462 = arith.constant 1 : index
    %c1_463 = arith.constant 1 : index
    %c0_464 = arith.constant 0 : index
    %373 = vector.load %arg9[%c1_462, %c1_463, %c0_464] : memref<6x6x8xf32, #tpu.memory_space<vmem>>, vector<4x4x8xf32>
    tpu.vector_store %arg9[%c1_462, %c1_463, %c0_464], %372 {strides = array<i32>} : memref<6x6x8xf32, #tpu.memory_space<vmem>>, vector<4x4x8xf32>,
    %c0_465 = arith.constant 0 : index
    %c0_466 = arith.constant 0 : index
    %c0_467 = arith.constant 0 : index
    %374 = vector.load %arg9[%c0_465, %c0_466, %c0_467] : memref<6x6x8xf32, #tpu.memory_space<vmem>>, vector<4x4x8xf32>
    %c0_468 = arith.constant 0 : index
    %c1_469 = arith.constant 1 : index
    %c0_470 = arith.constant 0 : index
    %375 = vector.load %arg9[%c0_468, %c1_469, %c0_470] : memref<6x6x8xf32, #tpu.memory_space<vmem>>, vector<4x4x8xf32>
    %c0_471 = arith.constant 0 : index
    %c2_472 = arith.constant 2 : index
    %c0_473 = arith.constant 0 : index
    %376 = vector.load %arg9[%c0_471, %c2_472, %c0_473] : memref<6x6x8xf32, #tpu.memory_space<vmem>>, vector<4x4x8xf32>
    %c1_474 = arith.constant 1 : index
    %c0_475 = arith.constant 0 : index
    %c0_476 = arith.constant 0 : index
    %377 = vector.load %arg9[%c1_474, %c0_475, %c0_476] : memref<6x6x8xf32, #tpu.memory_space<vmem>>, vector<4x4x8xf32>
    %c1_477 = arith.constant 1 : index
    %c1_478 = arith.constant 1 : index
    %c0_479 = arith.constant 0 : index
    %378 = vector.load %arg9[%c1_477, %c1_478, %c0_479] : memref<6x6x8xf32, #tpu.memory_space<vmem>>, vector<4x4x8xf32>
    %c1_480 = arith.constant 1 : index
    %c2_481 = arith.constant 2 : index
    %c0_482 = arith.constant 0 : index
    %379 = vector.load %arg9[%c1_480, %c2_481, %c0_482] : memref<6x6x8xf32, #tpu.memory_space<vmem>>, vector<4x4x8xf32>
    %c2_483 = arith.constant 2 : index
    %c0_484 = arith.constant 0 : index
    %c0_485 = arith.constant 0 : index
    %380 = vector.load %arg9[%c2_483, %c0_484, %c0_485] : memref<6x6x8xf32, #tpu.memory_space<vmem>>, vector<4x4x8xf32>
    %c2_486 = arith.constant 2 : index
    %c1_487 = arith.constant 1 : index
    %c0_488 = arith.constant 0 : index
    %381 = vector.load %arg9[%c2_486, %c1_487, %c0_488] : memref<6x6x8xf32, #tpu.memory_space<vmem>>, vector<4x4x8xf32>
    %c2_489 = arith.constant 2 : index
    %c2_490 = arith.constant 2 : index
    %c0_491 = arith.constant 0 : index
    %382 = vector.load %arg9[%c2_489, %c2_490, %c0_491] : memref<6x6x8xf32, #tpu.memory_space<vmem>>, vector<4x4x8xf32>
    %c0_492 = arith.constant 0 : index
    %c0_493 = arith.constant 0 : index
    %c0_494 = arith.constant 0 : index
    %383 = vector.load %arg10[%c0_492, %c0_493, %c0_494] : memref<6x6x8xf32, #tpu.memory_space<vmem>>, vector<4x4x8xf32>
    %c0_495 = arith.constant 0 : index
    %c1_496 = arith.constant 1 : index
    %c0_497 = arith.constant 0 : index
    %384 = vector.load %arg10[%c0_495, %c1_496, %c0_497] : memref<6x6x8xf32, #tpu.memory_space<vmem>>, vector<4x4x8xf32>
    %c0_498 = arith.constant 0 : index
    %c2_499 = arith.constant 2 : index
    %c0_500 = arith.constant 0 : index
    %385 = vector.load %arg10[%c0_498, %c2_499, %c0_500] : memref<6x6x8xf32, #tpu.memory_space<vmem>>, vector<4x4x8xf32>
    %c1_501 = arith.constant 1 : index
    %c0_502 = arith.constant 0 : index
    %c0_503 = arith.constant 0 : index
    %386 = vector.load %arg10[%c1_501, %c0_502, %c0_503] : memref<6x6x8xf32, #tpu.memory_space<vmem>>, vector<4x4x8xf32>
    %c1_504 = arith.constant 1 : index
    %c1_505 = arith.constant 1 : index
    %c0_506 = arith.constant 0 : index
    %387 = vector.load %arg10[%c1_504, %c1_505, %c0_506] : memref<6x6x8xf32, #tpu.memory_space<vmem>>, vector<4x4x8xf32>
    %c1_507 = arith.constant 1 : index
    %c2_508 = arith.constant 2 : index
    %c0_509 = arith.constant 0 : index
    %388 = vector.load %arg10[%c1_507, %c2_508, %c0_509] : memref<6x6x8xf32, #tpu.memory_space<vmem>>, vector<4x4x8xf32>
    %c2_510 = arith.constant 2 : index
    %c0_511 = arith.constant 0 : index
    %c0_512 = arith.constant 0 : index
    %389 = vector.load %arg10[%c2_510, %c0_511, %c0_512] : memref<6x6x8xf32, #tpu.memory_space<vmem>>, vector<4x4x8xf32>
    %c2_513 = arith.constant 2 : index
    %c1_514 = arith.constant 1 : index
    %c0_515 = arith.constant 0 : index
    %390 = vector.load %arg10[%c2_513, %c1_514, %c0_515] : memref<6x6x8xf32, #tpu.memory_space<vmem>>, vector<4x4x8xf32>
    %c2_516 = arith.constant 2 : index
    %c2_517 = arith.constant 2 : index
    %c0_518 = arith.constant 0 : index
    %391 = vector.load %arg10[%c2_516, %c2_517, %c0_518] : memref<6x6x8xf32, #tpu.memory_space<vmem>>, vector<4x4x8xf32>
    %392 = tpu.concatenate %374, %375, %376, %377, %378, %379, %380, %381, %382, %383, %384, %385, %386, %387, %388, %389 in 2 : vector<4x4x8xf32>, vector<4x4x8xf32>, vector<4x4x8xf32>, vector<4x4x8xf32>, vector<4x4x8xf32>, vector<4x4x8xf32>, vector<4x4x8xf32>, vector<4x4x8xf32>, vector<4x4x8xf32>, vector<4x4x8xf32>, vector<4x4x8xf32>, vector<4x4x8xf32>, vector<4x4x8xf32>, vector<4x4x8xf32>, vector<4x4x8xf32>, vector<4x4x8xf32> -> vector<4x4x128xf32>
    %393 = tpu.concatenate %390, %391 in 2 : vector<4x4x8xf32>, vector<4x4x8xf32> -> vector<4x4x16xf32>
    %394 = tpu.concatenate %392, %393 in 2 : vector<4x4x128xf32>, vector<4x4x16xf32> -> vector<4x4x144xf32>
    %395 = vector.shape_cast %394 : vector<4x4x144xf32> to vector<16x144xf32>
    %c0_519 = arith.constant 0 : index
    %c0_520 = arith.constant 0 : index
    %396 = vector.load %arg4[%c0_519, %c0_520] : memref<144x32xf32, #tpu.memory_space<vmem>>, vector<144x32xf32>
    %cst_521 = arith.constant dense<0.000000e+00> : vector<16x32xf32>
    %397 = tpu.matmul %395, %396, %cst_521 {dimension_numbers = #tpu.dot_dimension_numbers<[1], [0], [0], [1], [0, 0, 1, 1], [], []>} : vector<16x144xf32>, vector<144x32xf32>, vector<16x32xf32> -> vector<16x32xf32>
    %c0_522 = arith.constant 0 : index
    %c0_523 = arith.constant 0 : index
    %398 = vector.load %arg5[%c0_522, %c0_523] : memref<1x32xf32, #tpu.memory_space<vmem>>, vector<1x32xf32>
    %399 = vector.broadcast %398 : vector<1x32xf32> to vector<16x32xf32>
    %400 = arith.addf %397, %399 : vector<16x32xf32>
    %401 = vector.extract_strided_slice %400 {offsets = [0, 0], sizes = [16, 24], strides = [1, 1]} : vector<16x32xf32> to vector<16x24xf32>
    %402 = arith.negf %401 : vector<16x24xf32>
    %403 = math.exp %402 : vector<16x24xf32>
    %cst_524 = arith.constant 1.000000e+00 : f32
    %404 = vector.broadcast %cst_524 : f32 to vector<16x24xf32>
    %405 = arith.addf %404, %403 : vector<16x24xf32>
    %406 = arith.divf %404, %405 : vector<16x24xf32>
    %407 = vector.extract_strided_slice %400 {offsets = [0, 24], sizes = [16, 8], strides = [1, 1]} : vector<16x32xf32> to vector<16x8xf32>
    %408 = math.tanh %407 : vector<16x8xf32>
    %409 = vector.extract_strided_slice %406 {offsets = [0, 0], sizes = [16, 8], strides = [1, 1]} : vector<16x24xf32> to vector<16x8xf32>
    %410 = vector.extract_strided_slice %406 {offsets = [0, 8], sizes = [16, 8], strides = [1, 1]} : vector<16x24xf32> to vector<16x8xf32>
    %411 = vector.extract_strided_slice %406 {offsets = [0, 16], sizes = [16, 8], strides = [1, 1]} : vector<16x24xf32> to vector<16x8xf32>
    %412 = arith.mulf %410, %331 : vector<16x8xf32>
    %413 = arith.mulf %409, %408 : vector<16x8xf32>
    %414 = arith.addf %412, %413 : vector<16x8xf32>
    %415 = math.tanh %414 : vector<16x8xf32>
    %416 = arith.mulf %411, %415 : vector<16x8xf32>
    %417 = vector.shape_cast %416 : vector<16x8xf32> to vector<4x4x8xf32>
    %c1_525 = arith.constant 1 : index
    %c1_526 = arith.constant 1 : index
    %c0_527 = arith.constant 0 : index
    %418 = vector.load %arg10[%c1_525, %c1_526, %c0_527] : memref<6x6x8xf32, #tpu.memory_space<vmem>>, vector<4x4x8xf32>
    tpu.vector_store %arg10[%c1_525, %c1_526, %c0_527], %417 {strides = array<i32>} : memref<6x6x8xf32, #tpu.memory_space<vmem>>, vector<4x4x8xf32>,
    %cst_528 = arith.constant dense<0.000000e+00> : vector<8xf32>
    %419 = vector.multi_reduction <add>, %416, %cst_528 [0] : vector<16x8xf32> to vector<8xf32>
    %420 = vector.shape_cast %419 : vector<8xf32> to vector<1x8xf32>
    %c0_529 = arith.constant 0 : index
    %c5 = arith.constant 5 : index
    %c0_530 = arith.constant 0 : index
    %c0_531 = arith.constant 0 : index
    %c0_532 = arith.constant 0 : index
    %421 = vector.load %arg1[%c0_529, %c5, %c0_530, %c0_531, %c0_532] : memref<1x8x4x4x288xf32, #tpu.memory_space<vmem>>, vector<1x1x4x4x288xf32>
    %422 = vector.shape_cast %421 : vector<1x1x4x4x288xf32> to vector<4x4x288xf32>
    %c0_533 = arith.constant 0 : index
    %c0_534 = arith.constant 0 : index
    %c0_535 = arith.constant 0 : index
    %423 = vector.load %arg9[%c0_533, %c0_534, %c0_535] : memref<6x6x8xf32, #tpu.memory_space<vmem>>, vector<4x4x8xf32>
    %c0_536 = arith.constant 0 : index
    %c1_537 = arith.constant 1 : index
    %c0_538 = arith.constant 0 : index
    %424 = vector.load %arg9[%c0_536, %c1_537, %c0_538] : memref<6x6x8xf32, #tpu.memory_space<vmem>>, vector<4x4x8xf32>
    %c0_539 = arith.constant 0 : index
    %c2_540 = arith.constant 2 : index
    %c0_541 = arith.constant 0 : index
    %425 = vector.load %arg9[%c0_539, %c2_540, %c0_541] : memref<6x6x8xf32, #tpu.memory_space<vmem>>, vector<4x4x8xf32>
    %c1_542 = arith.constant 1 : index
    %c0_543 = arith.constant 0 : index
    %c0_544 = arith.constant 0 : index
    %426 = vector.load %arg9[%c1_542, %c0_543, %c0_544] : memref<6x6x8xf32, #tpu.memory_space<vmem>>, vector<4x4x8xf32>
    %c1_545 = arith.constant 1 : index
    %c1_546 = arith.constant 1 : index
    %c0_547 = arith.constant 0 : index
    %427 = vector.load %arg9[%c1_545, %c1_546, %c0_547] : memref<6x6x8xf32, #tpu.memory_space<vmem>>, vector<4x4x8xf32>
    %c1_548 = arith.constant 1 : index
    %c2_549 = arith.constant 2 : index
    %c0_550 = arith.constant 0 : index
    %428 = vector.load %arg9[%c1_548, %c2_549, %c0_550] : memref<6x6x8xf32, #tpu.memory_space<vmem>>, vector<4x4x8xf32>
    %c2_551 = arith.constant 2 : index
    %c0_552 = arith.constant 0 : index
    %c0_553 = arith.constant 0 : index
    %429 = vector.load %arg9[%c2_551, %c0_552, %c0_553] : memref<6x6x8xf32, #tpu.memory_space<vmem>>, vector<4x4x8xf32>
    %c2_554 = arith.constant 2 : index
    %c1_555 = arith.constant 1 : index
    %c0_556 = arith.constant 0 : index
    %430 = vector.load %arg9[%c2_554, %c1_555, %c0_556] : memref<6x6x8xf32, #tpu.memory_space<vmem>>, vector<4x4x8xf32>
    %c2_557 = arith.constant 2 : index
    %c2_558 = arith.constant 2 : index
    %c0_559 = arith.constant 0 : index
    %431 = vector.load %arg9[%c2_557, %c2_558, %c0_559] : memref<6x6x8xf32, #tpu.memory_space<vmem>>, vector<4x4x8xf32>
    %432 = tpu.concatenate %422, %423, %424, %425, %426, %427, %428, %429, %430, %431 in 2 : vector<4x4x288xf32>, vector<4x4x8xf32>, vector<4x4x8xf32>, vector<4x4x8xf32>, vector<4x4x8xf32>, vector<4x4x8xf32>, vector<4x4x8xf32>, vector<4x4x8xf32>, vector<4x4x8xf32>, vector<4x4x8xf32> -> vector<4x4x360xf32>
    %433 = vector.shape_cast %432 : vector<4x4x360xf32> to vector<16x360xf32>
    %c0_560 = arith.constant 0 : index
    %c0_561 = arith.constant 0 : index
    %434 = vector.load %arg2[%c0_560, %c0_561] : memref<360x32xf32, #tpu.memory_space<vmem>>, vector<360x32xf32>
    %cst_562 = arith.constant dense<0.000000e+00> : vector<16x32xf32>
    %435 = tpu.matmul %433, %434, %cst_562 {dimension_numbers = #tpu.dot_dimension_numbers<[1], [0], [0], [1], [0, 0, 1, 1], [], []>} : vector<16x360xf32>, vector<360x32xf32>, vector<16x32xf32> -> vector<16x32xf32>
    %c0_563 = arith.constant 0 : index
    %c0_564 = arith.constant 0 : index
    %436 = vector.load %arg3[%c0_563, %c0_564] : memref<1x32xf32, #tpu.memory_space<vmem>>, vector<1x32xf32>
    %437 = vector.broadcast %436 : vector<1x32xf32> to vector<16x32xf32>
    %438 = arith.addf %435, %437 : vector<16x32xf32>
    %439 = vector.extract_strided_slice %438 {offsets = [0, 0], sizes = [16, 24], strides = [1, 1]} : vector<16x32xf32> to vector<16x24xf32>
    %440 = arith.negf %439 : vector<16x24xf32>
    %441 = math.exp %440 : vector<16x24xf32>
    %cst_565 = arith.constant 1.000000e+00 : f32
    %442 = vector.broadcast %cst_565 : f32 to vector<16x24xf32>
    %443 = arith.addf %442, %441 : vector<16x24xf32>
    %444 = arith.divf %442, %443 : vector<16x24xf32>
    %445 = vector.extract_strided_slice %438 {offsets = [0, 24], sizes = [16, 8], strides = [1, 1]} : vector<16x32xf32> to vector<16x8xf32>
    %446 = math.tanh %445 : vector<16x8xf32>
    %447 = vector.extract_strided_slice %444 {offsets = [0, 0], sizes = [16, 8], strides = [1, 1]} : vector<16x24xf32> to vector<16x8xf32>
    %448 = vector.extract_strided_slice %444 {offsets = [0, 8], sizes = [16, 8], strides = [1, 1]} : vector<16x24xf32> to vector<16x8xf32>
    %449 = vector.extract_strided_slice %444 {offsets = [0, 16], sizes = [16, 8], strides = [1, 1]} : vector<16x24xf32> to vector<16x8xf32>
    %450 = arith.mulf %448, %369 : vector<16x8xf32>
    %451 = arith.mulf %447, %446 : vector<16x8xf32>
    %452 = arith.addf %450, %451 : vector<16x8xf32>
    %453 = math.tanh %452 : vector<16x8xf32>
    %454 = arith.mulf %449, %453 : vector<16x8xf32>
    %455 = vector.shape_cast %454 : vector<16x8xf32> to vector<4x4x8xf32>
    %c1_566 = arith.constant 1 : index
    %c1_567 = arith.constant 1 : index
    %c0_568 = arith.constant 0 : index
    %456 = vector.load %arg9[%c1_566, %c1_567, %c0_568] : memref<6x6x8xf32, #tpu.memory_space<vmem>>, vector<4x4x8xf32>
    tpu.vector_store %arg9[%c1_566, %c1_567, %c0_568], %455 {strides = array<i32>} : memref<6x6x8xf32, #tpu.memory_space<vmem>>, vector<4x4x8xf32>,
    %c0_569 = arith.constant 0 : index
    %c0_570 = arith.constant 0 : index
    %c0_571 = arith.constant 0 : index
    %457 = vector.load %arg9[%c0_569, %c0_570, %c0_571] : memref<6x6x8xf32, #tpu.memory_space<vmem>>, vector<4x4x8xf32>
    %c0_572 = arith.constant 0 : index
    %c1_573 = arith.constant 1 : index
    %c0_574 = arith.constant 0 : index
    %458 = vector.load %arg9[%c0_572, %c1_573, %c0_574] : memref<6x6x8xf32, #tpu.memory_space<vmem>>, vector<4x4x8xf32>
    %c0_575 = arith.constant 0 : index
    %c2_576 = arith.constant 2 : index
    %c0_577 = arith.constant 0 : index
    %459 = vector.load %arg9[%c0_575, %c2_576, %c0_577] : memref<6x6x8xf32, #tpu.memory_space<vmem>>, vector<4x4x8xf32>
    %c1_578 = arith.constant 1 : index
    %c0_579 = arith.constant 0 : index
    %c0_580 = arith.constant 0 : index
    %460 = vector.load %arg9[%c1_578, %c0_579, %c0_580] : memref<6x6x8xf32, #tpu.memory_space<vmem>>, vector<4x4x8xf32>
    %c1_581 = arith.constant 1 : index
    %c1_582 = arith.constant 1 : index
    %c0_583 = arith.constant 0 : index
    %461 = vector.load %arg9[%c1_581, %c1_582, %c0_583] : memref<6x6x8xf32, #tpu.memory_space<vmem>>, vector<4x4x8xf32>
    %c1_584 = arith.constant 1 : index
    %c2_585 = arith.constant 2 : index
    %c0_586 = arith.constant 0 : index
    %462 = vector.load %arg9[%c1_584, %c2_585, %c0_586] : memref<6x6x8xf32, #tpu.memory_space<vmem>>, vector<4x4x8xf32>
    %c2_587 = arith.constant 2 : index
    %c0_588 = arith.constant 0 : index
    %c0_589 = arith.constant 0 : index
    %463 = vector.load %arg9[%c2_587, %c0_588, %c0_589] : memref<6x6x8xf32, #tpu.memory_space<vmem>>, vector<4x4x8xf32>
    %c2_590 = arith.constant 2 : index
    %c1_591 = arith.constant 1 : index
    %c0_592 = arith.constant 0 : index
    %464 = vector.load %arg9[%c2_590, %c1_591, %c0_592] : memref<6x6x8xf32, #tpu.memory_space<vmem>>, vector<4x4x8xf32>
    %c2_593 = arith.constant 2 : index
    %c2_594 = arith.constant 2 : index
    %c0_595 = arith.constant 0 : index
    %465 = vector.load %arg9[%c2_593, %c2_594, %c0_595] : memref<6x6x8xf32, #tpu.memory_space<vmem>>, vector<4x4x8xf32>
    %c0_596 = arith.constant 0 : index
    %c0_597 = arith.constant 0 : index
    %c0_598 = arith.constant 0 : index
    %466 = vector.load %arg10[%c0_596, %c0_597, %c0_598] : memref<6x6x8xf32, #tpu.memory_space<vmem>>, vector<4x4x8xf32>
    %c0_599 = arith.constant 0 : index
    %c1_600 = arith.constant 1 : index
    %c0_601 = arith.constant 0 : index
    %467 = vector.load %arg10[%c0_599, %c1_600, %c0_601] : memref<6x6x8xf32, #tpu.memory_space<vmem>>, vector<4x4x8xf32>
    %c0_602 = arith.constant 0 : index
    %c2_603 = arith.constant 2 : index
    %c0_604 = arith.constant 0 : index
    %468 = vector.load %arg10[%c0_602, %c2_603, %c0_604] : memref<6x6x8xf32, #tpu.memory_space<vmem>>, vector<4x4x8xf32>
    %c1_605 = arith.constant 1 : index
    %c0_606 = arith.constant 0 : index
    %c0_607 = arith.constant 0 : index
    %469 = vector.load %arg10[%c1_605, %c0_606, %c0_607] : memref<6x6x8xf32, #tpu.memory_space<vmem>>, vector<4x4x8xf32>
    %c1_608 = arith.constant 1 : index
    %c1_609 = arith.constant 1 : index
    %c0_610 = arith.constant 0 : index
    %470 = vector.load %arg10[%c1_608, %c1_609, %c0_610] : memref<6x6x8xf32, #tpu.memory_space<vmem>>, vector<4x4x8xf32>
    %c1_611 = arith.constant 1 : index
    %c2_612 = arith.constant 2 : index
    %c0_613 = arith.constant 0 : index
    %471 = vector.load %arg10[%c1_611, %c2_612, %c0_613] : memref<6x6x8xf32, #tpu.memory_space<vmem>>, vector<4x4x8xf32>
    %c2_614 = arith.constant 2 : index
    %c0_615 = arith.constant 0 : index
    %c0_616 = arith.constant 0 : index
    %472 = vector.load %arg10[%c2_614, %c0_615, %c0_616] : memref<6x6x8xf32, #tpu.memory_space<vmem>>, vector<4x4x8xf32>
    %c2_617 = arith.constant 2 : index
    %c1_618 = arith.constant 1 : index
    %c0_619 = arith.constant 0 : index
    %473 = vector.load %arg10[%c2_617, %c1_618, %c0_619] : memref<6x6x8xf32, #tpu.memory_space<vmem>>, vector<4x4x8xf32>
    %c2_620 = arith.constant 2 : index
    %c2_621 = arith.constant 2 : index
    %c0_622 = arith.constant 0 : index
    %474 = vector.load %arg10[%c2_620, %c2_621, %c0_622] : memref<6x6x8xf32, #tpu.memory_space<vmem>>, vector<4x4x8xf32>
    %475 = tpu.concatenate %457, %458, %459, %460, %461, %462, %463, %464, %465, %466, %467, %468, %469, %470, %471, %472 in 2 : vector<4x4x8xf32>, vector<4x4x8xf32>, vector<4x4x8xf32>, vector<4x4x8xf32>, vector<4x4x8xf32>, vector<4x4x8xf32>, vector<4x4x8xf32>, vector<4x4x8xf32>, vector<4x4x8xf32>, vector<4x4x8xf32>, vector<4x4x8xf32>, vector<4x4x8xf32>, vector<4x4x8xf32>, vector<4x4x8xf32>, vector<4x4x8xf32>, vector<4x4x8xf32> -> vector<4x4x128xf32>
    %476 = tpu.concatenate %473, %474 in 2 : vector<4x4x8xf32>, vector<4x4x8xf32> -> vector<4x4x16xf32>
    %477 = tpu.concatenate %475, %476 in 2 : vector<4x4x128xf32>, vector<4x4x16xf32> -> vector<4x4x144xf32>
    %478 = vector.shape_cast %477 : vector<4x4x144xf32> to vector<16x144xf32>
    %c0_623 = arith.constant 0 : index
    %c0_624 = arith.constant 0 : index
    %479 = vector.load %arg4[%c0_623, %c0_624] : memref<144x32xf32, #tpu.memory_space<vmem>>, vector<144x32xf32>
    %cst_625 = arith.constant dense<0.000000e+00> : vector<16x32xf32>
    %480 = tpu.matmul %478, %479, %cst_625 {dimension_numbers = #tpu.dot_dimension_numbers<[1], [0], [0], [1], [0, 0, 1, 1], [], []>} : vector<16x144xf32>, vector<144x32xf32>, vector<16x32xf32> -> vector<16x32xf32>
    %c0_626 = arith.constant 0 : index
    %c0_627 = arith.constant 0 : index
    %481 = vector.load %arg5[%c0_626, %c0_627] : memref<1x32xf32, #tpu.memory_space<vmem>>, vector<1x32xf32>
    %482 = vector.broadcast %481 : vector<1x32xf32> to vector<16x32xf32>
    %483 = arith.addf %480, %482 : vector<16x32xf32>
    %484 = vector.extract_strided_slice %483 {offsets = [0, 0], sizes = [16, 24], strides = [1, 1]} : vector<16x32xf32> to vector<16x24xf32>
    %485 = arith.negf %484 : vector<16x24xf32>
    %486 = math.exp %485 : vector<16x24xf32>
    %cst_628 = arith.constant 1.000000e+00 : f32
    %487 = vector.broadcast %cst_628 : f32 to vector<16x24xf32>
    %488 = arith.addf %487, %486 : vector<16x24xf32>
    %489 = arith.divf %487, %488 : vector<16x24xf32>
    %490 = vector.extract_strided_slice %483 {offsets = [0, 24], sizes = [16, 8], strides = [1, 1]} : vector<16x32xf32> to vector<16x8xf32>
    %491 = math.tanh %490 : vector<16x8xf32>
    %492 = vector.extract_strided_slice %489 {offsets = [0, 0], sizes = [16, 8], strides = [1, 1]} : vector<16x24xf32> to vector<16x8xf32>
    %493 = vector.extract_strided_slice %489 {offsets = [0, 8], sizes = [16, 8], strides = [1, 1]} : vector<16x24xf32> to vector<16x8xf32>
    %494 = vector.extract_strided_slice %489 {offsets = [0, 16], sizes = [16, 8], strides = [1, 1]} : vector<16x24xf32> to vector<16x8xf32>
    %495 = arith.mulf %493, %414 : vector<16x8xf32>
    %496 = arith.mulf %492, %491 : vector<16x8xf32>
    %497 = arith.addf %495, %496 : vector<16x8xf32>
    %498 = math.tanh %497 : vector<16x8xf32>
    %499 = arith.mulf %494, %498 : vector<16x8xf32>
    %500 = vector.shape_cast %499 : vector<16x8xf32> to vector<4x4x8xf32>
    %c1_629 = arith.constant 1 : index
    %c1_630 = arith.constant 1 : index
    %c0_631 = arith.constant 0 : index
    %501 = vector.load %arg10[%c1_629, %c1_630, %c0_631] : memref<6x6x8xf32, #tpu.memory_space<vmem>>, vector<4x4x8xf32>
    tpu.vector_store %arg10[%c1_629, %c1_630, %c0_631], %500 {strides = array<i32>} : memref<6x6x8xf32, #tpu.memory_space<vmem>>, vector<4x4x8xf32>,
    %cst_632 = arith.constant dense<0.000000e+00> : vector<8xf32>
    %502 = vector.multi_reduction <add>, %499, %cst_632 [0] : vector<16x8xf32> to vector<8xf32>
    %503 = vector.shape_cast %502 : vector<8xf32> to vector<1x8xf32>
    %c0_633 = arith.constant 0 : index
    %c6 = arith.constant 6 : index
    %c0_634 = arith.constant 0 : index
    %c0_635 = arith.constant 0 : index
    %c0_636 = arith.constant 0 : index
    %504 = vector.load %arg1[%c0_633, %c6, %c0_634, %c0_635, %c0_636] : memref<1x8x4x4x288xf32, #tpu.memory_space<vmem>>, vector<1x1x4x4x288xf32>
    %505 = vector.shape_cast %504 : vector<1x1x4x4x288xf32> to vector<4x4x288xf32>
    %c0_637 = arith.constant 0 : index
    %c0_638 = arith.constant 0 : index
    %c0_639 = arith.constant 0 : index
    %506 = vector.load %arg9[%c0_637, %c0_638, %c0_639] : memref<6x6x8xf32, #tpu.memory_space<vmem>>, vector<4x4x8xf32>
    %c0_640 = arith.constant 0 : index
    %c1_641 = arith.constant 1 : index
    %c0_642 = arith.constant 0 : index
    %507 = vector.load %arg9[%c0_640, %c1_641, %c0_642] : memref<6x6x8xf32, #tpu.memory_space<vmem>>, vector<4x4x8xf32>
    %c0_643 = arith.constant 0 : index
    %c2_644 = arith.constant 2 : index
    %c0_645 = arith.constant 0 : index
    %508 = vector.load %arg9[%c0_643, %c2_644, %c0_645] : memref<6x6x8xf32, #tpu.memory_space<vmem>>, vector<4x4x8xf32>
    %c1_646 = arith.constant 1 : index
    %c0_647 = arith.constant 0 : index
    %c0_648 = arith.constant 0 : index
    %509 = vector.load %arg9[%c1_646, %c0_647, %c0_648] : memref<6x6x8xf32, #tpu.memory_space<vmem>>, vector<4x4x8xf32>
    %c1_649 = arith.constant 1 : index
    %c1_650 = arith.constant 1 : index
    %c0_651 = arith.constant 0 : index
    %510 = vector.load %arg9[%c1_649, %c1_650, %c0_651] : memref<6x6x8xf32, #tpu.memory_space<vmem>>, vector<4x4x8xf32>
    %c1_652 = arith.constant 1 : index
    %c2_653 = arith.constant 2 : index
    %c0_654 = arith.constant 0 : index
    %511 = vector.load %arg9[%c1_652, %c2_653, %c0_654] : memref<6x6x8xf32, #tpu.memory_space<vmem>>, vector<4x4x8xf32>
    %c2_655 = arith.constant 2 : index
    %c0_656 = arith.constant 0 : index
    %c0_657 = arith.constant 0 : index
    %512 = vector.load %arg9[%c2_655, %c0_656, %c0_657] : memref<6x6x8xf32, #tpu.memory_space<vmem>>, vector<4x4x8xf32>
    %c2_658 = arith.constant 2 : index
    %c1_659 = arith.constant 1 : index
    %c0_660 = arith.constant 0 : index
    %513 = vector.load %arg9[%c2_658, %c1_659, %c0_660] : memref<6x6x8xf32, #tpu.memory_space<vmem>>, vector<4x4x8xf32>
    %c2_661 = arith.constant 2 : index
    %c2_662 = arith.constant 2 : index
    %c0_663 = arith.constant 0 : index
    %514 = vector.load %arg9[%c2_661, %c2_662, %c0_663] : memref<6x6x8xf32, #tpu.memory_space<vmem>>, vector<4x4x8xf32>
    %515 = tpu.concatenate %505, %506, %507, %508, %509, %510, %511, %512, %513, %514 in 2 : vector<4x4x288xf32>, vector<4x4x8xf32>, vector<4x4x8xf32>, vector<4x4x8xf32>, vector<4x4x8xf32>, vector<4x4x8xf32>, vector<4x4x8xf32>, vector<4x4x8xf32>, vector<4x4x8xf32>, vector<4x4x8xf32> -> vector<4x4x360xf32>
    %516 = vector.shape_cast %515 : vector<4x4x360xf32> to vector<16x360xf32>
    %c0_664 = arith.constant 0 : index
    %c0_665 = arith.constant 0 : index
    %517 = vector.load %arg2[%c0_664, %c0_665] : memref<360x32xf32, #tpu.memory_space<vmem>>, vector<360x32xf32>
    %cst_666 = arith.constant dense<0.000000e+00> : vector<16x32xf32>
    %518 = tpu.matmul %516, %517, %cst_666 {dimension_numbers = #tpu.dot_dimension_numbers<[1], [0], [0], [1], [0, 0, 1, 1], [], []>} : vector<16x360xf32>, vector<360x32xf32>, vector<16x32xf32> -> vector<16x32xf32>
    %c0_667 = arith.constant 0 : index
    %c0_668 = arith.constant 0 : index
    %519 = vector.load %arg3[%c0_667, %c0_668] : memref<1x32xf32, #tpu.memory_space<vmem>>, vector<1x32xf32>
    %520 = vector.broadcast %519 : vector<1x32xf32> to vector<16x32xf32>
    %521 = arith.addf %518, %520 : vector<16x32xf32>
    %522 = vector.extract_strided_slice %521 {offsets = [0, 0], sizes = [16, 24], strides = [1, 1]} : vector<16x32xf32> to vector<16x24xf32>
    %523 = arith.negf %522 : vector<16x24xf32>
    %524 = math.exp %523 : vector<16x24xf32>
    %cst_669 = arith.constant 1.000000e+00 : f32
    %525 = vector.broadcast %cst_669 : f32 to vector<16x24xf32>
    %526 = arith.addf %525, %524 : vector<16x24xf32>
    %527 = arith.divf %525, %526 : vector<16x24xf32>
    %528 = vector.extract_strided_slice %521 {offsets = [0, 24], sizes = [16, 8], strides = [1, 1]} : vector<16x32xf32> to vector<16x8xf32>
    %529 = math.tanh %528 : vector<16x8xf32>
    %530 = vector.extract_strided_slice %527 {offsets = [0, 0], sizes = [16, 8], strides = [1, 1]} : vector<16x24xf32> to vector<16x8xf32>
    %531 = vector.extract_strided_slice %527 {offsets = [0, 8], sizes = [16, 8], strides = [1, 1]} : vector<16x24xf32> to vector<16x8xf32>
    %532 = vector.extract_strided_slice %527 {offsets = [0, 16], sizes = [16, 8], strides = [1, 1]} : vector<16x24xf32> to vector<16x8xf32>
    %533 = arith.mulf %531, %452 : vector<16x8xf32>
    %534 = arith.mulf %530, %529 : vector<16x8xf32>
    %535 = arith.addf %533, %534 : vector<16x8xf32>
    %536 = math.tanh %535 : vector<16x8xf32>
    %537 = arith.mulf %532, %536 : vector<16x8xf32>
    %538 = vector.shape_cast %537 : vector<16x8xf32> to vector<4x4x8xf32>
    %c1_670 = arith.constant 1 : index
    %c1_671 = arith.constant 1 : index
    %c0_672 = arith.constant 0 : index
    %539 = vector.load %arg9[%c1_670, %c1_671, %c0_672] : memref<6x6x8xf32, #tpu.memory_space<vmem>>, vector<4x4x8xf32>
    tpu.vector_store %arg9[%c1_670, %c1_671, %c0_672], %538 {strides = array<i32>} : memref<6x6x8xf32, #tpu.memory_space<vmem>>, vector<4x4x8xf32>,
    %c0_673 = arith.constant 0 : index
    %c0_674 = arith.constant 0 : index
    %c0_675 = arith.constant 0 : index
    %540 = vector.load %arg9[%c0_673, %c0_674, %c0_675] : memref<6x6x8xf32, #tpu.memory_space<vmem>>, vector<4x4x8xf32>
    %c0_676 = arith.constant 0 : index
    %c1_677 = arith.constant 1 : index
    %c0_678 = arith.constant 0 : index
    %541 = vector.load %arg9[%c0_676, %c1_677, %c0_678] : memref<6x6x8xf32, #tpu.memory_space<vmem>>, vector<4x4x8xf32>
    %c0_679 = arith.constant 0 : index
    %c2_680 = arith.constant 2 : index
    %c0_681 = arith.constant 0 : index
    %542 = vector.load %arg9[%c0_679, %c2_680, %c0_681] : memref<6x6x8xf32, #tpu.memory_space<vmem>>, vector<4x4x8xf32>
    %c1_682 = arith.constant 1 : index
    %c0_683 = arith.constant 0 : index
    %c0_684 = arith.constant 0 : index
    %543 = vector.load %arg9[%c1_682, %c0_683, %c0_684] : memref<6x6x8xf32, #tpu.memory_space<vmem>>, vector<4x4x8xf32>
    %c1_685 = arith.constant 1 : index
    %c1_686 = arith.constant 1 : index
    %c0_687 = arith.constant 0 : index
    %544 = vector.load %arg9[%c1_685, %c1_686, %c0_687] : memref<6x6x8xf32, #tpu.memory_space<vmem>>, vector<4x4x8xf32>
    %c1_688 = arith.constant 1 : index
    %c2_689 = arith.constant 2 : index
    %c0_690 = arith.constant 0 : index
    %545 = vector.load %arg9[%c1_688, %c2_689, %c0_690] : memref<6x6x8xf32, #tpu.memory_space<vmem>>, vector<4x4x8xf32>
    %c2_691 = arith.constant 2 : index
    %c0_692 = arith.constant 0 : index
    %c0_693 = arith.constant 0 : index
    %546 = vector.load %arg9[%c2_691, %c0_692, %c0_693] : memref<6x6x8xf32, #tpu.memory_space<vmem>>, vector<4x4x8xf32>
    %c2_694 = arith.constant 2 : index
    %c1_695 = arith.constant 1 : index
    %c0_696 = arith.constant 0 : index
    %547 = vector.load %arg9[%c2_694, %c1_695, %c0_696] : memref<6x6x8xf32, #tpu.memory_space<vmem>>, vector<4x4x8xf32>
    %c2_697 = arith.constant 2 : index
    %c2_698 = arith.constant 2 : index
    %c0_699 = arith.constant 0 : index
    %548 = vector.load %arg9[%c2_697, %c2_698, %c0_699] : memref<6x6x8xf32, #tpu.memory_space<vmem>>, vector<4x4x8xf32>
    %c0_700 = arith.constant 0 : index
    %c0_701 = arith.constant 0 : index
    %c0_702 = arith.constant 0 : index
    %549 = vector.load %arg10[%c0_700, %c0_701, %c0_702] : memref<6x6x8xf32, #tpu.memory_space<vmem>>, vector<4x4x8xf32>
    %c0_703 = arith.constant 0 : index
    %c1_704 = arith.constant 1 : index
    %c0_705 = arith.constant 0 : index
    %550 = vector.load %arg10[%c0_703, %c1_704, %c0_705] : memref<6x6x8xf32, #tpu.memory_space<vmem>>, vector<4x4x8xf32>
    %c0_706 = arith.constant 0 : index
    %c2_707 = arith.constant 2 : index
    %c0_708 = arith.constant 0 : index
    %551 = vector.load %arg10[%c0_706, %c2_707, %c0_708] : memref<6x6x8xf32, #tpu.memory_space<vmem>>, vector<4x4x8xf32>
    %c1_709 = arith.constant 1 : index
    %c0_710 = arith.constant 0 : index
    %c0_711 = arith.constant 0 : index
    %552 = vector.load %arg10[%c1_709, %c0_710, %c0_711] : memref<6x6x8xf32, #tpu.memory_space<vmem>>, vector<4x4x8xf32>
    %c1_712 = arith.constant 1 : index
    %c1_713 = arith.constant 1 : index
    %c0_714 = arith.constant 0 : index
    %553 = vector.load %arg10[%c1_712, %c1_713, %c0_714] : memref<6x6x8xf32, #tpu.memory_space<vmem>>, vector<4x4x8xf32>
    %c1_715 = arith.constant 1 : index
    %c2_716 = arith.constant 2 : index
    %c0_717 = arith.constant 0 : index
    %554 = vector.load %arg10[%c1_715, %c2_716, %c0_717] : memref<6x6x8xf32, #tpu.memory_space<vmem>>, vector<4x4x8xf32>
    %c2_718 = arith.constant 2 : index
    %c0_719 = arith.constant 0 : index
    %c0_720 = arith.constant 0 : index
    %555 = vector.load %arg10[%c2_718, %c0_719, %c0_720] : memref<6x6x8xf32, #tpu.memory_space<vmem>>, vector<4x4x8xf32>
    %c2_721 = arith.constant 2 : index
    %c1_722 = arith.constant 1 : index
    %c0_723 = arith.constant 0 : index
    %556 = vector.load %arg10[%c2_721, %c1_722, %c0_723] : memref<6x6x8xf32, #tpu.memory_space<vmem>>, vector<4x4x8xf32>
    %c2_724 = arith.constant 2 : index
    %c2_725 = arith.constant 2 : index
    %c0_726 = arith.constant 0 : index
    %557 = vector.load %arg10[%c2_724, %c2_725, %c0_726] : memref<6x6x8xf32, #tpu.memory_space<vmem>>, vector<4x4x8xf32>
    %558 = tpu.concatenate %540, %541, %542, %543, %544, %545, %546, %547, %548, %549, %550, %551, %552, %553, %554, %555 in 2 : vector<4x4x8xf32>, vector<4x4x8xf32>, vector<4x4x8xf32>, vector<4x4x8xf32>, vector<4x4x8xf32>, vector<4x4x8xf32>, vector<4x4x8xf32>, vector<4x4x8xf32>, vector<4x4x8xf32>, vector<4x4x8xf32>, vector<4x4x8xf32>, vector<4x4x8xf32>, vector<4x4x8xf32>, vector<4x4x8xf32>, vector<4x4x8xf32>, vector<4x4x8xf32> -> vector<4x4x128xf32>
    %559 = tpu.concatenate %556, %557 in 2 : vector<4x4x8xf32>, vector<4x4x8xf32> -> vector<4x4x16xf32>
    %560 = tpu.concatenate %558, %559 in 2 : vector<4x4x128xf32>, vector<4x4x16xf32> -> vector<4x4x144xf32>
    %561 = vector.shape_cast %560 : vector<4x4x144xf32> to vector<16x144xf32>
    %c0_727 = arith.constant 0 : index
    %c0_728 = arith.constant 0 : index
    %562 = vector.load %arg4[%c0_727, %c0_728] : memref<144x32xf32, #tpu.memory_space<vmem>>, vector<144x32xf32>
    %cst_729 = arith.constant dense<0.000000e+00> : vector<16x32xf32>
    %563 = tpu.matmul %561, %562, %cst_729 {dimension_numbers = #tpu.dot_dimension_numbers<[1], [0], [0], [1], [0, 0, 1, 1], [], []>} : vector<16x144xf32>, vector<144x32xf32>, vector<16x32xf32> -> vector<16x32xf32>
    %c0_730 = arith.constant 0 : index
    %c0_731 = arith.constant 0 : index
    %564 = vector.load %arg5[%c0_730, %c0_731] : memref<1x32xf32, #tpu.memory_space<vmem>>, vector<1x32xf32>
    %565 = vector.broadcast %564 : vector<1x32xf32> to vector<16x32xf32>
    %566 = arith.addf %563, %565 : vector<16x32xf32>
    %567 = vector.extract_strided_slice %566 {offsets = [0, 0], sizes = [16, 24], strides = [1, 1]} : vector<16x32xf32> to vector<16x24xf32>
    %568 = arith.negf %567 : vector<16x24xf32>
    %569 = math.exp %568 : vector<16x24xf32>
    %cst_732 = arith.constant 1.000000e+00 : f32
    %570 = vector.broadcast %cst_732 : f32 to vector<16x24xf32>
    %571 = arith.addf %570, %569 : vector<16x24xf32>
    %572 = arith.divf %570, %571 : vector<16x24xf32>
    %573 = vector.extract_strided_slice %566 {offsets = [0, 24], sizes = [16, 8], strides = [1, 1]} : vector<16x32xf32> to vector<16x8xf32>
    %574 = math.tanh %573 : vector<16x8xf32>
    %575 = vector.extract_strided_slice %572 {offsets = [0, 0], sizes = [16, 8], strides = [1, 1]} : vector<16x24xf32> to vector<16x8xf32>
    %576 = vector.extract_strided_slice %572 {offsets = [0, 8], sizes = [16, 8], strides = [1, 1]} : vector<16x24xf32> to vector<16x8xf32>
    %577 = vector.extract_strided_slice %572 {offsets = [0, 16], sizes = [16, 8], strides = [1, 1]} : vector<16x24xf32> to vector<16x8xf32>
    %578 = arith.mulf %576, %497 : vector<16x8xf32>
    %579 = arith.mulf %575, %574 : vector<16x8xf32>
    %580 = arith.addf %578, %579 : vector<16x8xf32>
    %581 = math.tanh %580 : vector<16x8xf32>
    %582 = arith.mulf %577, %581 : vector<16x8xf32>
    %583 = vector.shape_cast %582 : vector<16x8xf32> to vector<4x4x8xf32>
    %c1_733 = arith.constant 1 : index
    %c1_734 = arith.constant 1 : index
    %c0_735 = arith.constant 0 : index
    %584 = vector.load %arg10[%c1_733, %c1_734, %c0_735] : memref<6x6x8xf32, #tpu.memory_space<vmem>>, vector<4x4x8xf32>
    tpu.vector_store %arg10[%c1_733, %c1_734, %c0_735], %583 {strides = array<i32>} : memref<6x6x8xf32, #tpu.memory_space<vmem>>, vector<4x4x8xf32>,
    %cst_736 = arith.constant dense<0.000000e+00> : vector<8xf32>
    %585 = vector.multi_reduction <add>, %582, %cst_736 [0] : vector<16x8xf32> to vector<8xf32>
    %586 = vector.shape_cast %585 : vector<8xf32> to vector<1x8xf32>
    %c0_737 = arith.constant 0 : index
    %c7 = arith.constant 7 : index
    %c0_738 = arith.constant 0 : index
    %c0_739 = arith.constant 0 : index
    %c0_740 = arith.constant 0 : index
    %587 = vector.load %arg1[%c0_737, %c7, %c0_738, %c0_739, %c0_740] : memref<1x8x4x4x288xf32, #tpu.memory_space<vmem>>, vector<1x1x4x4x288xf32>
    %588 = vector.shape_cast %587 : vector<1x1x4x4x288xf32> to vector<4x4x288xf32>
    %c0_741 = arith.constant 0 : index
    %c0_742 = arith.constant 0 : index
    %c0_743 = arith.constant 0 : index
    %589 = vector.load %arg9[%c0_741, %c0_742, %c0_743] : memref<6x6x8xf32, #tpu.memory_space<vmem>>, vector<4x4x8xf32>
    %c0_744 = arith.constant 0 : index
    %c1_745 = arith.constant 1 : index
    %c0_746 = arith.constant 0 : index
    %590 = vector.load %arg9[%c0_744, %c1_745, %c0_746] : memref<6x6x8xf32, #tpu.memory_space<vmem>>, vector<4x4x8xf32>
    %c0_747 = arith.constant 0 : index
    %c2_748 = arith.constant 2 : index
    %c0_749 = arith.constant 0 : index
    %591 = vector.load %arg9[%c0_747, %c2_748, %c0_749] : memref<6x6x8xf32, #tpu.memory_space<vmem>>, vector<4x4x8xf32>
    %c1_750 = arith.constant 1 : index
    %c0_751 = arith.constant 0 : index
    %c0_752 = arith.constant 0 : index
    %592 = vector.load %arg9[%c1_750, %c0_751, %c0_752] : memref<6x6x8xf32, #tpu.memory_space<vmem>>, vector<4x4x8xf32>
    %c1_753 = arith.constant 1 : index
    %c1_754 = arith.constant 1 : index
    %c0_755 = arith.constant 0 : index
    %593 = vector.load %arg9[%c1_753, %c1_754, %c0_755] : memref<6x6x8xf32, #tpu.memory_space<vmem>>, vector<4x4x8xf32>
    %c1_756 = arith.constant 1 : index
    %c2_757 = arith.constant 2 : index
    %c0_758 = arith.constant 0 : index
    %594 = vector.load %arg9[%c1_756, %c2_757, %c0_758] : memref<6x6x8xf32, #tpu.memory_space<vmem>>, vector<4x4x8xf32>
    %c2_759 = arith.constant 2 : index
    %c0_760 = arith.constant 0 : index
    %c0_761 = arith.constant 0 : index
    %595 = vector.load %arg9[%c2_759, %c0_760, %c0_761] : memref<6x6x8xf32, #tpu.memory_space<vmem>>, vector<4x4x8xf32>
    %c2_762 = arith.constant 2 : index
    %c1_763 = arith.constant 1 : index
    %c0_764 = arith.constant 0 : index
    %596 = vector.load %arg9[%c2_762, %c1_763, %c0_764] : memref<6x6x8xf32, #tpu.memory_space<vmem>>, vector<4x4x8xf32>
    %c2_765 = arith.constant 2 : index
    %c2_766 = arith.constant 2 : index
    %c0_767 = arith.constant 0 : index
    %597 = vector.load %arg9[%c2_765, %c2_766, %c0_767] : memref<6x6x8xf32, #tpu.memory_space<vmem>>, vector<4x4x8xf32>
    %598 = tpu.concatenate %588, %589, %590, %591, %592, %593, %594, %595, %596, %597 in 2 : vector<4x4x288xf32>, vector<4x4x8xf32>, vector<4x4x8xf32>, vector<4x4x8xf32>, vector<4x4x8xf32>, vector<4x4x8xf32>, vector<4x4x8xf32>, vector<4x4x8xf32>, vector<4x4x8xf32>, vector<4x4x8xf32> -> vector<4x4x360xf32>
    %599 = vector.shape_cast %598 : vector<4x4x360xf32> to vector<16x360xf32>
    %c0_768 = arith.constant 0 : index
    %c0_769 = arith.constant 0 : index
    %600 = vector.load %arg2[%c0_768, %c0_769] : memref<360x32xf32, #tpu.memory_space<vmem>>, vector<360x32xf32>
    %cst_770 = arith.constant dense<0.000000e+00> : vector<16x32xf32>
    %601 = tpu.matmul %599, %600, %cst_770 {dimension_numbers = #tpu.dot_dimension_numbers<[1], [0], [0], [1], [0, 0, 1, 1], [], []>} : vector<16x360xf32>, vector<360x32xf32>, vector<16x32xf32> -> vector<16x32xf32>
    %c0_771 = arith.constant 0 : index
    %c0_772 = arith.constant 0 : index
    %602 = vector.load %arg3[%c0_771, %c0_772] : memref<1x32xf32, #tpu.memory_space<vmem>>, vector<1x32xf32>
    %603 = vector.broadcast %602 : vector<1x32xf32> to vector<16x32xf32>
    %604 = arith.addf %601, %603 : vector<16x32xf32>
    %605 = vector.extract_strided_slice %604 {offsets = [0, 0], sizes = [16, 24], strides = [1, 1]} : vector<16x32xf32> to vector<16x24xf32>
    %606 = arith.negf %605 : vector<16x24xf32>
    %607 = math.exp %606 : vector<16x24xf32>
    %cst_773 = arith.constant 1.000000e+00 : f32
    %608 = vector.broadcast %cst_773 : f32 to vector<16x24xf32>
    %609 = arith.addf %608, %607 : vector<16x24xf32>
    %610 = arith.divf %608, %609 : vector<16x24xf32>
    %611 = vector.extract_strided_slice %604 {offsets = [0, 24], sizes = [16, 8], strides = [1, 1]} : vector<16x32xf32> to vector<16x8xf32>
    %612 = math.tanh %611 : vector<16x8xf32>
    %613 = vector.extract_strided_slice %610 {offsets = [0, 0], sizes = [16, 8], strides = [1, 1]} : vector<16x24xf32> to vector<16x8xf32>
    %614 = vector.extract_strided_slice %610 {offsets = [0, 8], sizes = [16, 8], strides = [1, 1]} : vector<16x24xf32> to vector<16x8xf32>
    %615 = vector.extract_strided_slice %610 {offsets = [0, 16], sizes = [16, 8], strides = [1, 1]} : vector<16x24xf32> to vector<16x8xf32>
    %616 = arith.mulf %614, %535 : vector<16x8xf32>
    %617 = arith.mulf %613, %612 : vector<16x8xf32>
    %618 = arith.addf %616, %617 : vector<16x8xf32>
    %619 = math.tanh %618 : vector<16x8xf32>
    %620 = arith.mulf %615, %619 : vector<16x8xf32>
    %621 = vector.shape_cast %620 : vector<16x8xf32> to vector<4x4x8xf32>
    %c1_774 = arith.constant 1 : index
    %c1_775 = arith.constant 1 : index
    %c0_776 = arith.constant 0 : index
    %622 = vector.load %arg9[%c1_774, %c1_775, %c0_776] : memref<6x6x8xf32, #tpu.memory_space<vmem>>, vector<4x4x8xf32>
    tpu.vector_store %arg9[%c1_774, %c1_775, %c0_776], %621 {strides = array<i32>} : memref<6x6x8xf32, #tpu.memory_space<vmem>>, vector<4x4x8xf32>,
    %c0_777 = arith.constant 0 : index
    %c0_778 = arith.constant 0 : index
    %c0_779 = arith.constant 0 : index
    %623 = vector.load %arg9[%c0_777, %c0_778, %c0_779] : memref<6x6x8xf32, #tpu.memory_space<vmem>>, vector<4x4x8xf32>
    %c0_780 = arith.constant 0 : index
    %c1_781 = arith.constant 1 : index
    %c0_782 = arith.constant 0 : index
    %624 = vector.load %arg9[%c0_780, %c1_781, %c0_782] : memref<6x6x8xf32, #tpu.memory_space<vmem>>, vector<4x4x8xf32>
    %c0_783 = arith.constant 0 : index
    %c2_784 = arith.constant 2 : index
    %c0_785 = arith.constant 0 : index
    %625 = vector.load %arg9[%c0_783, %c2_784, %c0_785] : memref<6x6x8xf32, #tpu.memory_space<vmem>>, vector<4x4x8xf32>
    %c1_786 = arith.constant 1 : index
    %c0_787 = arith.constant 0 : index
    %c0_788 = arith.constant 0 : index
    %626 = vector.load %arg9[%c1_786, %c0_787, %c0_788] : memref<6x6x8xf32, #tpu.memory_space<vmem>>, vector<4x4x8xf32>
    %c1_789 = arith.constant 1 : index
    %c1_790 = arith.constant 1 : index
    %c0_791 = arith.constant 0 : index
    %627 = vector.load %arg9[%c1_789, %c1_790, %c0_791] : memref<6x6x8xf32, #tpu.memory_space<vmem>>, vector<4x4x8xf32>
    %c1_792 = arith.constant 1 : index
    %c2_793 = arith.constant 2 : index
    %c0_794 = arith.constant 0 : index
    %628 = vector.load %arg9[%c1_792, %c2_793, %c0_794] : memref<6x6x8xf32, #tpu.memory_space<vmem>>, vector<4x4x8xf32>
    %c2_795 = arith.constant 2 : index
    %c0_796 = arith.constant 0 : index
    %c0_797 = arith.constant 0 : index
    %629 = vector.load %arg9[%c2_795, %c0_796, %c0_797] : memref<6x6x8xf32, #tpu.memory_space<vmem>>, vector<4x4x8xf32>
    %c2_798 = arith.constant 2 : index
    %c1_799 = arith.constant 1 : index
    %c0_800 = arith.constant 0 : index
    %630 = vector.load %arg9[%c2_798, %c1_799, %c0_800] : memref<6x6x8xf32, #tpu.memory_space<vmem>>, vector<4x4x8xf32>
    %c2_801 = arith.constant 2 : index
    %c2_802 = arith.constant 2 : index
    %c0_803 = arith.constant 0 : index
    %631 = vector.load %arg9[%c2_801, %c2_802, %c0_803] : memref<6x6x8xf32, #tpu.memory_space<vmem>>, vector<4x4x8xf32>
    %c0_804 = arith.constant 0 : index
    %c0_805 = arith.constant 0 : index
    %c0_806 = arith.constant 0 : index
    %632 = vector.load %arg10[%c0_804, %c0_805, %c0_806] : memref<6x6x8xf32, #tpu.memory_space<vmem>>, vector<4x4x8xf32>
    %c0_807 = arith.constant 0 : index
    %c1_808 = arith.constant 1 : index
    %c0_809 = arith.constant 0 : index
    %633 = vector.load %arg10[%c0_807, %c1_808, %c0_809] : memref<6x6x8xf32, #tpu.memory_space<vmem>>, vector<4x4x8xf32>
    %c0_810 = arith.constant 0 : index
    %c2_811 = arith.constant 2 : index
    %c0_812 = arith.constant 0 : index
    %634 = vector.load %arg10[%c0_810, %c2_811, %c0_812] : memref<6x6x8xf32, #tpu.memory_space<vmem>>, vector<4x4x8xf32>
    %c1_813 = arith.constant 1 : index
    %c0_814 = arith.constant 0 : index
    %c0_815 = arith.constant 0 : index
    %635 = vector.load %arg10[%c1_813, %c0_814, %c0_815] : memref<6x6x8xf32, #tpu.memory_space<vmem>>, vector<4x4x8xf32>
    %c1_816 = arith.constant 1 : index
    %c1_817 = arith.constant 1 : index
    %c0_818 = arith.constant 0 : index
    %636 = vector.load %arg10[%c1_816, %c1_817, %c0_818] : memref<6x6x8xf32, #tpu.memory_space<vmem>>, vector<4x4x8xf32>
    %c1_819 = arith.constant 1 : index
    %c2_820 = arith.constant 2 : index
    %c0_821 = arith.constant 0 : index
    %637 = vector.load %arg10[%c1_819, %c2_820, %c0_821] : memref<6x6x8xf32, #tpu.memory_space<vmem>>, vector<4x4x8xf32>
    %c2_822 = arith.constant 2 : index
    %c0_823 = arith.constant 0 : index
    %c0_824 = arith.constant 0 : index
    %638 = vector.load %arg10[%c2_822, %c0_823, %c0_824] : memref<6x6x8xf32, #tpu.memory_space<vmem>>, vector<4x4x8xf32>
    %c2_825 = arith.constant 2 : index
    %c1_826 = arith.constant 1 : index
    %c0_827 = arith.constant 0 : index
    %639 = vector.load %arg10[%c2_825, %c1_826, %c0_827] : memref<6x6x8xf32, #tpu.memory_space<vmem>>, vector<4x4x8xf32>
    %c2_828 = arith.constant 2 : index
    %c2_829 = arith.constant 2 : index
    %c0_830 = arith.constant 0 : index
    %640 = vector.load %arg10[%c2_828, %c2_829, %c0_830] : memref<6x6x8xf32, #tpu.memory_space<vmem>>, vector<4x4x8xf32>
    %641 = tpu.concatenate %623, %624, %625, %626, %627, %628, %629, %630, %631, %632, %633, %634, %635, %636, %637, %638 in 2 : vector<4x4x8xf32>, vector<4x4x8xf32>, vector<4x4x8xf32>, vector<4x4x8xf32>, vector<4x4x8xf32>, vector<4x4x8xf32>, vector<4x4x8xf32>, vector<4x4x8xf32>, vector<4x4x8xf32>, vector<4x4x8xf32>, vector<4x4x8xf32>, vector<4x4x8xf32>, vector<4x4x8xf32>, vector<4x4x8xf32>, vector<4x4x8xf32>, vector<4x4x8xf32> -> vector<4x4x128xf32>
    %642 = tpu.concatenate %639, %640 in 2 : vector<4x4x8xf32>, vector<4x4x8xf32> -> vector<4x4x16xf32>
    %643 = tpu.concatenate %641, %642 in 2 : vector<4x4x128xf32>, vector<4x4x16xf32> -> vector<4x4x144xf32>
    %644 = vector.shape_cast %643 : vector<4x4x144xf32> to vector<16x144xf32>
    %c0_831 = arith.constant 0 : index
    %c0_832 = arith.constant 0 : index
    %645 = vector.load %arg4[%c0_831, %c0_832] : memref<144x32xf32, #tpu.memory_space<vmem>>, vector<144x32xf32>
    %cst_833 = arith.constant dense<0.000000e+00> : vector<16x32xf32>
    %646 = tpu.matmul %644, %645, %cst_833 {dimension_numbers = #tpu.dot_dimension_numbers<[1], [0], [0], [1], [0, 0, 1, 1], [], []>} : vector<16x144xf32>, vector<144x32xf32>, vector<16x32xf32> -> vector<16x32xf32>
    %c0_834 = arith.constant 0 : index
    %c0_835 = arith.constant 0 : index
    %647 = vector.load %arg5[%c0_834, %c0_835] : memref<1x32xf32, #tpu.memory_space<vmem>>, vector<1x32xf32>
    %648 = vector.broadcast %647 : vector<1x32xf32> to vector<16x32xf32>
    %649 = arith.addf %646, %648 : vector<16x32xf32>
    %650 = vector.extract_strided_slice %649 {offsets = [0, 0], sizes = [16, 24], strides = [1, 1]} : vector<16x32xf32> to vector<16x24xf32>
    %651 = arith.negf %650 : vector<16x24xf32>
    %652 = math.exp %651 : vector<16x24xf32>
    %cst_836 = arith.constant 1.000000e+00 : f32
    %653 = vector.broadcast %cst_836 : f32 to vector<16x24xf32>
    %654 = arith.addf %653, %652 : vector<16x24xf32>
    %655 = arith.divf %653, %654 : vector<16x24xf32>
    %656 = vector.extract_strided_slice %649 {offsets = [0, 24], sizes = [16, 8], strides = [1, 1]} : vector<16x32xf32> to vector<16x8xf32>
    %657 = math.tanh %656 : vector<16x8xf32>
    %658 = vector.extract_strided_slice %655 {offsets = [0, 0], sizes = [16, 8], strides = [1, 1]} : vector<16x24xf32> to vector<16x8xf32>
    %659 = vector.extract_strided_slice %655 {offsets = [0, 8], sizes = [16, 8], strides = [1, 1]} : vector<16x24xf32> to vector<16x8xf32>
    %660 = vector.extract_strided_slice %655 {offsets = [0, 16], sizes = [16, 8], strides = [1, 1]} : vector<16x24xf32> to vector<16x8xf32>
    %661 = arith.mulf %659, %580 : vector<16x8xf32>
    %662 = arith.mulf %658, %657 : vector<16x8xf32>
    %663 = arith.addf %661, %662 : vector<16x8xf32>
    %664 = math.tanh %663 : vector<16x8xf32>
    %665 = arith.mulf %660, %664 : vector<16x8xf32>
    %666 = vector.shape_cast %665 : vector<16x8xf32> to vector<4x4x8xf32>
    %c1_837 = arith.constant 1 : index
    %c1_838 = arith.constant 1 : index
    %c0_839 = arith.constant 0 : index
    %667 = vector.load %arg10[%c1_837, %c1_838, %c0_839] : memref<6x6x8xf32, #tpu.memory_space<vmem>>, vector<4x4x8xf32>
    tpu.vector_store %arg10[%c1_837, %c1_838, %c0_839], %666 {strides = array<i32>} : memref<6x6x8xf32, #tpu.memory_space<vmem>>, vector<4x4x8xf32>,
    %cst_840 = arith.constant dense<0.000000e+00> : vector<8xf32>
    %668 = vector.multi_reduction <add>, %665, %cst_840 [0] : vector<16x8xf32> to vector<8xf32>
    %669 = vector.shape_cast %668 : vector<8xf32> to vector<1x8xf32>
    %670 = tpu.concatenate %88, %171, %254, %337, %420, %503, %586, %669 in 0 : vector<1x8xf32>, vector<1x8xf32>, vector<1x8xf32>, vector<1x8xf32>, vector<1x8xf32>, vector<1x8xf32>, vector<1x8xf32>, vector<1x8xf32> -> vector<8x8xf32>
    %c0_841 = arith.constant 0 : index
    %c0_842 = arith.constant 0 : index
    %671 = vector.load %arg6[%c0_841, %c0_842] : memref<8x10xf32, #tpu.memory_space<vmem>>, vector<8x10xf32>
    %cst_843 = arith.constant dense<0.000000e+00> : vector<8x10xf32>
    %672 = tpu.matmul %670, %671, %cst_843 {dimension_numbers = #tpu.dot_dimension_numbers<[1], [0], [0], [1], [0, 0, 1, 1], [], []>} : vector<8x8xf32>, vector<8x10xf32>, vector<8x10xf32> -> vector<8x10xf32>
    %c0_844 = arith.constant 0 : index
    %c0_845 = arith.constant 0 : index
    %673 = vector.load %arg7[%c0_844, %c0_845] : memref<1x10xf32, #tpu.memory_space<vmem>>, vector<1x10xf32>
    %674 = vector.broadcast %673 : vector<1x10xf32> to vector<8x10xf32>
    %675 = arith.addf %672, %674 : vector<8x10xf32>
    %c0_846 = arith.constant 0 : index
    %c0_847 = arith.constant 0 : index
    %c0_848 = arith.constant 0 : index
    %676 = vector.load %arg8[%c0_846, %c0_847, %c0_848] : memref<1x8x10xf32, #tpu.memory_space<vmem>>, vector<1x8x10xf32>
    %677 = vector.shape_cast %676 : vector<1x8x10xf32> to vector<8x10xf32>
    %678 = vector.shape_cast %675 : vector<8x10xf32> to vector<1x8x10xf32>
    tpu.vector_store %arg8[%c0_846, %c0_847, %c0_848], %678 {strides = array<i32>} : memref<1x8x10xf32, #tpu.memory_space<vmem>>, vector<1x8x10xf32>,
    return
  }
  func.func @transform_0(%arg0: i32) -> (i32, i32, i32, i32, i32) {
    %c0_i32 = arith.constant 0 : i32
    %c0_i32_0 = arith.constant 0 : i32
    %c0_i32_1 = arith.constant 0 : i32
    %c0_i32_2 = arith.constant 0 : i32
    %c0_i32_3 = arith.constant 0 : i32
    return %arg0, %c0_i32, %c0_i32_0, %c0_i32_1, %c0_i32_2 : i32, i32, i32, i32, i32
  }
  func.func @transform_1(%arg0: i32) -> (i32, i32) {
    %c0_i32 = arith.constant 0 : i32
    %c0_i32_0 = arith.constant 0 : i32
    %c0_i32_1 = arith.constant 0 : i32
    return %c0_i32, %c0_i32_0 : i32, i32
  }
  func.func @transform_2(%arg0: i32) -> (i32, i32) {
    %c0_i32 = arith.constant 0 : i32
    %c0_i32_0 = arith.constant 0 : i32
    %c0_i32_1 = arith.constant 0 : i32
    return %c0_i32, %c0_i32_0 : i32, i32
  }
  func.func @transform_3(%arg0: i32) -> (i32, i32) {
    %c0_i32 = arith.constant 0 : i32
    %c0_i32_0 = arith.constant 0 : i32
    %c0_i32_1 = arith.constant 0 : i32
    return %c0_i32, %c0_i32_0 : i32, i32
  }
  func.func @transform_4(%arg0: i32) -> (i32, i32) {
    %c0_i32 = arith.constant 0 : i32
    %c0_i32_0 = arith.constant 0 : i32
    %c0_i32_1 = arith.constant 0 : i32
    return %c0_i32, %c0_i32_0 : i32, i32
  }
  func.func @transform_5(%arg0: i32) -> (i32, i32) {
    %c0_i32 = arith.constant 0 : i32
    %c0_i32_0 = arith.constant 0 : i32
    %c0_i32_1 = arith.constant 0 : i32
    return %c0_i32, %c0_i32_0 : i32, i32
  }
  func.func @transform_6(%arg0: i32) -> (i32, i32) {
    %c0_i32 = arith.constant 0 : i32
    %c0_i32_0 = arith.constant 0 : i32
    %c0_i32_1 = arith.constant 0 : i32
    return %c0_i32, %c0_i32_0 : i32, i32
  }
  func.func @transform_7(%arg0: i32) -> (i32, i32, i32) {
    %c0_i32 = arith.constant 0 : i32
    %c0_i32_0 = arith.constant 0 : i32
    %c0_i32_1 = arith.constant 0 : i32
    return %arg0, %c0_i32, %c0_i32_0 : i32, i32, i32
  }
}

</mosaic_0001>

<llo_original>
// kernel: conv_decoder.1
$region0: #{conv_decoder.1}
  #allocation0 [shape = 'u32[]', space=smem, size = 0x4, offset = 0x4, fixed_abs, tag = 'smem constant byte address 0x4 - core index']
  #allocation1 [shape = 'u32[144,128]{1,0:T(1,128)}', space=vmem, size = 0x12000, scoped, tag = 'internal scratch']
  #allocation2 [shape = 'f32[6,6,8]{2,1,0:T(8,128)}', space=vmem, size = 0x6000, scoped, tag = 'scratch operand']
  #allocation3 [shape = 'f32[6,6,8]{2,1,0:T(8,128)}', space=vmem, size = 0x6000, scoped, tag = 'scratch operand']
  %s0 = inlined_call_operand.vmem [shape: f32[2,8,4,4,288], index: 0, kind: input, shape index: {}]
  %s1 = inlined_call_operand.vmem [shape: f32[360,32], index: 1, kind: input, shape index: {}]
  %s2 = inlined_call_operand.vmem [shape: f32[1,32], index: 2, kind: input, shape index: {}]
  %s3 = inlined_call_operand.vmem [shape: f32[144,32], index: 3, kind: input, shape index: {}]
  %s4 = inlined_call_operand.vmem [shape: f32[1,32], index: 4, kind: input, shape index: {}]
  %s5 = inlined_call_operand.vmem [shape: f32[8,10], index: 5, kind: input, shape index: {}]
  %s6 = inlined_call_operand.vmem [shape: f32[1,10], index: 6, kind: input, shape index: {}]
  %s7 = inlined_call_operand.hbm [shape: f32[2,8,10], index: 7, kind: output, shape index: {}]
  %s8 = sld [smem:[#allocation0]]
  $region61: #{conv_decoder.1} parent=0
    _
  %s10 = ssub.s32 1, %s8
  %s11 = scalar_select 0, %s10, %s8
  $region1: #{conv_decoder.1} parent=0
    #allocation4 [shape = 'u8[8192]{0}', space=vmem, size = 0x2000, scoped, tag = 'output window, operand 0']
    #allocation5 [shape = 's32[2]{0}', space=sflag, size = 0x8, scoped, tag = 'scoped memory for conv_decoder.1']
    %12 = vsyncpa [#allocation5], 0
    %s13 = scalar_lea.sflag [#allocation5], 1
    %14 = vsyncpa %s13, 0
    loop: start=0, step=1, limit=4
    $region2: #{conv_decoder.1} parent=1 // loop_pre_header
      _
    $region3: #{conv_decoder.1} parent=1 // loop_header
      %s16 = sphi 0, %s20
      %p17 = scmp.ge.s32.totalorder %s16, 4
      %s26 = sphi 0, %s28
      %s29 = sphi 0, %s26
      %s30 = sphi 0, %s29
      %s46 = sphi 0, %s30
      %s50 = sphi 0, %s50
      %s52 = sphi 0, %s50
      %s53 = sphi 0, %s52
      %s67 = sphi 0, %s53
      %s71 = sphi 0, %s71
      %s73 = sphi 0, %s71
      %s74 = sphi 0, %s73
      %s88 = sphi 0, %s74
      %s92 = sphi 0, %s92
      %s94 = sphi 0, %s92
      %s95 = sphi 0, %s94
      %s109 = sphi 0, %s95
      %s113 = sphi 0, %s113
      %s115 = sphi 0, %s113
      %s116 = sphi 0, %s115
      %s130 = sphi 0, %s116
      %s134 = sphi 0, %s134
      %s136 = sphi 0, %s134
      %s137 = sphi 0, %s136
      %s151 = sphi 0, %s137
      %s155 = sphi 0, %s155
      %s157 = sphi 0, %s155
      %s158 = sphi 0, %s157
      %s172 = sphi 0, %s158
      %s178 = sphi 0, %s180
      %s181 = sphi 0, %s178
      %s182 = sphi 0, %s181
      %s198 = sphi 0, %s182
    $region4: #{conv_decoder.1} parent=1 // loop_header_branch
      %19 = sbr.rel (%p17) target = $region8
    $region5: #{conv_decoder.1} parent=1 // loop_body
      %s21 = ssub.s32 %s16, 1
      %s22 = ssub.s32 %s16, 2
      %s23 = sadd.s32 %s16, 1
      %s24 = ssub.s32 %s16, %s23
      %p25 = scmp.eq.s32.totalorder %s24, 0
      %s27 = sadd.s32 %s26, 1
      %s28 = scalar_select %p25, %s26, %s27
      %p31 = pneg %p25
      %p32 = scmp.eq.s32.totalorder %s16, 1
      %p33 = por %p31, %p32
      %p34 = scmp.ne.s32.totalorder %s26, %s29
      %p35 = scmp.eq.s32.totalorder %s16, 0
      %p36 = por %p34, %p35
      %p37 = scmp.ne.s32.totalorder %s26, %s29
      %p38 = scmp.eq.s32.totalorder %s21, 1
      %p39 = por %p37, %p38
      %p40 = scmp.ne.s32.totalorder %s29, %s30
      %p41 = scmp.eq.s32.totalorder %s21, 0
      %p42 = por %p40, %p41
      %p43 = scmp.ne.s32.totalorder %s29, %s30
      %p44 = scmp.eq.s32.totalorder %s22, 1
      %p45 = por %p43, %p44
      %p47 = scmp.ne.s32.totalorder %s30, %s46
      %p48 = scmp.eq.s32.totalorder %s22, 0
      %p49 = por %p47, %p48
      %s51 = sadd.s32 %s50, 1
      %p54 = scmp.eq.s32.totalorder %s16, 1
      %p55 = scmp.ne.s32.totalorder %s50, %s52
      %p56 = scmp.eq.s32.totalorder %s16, 0
      %p57 = por %p55, %p56
      %p58 = scmp.ne.s32.totalorder %s50, %s52
      %p59 = scmp.eq.s32.totalorder %s21, 1
      %p60 = por %p58, %p59
      %p61 = scmp.ne.s32.totalorder %s52, %s53
      %p62 = scmp.eq.s32.totalorder %s21, 0
      %p63 = por %p61, %p62
      %p64 = scmp.ne.s32.totalorder %s52, %s53
      %p65 = scmp.eq.s32.totalorder %s22, 1
      %p66 = por %p64, %p65
      %p68 = scmp.ne.s32.totalorder %s53, %s67
      %p69 = scmp.eq.s32.totalorder %s22, 0
      %p70 = por %p68, %p69
      %s72 = sadd.s32 %s71, 1
      %p75 = scmp.eq.s32.totalorder %s16, 1
      %p76 = scmp.ne.s32.totalorder %s71, %s73
      %p77 = scmp.eq.s32.totalorder %s16, 0
      %p78 = por %p76, %p77
      %p79 = scmp.ne.s32.totalorder %s71, %s73
      %p80 = scmp.eq.s32.totalorder %s21, 1
      %p81 = por %p79, %p80
      %p82 = scmp.ne.s32.totalorder %s73, %s74
      %p83 = scmp.eq.s32.totalorder %s21, 0
      %p84 = por %p82, %p83
      %p85 = scmp.ne.s32.totalorder %s73, %s74
      %p86 = scmp.eq.s32.totalorder %s22, 1
      %p87 = por %p85, %p86
      %p89 = scmp.ne.s32.totalorder %s74, %s88
      %p90 = scmp.eq.s32.totalorder %s22, 0
      %p91 = por %p89, %p90
      %s93 = sadd.s32 %s92, 1
      %p96 = scmp.eq.s32.totalorder %s16, 1
      %p97 = scmp.ne.s32.totalorder %s92, %s94
      %p98 = scmp.eq.s32.totalorder %s16, 0
      %p99 = por %p97, %p98
      %p100 = scmp.ne.s32.totalorder %s92, %s94
      %p101 = scmp.eq.s32.totalorder %s21, 1
      %p102 = por %p100, %p101
      %p103 = scmp.ne.s32.totalorder %s94, %s95
      %p104 = scmp.eq.s32.totalorder %s21, 0
      %p105 = por %p103, %p104
      %p106 = scmp.ne.s32.totalorder %s94, %s95
      %p107 = scmp.eq.s32.totalorder %s22, 1
      %p108 = por %p106, %p107
      %p110 = scmp.ne.s32.totalorder %s95, %s109
      %p111 = scmp.eq.s32.totalorder %s22, 0
      %p112 = por %p110, %p111
      %s114 = sadd.s32 %s113, 1
      %p117 = scmp.eq.s32.totalorder %s16, 1
      %p118 = scmp.ne.s32.totalorder %s113, %s115
      %p119 = scmp.eq.s32.totalorder %s16, 0
      %p120 = por %p118, %p119
      %p121 = scmp.ne.s32.totalorder %s113, %s115
      %p122 = scmp.eq.s32.totalorder %s21, 1
      %p123 = por %p121, %p122
      %p124 = scmp.ne.s32.totalorder %s115, %s116
      %p125 = scmp.eq.s32.totalorder %s21, 0
      %p126 = por %p124, %p125
      %p127 = scmp.ne.s32.totalorder %s115, %s116
      %p128 = scmp.eq.s32.totalorder %s22, 1
      %p129 = por %p127, %p128
      %p131 = scmp.ne.s32.totalorder %s116, %s130
      %p132 = scmp.eq.s32.totalorder %s22, 0
      %p133 = por %p131, %p132
      %s135 = sadd.s32 %s134, 1
      %p138 = scmp.eq.s32.totalorder %s16, 1
      %p139 = scmp.ne.s32.totalorder %s134, %s136
      %p140 = scmp.eq.s32.totalorder %s16, 0
      %p141 = por %p139, %p140
      %p142 = scmp.ne.s32.totalorder %s134, %s136
      %p143 = scmp.eq.s32.totalorder %s21, 1
      %p144 = por %p142, %p143
      %p145 = scmp.ne.s32.totalorder %s136, %s137
      %p146 = scmp.eq.s32.totalorder %s21, 0
      %p147 = por %p145, %p146
      %p148 = scmp.ne.s32.totalorder %s136, %s137
      %p149 = scmp.eq.s32.totalorder %s22, 1
      %p150 = por %p148, %p149
      %p152 = scmp.ne.s32.totalorder %s137, %s151
      %p153 = scmp.eq.s32.totalorder %s22, 0
      %p154 = por %p152, %p153
      %s156 = sadd.s32 %s155, 1
      %p159 = scmp.eq.s32.totalorder %s16, 1
      %p160 = scmp.ne.s32.totalorder %s155, %s157
      %p161 = scmp.eq.s32.totalorder %s16, 0
      %p162 = por %p160, %p161
      %p163 = scmp.ne.s32.totalorder %s155, %s157
      %p164 = scmp.eq.s32.totalorder %s21, 1
      %p165 = por %p163, %p164
      %p166 = scmp.ne.s32.totalorder %s157, %s158
      %p167 = scmp.eq.s32.totalorder %s21, 0
      %p168 = por %p166, %p167
      %p169 = scmp.ne.s32.totalorder %s157, %s158
      %p170 = scmp.eq.s32.totalorder %s22, 1
      %p171 = por %p169, %p170
      %p173 = scmp.ne.s32.totalorder %s158, %s172
      %p174 = scmp.eq.s32.totalorder %s22, 0
      %p175 = por %p173, %p174
      %s176 = ssub.s32 %s16, %s23
      %p177 = scmp.eq.s32.totalorder %s176, 0
      %s179 = sadd.s32 %s178, 1
      %s180 = scalar_select %p177, %s178, %s179
      %p183 = pneg %p177
      %p184 = scmp.eq.s32.totalorder %s16, 1
      %p185 = por %p183, %p184
      %p186 = scmp.ne.s32.totalorder %s178, %s181
      %p187 = scmp.eq.s32.totalorder %s16, 0
      %p188 = por %p186, %p187
      %p189 = scmp.ne.s32.totalorder %s178, %s181
      %p190 = scmp.eq.s32.totalorder %s21, 1
      %p191 = por %p189, %p190
      %p192 = scmp.ne.s32.totalorder %s181, %s182
      %p193 = scmp.eq.s32.totalorder %s21, 0
      %p194 = por %p192, %p193
      %p195 = scmp.ne.s32.totalorder %s181, %s182
      %p196 = scmp.eq.s32.totalorder %s22, 1
      %p197 = por %p195, %p196
      %p199 = scmp.ne.s32.totalorder %s182, %s198
      %p200 = scmp.eq.s32.totalorder %s22, 0
      %p201 = por %p199, %p200
      %p202 = scmp.le.s32.totalorder 1, %s16
      %p203 = scmp.lt.s32.totalorder %s16, 3
      %p204 = pnand %p202, %p203
      %p205 = pneg %p204
      // Predicated region
      $region9: #{conv_decoder.1} parent=5 // pred_check
        _
      $region10: #{conv_decoder.1} parent=5 // pred_check_branch
        %207 = sbr.rel (%p204) target = $region12
      $region11: #{conv_decoder.1} parent=5 // pred_region
        %s208 = ssub.s32 %s16, 1
        // Predicated region
        $region13: #{conv_decoder.1} parent=11 // pred_check
          %p209 = pneg %p63
        $region14: #{conv_decoder.1} parent=11 // pred_check_branch
          %211 = sbr.rel (%p209) target = $region16
        $region15: #{conv_decoder.1} parent=11 // pred_region
          _
        $region16: #{conv_decoder.1} parent=11 // pred_fallthru
          _
        // Predicated region
        $region17: #{conv_decoder.1} parent=11 // pred_check
          %p212 = pneg %p84
        $region18: #{conv_decoder.1} parent=11 // pred_check_branch
          %214 = sbr.rel (%p212) target = $region20
        $region19: #{conv_decoder.1} parent=11 // pred_region
          _
        $region20: #{conv_decoder.1} parent=11 // pred_fallthru
          _
        // Predicated region
        $region21: #{conv_decoder.1} parent=11 // pred_check
          %p215 = pneg %p105
        $region22: #{conv_decoder.1} parent=11 // pred_check_branch
          %217 = sbr.rel (%p215) target = $region24
        $region23: #{conv_decoder.1} parent=11 // pred_region
          _
        $region24: #{conv_decoder.1} parent=11 // pred_fallthru
          _
        // Predicated region
        $region25: #{conv_decoder.1} parent=11 // pred_check
          %p218 = pneg %p126
        $region26: #{conv_decoder.1} parent=11 // pred_check_branch
          %220 = sbr.rel (%p218) target = $region28
        $region27: #{conv_decoder.1} parent=11 // pred_region
          _
        $region28: #{conv_decoder.1} parent=11 // pred_fallthru
          _
        // Predicated region
        $region29: #{conv_decoder.1} parent=11 // pred_check
          %p221 = pneg %p147
        $region30: #{conv_decoder.1} parent=11 // pred_check_branch
          %223 = sbr.rel (%p221) target = $region32
        $region31: #{conv_decoder.1} parent=11 // pred_region
          _
        $region32: #{conv_decoder.1} parent=11 // pred_fallthru
          _
        // Predicated region
        $region33: #{conv_decoder.1} parent=11 // pred_check
          %p224 = pneg %p168
        $region34: #{conv_decoder.1} parent=11 // pred_check_branch
          %226 = sbr.rel (%p224) target = $region36
        $region35: #{conv_decoder.1} parent=11 // pred_region
          _
        $region36: #{conv_decoder.1} parent=11 // pred_fallthru
          _
      $region12: #{conv_decoder.1} parent=5 // pred_fallthru
        _
      %p227 = scmp.lt.s32.totalorder %s16, 2
      // Predicated region
      $region37: #{conv_decoder.1} parent=5 // pred_check
        %p228 = pneg %p227
      $region38: #{conv_decoder.1} parent=5 // pred_check_branch
        %230 = sbr.rel (%p228) target = $region40
      $region39: #{conv_decoder.1} parent=5 // pred_region
        // Predicated region
        $region41: #{conv_decoder.1} parent=39 // pred_check
          %p231 = pneg %p36
        $region42: #{conv_decoder.1} parent=39 // pred_check_branch
          %233 = sbr.rel (%p231) target = $region44
        $region43: #{conv_decoder.1} parent=39 // pred_region
          %p234 = scmp.lt.s32.totalorder %s16, 1
          %s235 = scalar_select %p234, %s16, 1
          %s236 = smul.addr %s235, 96
          %s237 = smul.addr %s236, 4
          %s238 = scalar_lea.vmem %s0, %s237
        $region44: #{conv_decoder.1} parent=39 // pred_fallthru
          _
      $region40: #{conv_decoder.1} parent=5 // pred_fallthru
        _
      %p239 = scmp.le.s32.totalorder 1, %s16
      %p240 = scmp.lt.s32.totalorder %s16, 3
      %p241 = pnand %p239, %p240
      %p242 = pneg %p241
      // Predicated region
      $region45: #{conv_decoder.1} parent=5 // pred_check
        _
      $region46: #{conv_decoder.1} parent=5 // pred_check_branch
        %244 = sbr.rel (%p241) target = $region48
      $region47: #{conv_decoder.1} parent=5 // pred_region
        %s245 = ssub.s32 %s16, 1
        %p246 = scmp.lt.s32.totalorder %s21, 1
        %s247 = scalar_select %p246, %s21, 1
        %s248 = smul.addr %s247, 96
        %s249 = smul.addr %s248, 4
        %s250 = scalar_lea.vmem %s0, %s249
        %p251 = pneg %p42
        %p252 = pneg %p39
        %p253 = pneg %p63
        %p254 = pneg %p60
        %p255 = pneg %p84
        %p256 = pneg %p81
        %p257 = pneg %p105
        %p258 = pneg %p102
        %p259 = pneg %p126
        %p260 = pneg %p123
        %p261 = pneg %p147
        %p262 = pneg %p144
        %p263 = pneg %p168
        %p264 = pneg %p165
        %p265 = pneg %p194
        %p266 = pneg %p191
        %s267 = sand.u32 %s181, 1
        %s268 = scalar_lea.sflag [#allocation5], %s267
        %s269 = sand.u32 %s181, 1
        %s270 = smul.addr %s269, 8
        %s271 = scalar_lea.vmem [#allocation4], %s270
        %p272 = scmp.lt.s32.totalorder %s21, 1
        %s273 = scalar_select %p272, %s21, 1
        %s274 = smul.addr %s273, 96
        %s275 = smul.addr %s274, 4
        %s276 = scalar_lea.vmem %s0, %s275
        %vm277 = vcmask 62464
        %278 = vst.msk [vmem:[#allocation2] sm:$0x3f] %vm277, 0.0
        %279 = vst.msk [vmem:[#allocation2 + $0x8] sm:$0x3f] %vm277, 0.0
        %280 = vst.msk [vmem:[#allocation2 + $0x10] sm:$0x3f] %vm277, 0.0
        %281 = vst.msk [vmem:[#allocation2 + $0x18] sm:$0x3f] %vm277, 0.0
        %282 = vst.msk [vmem:[#allocation2 + $0x20] sm:$0x3f] %vm277, 0.0
        %283 = vst.msk [vmem:[#allocation2 + $0x28] sm:$0x3f] %vm277, 0.0
        %284 = vst.msk [vmem:[#allocation3] sm:$0x3f] %vm277, 0.0
        %285 = vst.msk [vmem:[#allocation3 + $0x8] sm:$0x3f] %vm277, 0.0
        %286 = vst.msk [vmem:[#allocation3 + $0x10] sm:$0x3f] %vm277, 0.0
        %287 = vst.msk [vmem:[#allocation3 + $0x18] sm:$0x3f] %vm277, 0.0
        %288 = vst.msk [vmem:[#allocation3 + $0x20] sm:$0x3f] %vm277, 0.0
        %289 = vst.msk [vmem:[#allocation3 + $0x28] sm:$0x3f] %vm277, 0.0
        %v290 = vld [vmem:[%s276] sm:$0xff]
        %v291 = vld [vmem:[%s276 + $0x8] sm:$0xf]
        %v292 = vld [vmem:[%s276 + $0xc] sm:$0xff]
        %v293 = vld [vmem:[%s276 + $0x14] sm:$0xf]
        %v294 = vld [vmem:[%s276 + $0x18] sm:$0xff]
        %v295 = vld [vmem:[%s276 + $0x20] sm:$0xf]
        %v296 = vld [vmem:[%s276 + $0x24] sm:$0xff]
        %v297 = vld [vmem:[%s276 + $0x2c] sm:$0xf]
        %v298 = vld [vmem:[#allocation2] sm:$0xf]
        %v299 = vld [vmem:[#allocation2 + $0x8] sm:$0xf]
        %v300 = vld [vmem:[#allocation2 + $0x10] sm:$0xf]
        %v301 = vld [vmem:[#allocation2 + $0x18] sm:$0xf]
        %v302 = vld [vmem:[#allocation2 + $0x1] sm:$0xf]
        %v303 = vld [vmem:[#allocation2 + $0x9] sm:$0xf]
        %v304 = vld [vmem:[#allocation2 + $0x11] sm:$0xf]
        %v305 = vld [vmem:[#allocation2 + $0x19] sm:$0xf]
        %v306 = vld [vmem:[#allocation2 + $0x2] sm:$0xf]
        %v307 = vld [vmem:[#allocation2 + $0xa] sm:$0xf]
        %v308 = vld [vmem:[#allocation2 + $0x12] sm:$0xf]
        %v309 = vld [vmem:[#allocation2 + $0x1a] sm:$0xf]
        %s310 = scalar_lea.vmem [#allocation2], 8
        %v311 = vld [vmem:[%s310] sm:$0xf]
        %v312 = vld [vmem:[%s310 + $0x8] sm:$0xf]
        %v313 = vld [vmem:[%s310 + $0x10] sm:$0xf]
        %v314 = vld [vmem:[%s310 + $0x18] sm:$0xf]
        %v315 = vld [vmem:[%s310 + $0x1] sm:$0xf]
        %v316 = vld [vmem:[%s310 + $0x9] sm:$0xf]
        %v317 = vld [vmem:[%s310 + $0x11] sm:$0xf]
        %v318 = vld [vmem:[%s310 + $0x19] sm:$0xf]
        %v319 = vld [vmem:[%s310 + $0x2] sm:$0xf]
        %v320 = vld [vmem:[%s310 + $0xa] sm:$0xf]
        %v321 = vld [vmem:[%s310 + $0x12] sm:$0xf]
        %v322 = vld [vmem:[%s310 + $0x1a] sm:$0xf]
        %s323 = scalar_lea.vmem [#allocation2], 16
        %v324 = vld [vmem:[%s323] sm:$0xf]
        %v325 = vld [vmem:[%s323 + $0x8] sm:$0xf]
        %v326 = vld [vmem:[%s323 + $0x10] sm:$0xf]
        %v327 = vld [vmem:[%s323 + $0x18] sm:$0xf]
        %v328 = vld [vmem:[%s323 + $0x1] sm:$0xf]
        %v329 = vld [vmem:[%s323 + $0x9] sm:$0xf]
        %v330 = vld [vmem:[%s323 + $0x11] sm:$0xf]
        %v331 = vld [vmem:[%s323 + $0x19] sm:$0xf]
        %v332 = vld [vmem:[%s323 + $0x2] sm:$0xf]
        %v333 = vld [vmem:[%s323 + $0xa] sm:$0xf]
        %v334 = vld [vmem:[%s323 + $0x12] sm:$0xf]
        %v335 = vld [vmem:[%s323 + $0x1a] sm:$0xf]
        %v340 = vcombine.high %v290, %v290
        %v341 = vcombine.high %v292, %v292
        %v342 = vcombine.high %v294, %v294
        %v343 = vcombine.high %v296, %v296
        %348 = vrot.lane.b32.xlu0 %v298, 32
        %v349 = vpop.permute.xlu0 %348
        %350 = vrot.lane.b32.xlu0 %v299, 32
        %v351 = vpop.permute.xlu0 %350
        %352 = vrot.lane.b32.xlu0 %v300, 32
        %v353 = vpop.permute.xlu0 %352
        %354 = vrot.lane.b32.xlu0 %v301, 32
        %v355 = vpop.permute.xlu0 %354
        %364 = vrot.lane.b32.xlu0 %v302, 40
        %v365 = vpop.permute.xlu0 %364
        %366 = vrot.lane.b32.xlu0 %v303, 40
        %v367 = vpop.permute.xlu0 %366
        %368 = vrot.lane.b32.xlu0 %v304, 40
        %v369 = vpop.permute.xlu0 %368
        %370 = vrot.lane.b32.xlu0 %v305, 40
        %v371 = vpop.permute.xlu0 %370
        %380 = vrot.lane.b32.xlu0 %v306, 48
        %v381 = vpop.permute.xlu0 %380
        %382 = vrot.lane.b32.xlu0 %v307, 48
        %v383 = vpop.permute.xlu0 %382
        %384 = vrot.lane.b32.xlu0 %v308, 48
        %v385 = vpop.permute.xlu0 %384
        %386 = vrot.lane.b32.xlu0 %v309, 48
        %v387 = vpop.permute.xlu0 %386
        %396 = vrot.lane.b32.xlu0 %v311, 56
        %v397 = vpop.permute.xlu0 %396
        %398 = vrot.lane.b32.xlu0 %v312, 56
        %v399 = vpop.permute.xlu0 %398
        %400 = vrot.lane.b32.xlu0 %v313, 56
        %v401 = vpop.permute.xlu0 %400
        %402 = vrot.lane.b32.xlu0 %v314, 56
        %v403 = vpop.permute.xlu0 %402
        %412 = vrot.lane.b32.xlu0 %v315, 64
        %v413 = vpop.permute.xlu0 %412
        %414 = vrot.lane.b32.xlu0 %v316, 64
        %v415 = vpop.permute.xlu0 %414
        %416 = vrot.lane.b32.xlu0 %v317, 64
        %v417 = vpop.permute.xlu0 %416
        %418 = vrot.lane.b32.xlu0 %v318, 64
        %v419 = vpop.permute.xlu0 %418
        %428 = vrot.lane.b32.xlu0 %v319, 72
        %v429 = vpop.permute.xlu0 %428
        %430 = vrot.lane.b32.xlu0 %v320, 72
        %v431 = vpop.permute.xlu0 %430
        %432 = vrot.lane.b32.xlu0 %v321, 72
        %v433 = vpop.permute.xlu0 %432
        %434 = vrot.lane.b32.xlu0 %v322, 72
        %v435 = vpop.permute.xlu0 %434
        %444 = vrot.lane.b32.xlu0 %v324, 80
        %v445 = vpop.permute.xlu0 %444
        %446 = vrot.lane.b32.xlu0 %v325, 80
        %v447 = vpop.permute.xlu0 %446
        %448 = vrot.lane.b32.xlu0 %v326, 80
        %v449 = vpop.permute.xlu0 %448
        %450 = vrot.lane.b32.xlu0 %v327, 80
        %v451 = vpop.permute.xlu0 %450
        %460 = vrot.lane.b32.xlu0 %v328, 88
        %v461 = vpop.permute.xlu0 %460
        %462 = vrot.lane.b32.xlu0 %v329, 88
        %v463 = vpop.permute.xlu0 %462
        %464 = vrot.lane.b32.xlu0 %v330, 88
        %v465 = vpop.permute.xlu0 %464
        %466 = vrot.lane.b32.xlu0 %v331, 88
        %v467 = vpop.permute.xlu0 %466
        %476 = vrot.lane.b32.xlu0 %v332, 96
        %v477 = vpop.permute.xlu0 %476
        %478 = vrot.lane.b32.xlu0 %v333, 96
        %v479 = vpop.permute.xlu0 %478
        %480 = vrot.lane.b32.xlu0 %v334, 96
        %v481 = vpop.permute.xlu0 %480
        %482 = vrot.lane.b32.xlu0 %v335, 96
        %v483 = vpop.permute.xlu0 %482
        %vm488 = vcmask 261120
        %v489 = vsel %vm488, %v291, %v349
        %v490 = vsel %vm488, %v293, %v351
        %v491 = vsel %vm488, %v295, %v353
        %v492 = vsel %vm488, %v297, %v355
        %vm493 = vcmask 326656
        %v494 = vsel %vm493, %v489, %v365
        %v495 = vsel %vm493, %v490, %v367
        %v496 = vsel %vm493, %v491, %v369
        %v497 = vsel %vm493, %v492, %v371
        %vm498 = vcmask 392192
        %v499 = vsel %vm498, %v494, %v381
        %v500 = vsel %vm498, %v495, %v383
        %v501 = vsel %vm498, %v496, %v385
        %v502 = vsel %vm498, %v497, %v387
        %vm503 = vcmask 457728
        %v504 = vsel %vm503, %v499, %v397
        %v505 = vsel %vm503, %v500, %v399
        %v506 = vsel %vm503, %v501, %v401
        %v507 = vsel %vm503, %v502, %v403
        %vm508 = vcmask 523264
        %v509 = vsel %vm508, %v504, %v413
        %v510 = vsel %vm508, %v505, %v415
        %v511 = vsel %vm508, %v506, %v417
        %v512 = vsel %vm508, %v507, %v419
        %vm513 = vcmask 588800
        %v514 = vsel %vm513, %v509, %v429
        %v515 = vsel %vm513, %v510, %v431
        %v516 = vsel %vm513, %v511, %v433
        %v517 = vsel %vm513, %v512, %v435
        %vm518 = vcmask 654336
        %v519 = vsel %vm518, %v514, %v445
        %v520 = vsel %vm518, %v515, %v447
        %v521 = vsel %vm518, %v516, %v449
        %v522 = vsel %vm518, %v517, %v451
        %vm523 = vcmask 719872
        %v524 = vsel %vm523, %v519, %v461
        %v525 = vsel %vm523, %v520, %v463
        %v526 = vsel %vm523, %v521, %v465
        %v527 = vsel %vm523, %v522, %v467
        %vm528 = vcmask 785408
        %v529 = vsel %vm528, %v524, %v477
        %v530 = vsel %vm528, %v525, %v479
        %v531 = vsel %vm528, %v526, %v481
        %v532 = vsel %vm528, %v527, %v483
        %v537 = vcombine.low %v290, %v340
        %v538 = vcombine.low %v292, %v341
        %v539 = vcombine.low %v294, %v342
        %v540 = vcombine.low %v296, %v343
        %v541 = vld [vmem:[%s1] sm:$0xff]
        %v542 = vld [vmem:[%s1 + $0x8] sm:$0xff]
        %v543 = vld [vmem:[%s1 + $0x10] sm:$0xff]
        %v544 = vld [vmem:[%s1 + $0x18] sm:$0xff]
        %v545 = vld [vmem:[%s1 + $0x20] sm:$0xff]
        %v546 = vld [vmem:[%s1 + $0x28] sm:$0xff]
        %v547 = vld [vmem:[%s1 + $0x30] sm:$0xff]
        %v548 = vld [vmem:[%s1 + $0x38] sm:$0xff]
        %v549 = vld [vmem:[%s1 + $0x40] sm:$0xff]
        %v550 = vld [vmem:[%s1 + $0x48] sm:$0xff]
        %v551 = vld [vmem:[%s1 + $0x50] sm:$0xff]
        %v552 = vld [vmem:[%s1 + $0x58] sm:$0xff]
        %v553 = vld [vmem:[%s1 + $0x60] sm:$0xff]
        %v554 = vld [vmem:[%s1 + $0x68] sm:$0xff]
        %v555 = vld [vmem:[%s1 + $0x70] sm:$0xff]
        %v556 = vld [vmem:[%s1 + $0x78] sm:$0xff]
        %v557 = vld [vmem:[%s1 + $0x80] sm:$0xff]
        %v558 = vld [vmem:[%s1 + $0x88] sm:$0xff]
        %v559 = vld [vmem:[%s1 + $0x90] sm:$0xff]
        %v560 = vld [vmem:[%s1 + $0x98] sm:$0xff]
        %v561 = vld [vmem:[%s1 + $0xa0] sm:$0xff]
        %v562 = vld [vmem:[%s1 + $0xa8] sm:$0xff]
        %v563 = vld [vmem:[%s1 + $0xb0] sm:$0xff]
        %v564 = vld [vmem:[%s1 + $0xb8] sm:$0xff]
        %v565 = vld [vmem:[%s1 + $0xc0] sm:$0xff]
        %v566 = vld [vmem:[%s1 + $0xc8] sm:$0xff]
        %v567 = vld [vmem:[%s1 + $0xd0] sm:$0xff]
        %v568 = vld [vmem:[%s1 + $0xd8] sm:$0xff]
        %v569 = vld [vmem:[%s1 + $0xe0] sm:$0xff]
        %v570 = vld [vmem:[%s1 + $0xe8] sm:$0xff]
        %v571 = vld [vmem:[%s1 + $0xf0] sm:$0xff]
        %v572 = vld [vmem:[%s1 + $0xf8] sm:$0xff]
        %v573 = vld [vmem:[%s1 + $0x100] sm:$0xff]
        %v574 = vld [vmem:[%s1 + $0x108] sm:$0xff]
        %v575 = vld [vmem:[%s1 + $0x110] sm:$0xff]
        %v576 = vld [vmem:[%s1 + $0x118] sm:$0xff]
        %v577 = vld [vmem:[%s1 + $0x120] sm:$0xff]
        %v578 = vld [vmem:[%s1 + $0x128] sm:$0xff]
        %v579 = vld [vmem:[%s1 + $0x130] sm:$0xff]
        %v580 = vld [vmem:[%s1 + $0x138] sm:$0xff]
        %v581 = vld [vmem:[%s1 + $0x140] sm:$0xff]
        %v582 = vld [vmem:[%s1 + $0x148] sm:$0xff]
        %v583 = vld [vmem:[%s1 + $0x150] sm:$0xff]
        %v584 = vld [vmem:[%s1 + $0x158] sm:$0xff]
        %v585 = vld [vmem:[%s1 + $0x160] sm:$0xff]
        %v586 = vld [vmem:[%s2] sm:$0x1]
        %v588 = vlaneseq
        %v589 = vshrl.u32 %v588, 7
        %v590 = vsub.s32 0, %v589
        %v591 = vrot.slane %v586, %v590
        %v593 = vcombine.low %v537, %v538
        %v594 = vcombine.high %v537, %v538
        %v595 = vcombine.low %v529, %v530
        %v596 = vcombine.low %v539, %v540
        %v597 = vcombine.high %v539, %v540
        %v598 = vcombine.low %v531, %v532
        %vm603 = vcmask 850944
        %v604 = vsel %vm603, %v595, 0
        %v606 = vsel %vm603, %v598, 0
        %608 = vmatprep.subr.mxu0 0.0
        %609 = vmatpush1.msra.mxu0 %v556
        %610 = vmatprep.subr.mxu0 0.0
        %611 = vmatpush1.msra.mxu0 %v555
        %612 = vmatprep.subr.mxu0 0.0
        %613 = vmatpush1.msra.mxu0 %v554
        %614 = vmatprep.subr.mxu0 0.0
        %615 = vmatpush1.msra.mxu0 %v553
        %616 = vmatprep.subr.mxu0 0.0
        %617 = vmatpush1.msra.mxu0 %v552
        %618 = vmatprep.subr.mxu0 0.0
        %619 = vmatpush1.msra.mxu0 %v551
        %620 = vmatprep.subr.mxu0 0.0
        %621 = vmatpush1.msra.mxu0 %v550
        %622 = vmatprep.subr.mxu0 0.0
        %623 = vmatpush1.msra.mxu0 %v549
        %624 = vmatprep.subr.mxu0 0.0
        %625 = vmatpush1.msra.mxu0 %v548
        %626 = vmatprep.subr.mxu0 0.0
        %627 = vmatpush1.msra.mxu0 %v547
        %628 = vmatprep.subr.mxu0 0.0
        %629 = vmatpush1.msra.mxu0 %v546
        %630 = vmatprep.subr.mxu0 0.0
        %631 = vmatpush1.msra.mxu0 %v545
        %632 = vmatprep.subr.mxu0 0.0
        %633 = vmatpush1.msra.mxu0 %v544
        %634 = vmatprep.subr.mxu0 0.0
        %635 = vmatpush1.msra.mxu0 %v543
        %636 = vmatprep.subr.mxu0 0.0
        %637 = vmatpush1.msra.mxu0 %v542
        %638 = vmatprep.subr.mxu0 0.0
        %639 = vmatpush1.msra.mxu0 %v541
        %640 = vmatprep.subr.mxu0 0.0
        %641 = vmatpush2.msra.mxu0 %v572
        %642 = vmatprep.subr.mxu0 0.0
        %643 = vmatpush2.msra.mxu0 %v571
        %644 = vmatprep.subr.mxu0 0.0
        %645 = vmatpush2.msra.mxu0 %v570
        %646 = vmatprep.subr.mxu0 0.0
        %647 = vmatpush2.msra.mxu0 %v569
        %648 = vmatprep.subr.mxu0 0.0
        %649 = vmatpush2.msra.mxu0 %v568
        %650 = vmatprep.subr.mxu0 0.0
        %651 = vmatpush2.msra.mxu0 %v567
        %652 = vmatprep.subr.mxu0 0.0
        %653 = vmatpush2.msra.mxu0 %v566
        %654 = vmatprep.subr.mxu0 0.0
        %655 = vmatpush2.msra.mxu0 %v565
        %656 = vmatprep.subr.mxu0 0.0
        %657 = vmatpush2.msra.mxu0 %v564
        %658 = vmatprep.subr.mxu0 0.0
        %659 = vmatpush2.msra.mxu0 %v563
        %660 = vmatprep.subr.mxu0 0.0
        %661 = vmatpush2.msra.mxu0 %v562
        %662 = vmatprep.subr.mxu0 0.0
        %663 = vmatpush2.msra.mxu0 %v561
        %664 = vmatprep.subr.mxu0 0.0
        %665 = vmatpush2.msra.mxu0 %v560
        %666 = vmatprep.subr.mxu0 0.0
        %667 = vmatpush2.msra.mxu0 %v559
        %668 = vmatprep.subr.mxu0 0.0
        %669 = vmatpush2.msra.mxu0 %v558
        %670 = vmatprep.subr.mxu0 0.0
        %671 = vmatpush2.msra.mxu0 %v557
        %672 = vmatprep.mubr.f32.mxu0 %v594
        %673 = vmatmul.mubr.f32.gmra.mxu0 %v593
        %v674 = vpop.f32.mrf.mxu0
        %v675 = vadd.f32 %v591, %v674
        %v676 = vpop.f32.mrf.mxu0
        %677 = vmatprep.mubr.f32.mxu0 %v597
        %678 = vmatmul.mubr.f32.gmra.mxu0 %v596
        %v679 = vpop.f32.mrf.mxu0
        %v680 = vadd.f32 %v591, %v679
        %v681 = vpop.f32.mrf.mxu0
        %682 = vdwg.mxu0
        %683 = vmatprep.subr.mxu0 0.0
        %684 = vmatpush1.msra.mxu0 0.0
        %685 = vmatprep.subr.mxu0 0.0
        %686 = vmatpush1.msra.mxu0 0.0
        %687 = vmatprep.subr.mxu0 0.0
        %688 = vmatpush1.msra.mxu0 0.0
        %689 = vmatprep.subr.mxu0 0.0
        %690 = vmatpush1.msra.mxu0 %v585
        %691 = vmatprep.subr.mxu0 0.0
        %692 = vmatpush1.msra.mxu0 %v584
        %693 = vmatprep.subr.mxu0 0.0
        %694 = vmatpush1.msra.mxu0 %v583
        %695 = vmatprep.subr.mxu0 0.0
        %696 = vmatpush1.msra.mxu0 %v582
        %697 = vmatprep.subr.mxu0 0.0
        %698 = vmatpush1.msra.mxu0 %v581
        %699 = vmatprep.subr.mxu0 0.0
        %700 = vmatpush1.msra.mxu0 %v580
        %701 = vmatprep.subr.mxu0 0.0
        %702 = vmatpush1.msra.mxu0 %v579
        %703 = vmatprep.subr.mxu0 0.0
        %704 = vmatpush1.msra.mxu0 %v578
        %705 = vmatprep.subr.mxu0 0.0
        %706 = vmatpush1.msra.mxu0 %v577
        %707 = vmatprep.subr.mxu0 0.0
        %708 = vmatpush1.msra.mxu0 %v576
        %709 = vmatprep.subr.mxu0 0.0
        %710 = vmatpush1.msra.mxu0 %v575
        %711 = vmatprep.subr.mxu0 0.0
        %712 = vmatpush1.msra.mxu0 %v574
        %713 = vmatprep.subr.mxu0 0.0
        %714 = vmatpush1.msra.mxu0 %v573
        %715 = vmatprep.subr.mxu0 0.0
        %716 = vmatpush2.msra.mxu0 0.0
        %717 = vmatprep.subr.mxu0 0.0
        %718 = vmatpush2.msra.mxu0 0.0
        %719 = vmatprep.subr.mxu0 0.0
        %720 = vmatpush2.msra.mxu0 0.0
        %721 = vmatprep.subr.mxu0 0.0
        %722 = vmatpush2.msra.mxu0 0.0
        %723 = vmatprep.subr.mxu0 0.0
        %724 = vmatpush2.msra.mxu0 0.0
        %725 = vmatprep.subr.mxu0 0.0
        %726 = vmatpush2.msra.mxu0 0.0
        %727 = vmatprep.subr.mxu0 0.0
        %728 = vmatpush2.msra.mxu0 0.0
        %729 = vmatprep.subr.mxu0 0.0
        %730 = vmatpush2.msra.mxu0 0.0
        %731 = vmatprep.subr.mxu0 0.0
        %732 = vmatpush2.msra.mxu0 0.0
        %733 = vmatprep.subr.mxu0 0.0
        %734 = vmatpush2.msra.mxu0 0.0
        %735 = vmatprep.subr.mxu0 0.0
        %736 = vmatpush2.msra.mxu0 0.0
        %737 = vmatprep.subr.mxu0 0.0
        %738 = vmatpush2.msra.mxu0 0.0
        %739 = vmatprep.subr.mxu0 0.0
        %740 = vmatpush2.msra.mxu0 0.0
        %741 = vmatprep.subr.mxu0 0.0
        %742 = vmatpush2.msra.mxu0 0.0
        %743 = vmatprep.subr.mxu0 0.0
        %744 = vmatpush2.msra.mxu0 0.0
        %745 = vmatprep.subr.mxu0 0.0
        %746 = vmatpush2.msra.mxu0 0.0
        %747 = vmatprep.mubr.f32.mxu0 0.0
        %748 = vmatmul.mubr.f32.gmra.mxu0 %v604
        %v749 = vpop.f32.mrf.mxu0
        %v750 = vadd.f32 %v675, %v749
        %v751 = vpop.f32.mrf.mxu0
        %752 = vmatprep.mubr.f32.mxu0 0.0
        %753 = vmatmul.mubr.f32.gmra.mxu0 %v606
        %v754 = vpop.f32.mrf.mxu0
        %v755 = vadd.f32 %v680, %v754
        %v756 = vpop.f32.mrf.mxu0
        %757 = vdwg.mxu0
        %v758 = vxor.u32 %v750, 2147483648
        %v759 = vxor.u32 %v755, 2147483648
        %v760 = vmul.f32 %v758, 1.442695
        %v761 = vpow.pop %v760
        %v762 = vmul.f32 %v759, 1.442695
        %v763 = vpow.pop %v762
        %v764 = vadd.f32 %v761, 1.0
        %v765 = vadd.f32 %v763, 1.0
        %v766 = vrcp.pop %v764
        %v767 = vmul.f32 1.0, %v766
        %v768 = vrcp.pop %v765
        %v769 = vmul.f32 1.0, %v768
        %v770 = vtanh.pop %v750
        %v771 = vtanh.pop %v755
        %v772 = vmul.f32 %v767, 0.0
        %v773 = vmul.f32 %v769, 0.0
        %776 = vrot.lane.b32.xlu0 %v770, 104
        %v777 = vpop.permute.xlu0 %776
        %778 = vrot.lane.b32.xlu0 %v771, 104
        %v779 = vpop.permute.xlu0 %778
        %v782 = vmul.f32 %v767, %v777
        %v783 = vmul.f32 %v769, %v779
        %786 = vrot.lane.b32.xlu0 %v782, 8
        %v787 = vpop.permute.xlu0 %786
        %788 = vrot.lane.b32.xlu0 %v783, 8
        %v789 = vpop.permute.xlu0 %788
        %v792 = vadd.f32 %v772, %v787
        %v793 = vadd.f32 %v773, %v789
        %v794 = vtanh.pop %v792
        %v795 = vtanh.pop %v793
        %798 = vrot.lane.b32.xlu0 %v794, 8
        %v799 = vpop.permute.xlu0 %798
        %800 = vrot.lane.b32.xlu0 %v795, 8
        %v801 = vpop.permute.xlu0 %800
        %v804 = vmul.f32 %v767, %v799
        %v805 = vmul.f32 %v769, %v801
        %v808 = vcombine.high %v804, %v804
        %v809 = vcombine.high %v805, %v805
        %810 = vrot.lane.b32.xlu0 %v804, 112
        %v811 = vpop.permute.xlu0 %810
        %812 = vrot.lane.b32.xlu0 %v808, 112
        %v813 = vpop.permute.xlu0 %812
        %814 = vrot.lane.b32.xlu0 %v805, 112
        %v815 = vpop.permute.xlu0 %814
        %816 = vrot.lane.b32.xlu0 %v809, 112
        %v817 = vpop.permute.xlu0 %816
        %vm822 = vcmask 60416
        %823 = vst.msk [vmem:[%s310 + $0x1] sm:$0xf] %vm822, %v811
        %824 = vst.msk [vmem:[%s310 + $0x9] sm:$0xf] %vm822, %v813
        %825 = vst.msk [vmem:[%s310 + $0x11] sm:$0xf] %vm822, %v815
        %826 = vst.msk [vmem:[%s310 + $0x19] sm:$0xf] %vm822, %v817
        %v827 = vld [vmem:[#allocation2] sm:$0xf]
        %v828 = vld [vmem:[#allocation2 + $0x8] sm:$0xf]
        %v829 = vld [vmem:[#allocation2 + $0x10] sm:$0xf]
        %v830 = vld [vmem:[#allocation2 + $0x18] sm:$0xf]
        %v831 = vld [vmem:[#allocation2 + $0x1] sm:$0xf]
        %v832 = vld [vmem:[#allocation2 + $0x9] sm:$0xf]
        %v833 = vld [vmem:[#allocation2 + $0x11] sm:$0xf]
        %v834 = vld [vmem:[#allocation2 + $0x19] sm:$0xf]
        %v835 = vld [vmem:[#allocation2 + $0x2] sm:$0xf]
        %v836 = vld [vmem:[#allocation2 + $0xa] sm:$0xf]
        %v837 = vld [vmem:[#allocation2 + $0x12] sm:$0xf]
        %v838 = vld [vmem:[#allocation2 + $0x1a] sm:$0xf]
        %v839 = vld [vmem:[%s310] sm:$0xf]
        %v840 = vld [vmem:[%s310 + $0x8] sm:$0xf]
        %v841 = vld [vmem:[%s310 + $0x10] sm:$0xf]
        %v842 = vld [vmem:[%s310 + $0x18] sm:$0xf]
        %v843 = vld [vmem:[%s310 + $0x1] sm:$0xf]
        %v844 = vld [vmem:[%s310 + $0x9] sm:$0xf]
        %v845 = vld [vmem:[%s310 + $0x11] sm:$0xf]
        %v846 = vld [vmem:[%s310 + $0x19] sm:$0xf]
        %v847 = vld [vmem:[%s310 + $0x2] sm:$0xf]
        %v848 = vld [vmem:[%s310 + $0xa] sm:$0xf]
        %v849 = vld [vmem:[%s310 + $0x12] sm:$0xf]
        %v850 = vld [vmem:[%s310 + $0x1a] sm:$0xf]
        %v851 = vld [vmem:[%s323] sm:$0xf]
        %v852 = vld [vmem:[%s323 + $0x8] sm:$0xf]
        %v853 = vld [vmem:[%s323 + $0x10] sm:$0xf]
        %v854 = vld [vmem:[%s323 + $0x18] sm:$0xf]
        %v855 = vld [vmem:[%s323 + $0x1] sm:$0xf]
        %v856 = vld [vmem:[%s323 + $0x9] sm:$0xf]
        %v857 = vld [vmem:[%s323 + $0x11] sm:$0xf]
        %v858 = vld [vmem:[%s323 + $0x19] sm:$0xf]
        %v859 = vld [vmem:[%s323 + $0x2] sm:$0xf]
        %v860 = vld [vmem:[%s323 + $0xa] sm:$0xf]
        %v861 = vld [vmem:[%s323 + $0x12] sm:$0xf]
        %v862 = vld [vmem:[%s323 + $0x1a] sm:$0xf]
        %v863 = vld [vmem:[#allocation3] sm:$0xf]
        %v864 = vld [vmem:[#allocation3 + $0x8] sm:$0xf]
        %v865 = vld [vmem:[#allocation3 + $0x10] sm:$0xf]
        %v866 = vld [vmem:[#allocation3 + $0x18] sm:$0xf]
        %v867 = vld [vmem:[#allocation3 + $0x1] sm:$0xf]
        %v868 = vld [vmem:[#allocation3 + $0x9] sm:$0xf]
        %v869 = vld [vmem:[#allocation3 + $0x11] sm:$0xf]
        %v870 = vld [vmem:[#allocation3 + $0x19] sm:$0xf]
        %v871 = vld [vmem:[#allocation3 + $0x2] sm:$0xf]
        %v872 = vld [vmem:[#allocation3 + $0xa] sm:$0xf]
        %v873 = vld [vmem:[#allocation3 + $0x12] sm:$0xf]
        %v874 = vld [vmem:[#allocation3 + $0x1a] sm:$0xf]
        %s875 = scalar_lea.vmem [#allocation3], 8
        %v876 = vld [vmem:[%s875] sm:$0xf]
        %v877 = vld [vmem:[%s875 + $0x8] sm:$0xf]
        %v878 = vld [vmem:[%s875 + $0x10] sm:$0xf]
        %v879 = vld [vmem:[%s875 + $0x18] sm:$0xf]
        %v880 = vld [vmem:[%s875 + $0x1] sm:$0xf]
        %v881 = vld [vmem:[%s875 + $0x9] sm:$0xf]
        %v882 = vld [vmem:[%s875 + $0x11] sm:$0xf]
        %v883 = vld [vmem:[%s875 + $0x19] sm:$0xf]
        %v884 = vld [vmem:[%s875 + $0x2] sm:$0xf]
        %v885 = vld [vmem:[%s875 + $0xa] sm:$0xf]
        %v886 = vld [vmem:[%s875 + $0x12] sm:$0xf]
        %v887 = vld [vmem:[%s875 + $0x1a] sm:$0xf]
        %s888 = scalar_lea.vmem [#allocation3], 16
        %v889 = vld [vmem:[%s888] sm:$0xf]
        %v890 = vld [vmem:[%s888 + $0x8] sm:$0xf]
        %v891 = vld [vmem:[%s888 + $0x10] sm:$0xf]
        %v892 = vld [vmem:[%s888 + $0x18] sm:$0xf]
        %v893 = vld [vmem:[%s888 + $0x1] sm:$0xf]
        %v894 = vld [vmem:[%s888 + $0x9] sm:$0xf]
        %v895 = vld [vmem:[%s888 + $0x11] sm:$0xf]
        %v896 = vld [vmem:[%s888 + $0x19] sm:$0xf]
        %v897 = vld [vmem:[%s888 + $0x2] sm:$0xf]
        %v898 = vld [vmem:[%s888 + $0xa] sm:$0xf]
        %v899 = vld [vmem:[%s888 + $0x12] sm:$0xf]
        %v900 = vld [vmem:[%s888 + $0x1a] sm:$0xf]
        %905 = vrot.lane.b32.xlu0 %v831, 8
        %v906 = vpop.permute.xlu0 %905
        %907 = vrot.lane.b32.xlu0 %v832, 8
        %v908 = vpop.permute.xlu0 %907
        %909 = vrot.lane.b32.xlu0 %v833, 8
        %v910 = vpop.permute.xlu0 %909
        %911 = vrot.lane.b32.xlu0 %v834, 8
        %v912 = vpop.permute.xlu0 %911
        %921 = vrot.lane.b32.xlu0 %v835, 16
        %v922 = vpop.permute.xlu0 %921
        %923 = vrot.lane.b32.xlu0 %v836, 16
        %v924 = vpop.permute.xlu0 %923
        %925 = vrot.lane.b32.xlu0 %v837, 16
        %v926 = vpop.permute.xlu0 %925
        %927 = vrot.lane.b32.xlu0 %v838, 16
        %v928 = vpop.permute.xlu0 %927
        %937 = vrot.lane.b32.xlu0 %v839, 24
        %v938 = vpop.permute.xlu0 %937
        %939 = vrot.lane.b32.xlu0 %v840, 24
        %v940 = vpop.permute.xlu0 %939
        %941 = vrot.lane.b32.xlu0 %v841, 24
        %v942 = vpop.permute.xlu0 %941
        %943 = vrot.lane.b32.xlu0 %v842, 24
        %v944 = vpop.permute.xlu0 %943
        %953 = vrot.lane.b32.xlu0 %v843, 32
        %v954 = vpop.permute.xlu0 %953
        %955 = vrot.lane.b32.xlu0 %v844, 32
        %v956 = vpop.permute.xlu0 %955
        %957 = vrot.lane.b32.xlu0 %v845, 32
        %v958 = vpop.permute.xlu0 %957
        %959 = vrot.lane.b32.xlu0 %v846, 32
        %v960 = vpop.permute.xlu0 %959
        %969 = vrot.lane.b32.xlu0 %v847, 40
        %v970 = vpop.permute.xlu0 %969
        %971 = vrot.lane.b32.xlu0 %v848, 40
        %v972 = vpop.permute.xlu0 %971
        %973 = vrot.lane.b32.xlu0 %v849, 40
        %v974 = vpop.permute.xlu0 %973
        %975 = vrot.lane.b32.xlu0 %v850, 40
        %v976 = vpop.permute.xlu0 %975
        %985 = vrot.lane.b32.xlu0 %v851, 48
        %v986 = vpop.permute.xlu0 %985
        %987 = vrot.lane.b32.xlu0 %v852, 48
        %v988 = vpop.permute.xlu0 %987
        %989 = vrot.lane.b32.xlu0 %v853, 48
        %v990 = vpop.permute.xlu0 %989
        %991 = vrot.lane.b32.xlu0 %v854, 48
        %v992 = vpop.permute.xlu0 %991
        %1001 = vrot.lane.b32.xlu0 %v855, 56
        %v1002 = vpop.permute.xlu0 %1001
        %1003 = vrot.lane.b32.xlu0 %v856, 56
        %v1004 = vpop.permute.xlu0 %1003
        %1005 = vrot.lane.b32.xlu0 %v857, 56
        %v1006 = vpop.permute.xlu0 %1005
        %1007 = vrot.lane.b32.xlu0 %v858, 56
        %v1008 = vpop.permute.xlu0 %1007
        %1017 = vrot.lane.b32.xlu0 %v859, 64
        %v1018 = vpop.permute.xlu0 %1017
        %1019 = vrot.lane.b32.xlu0 %v860, 64
        %v1020 = vpop.permute.xlu0 %1019
        %1021 = vrot.lane.b32.xlu0 %v861, 64
        %v1022 = vpop.permute.xlu0 %1021
        %1023 = vrot.lane.b32.xlu0 %v862, 64
        %v1024 = vpop.permute.xlu0 %1023
        %1033 = vrot.lane.b32.xlu0 %v863, 72
        %v1034 = vpop.permute.xlu0 %1033
        %1035 = vrot.lane.b32.xlu0 %v864, 72
        %v1036 = vpop.permute.xlu0 %1035
        %1037 = vrot.lane.b32.xlu0 %v865, 72
        %v1038 = vpop.permute.xlu0 %1037
        %1039 = vrot.lane.b32.xlu0 %v866, 72
        %v1040 = vpop.permute.xlu0 %1039
        %1049 = vrot.lane.b32.xlu0 %v867, 80
        %v1050 = vpop.permute.xlu0 %1049
        %1051 = vrot.lane.b32.xlu0 %v868, 80
        %v1052 = vpop.permute.xlu0 %1051
        %1053 = vrot.lane.b32.xlu0 %v869, 80
        %v1054 = vpop.permute.xlu0 %1053
        %1055 = vrot.lane.b32.xlu0 %v870, 80
        %v1056 = vpop.permute.xlu0 %1055
        %1065 = vrot.lane.b32.xlu0 %v871, 88
        %v1066 = vpop.permute.xlu0 %1065
        %1067 = vrot.lane.b32.xlu0 %v872, 88
        %v1068 = vpop.permute.xlu0 %1067
        %1069 = vrot.lane.b32.xlu0 %v873, 88
        %v1070 = vpop.permute.xlu0 %1069
        %1071 = vrot.lane.b32.xlu0 %v874, 88
        %v1072 = vpop.permute.xlu0 %1071
        %1081 = vrot.lane.b32.xlu0 %v876, 96
        %v1082 = vpop.permute.xlu0 %1081
        %1083 = vrot.lane.b32.xlu0 %v877, 96
        %v1084 = vpop.permute.xlu0 %1083
        %1085 = vrot.lane.b32.xlu0 %v878, 96
        %v1086 = vpop.permute.xlu0 %1085
        %1087 = vrot.lane.b32.xlu0 %v879, 96
        %v1088 = vpop.permute.xlu0 %1087
        %1097 = vrot.lane.b32.xlu0 %v880, 104
        %v1098 = vpop.permute.xlu0 %1097
        %1099 = vrot.lane.b32.xlu0 %v881, 104
        %v1100 = vpop.permute.xlu0 %1099
        %1101 = vrot.lane.b32.xlu0 %v882, 104
        %v1102 = vpop.permute.xlu0 %1101
        %1103 = vrot.lane.b32.xlu0 %v883, 104
        %v1104 = vpop.permute.xlu0 %1103
        %1113 = vrot.lane.b32.xlu0 %v884, 112
        %v1114 = vpop.permute.xlu0 %1113
        %1115 = vrot.lane.b32.xlu0 %v885, 112
        %v1116 = vpop.permute.xlu0 %1115
        %1117 = vrot.lane.b32.xlu0 %v886, 112
        %v1118 = vpop.permute.xlu0 %1117
        %1119 = vrot.lane.b32.xlu0 %v887, 112
        %v1120 = vpop.permute.xlu0 %1119
        %1129 = vrot.lane.b32.xlu0 %v889, 120
        %v1130 = vpop.permute.xlu0 %1129
        %1131 = vrot.lane.b32.xlu0 %v890, 120
        %v1132 = vpop.permute.xlu0 %1131
        %1133 = vrot.lane.b32.xlu0 %v891, 120
        %v1134 = vpop.permute.xlu0 %1133
        %1135 = vrot.lane.b32.xlu0 %v892, 120
        %v1136 = vpop.permute.xlu0 %1135
        %vm1141 = vcmask 64512
        %v1142 = vsel %vm1141, %v827, %v906
        %v1143 = vsel %vm1141, %v828, %v908
        %v1144 = vsel %vm1141, %v829, %v910
        %v1145 = vsel %vm1141, %v830, %v912
        %vm1146 = vcmask 130048
        %v1147 = vsel %vm1146, %v1142, %v922
        %v1148 = vsel %vm1146, %v1143, %v924
        %v1149 = vsel %vm1146, %v1144, %v926
        %v1150 = vsel %vm1146, %v1145, %v928
        %vm1151 = vcmask 195584
        %v1152 = vsel %vm1151, %v1147, %v938
        %v1153 = vsel %vm1151, %v1148, %v940
        %v1154 = vsel %vm1151, %v1149, %v942
        %v1155 = vsel %vm1151, %v1150, %v944
        %v1156 = vsel %vm488, %v1152, %v954
        %v1157 = vsel %vm488, %v1153, %v956
        %v1158 = vsel %vm488, %v1154, %v958
        %v1159 = vsel %vm488, %v1155, %v960
        %v1160 = vsel %vm493, %v1156, %v970
        %v1161 = vsel %vm493, %v1157, %v972
        %v1162 = vsel %vm493, %v1158, %v974
        %v1163 = vsel %vm493, %v1159, %v976
        %v1164 = vsel %vm498, %v1160, %v986
        %v1165 = vsel %vm498, %v1161, %v988
        %v1166 = vsel %vm498, %v1162, %v990
        %v1167 = vsel %vm498, %v1163, %v992
        %v1168 = vsel %vm503, %v1164, %v1002
        %v1169 = vsel %vm503, %v1165, %v1004
        %v1170 = vsel %vm503, %v1166, %v1006
        %v1171 = vsel %vm503, %v1167, %v1008
        %v1172 = vsel %vm508, %v1168, %v1018
        %v1173 = vsel %vm508, %v1169, %v1020
        %v1174 = vsel %vm508, %v1170, %v1022
        %v1175 = vsel %vm508, %v1171, %v1024
        %v1176 = vsel %vm513, %v1172, %v1034
        %v1177 = vsel %vm513, %v1173, %v1036
        %v1178 = vsel %vm513, %v1174, %v1038
        %v1179 = vsel %vm513, %v1175, %v1040
        %v1180 = vsel %vm518, %v1176, %v1050
        %v1181 = vsel %vm518, %v1177, %v1052
        %v1182 = vsel %vm518, %v1178, %v1054
        %v1183 = vsel %vm518, %v1179, %v1056
        %v1184 = vsel %vm523, %v1180, %v1066
        %v1185 = vsel %vm523, %v1181, %v1068
        %v1186 = vsel %vm523, %v1182, %v1070
        %v1187 = vsel %vm523, %v1183, %v1072
        %v1188 = vsel %vm528, %v1184, %v1082
        %v1189 = vsel %vm528, %v1185, %v1084
        %v1190 = vsel %vm528, %v1186, %v1086
        %v1191 = vsel %vm528, %v1187, %v1088
        %v1192 = vsel %vm603, %v1188, %v1098
        %v1193 = vsel %vm603, %v1189, %v1100
        %v1194 = vsel %vm603, %v1190, %v1102
        %v1195 = vsel %vm603, %v1191, %v1104
        %vm1196 = vcmask 916480
        %v1197 = vsel %vm1196, %v1192, %v1114
        %v1198 = vsel %vm1196, %v1193, %v1116
        %v1199 = vsel %vm1196, %v1194, %v1118
        %v1200 = vsel %vm1196, %v1195, %v1120
        %vm1201 = vcmask 982016
        %v1202 = vsel %vm1201, %v1197, %v1130
        %v1203 = vsel %vm1201, %v1198, %v1132
        %v1204 = vsel %vm1201, %v1199, %v1134
        %v1205 = vsel %vm1201, %v1200, %v1136
        %1210 = vrot.lane.b32.xlu0 %v897, 8
        %v1211 = vpop.permute.xlu0 %1210
        %1212 = vrot.lane.b32.xlu0 %v898, 8
        %v1213 = vpop.permute.xlu0 %1212
        %1214 = vrot.lane.b32.xlu0 %v899, 8
        %v1215 = vpop.permute.xlu0 %1214
        %1216 = vrot.lane.b32.xlu0 %v900, 8
        %v1217 = vpop.permute.xlu0 %1216
        %v1222 = vsel %vm1141, %v893, %v1211
        %v1223 = vsel %vm1141, %v894, %v1213
        %v1224 = vsel %vm1141, %v895, %v1215
        %v1225 = vsel %vm1141, %v896, %v1217
        %v1234 = vcombine.low %v1202, %v1222
        %v1235 = vcombine.low %v1203, %v1223
        %v1236 = vcombine.low %v1204, %v1224
        %v1237 = vcombine.low %v1205, %v1225
        %v1238 = vld [vmem:[%s3] sm:$0xff]
        %v1239 = vld [vmem:[%s3 + $0x8] sm:$0xff]
        %v1240 = vld [vmem:[%s3 + $0x10] sm:$0xff]
        %v1241 = vld [vmem:[%s3 + $0x18] sm:$0xff]
        %v1242 = vld [vmem:[%s3 + $0x20] sm:$0xff]
        %v1243 = vld [vmem:[%s3 + $0x28] sm:$0xff]
        %v1244 = vld [vmem:[%s3 + $0x30] sm:$0xff]
        %v1245 = vld [vmem:[%s3 + $0x38] sm:$0xff]
        %v1246 = vld [vmem:[%s3 + $0x40] sm:$0xff]
        %v1247 = vld [vmem:[%s3 + $0x48] sm:$0xff]
        %v1248 = vld [vmem:[%s3 + $0x50] sm:$0xff]
        %v1249 = vld [vmem:[%s3 + $0x58] sm:$0xff]
        %v1250 = vld [vmem:[%s3 + $0x60] sm:$0xff]
        %v1251 = vld [vmem:[%s3 + $0x68] sm:$0xff]
        %v1252 = vld [vmem:[%s3 + $0x70] sm:$0xff]
        %v1253 = vld [vmem:[%s3 + $0x78] sm:$0xff]
        %v1254 = vld [vmem:[%s3 + $0x80] sm:$0xff]
        %v1255 = vld [vmem:[%s3 + $0x88] sm:$0xff]
        %v1256 = vld [vmem:[%s4] sm:$0x1]
        %v1258 = vlaneseq
        %v1259 = vshrl.u32 %v1258, 7
        %v1260 = vsub.s32 0, %v1259
        %v1261 = vrot.slane %v1256, %v1260
        %v1263 = vcombine.low %v1234, %v1235
        %v1264 = vcombine.high %v1234, %v1235
        %v1265 = vcombine.low %v1236, %v1237
        %v1266 = vcombine.high %v1236, %v1237
        %v1269 = vsel %vm1146, %v1264, 0
        %v1271 = vsel %vm1146, %v1266, 0
        %1273 = vmatprep.subr.mxu0 0.0
        %1274 = vmatpush1.msra.mxu0 %v1253
        %1275 = vmatprep.subr.mxu0 0.0
        %1276 = vmatpush1.msra.mxu0 %v1252
        %1277 = vmatprep.subr.mxu0 0.0
        %1278 = vmatpush1.msra.mxu0 %v1251
        %1279 = vmatprep.subr.mxu0 0.0
        %1280 = vmatpush1.msra.mxu0 %v1250
        %1281 = vmatprep.subr.mxu0 0.0
        %1282 = vmatpush1.msra.mxu0 %v1249
        %1283 = vmatprep.subr.mxu0 0.0
        %1284 = vmatpush1.msra.mxu0 %v1248
        %1285 = vmatprep.subr.mxu0 0.0
        %1286 = vmatpush1.msra.mxu0 %v1247
        %1287 = vmatprep.subr.mxu0 0.0
        %1288 = vmatpush1.msra.mxu0 %v1246
        %1289 = vmatprep.subr.mxu0 0.0
        %1290 = vmatpush1.msra.mxu0 %v1245
        %1291 = vmatprep.subr.mxu0 0.0
        %1292 = vmatpush1.msra.mxu0 %v1244
        %1293 = vmatprep.subr.mxu0 0.0
        %1294 = vmatpush1.msra.mxu0 %v1243
        %1295 = vmatprep.subr.mxu0 0.0
        %1296 = vmatpush1.msra.mxu0 %v1242
        %1297 = vmatprep.subr.mxu0 0.0
        %1298 = vmatpush1.msra.mxu0 %v1241
        %1299 = vmatprep.subr.mxu0 0.0
        %1300 = vmatpush1.msra.mxu0 %v1240
        %1301 = vmatprep.subr.mxu0 0.0
        %1302 = vmatpush1.msra.mxu0 %v1239
        %1303 = vmatprep.subr.mxu0 0.0
        %1304 = vmatpush1.msra.mxu0 %v1238
        %1305 = vmatprep.subr.mxu0 0.0
        %1306 = vmatpush2.msra.mxu0 0.0
        %1307 = vmatprep.subr.mxu0 0.0
        %1308 = vmatpush2.msra.mxu0 0.0
        %1309 = vmatprep.subr.mxu0 0.0
        %1310 = vmatpush2.msra.mxu0 0.0
        %1311 = vmatprep.subr.mxu0 0.0
        %1312 = vmatpush2.msra.mxu0 0.0
        %1313 = vmatprep.subr.mxu0 0.0
        %1314 = vmatpush2.msra.mxu0 0.0
        %1315 = vmatprep.subr.mxu0 0.0
        %1316 = vmatpush2.msra.mxu0 0.0
        %1317 = vmatprep.subr.mxu0 0.0
        %1318 = vmatpush2.msra.mxu0 0.0
        %1319 = vmatprep.subr.mxu0 0.0
        %1320 = vmatpush2.msra.mxu0 0.0
        %1321 = vmatprep.subr.mxu0 0.0
        %1322 = vmatpush2.msra.mxu0 0.0
        %1323 = vmatprep.subr.mxu0 0.0
        %1324 = vmatpush2.msra.mxu0 0.0
        %1325 = vmatprep.subr.mxu0 0.0
        %1326 = vmatpush2.msra.mxu0 0.0
        %1327 = vmatprep.subr.mxu0 0.0
        %1328 = vmatpush2.msra.mxu0 0.0
        %1329 = vmatprep.subr.mxu0 0.0
        %1330 = vmatpush2.msra.mxu0 0.0
        %1331 = vmatprep.subr.mxu0 0.0
        %1332 = vmatpush2.msra.mxu0 0.0
        %1333 = vmatprep.subr.mxu0 0.0
        %1334 = vmatpush2.msra.mxu0 %v1255
        %1335 = vmatprep.subr.mxu0 0.0
        %1336 = vmatpush2.msra.mxu0 %v1254
        %1337 = vmatprep.mubr.f32.mxu0 %v1269
        %1338 = vmatmul.mubr.f32.gmra.mxu0 %v1263
        %v1339 = vpop.f32.mrf.mxu0
        %v1340 = vadd.f32 %v1261, %v1339
        %v1341 = vpop.f32.mrf.mxu0
        %1342 = vmatprep.mubr.f32.mxu0 %v1271
        %1343 = vmatmul.mubr.f32.gmra.mxu0 %v1265
        %v1344 = vpop.f32.mrf.mxu0
        %v1345 = vadd.f32 %v1261, %v1344
        %v1346 = vpop.f32.mrf.mxu0
        %1347 = vdwg.mxu0
        %v1348 = vxor.u32 %v1340, 2147483648
        %v1349 = vxor.u32 %v1345, 2147483648
        %v1350 = vmul.f32 %v1348, 1.442695
        %v1351 = vpow.pop %v1350
        %v1352 = vmul.f32 %v1349, 1.442695
        %v1353 = vpow.pop %v1352
        %v1354 = vadd.f32 %v1351, 1.0
        %v1355 = vadd.f32 %v1353, 1.0
        %v1356 = vrcp.pop %v1354
        %v1357 = vmul.f32 1.0, %v1356
        %v1358 = vrcp.pop %v1355
        %v1359 = vmul.f32 1.0, %v1358
        %v1360 = vtanh.pop %v1340
        %v1361 = vtanh.pop %v1345
        %v1362 = vmul.f32 %v1357, 0.0
        %v1363 = vmul.f32 %v1359, 0.0
        %1366 = vrot.lane.b32.xlu0 %v1360, 104
        %v1367 = vpop.permute.xlu0 %1366
        %1368 = vrot.lane.b32.xlu0 %v1361, 104
        %v1369 = vpop.permute.xlu0 %1368
        %v1372 = vmul.f32 %v1357, %v1367
        %v1373 = vmul.f32 %v1359, %v1369
        %1376 = vrot.lane.b32.xlu0 %v1372, 8
        %v1377 = vpop.permute.xlu0 %1376
        %1378 = vrot.lane.b32.xlu0 %v1373, 8
        %v1379 = vpop.permute.xlu0 %1378
        %v1382 = vadd.f32 %v1362, %v1377
        %v1383 = vadd.f32 %v1363, %v1379
        %v1384 = vtanh.pop %v1382
        %v1385 = vtanh.pop %v1383
        %1388 = vrot.lane.b32.xlu0 %v1384, 8
        %v1389 = vpop.permute.xlu0 %1388
        %1390 = vrot.lane.b32.xlu0 %v1385, 8
        %v1391 = vpop.permute.xlu0 %1390
        %v1394 = vmul.f32 %v1357, %v1389
        %v1395 = vmul.f32 %v1359, %v1391
        %v1398 = vcombine.high %v1394, %v1394
        %v1399 = vcombine.high %v1395, %v1395
        %1400 = vrot.lane.b32.xlu0 %v1394, 112
        %v1401 = vpop.permute.xlu0 %1400
        %1402 = vrot.lane.b32.xlu0 %v1398, 112
        %v1403 = vpop.permute.xlu0 %1402
        %1404 = vrot.lane.b32.xlu0 %v1395, 112
        %v1405 = vpop.permute.xlu0 %1404
        %1406 = vrot.lane.b32.xlu0 %v1399, 112
        %v1407 = vpop.permute.xlu0 %1406
        %1412 = vst.msk [vmem:[%s875 + $0x1] sm:$0xf] %vm822, %v1401
        %1413 = vst.msk [vmem:[%s875 + $0x9] sm:$0xf] %vm822, %v1403
        %1414 = vst.msk [vmem:[%s875 + $0x11] sm:$0xf] %vm822, %v1405
        %1415 = vst.msk [vmem:[%s875 + $0x19] sm:$0xf] %vm822, %v1407
        %vm1416 = vcmask 195712
        %v1417 = vsel %vm1416, %v1394, 0.0
        %v1418 = vsel %vm1416, %v1395, 0.0
        %v1419 = vadd.f32 %v1417, %v1418
        %v1420 = vrot.slane %v1419, 4
        %v1421 = vadd.f32 %v1419, %v1420
        %v1422 = vrot.slane %v1421, 2
        %v1423 = vadd.f32 %v1421, %v1422
        %v1424 = vrot.slane %v1423, 1
        %v1425 = vadd.f32 %v1423, %v1424
        %s1426 = scalar_lea.vmem %s276, 48
        %v1427 = vld [vmem:[%s1426] sm:$0xff]
        %v1428 = vld [vmem:[%s1426 + $0x8] sm:$0xf]
        %v1429 = vld [vmem:[%s1426 + $0xc] sm:$0xff]
        %v1430 = vld [vmem:[%s1426 + $0x14] sm:$0xf]
        %v1431 = vld [vmem:[%s1426 + $0x18] sm:$0xff]
        %v1432 = vld [vmem:[%s1426 + $0x20] sm:$0xf]
        %v1433 = vld [vmem:[%s1426 + $0x24] sm:$0xff]
        %v1434 = vld [vmem:[%s1426 + $0x2c] sm:$0xf]
        %v1435 = vld [vmem:[#allocation2] sm:$0xf]
        %v1436 = vld [vmem:[#allocation2 + $0x8] sm:$0xf]
        %v1437 = vld [vmem:[#allocation2 + $0x10] sm:$0xf]
        %v1438 = vld [vmem:[#allocation2 + $0x18] sm:$0xf]
        %v1439 = vld [vmem:[#allocation2 + $0x1] sm:$0xf]
        %v1440 = vld [vmem:[#allocation2 + $0x9] sm:$0xf]
        %v1441 = vld [vmem:[#allocation2 + $0x11] sm:$0xf]
        %v1442 = vld [vmem:[#allocation2 + $0x19] sm:$0xf]
        %v1443 = vld [vmem:[#allocation2 + $0x2] sm:$0xf]
        %v1444 = vld [vmem:[#allocation2 + $0xa] sm:$0xf]
        %v1445 = vld [vmem:[#allocation2 + $0x12] sm:$0xf]
        %v1446 = vld [vmem:[#allocation2 + $0x1a] sm:$0xf]
        %v1447 = vld [vmem:[%s310] sm:$0xf]
        %v1448 = vld [vmem:[%s310 + $0x8] sm:$0xf]
        %v1449 = vld [vmem:[%s310 + $0x10] sm:$0xf]
        %v1450 = vld [vmem:[%s310 + $0x18] sm:$0xf]
        %v1451 = vld [vmem:[%s310 + $0x1] sm:$0xf]
        %v1452 = vld [vmem:[%s310 + $0x9] sm:$0xf]
        %v1453 = vld [vmem:[%s310 + $0x11] sm:$0xf]
        %v1454 = vld [vmem:[%s310 + $0x19] sm:$0xf]
        %v1455 = vld [vmem:[%s310 + $0x2] sm:$0xf]
        %v1456 = vld [vmem:[%s310 + $0xa] sm:$0xf]
        %v1457 = vld [vmem:[%s310 + $0x12] sm:$0xf]
        %v1458 = vld [vmem:[%s310 + $0x1a] sm:$0xf]
        %v1459 = vld [vmem:[%s323] sm:$0xf]
        %v1460 = vld [vmem:[%s323 + $0x8] sm:$0xf]
        %v1461 = vld [vmem:[%s323 + $0x10] sm:$0xf]
        %v1462 = vld [vmem:[%s323 + $0x18] sm:$0xf]
        %v1463 = vld [vmem:[%s323 + $0x1] sm:$0xf]
        %v1464 = vld [vmem:[%s323 + $0x9] sm:$0xf]
        %v1465 = vld [vmem:[%s323 + $0x11] sm:$0xf]
        %v1466 = vld [vmem:[%s323 + $0x19] sm:$0xf]
        %v1467 = vld [vmem:[%s323 + $0x2] sm:$0xf]
        %v1468 = vld [vmem:[%s323 + $0xa] sm:$0xf]
        %v1469 = vld [vmem:[%s323 + $0x12] sm:$0xf]
        %v1470 = vld [vmem:[%s323 + $0x1a] sm:$0xf]
        %v1475 = vcombine.high %v1427, %v1427
        %v1476 = vcombine.high %v1429, %v1429
        %v1477 = vcombine.high %v1431, %v1431
        %v1478 = vcombine.high %v1433, %v1433
        %1483 = vrot.lane.b32.xlu0 %v1435, 32
        %v1484 = vpop.permute.xlu0 %1483
        %1485 = vrot.lane.b32.xlu0 %v1436, 32
        %v1486 = vpop.permute.xlu0 %1485
        %1487 = vrot.lane.b32.xlu0 %v1437, 32
        %v1488 = vpop.permute.xlu0 %1487
        %1489 = vrot.lane.b32.xlu0 %v1438, 32
        %v1490 = vpop.permute.xlu0 %1489
        %1499 = vrot.lane.b32.xlu0 %v1439, 40
        %v1500 = vpop.permute.xlu0 %1499
        %1501 = vrot.lane.b32.xlu0 %v1440, 40
        %v1502 = vpop.permute.xlu0 %1501
        %1503 = vrot.lane.b32.xlu0 %v1441, 40
        %v1504 = vpop.permute.xlu0 %1503
        %1505 = vrot.lane.b32.xlu0 %v1442, 40
        %v1506 = vpop.permute.xlu0 %1505
        %1515 = vrot.lane.b32.xlu0 %v1443, 48
        %v1516 = vpop.permute.xlu0 %1515
        %1517 = vrot.lane.b32.xlu0 %v1444, 48
        %v1518 = vpop.permute.xlu0 %1517
        %1519 = vrot.lane.b32.xlu0 %v1445, 48
        %v1520 = vpop.permute.xlu0 %1519
        %1521 = vrot.lane.b32.xlu0 %v1446, 48
        %v1522 = vpop.permute.xlu0 %1521
        %1531 = vrot.lane.b32.xlu0 %v1447, 56
        %v1532 = vpop.permute.xlu0 %1531
        %1533 = vrot.lane.b32.xlu0 %v1448, 56
        %v1534 = vpop.permute.xlu0 %1533
        %1535 = vrot.lane.b32.xlu0 %v1449, 56
        %v1536 = vpop.permute.xlu0 %1535
        %1537 = vrot.lane.b32.xlu0 %v1450, 56
        %v1538 = vpop.permute.xlu0 %1537
        %1547 = vrot.lane.b32.xlu0 %v1451, 64
        %v1548 = vpop.permute.xlu0 %1547
        %1549 = vrot.lane.b32.xlu0 %v1452, 64
        %v1550 = vpop.permute.xlu0 %1549
        %1551 = vrot.lane.b32.xlu0 %v1453, 64
        %v1552 = vpop.permute.xlu0 %1551
        %1553 = vrot.lane.b32.xlu0 %v1454, 64
        %v1554 = vpop.permute.xlu0 %1553
        %1563 = vrot.lane.b32.xlu0 %v1455, 72
        %v1564 = vpop.permute.xlu0 %1563
        %1565 = vrot.lane.b32.xlu0 %v1456, 72
        %v1566 = vpop.permute.xlu0 %1565
        %1567 = vrot.lane.b32.xlu0 %v1457, 72
        %v1568 = vpop.permute.xlu0 %1567
        %1569 = vrot.lane.b32.xlu0 %v1458, 72
        %v1570 = vpop.permute.xlu0 %1569
        %1579 = vrot.lane.b32.xlu0 %v1459, 80
        %v1580 = vpop.permute.xlu0 %1579
        %1581 = vrot.lane.b32.xlu0 %v1460, 80
        %v1582 = vpop.permute.xlu0 %1581
        %1583 = vrot.lane.b32.xlu0 %v1461, 80
        %v1584 = vpop.permute.xlu0 %1583
        %1585 = vrot.lane.b32.xlu0 %v1462, 80
        %v1586 = vpop.permute.xlu0 %1585
        %1595 = vrot.lane.b32.xlu0 %v1463, 88
        %v1596 = vpop.permute.xlu0 %1595
        %1597 = vrot.lane.b32.xlu0 %v1464, 88
        %v1598 = vpop.permute.xlu0 %1597
        %1599 = vrot.lane.b32.xlu0 %v1465, 88
        %v1600 = vpop.permute.xlu0 %1599
        %1601 = vrot.lane.b32.xlu0 %v1466, 88
        %v1602 = vpop.permute.xlu0 %1601
        %1611 = vrot.lane.b32.xlu0 %v1467, 96
        %v1612 = vpop.permute.xlu0 %1611
        %1613 = vrot.lane.b32.xlu0 %v1468, 96
        %v1614 = vpop.permute.xlu0 %1613
        %1615 = vrot.lane.b32.xlu0 %v1469, 96
        %v1616 = vpop.permute.xlu0 %1615
        %1617 = vrot.lane.b32.xlu0 %v1470, 96
        %v1618 = vpop.permute.xlu0 %1617
        %v1623 = vsel %vm488, %v1428, %v1484
        %v1624 = vsel %vm488, %v1430, %v1486
        %v1625 = vsel %vm488, %v1432, %v1488
        %v1626 = vsel %vm488, %v1434, %v1490
        %v1627 = vsel %vm493, %v1623, %v1500
        %v1628 = vsel %vm493, %v1624, %v1502
        %v1629 = vsel %vm493, %v1625, %v1504
        %v1630 = vsel %vm493, %v1626, %v1506
        %v1631 = vsel %vm498, %v1627, %v1516
        %v1632 = vsel %vm498, %v1628, %v1518
        %v1633 = vsel %vm498, %v1629, %v1520
        %v1634 = vsel %vm498, %v1630, %v1522
        %v1635 = vsel %vm503, %v1631, %v1532
        %v1636 = vsel %vm503, %v1632, %v1534
        %v1637 = vsel %vm503, %v1633, %v1536
        %v1638 = vsel %vm503, %v1634, %v1538
        %v1639 = vsel %vm508, %v1635, %v1548
        %v1640 = vsel %vm508, %v1636, %v1550
        %v1641 = vsel %vm508, %v1637, %v1552
        %v1642 = vsel %vm508, %v1638, %v1554
        %v1643 = vsel %vm513, %v1639, %v1564
        %v1644 = vsel %vm513, %v1640, %v1566
        %v1645 = vsel %vm513, %v1641, %v1568
        %v1646 = vsel %vm513, %v1642, %v1570
        %v1647 = vsel %vm518, %v1643, %v1580
        %v1648 = vsel %vm518, %v1644, %v1582
        %v1649 = vsel %vm518, %v1645, %v1584
        %v1650 = vsel %vm518, %v1646, %v1586
        %v1651 = vsel %vm523, %v1647, %v1596
        %v1652 = vsel %vm523, %v1648, %v1598
        %v1653 = vsel %vm523, %v1649, %v1600
        %v1654 = vsel %vm523, %v1650, %v1602
        %v1655 = vsel %vm528, %v1651, %v1612
        %v1656 = vsel %vm528, %v1652, %v1614
        %v1657 = vsel %vm528, %v1653, %v1616
        %v1658 = vsel %vm528, %v1654, %v1618
        %v1663 = vcombine.low %v1427, %v1475
        %v1664 = vcombine.low %v1429, %v1476
        %v1665 = vcombine.low %v1431, %v1477
        %v1666 = vcombine.low %v1433, %v1478
        %v1667 = vld [vmem:[%s1] sm:$0xff]
        %v1668 = vld [vmem:[%s1 + $0x8] sm:$0xff]
        %v1669 = vld [vmem:[%s1 + $0x10] sm:$0xff]
        %v1670 = vld [vmem:[%s1 + $0x18] sm:$0xff]
        %v1671 = vld [vmem:[%s1 + $0x20] sm:$0xff]
        %v1672 = vld [vmem:[%s1 + $0x28] sm:$0xff]
        %v1673 = vld [vmem:[%s1 + $0x30] sm:$0xff]
        %v1674 = vld [vmem:[%s1 + $0x38] sm:$0xff]
        %v1675 = vld [vmem:[%s1 + $0x40] sm:$0xff]
        %v1676 = vld [vmem:[%s1 + $0x48] sm:$0xff]
        %v1677 = vld [vmem:[%s1 + $0x50] sm:$0xff]
        %v1678 = vld [vmem:[%s1 + $0x58] sm:$0xff]
        %v1679 = vld [vmem:[%s1 + $0x60] sm:$0xff]
        %v1680 = vld [vmem:[%s1 + $0x68] sm:$0xff]
        %v1681 = vld [vmem:[%s1 + $0x70] sm:$0xff]
        %v1682 = vld [vmem:[%s1 + $0x78] sm:$0xff]
        %v1683 = vld [vmem:[%s1 + $0x80] sm:$0xff]
        %v1684 = vld [vmem:[%s1 + $0x88] sm:$0xff]
        %v1685 = vld [vmem:[%s1 + $0x90] sm:$0xff]
        %v1686 = vld [vmem:[%s1 + $0x98] sm:$0xff]
        %v1687 = vld [vmem:[%s1 + $0xa0] sm:$0xff]
        %v1688 = vld [vmem:[%s1 + $0xa8] sm:$0xff]
        %v1689 = vld [vmem:[%s1 + $0xb0] sm:$0xff]
        %v1690 = vld [vmem:[%s1 + $0xb8] sm:$0xff]
        %v1691 = vld [vmem:[%s1 + $0xc0] sm:$0xff]
        %v1692 = vld [vmem:[%s1 + $0xc8] sm:$0xff]
        %v1693 = vld [vmem:[%s1 + $0xd0] sm:$0xff]
        %v1694 = vld [vmem:[%s1 + $0xd8] sm:$0xff]
        %v1695 = vld [vmem:[%s1 + $0xe0] sm:$0xff]
        %v1696 = vld [vmem:[%s1 + $0xe8] sm:$0xff]
        %v1697 = vld [vmem:[%s1 + $0xf0] sm:$0xff]
        %v1698 = vld [vmem:[%s1 + $0xf8] sm:$0xff]
        %v1699 = vld [vmem:[%s1 + $0x100] sm:$0xff]
        %v1700 = vld [vmem:[%s1 + $0x108] sm:$0xff]
        %v1701 = vld [vmem:[%s1 + $0x110] sm:$0xff]
        %v1702 = vld [vmem:[%s1 + $0x118] sm:$0xff]
        %v1703 = vld [vmem:[%s1 + $0x120] sm:$0xff]
        %v1704 = vld [vmem:[%s1 + $0x128] sm:$0xff]
        %v1705 = vld [vmem:[%s1 + $0x130] sm:$0xff]
        %v1706 = vld [vmem:[%s1 + $0x138] sm:$0xff]
        %v1707 = vld [vmem:[%s1 + $0x140] sm:$0xff]
        %v1708 = vld [vmem:[%s1 + $0x148] sm:$0xff]
        %v1709 = vld [vmem:[%s1 + $0x150] sm:$0xff]
        %v1710 = vld [vmem:[%s1 + $0x158] sm:$0xff]
        %v1711 = vld [vmem:[%s1 + $0x160] sm:$0xff]
        %v1712 = vld [vmem:[%s2] sm:$0x1]
        %v1714 = vlaneseq
        %v1715 = vshrl.u32 %v1714, 7
        %v1716 = vsub.s32 0, %v1715
        %v1717 = vrot.slane %v1712, %v1716
        %v1719 = vcombine.low %v1663, %v1664
        %v1720 = vcombine.high %v1663, %v1664
        %v1721 = vcombine.low %v1655, %v1656
        %v1722 = vcombine.low %v1665, %v1666
        %v1723 = vcombine.high %v1665, %v1666
        %v1724 = vcombine.low %v1657, %v1658
        %v1729 = vsel %vm603, %v1721, 0
        %v1731 = vsel %vm603, %v1724, 0
        %1733 = vmatprep.subr.mxu0 0.0
        %1734 = vmatpush1.msra.mxu0 %v1682
        %1735 = vmatprep.subr.mxu0 0.0
        %1736 = vmatpush1.msra.mxu0 %v1681
        %1737 = vmatprep.subr.mxu0 0.0
        %1738 = vmatpush1.msra.mxu0 %v1680
        %1739 = vmatprep.subr.mxu0 0.0
        %1740 = vmatpush1.msra.mxu0 %v1679
        %1741 = vmatprep.subr.mxu0 0.0
        %1742 = vmatpush1.msra.mxu0 %v1678
        %1743 = vmatprep.subr.mxu0 0.0
        %1744 = vmatpush1.msra.mxu0 %v1677
        %1745 = vmatprep.subr.mxu0 0.0
        %1746 = vmatpush1.msra.mxu0 %v1676
        %1747 = vmatprep.subr.mxu0 0.0
        %1748 = vmatpush1.msra.mxu0 %v1675
        %1749 = vmatprep.subr.mxu0 0.0
        %1750 = vmatpush1.msra.mxu0 %v1674
        %1751 = vmatprep.subr.mxu0 0.0
        %1752 = vmatpush1.msra.mxu0 %v1673
        %1753 = vmatprep.subr.mxu0 0.0
        %1754 = vmatpush1.msra.mxu0 %v1672
        %1755 = vmatprep.subr.mxu0 0.0
        %1756 = vmatpush1.msra.mxu0 %v1671
        %1757 = vmatprep.subr.mxu0 0.0
        %1758 = vmatpush1.msra.mxu0 %v1670
        %1759 = vmatprep.subr.mxu0 0.0
        %1760 = vmatpush1.msra.mxu0 %v1669
        %1761 = vmatprep.subr.mxu0 0.0
        %1762 = vmatpush1.msra.mxu0 %v1668
        %1763 = vmatprep.subr.mxu0 0.0
        %1764 = vmatpush1.msra.mxu0 %v1667
        %1765 = vmatprep.subr.mxu0 0.0
        %1766 = vmatpush2.msra.mxu0 %v1698
        %1767 = vmatprep.subr.mxu0 0.0
        %1768 = vmatpush2.msra.mxu0 %v1697
        %1769 = vmatprep.subr.mxu0 0.0
        %1770 = vmatpush2.msra.mxu0 %v1696
        %1771 = vmatprep.subr.mxu0 0.0
        %1772 = vmatpush2.msra.mxu0 %v1695
        %1773 = vmatprep.subr.mxu0 0.0
        %1774 = vmatpush2.msra.mxu0 %v1694
        %1775 = vmatprep.subr.mxu0 0.0
        %1776 = vmatpush2.msra.mxu0 %v1693
        %1777 = vmatprep.subr.mxu0 0.0
        %1778 = vmatpush2.msra.mxu0 %v1692
        %1779 = vmatprep.subr.mxu0 0.0
        %1780 = vmatpush2.msra.mxu0 %v1691
        %1781 = vmatprep.subr.mxu0 0.0
        %1782 = vmatpush2.msra.mxu0 %v1690
        %1783 = vmatprep.subr.mxu0 0.0
        %1784 = vmatpush2.msra.mxu0 %v1689
        %1785 = vmatprep.subr.mxu0 0.0
        %1786 = vmatpush2.msra.mxu0 %v1688
        %1787 = vmatprep.subr.mxu0 0.0
        %1788 = vmatpush2.msra.mxu0 %v1687
        %1789 = vmatprep.subr.mxu0 0.0
        %1790 = vmatpush2.msra.mxu0 %v1686
        %1791 = vmatprep.subr.mxu0 0.0
        %1792 = vmatpush2.msra.mxu0 %v1685
        %1793 = vmatprep.subr.mxu0 0.0
        %1794 = vmatpush2.msra.mxu0 %v1684
        %1795 = vmatprep.subr.mxu0 0.0
        %1796 = vmatpush2.msra.mxu0 %v1683
        %1797 = vmatprep.mubr.f32.mxu0 %v1720
        %1798 = vmatmul.mubr.f32.gmra.mxu0 %v1719
        %v1799 = vpop.f32.mrf.mxu0
        %v1800 = vadd.f32 %v1717, %v1799
        %v1801 = vpop.f32.mrf.mxu0
        %1802 = vmatprep.mubr.f32.mxu0 %v1723
        %1803 = vmatmul.mubr.f32.gmra.mxu0 %v1722
        %v1804 = vpop.f32.mrf.mxu0
        %v1805 = vadd.f32 %v1717, %v1804
        %v1806 = vpop.f32.mrf.mxu0
        %1807 = vdwg.mxu0
        %1808 = vmatprep.subr.mxu0 0.0
        %1809 = vmatpush1.msra.mxu0 0.0
        %1810 = vmatprep.subr.mxu0 0.0
        %1811 = vmatpush1.msra.mxu0 0.0
        %1812 = vmatprep.subr.mxu0 0.0
        %1813 = vmatpush1.msra.mxu0 0.0
        %1814 = vmatprep.subr.mxu0 0.0
        %1815 = vmatpush1.msra.mxu0 %v1711
        %1816 = vmatprep.subr.mxu0 0.0
        %1817 = vmatpush1.msra.mxu0 %v1710
        %1818 = vmatprep.subr.mxu0 0.0
        %1819 = vmatpush1.msra.mxu0 %v1709
        %1820 = vmatprep.subr.mxu0 0.0
        %1821 = vmatpush1.msra.mxu0 %v1708
        %1822 = vmatprep.subr.mxu0 0.0
        %1823 = vmatpush1.msra.mxu0 %v1707
        %1824 = vmatprep.subr.mxu0 0.0
        %1825 = vmatpush1.msra.mxu0 %v1706
        %1826 = vmatprep.subr.mxu0 0.0
        %1827 = vmatpush1.msra.mxu0 %v1705
        %1828 = vmatprep.subr.mxu0 0.0
        %1829 = vmatpush1.msra.mxu0 %v1704
        %1830 = vmatprep.subr.mxu0 0.0
        %1831 = vmatpush1.msra.mxu0 %v1703
        %1832 = vmatprep.subr.mxu0 0.0
        %1833 = vmatpush1.msra.mxu0 %v1702
        %1834 = vmatprep.subr.mxu0 0.0
        %1835 = vmatpush1.msra.mxu0 %v1701
        %1836 = vmatprep.subr.mxu0 0.0
        %1837 = vmatpush1.msra.mxu0 %v1700
        %1838 = vmatprep.subr.mxu0 0.0
        %1839 = vmatpush1.msra.mxu0 %v1699
        %1840 = vmatprep.subr.mxu0 0.0
        %1841 = vmatpush2.msra.mxu0 0.0
        %1842 = vmatprep.subr.mxu0 0.0
        %1843 = vmatpush2.msra.mxu0 0.0
        %1844 = vmatprep.subr.mxu0 0.0
        %1845 = vmatpush2.msra.mxu0 0.0
        %1846 = vmatprep.subr.mxu0 0.0
        %1847 = vmatpush2.msra.mxu0 0.0
        %1848 = vmatprep.subr.mxu0 0.0
        %1849 = vmatpush2.msra.mxu0 0.0
        %1850 = vmatprep.subr.mxu0 0.0
        %1851 = vmatpush2.msra.mxu0 0.0
        %1852 = vmatprep.subr.mxu0 0.0
        %1853 = vmatpush2.msra.mxu0 0.0
        %1854 = vmatprep.subr.mxu0 0.0
        %1855 = vmatpush2.msra.mxu0 0.0
        %1856 = vmatprep.subr.mxu0 0.0
        %1857 = vmatpush2.msra.mxu0 0.0
        %1858 = vmatprep.subr.mxu0 0.0
        %1859 = vmatpush2.msra.mxu0 0.0
        %1860 = vmatprep.subr.mxu0 0.0
        %1861 = vmatpush2.msra.mxu0 0.0
        %1862 = vmatprep.subr.mxu0 0.0
        %1863 = vmatpush2.msra.mxu0 0.0
        %1864 = vmatprep.subr.mxu0 0.0
        %1865 = vmatpush2.msra.mxu0 0.0
        %1866 = vmatprep.subr.mxu0 0.0
        %1867 = vmatpush2.msra.mxu0 0.0
        %1868 = vmatprep.subr.mxu0 0.0
        %1869 = vmatpush2.msra.mxu0 0.0
        %1870 = vmatprep.subr.mxu0 0.0
        %1871 = vmatpush2.msra.mxu0 0.0
        %1872 = vmatprep.mubr.f32.mxu0 0.0
        %1873 = vmatmul.mubr.f32.gmra.mxu0 %v1729
        %v1874 = vpop.f32.mrf.mxu0
        %v1875 = vadd.f32 %v1800, %v1874
        %v1876 = vpop.f32.mrf.mxu0
        %1877 = vmatprep.mubr.f32.mxu0 0.0
        %1878 = vmatmul.mubr.f32.gmra.mxu0 %v1731
        %v1879 = vpop.f32.mrf.mxu0
        %v1880 = vadd.f32 %v1805, %v1879
        %v1881 = vpop.f32.mrf.mxu0
        %1882 = vdwg.mxu0
        %v1883 = vxor.u32 %v1875, 2147483648
        %v1884 = vxor.u32 %v1880, 2147483648
        %v1885 = vmul.f32 %v1883, 1.442695
        %v1886 = vpow.pop %v1885
        %v1887 = vmul.f32 %v1884, 1.442695
        %v1888 = vpow.pop %v1887
        %v1889 = vadd.f32 %v1886, 1.0
        %v1890 = vadd.f32 %v1888, 1.0
        %v1891 = vrcp.pop %v1889
        %v1892 = vmul.f32 1.0, %v1891
        %v1893 = vrcp.pop %v1890
        %v1894 = vmul.f32 1.0, %v1893
        %v1895 = vtanh.pop %v1875
        %v1896 = vtanh.pop %v1880
        %v1897 = vmul.f32 %v1892, %v792
        %v1898 = vmul.f32 %v1894, %v793
        %1901 = vrot.lane.b32.xlu0 %v1895, 104
        %v1902 = vpop.permute.xlu0 %1901
        %1903 = vrot.lane.b32.xlu0 %v1896, 104
        %v1904 = vpop.permute.xlu0 %1903
        %v1907 = vmul.f32 %v1892, %v1902
        %v1908 = vmul.f32 %v1894, %v1904
        %1911 = vrot.lane.b32.xlu0 %v1907, 8
        %v1912 = vpop.permute.xlu0 %1911
        %1913 = vrot.lane.b32.xlu0 %v1908, 8
        %v1914 = vpop.permute.xlu0 %1913
        %v1917 = vadd.f32 %v1897, %v1912
        %v1918 = vadd.f32 %v1898, %v1914
        %v1919 = vtanh.pop %v1917
        %v1920 = vtanh.pop %v1918
        %1923 = vrot.lane.b32.xlu0 %v1919, 8
        %v1924 = vpop.permute.xlu0 %1923
        %1925 = vrot.lane.b32.xlu0 %v1920, 8
        %v1926 = vpop.permute.xlu0 %1925
        %v1929 = vmul.f32 %v1892, %v1924
        %v1930 = vmul.f32 %v1894, %v1926
        %v1933 = vcombine.high %v1929, %v1929
        %v1934 = vcombine.high %v1930, %v1930
        %1935 = vrot.lane.b32.xlu0 %v1929, 112
        %v1936 = vpop.permute.xlu0 %1935
        %1937 = vrot.lane.b32.xlu0 %v1933, 112
        %v1938 = vpop.permute.xlu0 %1937
        %1939 = vrot.lane.b32.xlu0 %v1930, 112
        %v1940 = vpop.permute.xlu0 %1939
        %1941 = vrot.lane.b32.xlu0 %v1934, 112
        %v1942 = vpop.permute.xlu0 %1941
        %1947 = vst.msk [vmem:[%s310 + $0x1] sm:$0xf] %vm822, %v1936
        %1948 = vst.msk [vmem:[%s310 + $0x9] sm:$0xf] %vm822, %v1938
        %1949 = vst.msk [vmem:[%s310 + $0x11] sm:$0xf] %vm822, %v1940
        %1950 = vst.msk [vmem:[%s310 + $0x19] sm:$0xf] %vm822, %v1942
        %v1951 = vld [vmem:[#allocation2] sm:$0xf]
        %v1952 = vld [vmem:[#allocation2 + $0x8] sm:$0xf]
        %v1953 = vld [vmem:[#allocation2 + $0x10] sm:$0xf]
        %v1954 = vld [vmem:[#allocation2 + $0x18] sm:$0xf]
        %v1955 = vld [vmem:[#allocation2 + $0x1] sm:$0xf]
        %v1956 = vld [vmem:[#allocation2 + $0x9] sm:$0xf]
        %v1957 = vld [vmem:[#allocation2 + $0x11] sm:$0xf]
        %v1958 = vld [vmem:[#allocation2 + $0x19] sm:$0xf]
        %v1959 = vld [vmem:[#allocation2 + $0x2] sm:$0xf]
        %v1960 = vld [vmem:[#allocation2 + $0xa] sm:$0xf]
        %v1961 = vld [vmem:[#allocation2 + $0x12] sm:$0xf]
        %v1962 = vld [vmem:[#allocation2 + $0x1a] sm:$0xf]
        %v1963 = vld [vmem:[%s310] sm:$0xf]
        %v1964 = vld [vmem:[%s310 + $0x8] sm:$0xf]
        %v1965 = vld [vmem:[%s310 + $0x10] sm:$0xf]
        %v1966 = vld [vmem:[%s310 + $0x18] sm:$0xf]
        %v1967 = vld [vmem:[%s310 + $0x1] sm:$0xf]
        %v1968 = vld [vmem:[%s310 + $0x9] sm:$0xf]
        %v1969 = vld [vmem:[%s310 + $0x11] sm:$0xf]
        %v1970 = vld [vmem:[%s310 + $0x19] sm:$0xf]
        %v1971 = vld [vmem:[%s310 + $0x2] sm:$0xf]
        %v1972 = vld [vmem:[%s310 + $0xa] sm:$0xf]
        %v1973 = vld [vmem:[%s310 + $0x12] sm:$0xf]
        %v1974 = vld [vmem:[%s310 + $0x1a] sm:$0xf]
        %v1975 = vld [vmem:[%s323] sm:$0xf]
        %v1976 = vld [vmem:[%s323 + $0x8] sm:$0xf]
        %v1977 = vld [vmem:[%s323 + $0x10] sm:$0xf]
        %v1978 = vld [vmem:[%s323 + $0x18] sm:$0xf]
        %v1979 = vld [vmem:[%s323 + $0x1] sm:$0xf]
        %v1980 = vld [vmem:[%s323 + $0x9] sm:$0xf]
        %v1981 = vld [vmem:[%s323 + $0x11] sm:$0xf]
        %v1982 = vld [vmem:[%s323 + $0x19] sm:$0xf]
        %v1983 = vld [vmem:[%s323 + $0x2] sm:$0xf]
        %v1984 = vld [vmem:[%s323 + $0xa] sm:$0xf]
        %v1985 = vld [vmem:[%s323 + $0x12] sm:$0xf]
        %v1986 = vld [vmem:[%s323 + $0x1a] sm:$0xf]
        %v1987 = vld [vmem:[#allocation3] sm:$0xf]
        %v1988 = vld [vmem:[#allocation3 + $0x8] sm:$0xf]
        %v1989 = vld [vmem:[#allocation3 + $0x10] sm:$0xf]
        %v1990 = vld [vmem:[#allocation3 + $0x18] sm:$0xf]
        %v1991 = vld [vmem:[#allocation3 + $0x1] sm:$0xf]
        %v1992 = vld [vmem:[#allocation3 + $0x9] sm:$0xf]
        %v1993 = vld [vmem:[#allocation3 + $0x11] sm:$0xf]
        %v1994 = vld [vmem:[#allocation3 + $0x19] sm:$0xf]
        %v1995 = vld [vmem:[#allocation3 + $0x2] sm:$0xf]
        %v1996 = vld [vmem:[#allocation3 + $0xa] sm:$0xf]
        %v1997 = vld [vmem:[#allocation3 + $0x12] sm:$0xf]
        %v1998 = vld [vmem:[#allocation3 + $0x1a] sm:$0xf]
        %v1999 = vld [vmem:[%s875] sm:$0xf]
        %v2000 = vld [vmem:[%s875 + $0x8] sm:$0xf]
        %v2001 = vld [vmem:[%s875 + $0x10] sm:$0xf]
        %v2002 = vld [vmem:[%s875 + $0x18] sm:$0xf]
        %v2003 = vld [vmem:[%s875 + $0x1] sm:$0xf]
        %v2004 = vld [vmem:[%s875 + $0x9] sm:$0xf]
        %v2005 = vld [vmem:[%s875 + $0x11] sm:$0xf]
        %v2006 = vld [vmem:[%s875 + $0x19] sm:$0xf]
        %v2007 = vld [vmem:[%s875 + $0x2] sm:$0xf]
        %v2008 = vld [vmem:[%s875 + $0xa] sm:$0xf]
        %v2009 = vld [vmem:[%s875 + $0x12] sm:$0xf]
        %v2010 = vld [vmem:[%s875 + $0x1a] sm:$0xf]
        %v2011 = vld [vmem:[%s888] sm:$0xf]
        %v2012 = vld [vmem:[%s888 + $0x8] sm:$0xf]
        %v2013 = vld [vmem:[%s888 + $0x10] sm:$0xf]
        %v2014 = vld [vmem:[%s888 + $0x18] sm:$0xf]
        %v2015 = vld [vmem:[%s888 + $0x1] sm:$0xf]
        %v2016 = vld [vmem:[%s888 + $0x9] sm:$0xf]
        %v2017 = vld [vmem:[%s888 + $0x11] sm:$0xf]
        %v2018 = vld [vmem:[%s888 + $0x19] sm:$0xf]
        %v2019 = vld [vmem:[%s888 + $0x2] sm:$0xf]
        %v2020 = vld [vmem:[%s888 + $0xa] sm:$0xf]
        %v2021 = vld [vmem:[%s888 + $0x12] sm:$0xf]
        %v2022 = vld [vmem:[%s888 + $0x1a] sm:$0xf]
        %2027 = vrot.lane.b32.xlu0 %v1955, 8
        %v2028 = vpop.permute.xlu0 %2027
        %2029 = vrot.lane.b32.xlu0 %v1956, 8
        %v2030 = vpop.permute.xlu0 %2029
        %2031 = vrot.lane.b32.xlu0 %v1957, 8
        %v2032 = vpop.permute.xlu0 %2031
        %2033 = vrot.lane.b32.xlu0 %v1958, 8
        %v2034 = vpop.permute.xlu0 %2033
        %2043 = vrot.lane.b32.xlu0 %v1959, 16
        %v2044 = vpop.permute.xlu0 %2043
        %2045 = vrot.lane.b32.xlu0 %v1960, 16
        %v2046 = vpop.permute.xlu0 %2045
        %2047 = vrot.lane.b32.xlu0 %v1961, 16
        %v2048 = vpop.permute.xlu0 %2047
        %2049 = vrot.lane.b32.xlu0 %v1962, 16
        %v2050 = vpop.permute.xlu0 %2049
        %2059 = vrot.lane.b32.xlu0 %v1963, 24
        %v2060 = vpop.permute.xlu0 %2059
        %2061 = vrot.lane.b32.xlu0 %v1964, 24
        %v2062 = vpop.permute.xlu0 %2061
        %2063 = vrot.lane.b32.xlu0 %v1965, 24
        %v2064 = vpop.permute.xlu0 %2063
        %2065 = vrot.lane.b32.xlu0 %v1966, 24
        %v2066 = vpop.permute.xlu0 %2065
        %2075 = vrot.lane.b32.xlu0 %v1967, 32
        %v2076 = vpop.permute.xlu0 %2075
        %2077 = vrot.lane.b32.xlu0 %v1968, 32
        %v2078 = vpop.permute.xlu0 %2077
        %2079 = vrot.lane.b32.xlu0 %v1969, 32
        %v2080 = vpop.permute.xlu0 %2079
        %2081 = vrot.lane.b32.xlu0 %v1970, 32
        %v2082 = vpop.permute.xlu0 %2081
        %2091 = vrot.lane.b32.xlu0 %v1971, 40
        %v2092 = vpop.permute.xlu0 %2091
        %2093 = vrot.lane.b32.xlu0 %v1972, 40
        %v2094 = vpop.permute.xlu0 %2093
        %2095 = vrot.lane.b32.xlu0 %v1973, 40
        %v2096 = vpop.permute.xlu0 %2095
        %2097 = vrot.lane.b32.xlu0 %v1974, 40
        %v2098 = vpop.permute.xlu0 %2097
        %2107 = vrot.lane.b32.xlu0 %v1975, 48
        %v2108 = vpop.permute.xlu0 %2107
        %2109 = vrot.lane.b32.xlu0 %v1976, 48
        %v2110 = vpop.permute.xlu0 %2109
        %2111 = vrot.lane.b32.xlu0 %v1977, 48
        %v2112 = vpop.permute.xlu0 %2111
        %2113 = vrot.lane.b32.xlu0 %v1978, 48
        %v2114 = vpop.permute.xlu0 %2113
        %2123 = vrot.lane.b32.xlu0 %v1979, 56
        %v2124 = vpop.permute.xlu0 %2123
        %2125 = vrot.lane.b32.xlu0 %v1980, 56
        %v2126 = vpop.permute.xlu0 %2125
        %2127 = vrot.lane.b32.xlu0 %v1981, 56
        %v2128 = vpop.permute.xlu0 %2127
        %2129 = vrot.lane.b32.xlu0 %v1982, 56
        %v2130 = vpop.permute.xlu0 %2129
        %2139 = vrot.lane.b32.xlu0 %v1983, 64
        %v2140 = vpop.permute.xlu0 %2139
        %2141 = vrot.lane.b32.xlu0 %v1984, 64
        %v2142 = vpop.permute.xlu0 %2141
        %2143 = vrot.lane.b32.xlu0 %v1985, 64
        %v2144 = vpop.permute.xlu0 %2143
        %2145 = vrot.lane.b32.xlu0 %v1986, 64
        %v2146 = vpop.permute.xlu0 %2145
        %2155 = vrot.lane.b32.xlu0 %v1987, 72
        %v2156 = vpop.permute.xlu0 %2155
        %2157 = vrot.lane.b32.xlu0 %v1988, 72
        %v2158 = vpop.permute.xlu0 %2157
        %2159 = vrot.lane.b32.xlu0 %v1989, 72
        %v2160 = vpop.permute.xlu0 %2159
        %2161 = vrot.lane.b32.xlu0 %v1990, 72
        %v2162 = vpop.permute.xlu0 %2161
        %2171 = vrot.lane.b32.xlu0 %v1991, 80
        %v2172 = vpop.permute.xlu0 %2171
        %2173 = vrot.lane.b32.xlu0 %v1992, 80
        %v2174 = vpop.permute.xlu0 %2173
        %2175 = vrot.lane.b32.xlu0 %v1993, 80
        %v2176 = vpop.permute.xlu0 %2175
        %2177 = vrot.lane.b32.xlu0 %v1994, 80
        %v2178 = vpop.permute.xlu0 %2177
        %2187 = vrot.lane.b32.xlu0 %v1995, 88
        %v2188 = vpop.permute.xlu0 %2187
        %2189 = vrot.lane.b32.xlu0 %v1996, 88
        %v2190 = vpop.permute.xlu0 %2189
        %2191 = vrot.lane.b32.xlu0 %v1997, 88
        %v2192 = vpop.permute.xlu0 %2191
        %2193 = vrot.lane.b32.xlu0 %v1998, 88
        %v2194 = vpop.permute.xlu0 %2193
        %2203 = vrot.lane.b32.xlu0 %v1999, 96
        %v2204 = vpop.permute.xlu0 %2203
        %2205 = vrot.lane.b32.xlu0 %v2000, 96
        %v2206 = vpop.permute.xlu0 %2205
        %2207 = vrot.lane.b32.xlu0 %v2001, 96
        %v2208 = vpop.permute.xlu0 %2207
        %2209 = vrot.lane.b32.xlu0 %v2002, 96
        %v2210 = vpop.permute.xlu0 %2209
        %2219 = vrot.lane.b32.xlu0 %v2003, 104
        %v2220 = vpop.permute.xlu0 %2219
        %2221 = vrot.lane.b32.xlu0 %v2004, 104
        %v2222 = vpop.permute.xlu0 %2221
        %2223 = vrot.lane.b32.xlu0 %v2005, 104
        %v2224 = vpop.permute.xlu0 %2223
        %2225 = vrot.lane.b32.xlu0 %v2006, 104
        %v2226 = vpop.permute.xlu0 %2225
        %2235 = vrot.lane.b32.xlu0 %v2007, 112
        %v2236 = vpop.permute.xlu0 %2235
        %2237 = vrot.lane.b32.xlu0 %v2008, 112
        %v2238 = vpop.permute.xlu0 %2237
        %2239 = vrot.lane.b32.xlu0 %v2009, 112
        %v2240 = vpop.permute.xlu0 %2239
        %2241 = vrot.lane.b32.xlu0 %v2010, 112
        %v2242 = vpop.permute.xlu0 %2241
        %2251 = vrot.lane.b32.xlu0 %v2011, 120
        %v2252 = vpop.permute.xlu0 %2251
        %2253 = vrot.lane.b32.xlu0 %v2012, 120
        %v2254 = vpop.permute.xlu0 %2253
        %2255 = vrot.lane.b32.xlu0 %v2013, 120
        %v2256 = vpop.permute.xlu0 %2255
        %2257 = vrot.lane.b32.xlu0 %v2014, 120
        %v2258 = vpop.permute.xlu0 %2257
        %v2263 = vsel %vm1141, %v1951, %v2028
        %v2264 = vsel %vm1141, %v1952, %v2030
        %v2265 = vsel %vm1141, %v1953, %v2032
        %v2266 = vsel %vm1141, %v1954, %v2034
        %v2267 = vsel %vm1146, %v2263, %v2044
        %v2268 = vsel %vm1146, %v2264, %v2046
        %v2269 = vsel %vm1146, %v2265, %v2048
        %v2270 = vsel %vm1146, %v2266, %v2050
        %v2271 = vsel %vm1151, %v2267, %v2060
        %v2272 = vsel %vm1151, %v2268, %v2062
        %v2273 = vsel %vm1151, %v2269, %v2064
        %v2274 = vsel %vm1151, %v2270, %v2066
        %v2275 = vsel %vm488, %v2271, %v2076
        %v2276 = vsel %vm488, %v2272, %v2078
        %v2277 = vsel %vm488, %v2273, %v2080
        %v2278 = vsel %vm488, %v2274, %v2082
        %v2279 = vsel %vm493, %v2275, %v2092
        %v2280 = vsel %vm493, %v2276, %v2094
        %v2281 = vsel %vm493, %v2277, %v2096
        %v2282 = vsel %vm493, %v2278, %v2098
        %v2283 = vsel %vm498, %v2279, %v2108
        %v2284 = vsel %vm498, %v2280, %v2110
        %v2285 = vsel %vm498, %v2281, %v2112
        %v2286 = vsel %vm498, %v2282, %v2114
        %v2287 = vsel %vm503, %v2283, %v2124
        %v2288 = vsel %vm503, %v2284, %v2126
        %v2289 = vsel %vm503, %v2285, %v2128
        %v2290 = vsel %vm503, %v2286, %v2130
        %v2291 = vsel %vm508, %v2287, %v2140
        %v2292 = vsel %vm508, %v2288, %v2142
        %v2293 = vsel %vm508, %v2289, %v2144
        %v2294 = vsel %vm508, %v2290, %v2146
        %v2295 = vsel %vm513, %v2291, %v2156
        %v2296 = vsel %vm513, %v2292, %v2158
        %v2297 = vsel %vm513, %v2293, %v2160
        %v2298 = vsel %vm513, %v2294, %v2162
        %v2299 = vsel %vm518, %v2295, %v2172
        %v2300 = vsel %vm518, %v2296, %v2174
        %v2301 = vsel %vm518, %v2297, %v2176
        %v2302 = vsel %vm518, %v2298, %v2178
        %v2303 = vsel %vm523, %v2299, %v2188
        %v2304 = vsel %vm523, %v2300, %v2190
        %v2305 = vsel %vm523, %v2301, %v2192
        %v2306 = vsel %vm523, %v2302, %v2194
        %v2307 = vsel %vm528, %v2303, %v2204
        %v2308 = vsel %vm528, %v2304, %v2206
        %v2309 = vsel %vm528, %v2305, %v2208
        %v2310 = vsel %vm528, %v2306, %v2210
        %v2311 = vsel %vm603, %v2307, %v2220
        %v2312 = vsel %vm603, %v2308, %v2222
        %v2313 = vsel %vm603, %v2309, %v2224
        %v2314 = vsel %vm603, %v2310, %v2226
        %v2315 = vsel %vm1196, %v2311, %v2236
        %v2316 = vsel %vm1196, %v2312, %v2238
        %v2317 = vsel %vm1196, %v2313, %v2240
        %v2318 = vsel %vm1196, %v2314, %v2242
        %v2319 = vsel %vm1201, %v2315, %v2252
        %v2320 = vsel %vm1201, %v2316, %v2254
        %v2321 = vsel %vm1201, %v2317, %v2256
        %v2322 = vsel %vm1201, %v2318, %v2258
        %2327 = vrot.lane.b32.xlu0 %v2019, 8
        %v2328 = vpop.permute.xlu0 %2327
        %2329 = vrot.lane.b32.xlu0 %v2020, 8
        %v2330 = vpop.permute.xlu0 %2329
        %2331 = vrot.lane.b32.xlu0 %v2021, 8
        %v2332 = vpop.permute.xlu0 %2331
        %2333 = vrot.lane.b32.xlu0 %v2022, 8
        %v2334 = vpop.permute.xlu0 %2333
        %v2339 = vsel %vm1141, %v2015, %v2328
        %v2340 = vsel %vm1141, %v2016, %v2330
        %v2341 = vsel %vm1141, %v2017, %v2332
        %v2342 = vsel %vm1141, %v2018, %v2334
        %v2351 = vcombine.low %v2319, %v2339
        %v2352 = vcombine.low %v2320, %v2340
        %v2353 = vcombine.low %v2321, %v2341
        %v2354 = vcombine.low %v2322, %v2342
        %v2355 = vld [vmem:[%s3] sm:$0xff]
        %v2356 = vld [vmem:[%s3 + $0x8] sm:$0xff]
        %v2357 = vld [vmem:[%s3 + $0x10] sm:$0xff]
        %v2358 = vld [vmem:[%s3 + $0x18] sm:$0xff]
        %v2359 = vld [vmem:[%s3 + $0x20] sm:$0xff]
        %v2360 = vld [vmem:[%s3 + $0x28] sm:$0xff]
        %v2361 = vld [vmem:[%s3 + $0x30] sm:$0xff]
        %v2362 = vld [vmem:[%s3 + $0x38] sm:$0xff]
        %v2363 = vld [vmem:[%s3 + $0x40] sm:$0xff]
        %v2364 = vld [vmem:[%s3 + $0x48] sm:$0xff]
        %v2365 = vld [vmem:[%s3 + $0x50] sm:$0xff]
        %v2366 = vld [vmem:[%s3 + $0x58] sm:$0xff]
        %v2367 = vld [vmem:[%s3 + $0x60] sm:$0xff]
        %v2368 = vld [vmem:[%s3 + $0x68] sm:$0xff]
        %v2369 = vld [vmem:[%s3 + $0x70] sm:$0xff]
        %v2370 = vld [vmem:[%s3 + $0x78] sm:$0xff]
        %v2371 = vld [vmem:[%s3 + $0x80] sm:$0xff]
        %v2372 = vld [vmem:[%s3 + $0x88] sm:$0xff]
        %v2373 = vld [vmem:[%s4] sm:$0x1]
        %v2375 = vlaneseq
        %v2376 = vshrl.u32 %v2375, 7
        %v2377 = vsub.s32 0, %v2376
        %v2378 = vrot.slane %v2373, %v2377
        %v2380 = vcombine.low %v2351, %v2352
        %v2381 = vcombine.high %v2351, %v2352
        %v2382 = vcombine.low %v2353, %v2354
        %v2383 = vcombine.high %v2353, %v2354
        %v2386 = vsel %vm1146, %v2381, 0
        %v2388 = vsel %vm1146, %v2383, 0
        %2390 = vmatprep.subr.mxu0 0.0
        %2391 = vmatpush1.msra.mxu0 %v2370
        %2392 = vmatprep.subr.mxu0 0.0
        %2393 = vmatpush1.msra.mxu0 %v2369
        %2394 = vmatprep.subr.mxu0 0.0
        %2395 = vmatpush1.msra.mxu0 %v2368
        %2396 = vmatprep.subr.mxu0 0.0
        %2397 = vmatpush1.msra.mxu0 %v2367
        %2398 = vmatprep.subr.mxu0 0.0
        %2399 = vmatpush1.msra.mxu0 %v2366
        %2400 = vmatprep.subr.mxu0 0.0
        %2401 = vmatpush1.msra.mxu0 %v2365
        %2402 = vmatprep.subr.mxu0 0.0
        %2403 = vmatpush1.msra.mxu0 %v2364
        %2404 = vmatprep.subr.mxu0 0.0
        %2405 = vmatpush1.msra.mxu0 %v2363
        %2406 = vmatprep.subr.mxu0 0.0
        %2407 = vmatpush1.msra.mxu0 %v2362
        %2408 = vmatprep.subr.mxu0 0.0
        %2409 = vmatpush1.msra.mxu0 %v2361
        %2410 = vmatprep.subr.mxu0 0.0
        %2411 = vmatpush1.msra.mxu0 %v2360
        %2412 = vmatprep.subr.mxu0 0.0
        %2413 = vmatpush1.msra.mxu0 %v2359
        %2414 = vmatprep.subr.mxu0 0.0
        %2415 = vmatpush1.msra.mxu0 %v2358
        %2416 = vmatprep.subr.mxu0 0.0
        %2417 = vmatpush1.msra.mxu0 %v2357
        %2418 = vmatprep.subr.mxu0 0.0
        %2419 = vmatpush1.msra.mxu0 %v2356
        %2420 = vmatprep.subr.mxu0 0.0
        %2421 = vmatpush1.msra.mxu0 %v2355
        %2422 = vmatprep.subr.mxu0 0.0
        %2423 = vmatpush2.msra.mxu0 0.0
        %2424 = vmatprep.subr.mxu0 0.0
        %2425 = vmatpush2.msra.mxu0 0.0
        %2426 = vmatprep.subr.mxu0 0.0
        %2427 = vmatpush2.msra.mxu0 0.0
        %2428 = vmatprep.subr.mxu0 0.0
        %2429 = vmatpush2.msra.mxu0 0.0
        %2430 = vmatprep.subr.mxu0 0.0
        %2431 = vmatpush2.msra.mxu0 0.0
        %2432 = vmatprep.subr.mxu0 0.0
        %2433 = vmatpush2.msra.mxu0 0.0
        %2434 = vmatprep.subr.mxu0 0.0
        %2435 = vmatpush2.msra.mxu0 0.0
        %2436 = vmatprep.subr.mxu0 0.0
        %2437 = vmatpush2.msra.mxu0 0.0
        %2438 = vmatprep.subr.mxu0 0.0
        %2439 = vmatpush2.msra.mxu0 0.0
        %2440 = vmatprep.subr.mxu0 0.0
        %2441 = vmatpush2.msra.mxu0 0.0
        %2442 = vmatprep.subr.mxu0 0.0
        %2443 = vmatpush2.msra.mxu0 0.0
        %2444 = vmatprep.subr.mxu0 0.0
        %2445 = vmatpush2.msra.mxu0 0.0
        %2446 = vmatprep.subr.mxu0 0.0
        %2447 = vmatpush2.msra.mxu0 0.0
        %2448 = vmatprep.subr.mxu0 0.0
        %2449 = vmatpush2.msra.mxu0 0.0
        %2450 = vmatprep.subr.mxu0 0.0
        %2451 = vmatpush2.msra.mxu0 %v2372
        %2452 = vmatprep.subr.mxu0 0.0
        %2453 = vmatpush2.msra.mxu0 %v2371
        %2454 = vmatprep.mubr.f32.mxu0 %v2386
        %2455 = vmatmul.mubr.f32.gmra.mxu0 %v2380
        %v2456 = vpop.f32.mrf.mxu0
        %v2457 = vadd.f32 %v2378, %v2456
        %v2458 = vpop.f32.mrf.mxu0
        %2459 = vmatprep.mubr.f32.mxu0 %v2388
        %2460 = vmatmul.mubr.f32.gmra.mxu0 %v2382
        %v2461 = vpop.f32.mrf.mxu0
        %v2462 = vadd.f32 %v2378, %v2461
        %v2463 = vpop.f32.mrf.mxu0
        %2464 = vdwg.mxu0
        %v2465 = vxor.u32 %v2457, 2147483648
        %v2466 = vxor.u32 %v2462, 2147483648
        %v2467 = vmul.f32 %v2465, 1.442695
        %v2468 = vpow.pop %v2467
        %v2469 = vmul.f32 %v2466, 1.442695
        %v2470 = vpow.pop %v2469
        %v2471 = vadd.f32 %v2468, 1.0
        %v2472 = vadd.f32 %v2470, 1.0
        %v2473 = vrcp.pop %v2471
        %v2474 = vmul.f32 1.0, %v2473
        %v2475 = vrcp.pop %v2472
        %v2476 = vmul.f32 1.0, %v2475
        %v2477 = vtanh.pop %v2457
        %v2478 = vtanh.pop %v2462
        %v2479 = vmul.f32 %v2474, %v1382
        %v2480 = vmul.f32 %v2476, %v1383
        %2483 = vrot.lane.b32.xlu0 %v2477, 104
        %v2484 = vpop.permute.xlu0 %2483
        %2485 = vrot.lane.b32.xlu0 %v2478, 104
        %v2486 = vpop.permute.xlu0 %2485
        %v2489 = vmul.f32 %v2474, %v2484
        %v2490 = vmul.f32 %v2476, %v2486
        %2493 = vrot.lane.b32.xlu0 %v2489, 8
        %v2494 = vpop.permute.xlu0 %2493
        %2495 = vrot.lane.b32.xlu0 %v2490, 8
        %v2496 = vpop.permute.xlu0 %2495
        %v2499 = vadd.f32 %v2479, %v2494
        %v2500 = vadd.f32 %v2480, %v2496
        %v2501 = vtanh.pop %v2499
        %v2502 = vtanh.pop %v2500
        %2505 = vrot.lane.b32.xlu0 %v2501, 8
        %v2506 = vpop.permute.xlu0 %2505
        %2507 = vrot.lane.b32.xlu0 %v2502, 8
        %v2508 = vpop.permute.xlu0 %2507
        %v2511 = vmul.f32 %v2474, %v2506
        %v2512 = vmul.f32 %v2476, %v2508
        %v2515 = vcombine.high %v2511, %v2511
        %v2516 = vcombine.high %v2512, %v2512
        %2517 = vrot.lane.b32.xlu0 %v2511, 112
        %v2518 = vpop.permute.xlu0 %2517
        %2519 = vrot.lane.b32.xlu0 %v2515, 112
        %v2520 = vpop.permute.xlu0 %2519
        %2521 = vrot.lane.b32.xlu0 %v2512, 112
        %v2522 = vpop.permute.xlu0 %2521
        %2523 = vrot.lane.b32.xlu0 %v2516, 112
        %v2524 = vpop.permute.xlu0 %2523
        %2529 = vst.msk [vmem:[%s875 + $0x1] sm:$0xf] %vm822, %v2518
        %2530 = vst.msk [vmem:[%s875 + $0x9] sm:$0xf] %vm822, %v2520
        %2531 = vst.msk [vmem:[%s875 + $0x11] sm:$0xf] %vm822, %v2522
        %2532 = vst.msk [vmem:[%s875 + $0x19] sm:$0xf] %vm822, %v2524
        %v2533 = vsel %vm1416, %v2511, 0.0
        %v2534 = vsel %vm1416, %v2512, 0.0
        %v2535 = vadd.f32 %v2533, %v2534
        %v2536 = vrot.slane %v2535, 4
        %v2537 = vadd.f32 %v2535, %v2536
        %v2538 = vrot.slane %v2537, 2
        %v2539 = vadd.f32 %v2537, %v2538
        %v2540 = vrot.slane %v2539, 1
        %v2541 = vadd.f32 %v2539, %v2540
        %s2542 = scalar_lea.vmem %s276, 96
        %v2543 = vld [vmem:[%s2542] sm:$0xff]
        %v2544 = vld [vmem:[%s2542 + $0x8] sm:$0xf]
        %v2545 = vld [vmem:[%s2542 + $0xc] sm:$0xff]
        %v2546 = vld [vmem:[%s2542 + $0x14] sm:$0xf]
        %v2547 = vld [vmem:[%s2542 + $0x18] sm:$0xff]
        %v2548 = vld [vmem:[%s2542 + $0x20] sm:$0xf]
        %v2549 = vld [vmem:[%s2542 + $0x24] sm:$0xff]
        %v2550 = vld [vmem:[%s2542 + $0x2c] sm:$0xf]
        %v2551 = vld [vmem:[#allocation2] sm:$0xf]
        %v2552 = vld [vmem:[#allocation2 + $0x8] sm:$0xf]
        %v2553 = vld [vmem:[#allocation2 + $0x10] sm:$0xf]
        %v2554 = vld [vmem:[#allocation2 + $0x18] sm:$0xf]
        %v2555 = vld [vmem:[#allocation2 + $0x1] sm:$0xf]
        %v2556 = vld [vmem:[#allocation2 + $0x9] sm:$0xf]
        %v2557 = vld [vmem:[#allocation2 + $0x11] sm:$0xf]
        %v2558 = vld [vmem:[#allocation2 + $0x19] sm:$0xf]
        %v2559 = vld [vmem:[#allocation2 + $0x2] sm:$0xf]
        %v2560 = vld [vmem:[#allocation2 + $0xa] sm:$0xf]
        %v2561 = vld [vmem:[#allocation2 + $0x12] sm:$0xf]
        %v2562 = vld [vmem:[#allocation2 + $0x1a] sm:$0xf]
        %v2563 = vld [vmem:[%s310] sm:$0xf]
        %v2564 = vld [vmem:[%s310 + $0x8] sm:$0xf]
        %v2565 = vld [vmem:[%s310 + $0x10] sm:$0xf]
        %v2566 = vld [vmem:[%s310 + $0x18] sm:$0xf]
        %v2567 = vld [vmem:[%s310 + $0x1] sm:$0xf]
        %v2568 = vld [vmem:[%s310 + $0x9] sm:$0xf]
        %v2569 = vld [vmem:[%s310 + $0x11] sm:$0xf]
        %v2570 = vld [vmem:[%s310 + $0x19] sm:$0xf]
        %v2571 = vld [vmem:[%s310 + $0x2] sm:$0xf]
        %v2572 = vld [vmem:[%s310 + $0xa] sm:$0xf]
        %v2573 = vld [vmem:[%s310 + $0x12] sm:$0xf]
        %v2574 = vld [vmem:[%s310 + $0x1a] sm:$0xf]
        %v2575 = vld [vmem:[%s323] sm:$0xf]
        %v2576 = vld [vmem:[%s323 + $0x8] sm:$0xf]
        %v2577 = vld [vmem:[%s323 + $0x10] sm:$0xf]
        %v2578 = vld [vmem:[%s323 + $0x18] sm:$0xf]
        %v2579 = vld [vmem:[%s323 + $0x1] sm:$0xf]
        %v2580 = vld [vmem:[%s323 + $0x9] sm:$0xf]
        %v2581 = vld [vmem:[%s323 + $0x11] sm:$0xf]
        %v2582 = vld [vmem:[%s323 + $0x19] sm:$0xf]
        %v2583 = vld [vmem:[%s323 + $0x2] sm:$0xf]
        %v2584 = vld [vmem:[%s323 + $0xa] sm:$0xf]
        %v2585 = vld [vmem:[%s323 + $0x12] sm:$0xf]
        %v2586 = vld [vmem:[%s323 + $0x1a] sm:$0xf]
        %v2591 = vcombine.high %v2543, %v2543
        %v2592 = vcombine.high %v2545, %v2545
        %v2593 = vcombine.high %v2547, %v2547
        %v2594 = vcombine.high %v2549, %v2549
        %2599 = vrot.lane.b32.xlu0 %v2551, 32
        %v2600 = vpop.permute.xlu0 %2599
        %2601 = vrot.lane.b32.xlu0 %v2552, 32
        %v2602 = vpop.permute.xlu0 %2601
        %2603 = vrot.lane.b32.xlu0 %v2553, 32
        %v2604 = vpop.permute.xlu0 %2603
        %2605 = vrot.lane.b32.xlu0 %v2554, 32
        %v2606 = vpop.permute.xlu0 %2605
        %2615 = vrot.lane.b32.xlu0 %v2555, 40
        %v2616 = vpop.permute.xlu0 %2615
        %2617 = vrot.lane.b32.xlu0 %v2556, 40
        %v2618 = vpop.permute.xlu0 %2617
        %2619 = vrot.lane.b32.xlu0 %v2557, 40
        %v2620 = vpop.permute.xlu0 %2619
        %2621 = vrot.lane.b32.xlu0 %v2558, 40
        %v2622 = vpop.permute.xlu0 %2621
        %2631 = vrot.lane.b32.xlu0 %v2559, 48
        %v2632 = vpop.permute.xlu0 %2631
        %2633 = vrot.lane.b32.xlu0 %v2560, 48
        %v2634 = vpop.permute.xlu0 %2633
        %2635 = vrot.lane.b32.xlu0 %v2561, 48
        %v2636 = vpop.permute.xlu0 %2635
        %2637 = vrot.lane.b32.xlu0 %v2562, 48
        %v2638 = vpop.permute.xlu0 %2637
        %2647 = vrot.lane.b32.xlu0 %v2563, 56
        %v2648 = vpop.permute.xlu0 %2647
        %2649 = vrot.lane.b32.xlu0 %v2564, 56
        %v2650 = vpop.permute.xlu0 %2649
        %2651 = vrot.lane.b32.xlu0 %v2565, 56
        %v2652 = vpop.permute.xlu0 %2651
        %2653 = vrot.lane.b32.xlu0 %v2566, 56
        %v2654 = vpop.permute.xlu0 %2653
        %2663 = vrot.lane.b32.xlu0 %v2567, 64
        %v2664 = vpop.permute.xlu0 %2663
        %2665 = vrot.lane.b32.xlu0 %v2568, 64
        %v2666 = vpop.permute.xlu0 %2665
        %2667 = vrot.lane.b32.xlu0 %v2569, 64
        %v2668 = vpop.permute.xlu0 %2667
        %2669 = vrot.lane.b32.xlu0 %v2570, 64
        %v2670 = vpop.permute.xlu0 %2669
        %2679 = vrot.lane.b32.xlu0 %v2571, 72
        %v2680 = vpop.permute.xlu0 %2679
        %2681 = vrot.lane.b32.xlu0 %v2572, 72
        %v2682 = vpop.permute.xlu0 %2681
        %2683 = vrot.lane.b32.xlu0 %v2573, 72
        %v2684 = vpop.permute.xlu0 %2683
        %2685 = vrot.lane.b32.xlu0 %v2574, 72
        %v2686 = vpop.permute.xlu0 %2685
        %2695 = vrot.lane.b32.xlu0 %v2575, 80
        %v2696 = vpop.permute.xlu0 %2695
        %2697 = vrot.lane.b32.xlu0 %v2576, 80
        %v2698 = vpop.permute.xlu0 %2697
        %2699 = vrot.lane.b32.xlu0 %v2577, 80
        %v2700 = vpop.permute.xlu0 %2699
        %2701 = vrot.lane.b32.xlu0 %v2578, 80
        %v2702 = vpop.permute.xlu0 %2701
        %2711 = vrot.lane.b32.xlu0 %v2579, 88
        %v2712 = vpop.permute.xlu0 %2711
        %2713 = vrot.lane.b32.xlu0 %v2580, 88
        %v2714 = vpop.permute.xlu0 %2713
        %2715 = vrot.lane.b32.xlu0 %v2581, 88
        %v2716 = vpop.permute.xlu0 %2715
        %2717 = vrot.lane.b32.xlu0 %v2582, 88
        %v2718 = vpop.permute.xlu0 %2717
        %2727 = vrot.lane.b32.xlu0 %v2583, 96
        %v2728 = vpop.permute.xlu0 %2727
        %2729 = vrot.lane.b32.xlu0 %v2584, 96
        %v2730 = vpop.permute.xlu0 %2729
        %2731 = vrot.lane.b32.xlu0 %v2585, 96
        %v2732 = vpop.permute.xlu0 %2731
        %2733 = vrot.lane.b32.xlu0 %v2586, 96
        %v2734 = vpop.permute.xlu0 %2733
        %v2739 = vsel %vm488, %v2544, %v2600
        %v2740 = vsel %vm488, %v2546, %v2602
        %v2741 = vsel %vm488, %v2548, %v2604
        %v2742 = vsel %vm488, %v2550, %v2606
        %v2743 = vsel %vm493, %v2739, %v2616
        %v2744 = vsel %vm493, %v2740, %v2618
        %v2745 = vsel %vm493, %v2741, %v2620
        %v2746 = vsel %vm493, %v2742, %v2622
        %v2747 = vsel %vm498, %v2743, %v2632
        %v2748 = vsel %vm498, %v2744, %v2634
        %v2749 = vsel %vm498, %v2745, %v2636
        %v2750 = vsel %vm498, %v2746, %v2638
        %v2751 = vsel %vm503, %v2747, %v2648
        %v2752 = vsel %vm503, %v2748, %v2650
        %v2753 = vsel %vm503, %v2749, %v2652
        %v2754 = vsel %vm503, %v2750, %v2654
        %v2755 = vsel %vm508, %v2751, %v2664
        %v2756 = vsel %vm508, %v2752, %v2666
        %v2757 = vsel %vm508, %v2753, %v2668
        %v2758 = vsel %vm508, %v2754, %v2670
        %v2759 = vsel %vm513, %v2755, %v2680
        %v2760 = vsel %vm513, %v2756, %v2682
        %v2761 = vsel %vm513, %v2757, %v2684
        %v2762 = vsel %vm513, %v2758, %v2686
        %v2763 = vsel %vm518, %v2759, %v2696
        %v2764 = vsel %vm518, %v2760, %v2698
        %v2765 = vsel %vm518, %v2761, %v2700
        %v2766 = vsel %vm518, %v2762, %v2702
        %v2767 = vsel %vm523, %v2763, %v2712
        %v2768 = vsel %vm523, %v2764, %v2714
        %v2769 = vsel %vm523, %v2765, %v2716
        %v2770 = vsel %vm523, %v2766, %v2718
        %v2771 = vsel %vm528, %v2767, %v2728
        %v2772 = vsel %vm528, %v2768, %v2730
        %v2773 = vsel %vm528, %v2769, %v2732
        %v2774 = vsel %vm528, %v2770, %v2734
        %v2779 = vcombine.low %v2543, %v2591
        %v2780 = vcombine.low %v2545, %v2592
        %v2781 = vcombine.low %v2547, %v2593
        %v2782 = vcombine.low %v2549, %v2594
        %v2783 = vld [vmem:[%s1] sm:$0xff]
        %v2784 = vld [vmem:[%s1 + $0x8] sm:$0xff]
        %v2785 = vld [vmem:[%s1 + $0x10] sm:$0xff]
        %v2786 = vld [vmem:[%s1 + $0x18] sm:$0xff]
        %v2787 = vld [vmem:[%s1 + $0x20] sm:$0xff]
        %v2788 = vld [vmem:[%s1 + $0x28] sm:$0xff]
        %v2789 = vld [vmem:[%s1 + $0x30] sm:$0xff]
        %v2790 = vld [vmem:[%s1 + $0x38] sm:$0xff]
        %v2791 = vld [vmem:[%s1 + $0x40] sm:$0xff]
        %v2792 = vld [vmem:[%s1 + $0x48] sm:$0xff]
        %v2793 = vld [vmem:[%s1 + $0x50] sm:$0xff]
        %v2794 = vld [vmem:[%s1 + $0x58] sm:$0xff]
        %v2795 = vld [vmem:[%s1 + $0x60] sm:$0xff]
        %v2796 = vld [vmem:[%s1 + $0x68] sm:$0xff]
        %v2797 = vld [vmem:[%s1 + $0x70] sm:$0xff]
        %v2798 = vld [vmem:[%s1 + $0x78] sm:$0xff]
        %v2799 = vld [vmem:[%s1 + $0x80] sm:$0xff]
        %v2800 = vld [vmem:[%s1 + $0x88] sm:$0xff]
        %v2801 = vld [vmem:[%s1 + $0x90] sm:$0xff]
        %v2802 = vld [vmem:[%s1 + $0x98] sm:$0xff]
        %v2803 = vld [vmem:[%s1 + $0xa0] sm:$0xff]
        %v2804 = vld [vmem:[%s1 + $0xa8] sm:$0xff]
        %v2805 = vld [vmem:[%s1 + $0xb0] sm:$0xff]
        %v2806 = vld [vmem:[%s1 + $0xb8] sm:$0xff]
        %v2807 = vld [vmem:[%s1 + $0xc0] sm:$0xff]
        %v2808 = vld [vmem:[%s1 + $0xc8] sm:$0xff]
        %v2809 = vld [vmem:[%s1 + $0xd0] sm:$0xff]
        %v2810 = vld [vmem:[%s1 + $0xd8] sm:$0xff]
        %v2811 = vld [vmem:[%s1 + $0xe0] sm:$0xff]
        %v2812 = vld [vmem:[%s1 + $0xe8] sm:$0xff]
        %v2813 = vld [vmem:[%s1 + $0xf0] sm:$0xff]
        %v2814 = vld [vmem:[%s1 + $0xf8] sm:$0xff]
        %v2815 = vld [vmem:[%s1 + $0x100] sm:$0xff]
        %v2816 = vld [vmem:[%s1 + $0x108] sm:$0xff]
        %v2817 = vld [vmem:[%s1 + $0x110] sm:$0xff]
        %v2818 = vld [vmem:[%s1 + $0x118] sm:$0xff]
        %v2819 = vld [vmem:[%s1 + $0x120] sm:$0xff]
        %v2820 = vld [vmem:[%s1 + $0x128] sm:$0xff]
        %v2821 = vld [vmem:[%s1 + $0x130] sm:$0xff]
        %v2822 = vld [vmem:[%s1 + $0x138] sm:$0xff]
        %v2823 = vld [vmem:[%s1 + $0x140] sm:$0xff]
        %v2824 = vld [vmem:[%s1 + $0x148] sm:$0xff]
        %v2825 = vld [vmem:[%s1 + $0x150] sm:$0xff]
        %v2826 = vld [vmem:[%s1 + $0x158] sm:$0xff]
        %v2827 = vld [vmem:[%s1 + $0x160] sm:$0xff]
        %v2828 = vld [vmem:[%s2] sm:$0x1]
        %v2830 = vlaneseq
        %v2831 = vshrl.u32 %v2830, 7
        %v2832 = vsub.s32 0, %v2831
        %v2833 = vrot.slane %v2828, %v2832
        %v2835 = vcombine.low %v2779, %v2780
        %v2836 = vcombine.high %v2779, %v2780
        %v2837 = vcombine.low %v2771, %v2772
        %v2838 = vcombine.low %v2781, %v2782
        %v2839 = vcombine.high %v2781, %v2782
        %v2840 = vcombine.low %v2773, %v2774
        %v2845 = vsel %vm603, %v2837, 0
        %v2847 = vsel %vm603, %v2840, 0
        %2849 = vmatprep.subr.mxu0 0.0
        %2850 = vmatpush1.msra.mxu0 %v2798
        %2851 = vmatprep.subr.mxu0 0.0
        %2852 = vmatpush1.msra.mxu0 %v2797
        %2853 = vmatprep.subr.mxu0 0.0
        %2854 = vmatpush1.msra.mxu0 %v2796
        %2855 = vmatprep.subr.mxu0 0.0
        %2856 = vmatpush1.msra.mxu0 %v2795
        %2857 = vmatprep.subr.mxu0 0.0
        %2858 = vmatpush1.msra.mxu0 %v2794
        %2859 = vmatprep.subr.mxu0 0.0
        %2860 = vmatpush1.msra.mxu0 %v2793
        %2861 = vmatprep.subr.mxu0 0.0
        %2862 = vmatpush1.msra.mxu0 %v2792
        %2863 = vmatprep.subr.mxu0 0.0
        %2864 = vmatpush1.msra.mxu0 %v2791
        %2865 = vmatprep.subr.mxu0 0.0
        %2866 = vmatpush1.msra.mxu0 %v2790
        %2867 = vmatprep.subr.mxu0 0.0
        %2868 = vmatpush1.msra.mxu0 %v2789
        %2869 = vmatprep.subr.mxu0 0.0
        %2870 = vmatpush1.msra.mxu0 %v2788
        %2871 = vmatprep.subr.mxu0 0.0
        %2872 = vmatpush1.msra.mxu0 %v2787
        %2873 = vmatprep.subr.mxu0 0.0
        %2874 = vmatpush1.msra.mxu0 %v2786
        %2875 = vmatprep.subr.mxu0 0.0
        %2876 = vmatpush1.msra.mxu0 %v2785
        %2877 = vmatprep.subr.mxu0 0.0
        %2878 = vmatpush1.msra.mxu0 %v2784
        %2879 = vmatprep.subr.mxu0 0.0
        %2880 = vmatpush1.msra.mxu0 %v2783
        %2881 = vmatprep.subr.mxu0 0.0
        %2882 = vmatpush2.msra.mxu0 %v2814
        %2883 = vmatprep.subr.mxu0 0.0
        %2884 = vmatpush2.msra.mxu0 %v2813
        %2885 = vmatprep.subr.mxu0 0.0
        %2886 = vmatpush2.msra.mxu0 %v2812
        %2887 = vmatprep.subr.mxu0 0.0
        %2888 = vmatpush2.msra.mxu0 %v2811
        %2889 = vmatprep.subr.mxu0 0.0
        %2890 = vmatpush2.msra.mxu0 %v2810
        %2891 = vmatprep.subr.mxu0 0.0
        %2892 = vmatpush2.msra.mxu0 %v2809
        %2893 = vmatprep.subr.mxu0 0.0
        %2894 = vmatpush2.msra.mxu0 %v2808
        %2895 = vmatprep.subr.mxu0 0.0
        %2896 = vmatpush2.msra.mxu0 %v2807
        %2897 = vmatprep.subr.mxu0 0.0
        %2898 = vmatpush2.msra.mxu0 %v2806
        %2899 = vmatprep.subr.mxu0 0.0
        %2900 = vmatpush2.msra.mxu0 %v2805
        %2901 = vmatprep.subr.mxu0 0.0
        %2902 = vmatpush2.msra.mxu0 %v2804
        %2903 = vmatprep.subr.mxu0 0.0
        %2904 = vmatpush2.msra.mxu0 %v2803
        %2905 = vmatprep.subr.mxu0 0.0
        %2906 = vmatpush2.msra.mxu0 %v2802
        %2907 = vmatprep.subr.mxu0 0.0
        %2908 = vmatpush2.msra.mxu0 %v2801
        %2909 = vmatprep.subr.mxu0 0.0
        %2910 = vmatpush2.msra.mxu0 %v2800
        %2911 = vmatprep.subr.mxu0 0.0
        %2912 = vmatpush2.msra.mxu0 %v2799
        %2913 = vmatprep.mubr.f32.mxu0 %v2836
        %2914 = vmatmul.mubr.f32.gmra.mxu0 %v2835
        %v2915 = vpop.f32.mrf.mxu0
        %v2916 = vadd.f32 %v2833, %v2915
        %v2917 = vpop.f32.mrf.mxu0
        %2918 = vmatprep.mubr.f32.mxu0 %v2839
        %2919 = vmatmul.mubr.f32.gmra.mxu0 %v2838
        %v2920 = vpop.f32.mrf.mxu0
        %v2921 = vadd.f32 %v2833, %v2920
        %v2922 = vpop.f32.mrf.mxu0
        %2923 = vdwg.mxu0
        %2924 = vmatprep.subr.mxu0 0.0
        %2925 = vmatpush1.msra.mxu0 0.0
        %2926 = vmatprep.subr.mxu0 0.0
        %2927 = vmatpush1.msra.mxu0 0.0
        %2928 = vmatprep.subr.mxu0 0.0
        %2929 = vmatpush1.msra.mxu0 0.0
        %2930 = vmatprep.subr.mxu0 0.0
        %2931 = vmatpush1.msra.mxu0 %v2827
        %2932 = vmatprep.subr.mxu0 0.0
        %2933 = vmatpush1.msra.mxu0 %v2826
        %2934 = vmatprep.subr.mxu0 0.0
        %2935 = vmatpush1.msra.mxu0 %v2825
        %2936 = vmatprep.subr.mxu0 0.0
        %2937 = vmatpush1.msra.mxu0 %v2824
        %2938 = vmatprep.subr.mxu0 0.0
        %2939 = vmatpush1.msra.mxu0 %v2823
        %2940 = vmatprep.subr.mxu0 0.0
        %2941 = vmatpush1.msra.mxu0 %v2822
        %2942 = vmatprep.subr.mxu0 0.0
        %2943 = vmatpush1.msra.mxu0 %v2821
        %2944 = vmatprep.subr.mxu0 0.0
        %2945 = vmatpush1.msra.mxu0 %v2820
        %2946 = vmatprep.subr.mxu0 0.0
        %2947 = vmatpush1.msra.mxu0 %v2819
        %2948 = vmatprep.subr.mxu0 0.0
        %2949 = vmatpush1.msra.mxu0 %v2818
        %2950 = vmatprep.subr.mxu0 0.0
        %2951 = vmatpush1.msra.mxu0 %v2817
        %2952 = vmatprep.subr.mxu0 0.0
        %2953 = vmatpush1.msra.mxu0 %v2816
        %2954 = vmatprep.subr.mxu0 0.0
        %2955 = vmatpush1.msra.mxu0 %v2815
        %2956 = vmatprep.subr.mxu0 0.0
        %2957 = vmatpush2.msra.mxu0 0.0
        %2958 = vmatprep.subr.mxu0 0.0
        %2959 = vmatpush2.msra.mxu0 0.0
        %2960 = vmatprep.subr.mxu0 0.0
        %2961 = vmatpush2.msra.mxu0 0.0
        %2962 = vmatprep.subr.mxu0 0.0
        %2963 = vmatpush2.msra.mxu0 0.0
        %2964 = vmatprep.subr.mxu0 0.0
        %2965 = vmatpush2.msra.mxu0 0.0
        %2966 = vmatprep.subr.mxu0 0.0
        %2967 = vmatpush2.msra.mxu0 0.0
        %2968 = vmatprep.subr.mxu0 0.0
        %2969 = vmatpush2.msra.mxu0 0.0
        %2970 = vmatprep.subr.mxu0 0.0
        %2971 = vmatpush2.msra.mxu0 0.0
        %2972 = vmatprep.subr.mxu0 0.0
        %2973 = vmatpush2.msra.mxu0 0.0
        %2974 = vmatprep.subr.mxu0 0.0
        %2975 = vmatpush2.msra.mxu0 0.0
        %2976 = vmatprep.subr.mxu0 0.0
        %2977 = vmatpush2.msra.mxu0 0.0
        %2978 = vmatprep.subr.mxu0 0.0
        %2979 = vmatpush2.msra.mxu0 0.0
        %2980 = vmatprep.subr.mxu0 0.0
        %2981 = vmatpush2.msra.mxu0 0.0
        %2982 = vmatprep.subr.mxu0 0.0
        %2983 = vmatpush2.msra.mxu0 0.0
        %2984 = vmatprep.subr.mxu0 0.0
        %2985 = vmatpush2.msra.mxu0 0.0
        %2986 = vmatprep.subr.mxu0 0.0
        %2987 = vmatpush2.msra.mxu0 0.0
        %2988 = vmatprep.mubr.f32.mxu0 0.0
        %2989 = vmatmul.mubr.f32.gmra.mxu0 %v2845
        %v2990 = vpop.f32.mrf.mxu0
        %v2991 = vadd.f32 %v2916, %v2990
        %v2992 = vpop.f32.mrf.mxu0
        %2993 = vmatprep.mubr.f32.mxu0 0.0
        %2994 = vmatmul.mubr.f32.gmra.mxu0 %v2847
        %v2995 = vpop.f32.mrf.mxu0
        %v2996 = vadd.f32 %v2921, %v2995
        %v2997 = vpop.f32.mrf.mxu0
        %2998 = vdwg.mxu0
        %v2999 = vxor.u32 %v2991, 2147483648
        %v3000 = vxor.u32 %v2996, 2147483648
        %v3001 = vmul.f32 %v2999, 1.442695
        %v3002 = vpow.pop %v3001
        %v3003 = vmul.f32 %v3000, 1.442695
        %v3004 = vpow.pop %v3003
        %v3005 = vadd.f32 %v3002, 1.0
        %v3006 = vadd.f32 %v3004, 1.0
        %v3007 = vrcp.pop %v3005
        %v3008 = vmul.f32 1.0, %v3007
        %v3009 = vrcp.pop %v3006
        %v3010 = vmul.f32 1.0, %v3009
        %v3011 = vtanh.pop %v2991
        %v3012 = vtanh.pop %v2996
        %v3013 = vmul.f32 %v3008, %v1917
        %v3014 = vmul.f32 %v3010, %v1918
        %3017 = vrot.lane.b32.xlu0 %v3011, 104
        %v3018 = vpop.permute.xlu0 %3017
        %3019 = vrot.lane.b32.xlu0 %v3012, 104
        %v3020 = vpop.permute.xlu0 %3019
        %v3023 = vmul.f32 %v3008, %v3018
        %v3024 = vmul.f32 %v3010, %v3020
        %3027 = vrot.lane.b32.xlu0 %v3023, 8
        %v3028 = vpop.permute.xlu0 %3027
        %3029 = vrot.lane.b32.xlu0 %v3024, 8
        %v3030 = vpop.permute.xlu0 %3029
        %v3033 = vadd.f32 %v3013, %v3028
        %v3034 = vadd.f32 %v3014, %v3030
        %v3035 = vtanh.pop %v3033
        %v3036 = vtanh.pop %v3034
        %3039 = vrot.lane.b32.xlu0 %v3035, 8
        %v3040 = vpop.permute.xlu0 %3039
        %3041 = vrot.lane.b32.xlu0 %v3036, 8
        %v3042 = vpop.permute.xlu0 %3041
        %v3045 = vmul.f32 %v3008, %v3040
        %v3046 = vmul.f32 %v3010, %v3042
        %v3049 = vcombine.high %v3045, %v3045
        %v3050 = vcombine.high %v3046, %v3046
        %3051 = vrot.lane.b32.xlu0 %v3045, 112
        %v3052 = vpop.permute.xlu0 %3051
        %3053 = vrot.lane.b32.xlu0 %v3049, 112
        %v3054 = vpop.permute.xlu0 %3053
        %3055 = vrot.lane.b32.xlu0 %v3046, 112
        %v3056 = vpop.permute.xlu0 %3055
        %3057 = vrot.lane.b32.xlu0 %v3050, 112
        %v3058 = vpop.permute.xlu0 %3057
        %3063 = vst.msk [vmem:[%s310 + $0x1] sm:$0xf] %vm822, %v3052
        %3064 = vst.msk [vmem:[%s310 + $0x9] sm:$0xf] %vm822, %v3054
        %3065 = vst.msk [vmem:[%s310 + $0x11] sm:$0xf] %vm822, %v3056
        %3066 = vst.msk [vmem:[%s310 + $0x19] sm:$0xf] %vm822, %v3058
        %v3067 = vld [vmem:[#allocation2] sm:$0xf]
        %v3068 = vld [vmem:[#allocation2 + $0x8] sm:$0xf]
        %v3069 = vld [vmem:[#allocation2 + $0x10] sm:$0xf]
        %v3070 = vld [vmem:[#allocation2 + $0x18] sm:$0xf]
        %v3071 = vld [vmem:[#allocation2 + $0x1] sm:$0xf]
        %v3072 = vld [vmem:[#allocation2 + $0x9] sm:$0xf]
        %v3073 = vld [vmem:[#allocation2 + $0x11] sm:$0xf]
        %v3074 = vld [vmem:[#allocation2 + $0x19] sm:$0xf]
        %v3075 = vld [vmem:[#allocation2 + $0x2] sm:$0xf]
        %v3076 = vld [vmem:[#allocation2 + $0xa] sm:$0xf]
        %v3077 = vld [vmem:[#allocation2 + $0x12] sm:$0xf]
        %v3078 = vld [vmem:[#allocation2 + $0x1a] sm:$0xf]
        %v3079 = vld [vmem:[%s310] sm:$0xf]
        %v3080 = vld [vmem:[%s310 + $0x8] sm:$0xf]
        %v3081 = vld [vmem:[%s310 + $0x10] sm:$0xf]
        %v3082 = vld [vmem:[%s310 + $0x18] sm:$0xf]
        %v3083 = vld [vmem:[%s310 + $0x1] sm:$0xf]
        %v3084 = vld [vmem:[%s310 + $0x9] sm:$0xf]
        %v3085 = vld [vmem:[%s310 + $0x11] sm:$0xf]
        %v3086 = vld [vmem:[%s310 + $0x19] sm:$0xf]
        %v3087 = vld [vmem:[%s310 + $0x2] sm:$0xf]
        %v3088 = vld [vmem:[%s310 + $0xa] sm:$0xf]
        %v3089 = vld [vmem:[%s310 + $0x12] sm:$0xf]
        %v3090 = vld [vmem:[%s310 + $0x1a] sm:$0xf]
        %v3091 = vld [vmem:[%s323] sm:$0xf]
        %v3092 = vld [vmem:[%s323 + $0x8] sm:$0xf]
        %v3093 = vld [vmem:[%s323 + $0x10] sm:$0xf]
        %v3094 = vld [vmem:[%s323 + $0x18] sm:$0xf]
        %v3095 = vld [vmem:[%s323 + $0x1] sm:$0xf]
        %v3096 = vld [vmem:[%s323 + $0x9] sm:$0xf]
        %v3097 = vld [vmem:[%s323 + $0x11] sm:$0xf]
        %v3098 = vld [vmem:[%s323 + $0x19] sm:$0xf]
        %v3099 = vld [vmem:[%s323 + $0x2] sm:$0xf]
        %v3100 = vld [vmem:[%s323 + $0xa] sm:$0xf]
        %v3101 = vld [vmem:[%s323 + $0x12] sm:$0xf]
        %v3102 = vld [vmem:[%s323 + $0x1a] sm:$0xf]
        %v3103 = vld [vmem:[#allocation3] sm:$0xf]
        %v3104 = vld [vmem:[#allocation3 + $0x8] sm:$0xf]
        %v3105 = vld [vmem:[#allocation3 + $0x10] sm:$0xf]
        %v3106 = vld [vmem:[#allocation3 + $0x18] sm:$0xf]
        %v3107 = vld [vmem:[#allocation3 + $0x1] sm:$0xf]
        %v3108 = vld [vmem:[#allocation3 + $0x9] sm:$0xf]
        %v3109 = vld [vmem:[#allocation3 + $0x11] sm:$0xf]
        %v3110 = vld [vmem:[#allocation3 + $0x19] sm:$0xf]
        %v3111 = vld [vmem:[#allocation3 + $0x2] sm:$0xf]
        %v3112 = vld [vmem:[#allocation3 + $0xa] sm:$0xf]
        %v3113 = vld [vmem:[#allocation3 + $0x12] sm:$0xf]
        %v3114 = vld [vmem:[#allocation3 + $0x1a] sm:$0xf]
        %v3115 = vld [vmem:[%s875] sm:$0xf]
        %v3116 = vld [vmem:[%s875 + $0x8] sm:$0xf]
        %v3117 = vld [vmem:[%s875 + $0x10] sm:$0xf]
        %v3118 = vld [vmem:[%s875 + $0x18] sm:$0xf]
        %v3119 = vld [vmem:[%s875 + $0x1] sm:$0xf]
        %v3120 = vld [vmem:[%s875 + $0x9] sm:$0xf]
        %v3121 = vld [vmem:[%s875 + $0x11] sm:$0xf]
        %v3122 = vld [vmem:[%s875 + $0x19] sm:$0xf]
        %v3123 = vld [vmem:[%s875 + $0x2] sm:$0xf]
        %v3124 = vld [vmem:[%s875 + $0xa] sm:$0xf]
        %v3125 = vld [vmem:[%s875 + $0x12] sm:$0xf]
        %v3126 = vld [vmem:[%s875 + $0x1a] sm:$0xf]
        %v3127 = vld [vmem:[%s888] sm:$0xf]
        %v3128 = vld [vmem:[%s888 + $0x8] sm:$0xf]
        %v3129 = vld [vmem:[%s888 + $0x10] sm:$0xf]
        %v3130 = vld [vmem:[%s888 + $0x18] sm:$0xf]
        %v3131 = vld [vmem:[%s888 + $0x1] sm:$0xf]
        %v3132 = vld [vmem:[%s888 + $0x9] sm:$0xf]
        %v3133 = vld [vmem:[%s888 + $0x11] sm:$0xf]
        %v3134 = vld [vmem:[%s888 + $0x19] sm:$0xf]
        %v3135 = vld [vmem:[%s888 + $0x2] sm:$0xf]
        %v3136 = vld [vmem:[%s888 + $0xa] sm:$0xf]
        %v3137 = vld [vmem:[%s888 + $0x12] sm:$0xf]
        %v3138 = vld [vmem:[%s888 + $0x1a] sm:$0xf]
        %3143 = vrot.lane.b32.xlu0 %v3071, 8
        %v3144 = vpop.permute.xlu0 %3143
        %3145 = vrot.lane.b32.xlu0 %v3072, 8
        %v3146 = vpop.permute.xlu0 %3145
        %3147 = vrot.lane.b32.xlu0 %v3073, 8
        %v3148 = vpop.permute.xlu0 %3147
        %3149 = vrot.lane.b32.xlu0 %v3074, 8
        %v3150 = vpop.permute.xlu0 %3149
        %3159 = vrot.lane.b32.xlu0 %v3075, 16
        %v3160 = vpop.permute.xlu0 %3159
        %3161 = vrot.lane.b32.xlu0 %v3076, 16
        %v3162 = vpop.permute.xlu0 %3161
        %3163 = vrot.lane.b32.xlu0 %v3077, 16
        %v3164 = vpop.permute.xlu0 %3163
        %3165 = vrot.lane.b32.xlu0 %v3078, 16
        %v3166 = vpop.permute.xlu0 %3165
        %3175 = vrot.lane.b32.xlu0 %v3079, 24
        %v3176 = vpop.permute.xlu0 %3175
        %3177 = vrot.lane.b32.xlu0 %v3080, 24
        %v3178 = vpop.permute.xlu0 %3177
        %3179 = vrot.lane.b32.xlu0 %v3081, 24
        %v3180 = vpop.permute.xlu0 %3179
        %3181 = vrot.lane.b32.xlu0 %v3082, 24
        %v3182 = vpop.permute.xlu0 %3181
        %3191 = vrot.lane.b32.xlu0 %v3083, 32
        %v3192 = vpop.permute.xlu0 %3191
        %3193 = vrot.lane.b32.xlu0 %v3084, 32
        %v3194 = vpop.permute.xlu0 %3193
        %3195 = vrot.lane.b32.xlu0 %v3085, 32
        %v3196 = vpop.permute.xlu0 %3195
        %3197 = vrot.lane.b32.xlu0 %v3086, 32
        %v3198 = vpop.permute.xlu0 %3197
        %3207 = vrot.lane.b32.xlu0 %v3087, 40
        %v3208 = vpop.permute.xlu0 %3207
        %3209 = vrot.lane.b32.xlu0 %v3088, 40
        %v3210 = vpop.permute.xlu0 %3209
        %3211 = vrot.lane.b32.xlu0 %v3089, 40
        %v3212 = vpop.permute.xlu0 %3211
        %3213 = vrot.lane.b32.xlu0 %v3090, 40
        %v3214 = vpop.permute.xlu0 %3213
        %3223 = vrot.lane.b32.xlu0 %v3091, 48
        %v3224 = vpop.permute.xlu0 %3223
        %3225 = vrot.lane.b32.xlu0 %v3092, 48
        %v3226 = vpop.permute.xlu0 %3225
        %3227 = vrot.lane.b32.xlu0 %v3093, 48
        %v3228 = vpop.permute.xlu0 %3227
        %3229 = vrot.lane.b32.xlu0 %v3094, 48
        %v3230 = vpop.permute.xlu0 %3229
        %3239 = vrot.lane.b32.xlu0 %v3095, 56
        %v3240 = vpop.permute.xlu0 %3239
        %3241 = vrot.lane.b32.xlu0 %v3096, 56
        %v3242 = vpop.permute.xlu0 %3241
        %3243 = vrot.lane.b32.xlu0 %v3097, 56
        %v3244 = vpop.permute.xlu0 %3243
        %3245 = vrot.lane.b32.xlu0 %v3098, 56
        %v3246 = vpop.permute.xlu0 %3245
        %3255 = vrot.lane.b32.xlu0 %v3099, 64
        %v3256 = vpop.permute.xlu0 %3255
        %3257 = vrot.lane.b32.xlu0 %v3100, 64
        %v3258 = vpop.permute.xlu0 %3257
        %3259 = vrot.lane.b32.xlu0 %v3101, 64
        %v3260 = vpop.permute.xlu0 %3259
        %3261 = vrot.lane.b32.xlu0 %v3102, 64
        %v3262 = vpop.permute.xlu0 %3261
        %3271 = vrot.lane.b32.xlu0 %v3103, 72
        %v3272 = vpop.permute.xlu0 %3271
        %3273 = vrot.lane.b32.xlu0 %v3104, 72
        %v3274 = vpop.permute.xlu0 %3273
        %3275 = vrot.lane.b32.xlu0 %v3105, 72
        %v3276 = vpop.permute.xlu0 %3275
        %3277 = vrot.lane.b32.xlu0 %v3106, 72
        %v3278 = vpop.permute.xlu0 %3277
        %3287 = vrot.lane.b32.xlu0 %v3107, 80
        %v3288 = vpop.permute.xlu0 %3287
        %3289 = vrot.lane.b32.xlu0 %v3108, 80
        %v3290 = vpop.permute.xlu0 %3289
        %3291 = vrot.lane.b32.xlu0 %v3109, 80
        %v3292 = vpop.permute.xlu0 %3291
        %3293 = vrot.lane.b32.xlu0 %v3110, 80
        %v3294 = vpop.permute.xlu0 %3293
        %3303 = vrot.lane.b32.xlu0 %v3111, 88
        %v3304 = vpop.permute.xlu0 %3303
        %3305 = vrot.lane.b32.xlu0 %v3112, 88
        %v3306 = vpop.permute.xlu0 %3305
        %3307 = vrot.lane.b32.xlu0 %v3113, 88
        %v3308 = vpop.permute.xlu0 %3307
        %3309 = vrot.lane.b32.xlu0 %v3114, 88
        %v3310 = vpop.permute.xlu0 %3309
        %3319 = vrot.lane.b32.xlu0 %v3115, 96
        %v3320 = vpop.permute.xlu0 %3319
        %3321 = vrot.lane.b32.xlu0 %v3116, 96
        %v3322 = vpop.permute.xlu0 %3321
        %3323 = vrot.lane.b32.xlu0 %v3117, 96
        %v3324 = vpop.permute.xlu0 %3323
        %3325 = vrot.lane.b32.xlu0 %v3118, 96
        %v3326 = vpop.permute.xlu0 %3325
        %3335 = vrot.lane.b32.xlu0 %v3119, 104
        %v3336 = vpop.permute.xlu0 %3335
        %3337 = vrot.lane.b32.xlu0 %v3120, 104
        %v3338 = vpop.permute.xlu0 %3337
        %3339 = vrot.lane.b32.xlu0 %v3121, 104
        %v3340 = vpop.permute.xlu0 %3339
        %3341 = vrot.lane.b32.xlu0 %v3122, 104
        %v3342 = vpop.permute.xlu0 %3341
        %3351 = vrot.lane.b32.xlu0 %v3123, 112
        %v3352 = vpop.permute.xlu0 %3351
        %3353 = vrot.lane.b32.xlu0 %v3124, 112
        %v3354 = vpop.permute.xlu0 %3353
        %3355 = vrot.lane.b32.xlu0 %v3125, 112
        %v3356 = vpop.permute.xlu0 %3355
        %3357 = vrot.lane.b32.xlu0 %v3126, 112
        %v3358 = vpop.permute.xlu0 %3357
        %3367 = vrot.lane.b32.xlu0 %v3127, 120
        %v3368 = vpop.permute.xlu0 %3367
        %3369 = vrot.lane.b32.xlu0 %v3128, 120
        %v3370 = vpop.permute.xlu0 %3369
        %3371 = vrot.lane.b32.xlu0 %v3129, 120
        %v3372 = vpop.permute.xlu0 %3371
        %3373 = vrot.lane.b32.xlu0 %v3130, 120
        %v3374 = vpop.permute.xlu0 %3373
        %v3379 = vsel %vm1141, %v3067, %v3144
        %v3380 = vsel %vm1141, %v3068, %v3146
        %v3381 = vsel %vm1141, %v3069, %v3148
        %v3382 = vsel %vm1141, %v3070, %v3150
        %v3383 = vsel %vm1146, %v3379, %v3160
        %v3384 = vsel %vm1146, %v3380, %v3162
        %v3385 = vsel %vm1146, %v3381, %v3164
        %v3386 = vsel %vm1146, %v3382, %v3166
        %v3387 = vsel %vm1151, %v3383, %v3176
        %v3388 = vsel %vm1151, %v3384, %v3178
        %v3389 = vsel %vm1151, %v3385, %v3180
        %v3390 = vsel %vm1151, %v3386, %v3182
        %v3391 = vsel %vm488, %v3387, %v3192
        %v3392 = vsel %vm488, %v3388, %v3194
        %v3393 = vsel %vm488, %v3389, %v3196
        %v3394 = vsel %vm488, %v3390, %v3198
        %v3395 = vsel %vm493, %v3391, %v3208
        %v3396 = vsel %vm493, %v3392, %v3210
        %v3397 = vsel %vm493, %v3393, %v3212
        %v3398 = vsel %vm493, %v3394, %v3214
        %v3399 = vsel %vm498, %v3395, %v3224
        %v3400 = vsel %vm498, %v3396, %v3226
        %v3401 = vsel %vm498, %v3397, %v3228
        %v3402 = vsel %vm498, %v3398, %v3230
        %v3403 = vsel %vm503, %v3399, %v3240
        %v3404 = vsel %vm503, %v3400, %v3242
        %v3405 = vsel %vm503, %v3401, %v3244
        %v3406 = vsel %vm503, %v3402, %v3246
        %v3407 = vsel %vm508, %v3403, %v3256
        %v3408 = vsel %vm508, %v3404, %v3258
        %v3409 = vsel %vm508, %v3405, %v3260
        %v3410 = vsel %vm508, %v3406, %v3262
        %v3411 = vsel %vm513, %v3407, %v3272
        %v3412 = vsel %vm513, %v3408, %v3274
        %v3413 = vsel %vm513, %v3409, %v3276
        %v3414 = vsel %vm513, %v3410, %v3278
        %v3415 = vsel %vm518, %v3411, %v3288
        %v3416 = vsel %vm518, %v3412, %v3290
        %v3417 = vsel %vm518, %v3413, %v3292
        %v3418 = vsel %vm518, %v3414, %v3294
        %v3419 = vsel %vm523, %v3415, %v3304
        %v3420 = vsel %vm523, %v3416, %v3306
        %v3421 = vsel %vm523, %v3417, %v3308
        %v3422 = vsel %vm523, %v3418, %v3310
        %v3423 = vsel %vm528, %v3419, %v3320
        %v3424 = vsel %vm528, %v3420, %v3322
        %v3425 = vsel %vm528, %v3421, %v3324
        %v3426 = vsel %vm528, %v3422, %v3326
        %v3427 = vsel %vm603, %v3423, %v3336
        %v3428 = vsel %vm603, %v3424, %v3338
        %v3429 = vsel %vm603, %v3425, %v3340
        %v3430 = vsel %vm603, %v3426, %v3342
        %v3431 = vsel %vm1196, %v3427, %v3352
        %v3432 = vsel %vm1196, %v3428, %v3354
        %v3433 = vsel %vm1196, %v3429, %v3356
        %v3434 = vsel %vm1196, %v3430, %v3358
        %v3435 = vsel %vm1201, %v3431, %v3368
        %v3436 = vsel %vm1201, %v3432, %v3370
        %v3437 = vsel %vm1201, %v3433, %v3372
        %v3438 = vsel %vm1201, %v3434, %v3374
        %3443 = vrot.lane.b32.xlu0 %v3135, 8
        %v3444 = vpop.permute.xlu0 %3443
        %3445 = vrot.lane.b32.xlu0 %v3136, 8
        %v3446 = vpop.permute.xlu0 %3445
        %3447 = vrot.lane.b32.xlu0 %v3137, 8
        %v3448 = vpop.permute.xlu0 %3447
        %3449 = vrot.lane.b32.xlu0 %v3138, 8
        %v3450 = vpop.permute.xlu0 %3449
        %v3455 = vsel %vm1141, %v3131, %v3444
        %v3456 = vsel %vm1141, %v3132, %v3446
        %v3457 = vsel %vm1141, %v3133, %v3448
        %v3458 = vsel %vm1141, %v3134, %v3450
        %v3467 = vcombine.low %v3435, %v3455
        %v3468 = vcombine.low %v3436, %v3456
        %v3469 = vcombine.low %v3437, %v3457
        %v3470 = vcombine.low %v3438, %v3458
        %v3471 = vld [vmem:[%s3] sm:$0xff]
        %v3472 = vld [vmem:[%s3 + $0x8] sm:$0xff]
        %v3473 = vld [vmem:[%s3 + $0x10] sm:$0xff]
        %v3474 = vld [vmem:[%s3 + $0x18] sm:$0xff]
        %v3475 = vld [vmem:[%s3 + $0x20] sm:$0xff]
        %v3476 = vld [vmem:[%s3 + $0x28] sm:$0xff]
        %v3477 = vld [vmem:[%s3 + $0x30] sm:$0xff]
        %v3478 = vld [vmem:[%s3 + $0x38] sm:$0xff]
        %v3479 = vld [vmem:[%s3 + $0x40] sm:$0xff]
        %v3480 = vld [vmem:[%s3 + $0x48] sm:$0xff]
        %v3481 = vld [vmem:[%s3 + $0x50] sm:$0xff]
        %v3482 = vld [vmem:[%s3 + $0x58] sm:$0xff]
        %v3483 = vld [vmem:[%s3 + $0x60] sm:$0xff]
        %v3484 = vld [vmem:[%s3 + $0x68] sm:$0xff]
        %v3485 = vld [vmem:[%s3 + $0x70] sm:$0xff]
        %v3486 = vld [vmem:[%s3 + $0x78] sm:$0xff]
        %v3487 = vld [vmem:[%s3 + $0x80] sm:$0xff]
        %v3488 = vld [vmem:[%s3 + $0x88] sm:$0xff]
        %v3489 = vld [vmem:[%s4] sm:$0x1]
        %v3491 = vlaneseq
        %v3492 = vshrl.u32 %v3491, 7
        %v3493 = vsub.s32 0, %v3492
        %v3494 = vrot.slane %v3489, %v3493
        %v3496 = vcombine.low %v3467, %v3468
        %v3497 = vcombine.high %v3467, %v3468
        %v3498 = vcombine.low %v3469, %v3470
        %v3499 = vcombine.high %v3469, %v3470
        %v3502 = vsel %vm1146, %v3497, 0
        %v3504 = vsel %vm1146, %v3499, 0
        %3506 = vmatprep.subr.mxu0 0.0
        %3507 = vmatpush1.msra.mxu0 %v3486
        %3508 = vmatprep.subr.mxu0 0.0
        %3509 = vmatpush1.msra.mxu0 %v3485
        %3510 = vmatprep.subr.mxu0 0.0
        %3511 = vmatpush1.msra.mxu0 %v3484
        %3512 = vmatprep.subr.mxu0 0.0
        %3513 = vmatpush1.msra.mxu0 %v3483
        %3514 = vmatprep.subr.mxu0 0.0
        %3515 = vmatpush1.msra.mxu0 %v3482
        %3516 = vmatprep.subr.mxu0 0.0
        %3517 = vmatpush1.msra.mxu0 %v3481
        %3518 = vmatprep.subr.mxu0 0.0
        %3519 = vmatpush1.msra.mxu0 %v3480
        %3520 = vmatprep.subr.mxu0 0.0
        %3521 = vmatpush1.msra.mxu0 %v3479
        %3522 = vmatprep.subr.mxu0 0.0
        %3523 = vmatpush1.msra.mxu0 %v3478
        %3524 = vmatprep.subr.mxu0 0.0
        %3525 = vmatpush1.msra.mxu0 %v3477
        %3526 = vmatprep.subr.mxu0 0.0
        %3527 = vmatpush1.msra.mxu0 %v3476
        %3528 = vmatprep.subr.mxu0 0.0
        %3529 = vmatpush1.msra.mxu0 %v3475
        %3530 = vmatprep.subr.mxu0 0.0
        %3531 = vmatpush1.msra.mxu0 %v3474
        %3532 = vmatprep.subr.mxu0 0.0
        %3533 = vmatpush1.msra.mxu0 %v3473
        %3534 = vmatprep.subr.mxu0 0.0
        %3535 = vmatpush1.msra.mxu0 %v3472
        %3536 = vmatprep.subr.mxu0 0.0
        %3537 = vmatpush1.msra.mxu0 %v3471
        %3538 = vmatprep.subr.mxu0 0.0
        %3539 = vmatpush2.msra.mxu0 0.0
        %3540 = vmatprep.subr.mxu0 0.0
        %3541 = vmatpush2.msra.mxu0 0.0
        %3542 = vmatprep.subr.mxu0 0.0
        %3543 = vmatpush2.msra.mxu0 0.0
        %3544 = vmatprep.subr.mxu0 0.0
        %3545 = vmatpush2.msra.mxu0 0.0
        %3546 = vmatprep.subr.mxu0 0.0
        %3547 = vmatpush2.msra.mxu0 0.0
        %3548 = vmatprep.subr.mxu0 0.0
        %3549 = vmatpush2.msra.mxu0 0.0
        %3550 = vmatprep.subr.mxu0 0.0
        %3551 = vmatpush2.msra.mxu0 0.0
        %3552 = vmatprep.subr.mxu0 0.0
        %3553 = vmatpush2.msra.mxu0 0.0
        %3554 = vmatprep.subr.mxu0 0.0
        %3555 = vmatpush2.msra.mxu0 0.0
        %3556 = vmatprep.subr.mxu0 0.0
        %3557 = vmatpush2.msra.mxu0 0.0
        %3558 = vmatprep.subr.mxu0 0.0
        %3559 = vmatpush2.msra.mxu0 0.0
        %3560 = vmatprep.subr.mxu0 0.0
        %3561 = vmatpush2.msra.mxu0 0.0
        %3562 = vmatprep.subr.mxu0 0.0
        %3563 = vmatpush2.msra.mxu0 0.0
        %3564 = vmatprep.subr.mxu0 0.0
        %3565 = vmatpush2.msra.mxu0 0.0
        %3566 = vmatprep.subr.mxu0 0.0
        %3567 = vmatpush2.msra.mxu0 %v3488
        %3568 = vmatprep.subr.mxu0 0.0
        %3569 = vmatpush2.msra.mxu0 %v3487
        %3570 = vmatprep.mubr.f32.mxu0 %v3502
        %3571 = vmatmul.mubr.f32.gmra.mxu0 %v3496
        %v3572 = vpop.f32.mrf.mxu0
        %v3573 = vadd.f32 %v3494, %v3572
        %v3574 = vpop.f32.mrf.mxu0
        %3575 = vmatprep.mubr.f32.mxu0 %v3504
        %3576 = vmatmul.mubr.f32.gmra.mxu0 %v3498
        %v3577 = vpop.f32.mrf.mxu0
        %v3578 = vadd.f32 %v3494, %v3577
        %v3579 = vpop.f32.mrf.mxu0
        %3580 = vdwg.mxu0
        %v3581 = vxor.u32 %v3573, 2147483648
        %v3582 = vxor.u32 %v3578, 2147483648
        %v3583 = vmul.f32 %v3581, 1.442695
        %v3584 = vpow.pop %v3583
        %v3585 = vmul.f32 %v3582, 1.442695
        %v3586 = vpow.pop %v3585
        %v3587 = vadd.f32 %v3584, 1.0
        %v3588 = vadd.f32 %v3586, 1.0
        %v3589 = vrcp.pop %v3587
        %v3590 = vmul.f32 1.0, %v3589
        %v3591 = vrcp.pop %v3588
        %v3592 = vmul.f32 1.0, %v3591
        %v3593 = vtanh.pop %v3573
        %v3594 = vtanh.pop %v3578
        %v3595 = vmul.f32 %v3590, %v2499
        %v3596 = vmul.f32 %v3592, %v2500
        %3599 = vrot.lane.b32.xlu0 %v3593, 104
        %v3600 = vpop.permute.xlu0 %3599
        %3601 = vrot.lane.b32.xlu0 %v3594, 104
        %v3602 = vpop.permute.xlu0 %3601
        %v3605 = vmul.f32 %v3590, %v3600
        %v3606 = vmul.f32 %v3592, %v3602
        %3609 = vrot.lane.b32.xlu0 %v3605, 8
        %v3610 = vpop.permute.xlu0 %3609
        %3611 = vrot.lane.b32.xlu0 %v3606, 8
        %v3612 = vpop.permute.xlu0 %3611
        %v3615 = vadd.f32 %v3595, %v3610
        %v3616 = vadd.f32 %v3596, %v3612
        %v3617 = vtanh.pop %v3615
        %v3618 = vtanh.pop %v3616
        %3621 = vrot.lane.b32.xlu0 %v3617, 8
        %v3622 = vpop.permute.xlu0 %3621
        %3623 = vrot.lane.b32.xlu0 %v3618, 8
        %v3624 = vpop.permute.xlu0 %3623
        %v3627 = vmul.f32 %v3590, %v3622
        %v3628 = vmul.f32 %v3592, %v3624
        %v3631 = vcombine.high %v3627, %v3627
        %v3632 = vcombine.high %v3628, %v3628
        %3633 = vrot.lane.b32.xlu0 %v3627, 112
        %v3634 = vpop.permute.xlu0 %3633
        %3635 = vrot.lane.b32.xlu0 %v3631, 112
        %v3636 = vpop.permute.xlu0 %3635
        %3637 = vrot.lane.b32.xlu0 %v3628, 112
        %v3638 = vpop.permute.xlu0 %3637
        %3639 = vrot.lane.b32.xlu0 %v3632, 112
        %v3640 = vpop.permute.xlu0 %3639
        %3645 = vst.msk [vmem:[%s875 + $0x1] sm:$0xf] %vm822, %v3634
        %3646 = vst.msk [vmem:[%s875 + $0x9] sm:$0xf] %vm822, %v3636
        %3647 = vst.msk [vmem:[%s875 + $0x11] sm:$0xf] %vm822, %v3638
        %3648 = vst.msk [vmem:[%s875 + $0x19] sm:$0xf] %vm822, %v3640
        %v3649 = vsel %vm1416, %v3627, 0.0
        %v3650 = vsel %vm1416, %v3628, 0.0
        %v3651 = vadd.f32 %v3649, %v3650
        %v3652 = vrot.slane %v3651, 4
        %v3653 = vadd.f32 %v3651, %v3652
        %v3654 = vrot.slane %v3653, 2
        %v3655 = vadd.f32 %v3653, %v3654
        %v3656 = vrot.slane %v3655, 1
        %v3657 = vadd.f32 %v3655, %v3656
        %s3658 = scalar_lea.vmem %s276, 144
        %v3659 = vld [vmem:[%s3658] sm:$0xff]
        %v3660 = vld [vmem:[%s3658 + $0x8] sm:$0xf]
        %v3661 = vld [vmem:[%s3658 + $0xc] sm:$0xff]
        %v3662 = vld [vmem:[%s3658 + $0x14] sm:$0xf]
        %v3663 = vld [vmem:[%s3658 + $0x18] sm:$0xff]
        %v3664 = vld [vmem:[%s3658 + $0x20] sm:$0xf]
        %v3665 = vld [vmem:[%s3658 + $0x24] sm:$0xff]
        %v3666 = vld [vmem:[%s3658 + $0x2c] sm:$0xf]
        %v3667 = vld [vmem:[#allocation2] sm:$0xf]
        %v3668 = vld [vmem:[#allocation2 + $0x8] sm:$0xf]
        %v3669 = vld [vmem:[#allocation2 + $0x10] sm:$0xf]
        %v3670 = vld [vmem:[#allocation2 + $0x18] sm:$0xf]
        %v3671 = vld [vmem:[#allocation2 + $0x1] sm:$0xf]
        %v3672 = vld [vmem:[#allocation2 + $0x9] sm:$0xf]
        %v3673 = vld [vmem:[#allocation2 + $0x11] sm:$0xf]
        %v3674 = vld [vmem:[#allocation2 + $0x19] sm:$0xf]
        %v3675 = vld [vmem:[#allocation2 + $0x2] sm:$0xf]
        %v3676 = vld [vmem:[#allocation2 + $0xa] sm:$0xf]
        %v3677 = vld [vmem:[#allocation2 + $0x12] sm:$0xf]
        %v3678 = vld [vmem:[#allocation2 + $0x1a] sm:$0xf]
        %v3679 = vld [vmem:[%s310] sm:$0xf]
        %v3680 = vld [vmem:[%s310 + $0x8] sm:$0xf]
        %v3681 = vld [vmem:[%s310 + $0x10] sm:$0xf]
        %v3682 = vld [vmem:[%s310 + $0x18] sm:$0xf]
        %v3683 = vld [vmem:[%s310 + $0x1] sm:$0xf]
        %v3684 = vld [vmem:[%s310 + $0x9] sm:$0xf]
        %v3685 = vld [vmem:[%s310 + $0x11] sm:$0xf]
        %v3686 = vld [vmem:[%s310 + $0x19] sm:$0xf]
        %v3687 = vld [vmem:[%s310 + $0x2] sm:$0xf]
        %v3688 = vld [vmem:[%s310 + $0xa] sm:$0xf]
        %v3689 = vld [vmem:[%s310 + $0x12] sm:$0xf]
        %v3690 = vld [vmem:[%s310 + $0x1a] sm:$0xf]
        %v3691 = vld [vmem:[%s323] sm:$0xf]
        %v3692 = vld [vmem:[%s323 + $0x8] sm:$0xf]
        %v3693 = vld [vmem:[%s323 + $0x10] sm:$0xf]
        %v3694 = vld [vmem:[%s323 + $0x18] sm:$0xf]
        %v3695 = vld [vmem:[%s323 + $0x1] sm:$0xf]
        %v3696 = vld [vmem:[%s323 + $0x9] sm:$0xf]
        %v3697 = vld [vmem:[%s323 + $0x11] sm:$0xf]
        %v3698 = vld [vmem:[%s323 + $0x19] sm:$0xf]
        %v3699 = vld [vmem:[%s323 + $0x2] sm:$0xf]
        %v3700 = vld [vmem:[%s323 + $0xa] sm:$0xf]
        %v3701 = vld [vmem:[%s323 + $0x12] sm:$0xf]
        %v3702 = vld [vmem:[%s323 + $0x1a] sm:$0xf]
        %v3707 = vcombine.high %v3659, %v3659
        %v3708 = vcombine.high %v3661, %v3661
        %v3709 = vcombine.high %v3663, %v3663
        %v3710 = vcombine.high %v3665, %v3665
        %3715 = vrot.lane.b32.xlu0 %v3667, 32
        %v3716 = vpop.permute.xlu0 %3715
        %3717 = vrot.lane.b32.xlu0 %v3668, 32
        %v3718 = vpop.permute.xlu0 %3717
        %3719 = vrot.lane.b32.xlu0 %v3669, 32
        %v3720 = vpop.permute.xlu0 %3719
        %3721 = vrot.lane.b32.xlu0 %v3670, 32
        %v3722 = vpop.permute.xlu0 %3721
        %3731 = vrot.lane.b32.xlu0 %v3671, 40
        %v3732 = vpop.permute.xlu0 %3731
        %3733 = vrot.lane.b32.xlu0 %v3672, 40
        %v3734 = vpop.permute.xlu0 %3733
        %3735 = vrot.lane.b32.xlu0 %v3673, 40
        %v3736 = vpop.permute.xlu0 %3735
        %3737 = vrot.lane.b32.xlu0 %v3674, 40
        %v3738 = vpop.permute.xlu0 %3737
        %3747 = vrot.lane.b32.xlu0 %v3675, 48
        %v3748 = vpop.permute.xlu0 %3747
        %3749 = vrot.lane.b32.xlu0 %v3676, 48
        %v3750 = vpop.permute.xlu0 %3749
        %3751 = vrot.lane.b32.xlu0 %v3677, 48
        %v3752 = vpop.permute.xlu0 %3751
        %3753 = vrot.lane.b32.xlu0 %v3678, 48
        %v3754 = vpop.permute.xlu0 %3753
        %3763 = vrot.lane.b32.xlu0 %v3679, 56
        %v3764 = vpop.permute.xlu0 %3763
        %3765 = vrot.lane.b32.xlu0 %v3680, 56
        %v3766 = vpop.permute.xlu0 %3765
        %3767 = vrot.lane.b32.xlu0 %v3681, 56
        %v3768 = vpop.permute.xlu0 %3767
        %3769 = vrot.lane.b32.xlu0 %v3682, 56
        %v3770 = vpop.permute.xlu0 %3769
        %3779 = vrot.lane.b32.xlu0 %v3683, 64
        %v3780 = vpop.permute.xlu0 %3779
        %3781 = vrot.lane.b32.xlu0 %v3684, 64
        %v3782 = vpop.permute.xlu0 %3781
        %3783 = vrot.lane.b32.xlu0 %v3685, 64
        %v3784 = vpop.permute.xlu0 %3783
        %3785 = vrot.lane.b32.xlu0 %v3686, 64
        %v3786 = vpop.permute.xlu0 %3785
        %3795 = vrot.lane.b32.xlu0 %v3687, 72
        %v3796 = vpop.permute.xlu0 %3795
        %3797 = vrot.lane.b32.xlu0 %v3688, 72
        %v3798 = vpop.permute.xlu0 %3797
        %3799 = vrot.lane.b32.xlu0 %v3689, 72
        %v3800 = vpop.permute.xlu0 %3799
        %3801 = vrot.lane.b32.xlu0 %v3690, 72
        %v3802 = vpop.permute.xlu0 %3801
        %3811 = vrot.lane.b32.xlu0 %v3691, 80
        %v3812 = vpop.permute.xlu0 %3811
        %3813 = vrot.lane.b32.xlu0 %v3692, 80
        %v3814 = vpop.permute.xlu0 %3813
        %3815 = vrot.lane.b32.xlu0 %v3693, 80
        %v3816 = vpop.permute.xlu0 %3815
        %3817 = vrot.lane.b32.xlu0 %v3694, 80
        %v3818 = vpop.permute.xlu0 %3817
        %3827 = vrot.lane.b32.xlu0 %v3695, 88
        %v3828 = vpop.permute.xlu0 %3827
        %3829 = vrot.lane.b32.xlu0 %v3696, 88
        %v3830 = vpop.permute.xlu0 %3829
        %3831 = vrot.lane.b32.xlu0 %v3697, 88
        %v3832 = vpop.permute.xlu0 %3831
        %3833 = vrot.lane.b32.xlu0 %v3698, 88
        %v3834 = vpop.permute.xlu0 %3833
        %3843 = vrot.lane.b32.xlu0 %v3699, 96
        %v3844 = vpop.permute.xlu0 %3843
        %3845 = vrot.lane.b32.xlu0 %v3700, 96
        %v3846 = vpop.permute.xlu0 %3845
        %3847 = vrot.lane.b32.xlu0 %v3701, 96
        %v3848 = vpop.permute.xlu0 %3847
        %3849 = vrot.lane.b32.xlu0 %v3702, 96
        %v3850 = vpop.permute.xlu0 %3849
        %v3855 = vsel %vm488, %v3660, %v3716
        %v3856 = vsel %vm488, %v3662, %v3718
        %v3857 = vsel %vm488, %v3664, %v3720
        %v3858 = vsel %vm488, %v3666, %v3722
        %v3859 = vsel %vm493, %v3855, %v3732
        %v3860 = vsel %vm493, %v3856, %v3734
        %v3861 = vsel %vm493, %v3857, %v3736
        %v3862 = vsel %vm493, %v3858, %v3738
        %v3863 = vsel %vm498, %v3859, %v3748
        %v3864 = vsel %vm498, %v3860, %v3750
        %v3865 = vsel %vm498, %v3861, %v3752
        %v3866 = vsel %vm498, %v3862, %v3754
        %v3867 = vsel %vm503, %v3863, %v3764
        %v3868 = vsel %vm503, %v3864, %v3766
        %v3869 = vsel %vm503, %v3865, %v3768
        %v3870 = vsel %vm503, %v3866, %v3770
        %v3871 = vsel %vm508, %v3867, %v3780
        %v3872 = vsel %vm508, %v3868, %v3782
        %v3873 = vsel %vm508, %v3869, %v3784
        %v3874 = vsel %vm508, %v3870, %v3786
        %v3875 = vsel %vm513, %v3871, %v3796
        %v3876 = vsel %vm513, %v3872, %v3798
        %v3877 = vsel %vm513, %v3873, %v3800
        %v3878 = vsel %vm513, %v3874, %v3802
        %v3879 = vsel %vm518, %v3875, %v3812
        %v3880 = vsel %vm518, %v3876, %v3814
        %v3881 = vsel %vm518, %v3877, %v3816
        %v3882 = vsel %vm518, %v3878, %v3818
        %v3883 = vsel %vm523, %v3879, %v3828
        %v3884 = vsel %vm523, %v3880, %v3830
        %v3885 = vsel %vm523, %v3881, %v3832
        %v3886 = vsel %vm523, %v3882, %v3834
        %v3887 = vsel %vm528, %v3883, %v3844
        %v3888 = vsel %vm528, %v3884, %v3846
        %v3889 = vsel %vm528, %v3885, %v3848
        %v3890 = vsel %vm528, %v3886, %v3850
        %v3895 = vcombine.low %v3659, %v3707
        %v3896 = vcombine.low %v3661, %v3708
        %v3897 = vcombine.low %v3663, %v3709
        %v3898 = vcombine.low %v3665, %v3710
        %v3899 = vld [vmem:[%s1] sm:$0xff]
        %v3900 = vld [vmem:[%s1 + $0x8] sm:$0xff]
        %v3901 = vld [vmem:[%s1 + $0x10] sm:$0xff]
        %v3902 = vld [vmem:[%s1 + $0x18] sm:$0xff]
        %v3903 = vld [vmem:[%s1 + $0x20] sm:$0xff]
        %v3904 = vld [vmem:[%s1 + $0x28] sm:$0xff]
        %v3905 = vld [vmem:[%s1 + $0x30] sm:$0xff]
        %v3906 = vld [vmem:[%s1 + $0x38] sm:$0xff]
        %v3907 = vld [vmem:[%s1 + $0x40] sm:$0xff]
        %v3908 = vld [vmem:[%s1 + $0x48] sm:$0xff]
        %v3909 = vld [vmem:[%s1 + $0x50] sm:$0xff]
        %v3910 = vld [vmem:[%s1 + $0x58] sm:$0xff]
        %v3911 = vld [vmem:[%s1 + $0x60] sm:$0xff]
        %v3912 = vld [vmem:[%s1 + $0x68] sm:$0xff]
        %v3913 = vld [vmem:[%s1 + $0x70] sm:$0xff]
        %v3914 = vld [vmem:[%s1 + $0x78] sm:$0xff]
        %v3915 = vld [vmem:[%s1 + $0x80] sm:$0xff]
        %v3916 = vld [vmem:[%s1 + $0x88] sm:$0xff]
        %v3917 = vld [vmem:[%s1 + $0x90] sm:$0xff]
        %v3918 = vld [vmem:[%s1 + $0x98] sm:$0xff]
        %v3919 = vld [vmem:[%s1 + $0xa0] sm:$0xff]
        %v3920 = vld [vmem:[%s1 + $0xa8] sm:$0xff]
        %v3921 = vld [vmem:[%s1 + $0xb0] sm:$0xff]
        %v3922 = vld [vmem:[%s1 + $0xb8] sm:$0xff]
        %v3923 = vld [vmem:[%s1 + $0xc0] sm:$0xff]
        %v3924 = vld [vmem:[%s1 + $0xc8] sm:$0xff]
        %v3925 = vld [vmem:[%s1 + $0xd0] sm:$0xff]
        %v3926 = vld [vmem:[%s1 + $0xd8] sm:$0xff]
        %v3927 = vld [vmem:[%s1 + $0xe0] sm:$0xff]
        %v3928 = vld [vmem:[%s1 + $0xe8] sm:$0xff]
        %v3929 = vld [vmem:[%s1 + $0xf0] sm:$0xff]
        %v3930 = vld [vmem:[%s1 + $0xf8] sm:$0xff]
        %v3931 = vld [vmem:[%s1 + $0x100] sm:$0xff]
        %v3932 = vld [vmem:[%s1 + $0x108] sm:$0xff]
        %v3933 = vld [vmem:[%s1 + $0x110] sm:$0xff]
        %v3934 = vld [vmem:[%s1 + $0x118] sm:$0xff]
        %v3935 = vld [vmem:[%s1 + $0x120] sm:$0xff]
        %v3936 = vld [vmem:[%s1 + $0x128] sm:$0xff]
        %v3937 = vld [vmem:[%s1 + $0x130] sm:$0xff]
        %v3938 = vld [vmem:[%s1 + $0x138] sm:$0xff]
        %v3939 = vld [vmem:[%s1 + $0x140] sm:$0xff]
        %v3940 = vld [vmem:[%s1 + $0x148] sm:$0xff]
        %v3941 = vld [vmem:[%s1 + $0x150] sm:$0xff]
        %v3942 = vld [vmem:[%s1 + $0x158] sm:$0xff]
        %v3943 = vld [vmem:[%s1 + $0x160] sm:$0xff]
        %v3944 = vld [vmem:[%s2] sm:$0x1]
        %v3946 = vlaneseq
        %v3947 = vshrl.u32 %v3946, 7
        %v3948 = vsub.s32 0, %v3947
        %v3949 = vrot.slane %v3944, %v3948
        %v3951 = vcombine.low %v3895, %v3896
        %v3952 = vcombine.high %v3895, %v3896
        %v3953 = vcombine.low %v3887, %v3888
        %v3954 = vcombine.low %v3897, %v3898
        %v3955 = vcombine.high %v3897, %v3898
        %v3956 = vcombine.low %v3889, %v3890
        %v3961 = vsel %vm603, %v3953, 0
        %v3963 = vsel %vm603, %v3956, 0
        %3965 = vmatprep.subr.mxu0 0.0
        %3966 = vmatpush1.msra.mxu0 %v3914
        %3967 = vmatprep.subr.mxu0 0.0
        %3968 = vmatpush1.msra.mxu0 %v3913
        %3969 = vmatprep.subr.mxu0 0.0
        %3970 = vmatpush1.msra.mxu0 %v3912
        %3971 = vmatprep.subr.mxu0 0.0
        %3972 = vmatpush1.msra.mxu0 %v3911
        %3973 = vmatprep.subr.mxu0 0.0
        %3974 = vmatpush1.msra.mxu0 %v3910
        %3975 = vmatprep.subr.mxu0 0.0
        %3976 = vmatpush1.msra.mxu0 %v3909
        %3977 = vmatprep.subr.mxu0 0.0
        %3978 = vmatpush1.msra.mxu0 %v3908
        %3979 = vmatprep.subr.mxu0 0.0
        %3980 = vmatpush1.msra.mxu0 %v3907
        %3981 = vmatprep.subr.mxu0 0.0
        %3982 = vmatpush1.msra.mxu0 %v3906
        %3983 = vmatprep.subr.mxu0 0.0
        %3984 = vmatpush1.msra.mxu0 %v3905
        %3985 = vmatprep.subr.mxu0 0.0
        %3986 = vmatpush1.msra.mxu0 %v3904
        %3987 = vmatprep.subr.mxu0 0.0
        %3988 = vmatpush1.msra.mxu0 %v3903
        %3989 = vmatprep.subr.mxu0 0.0
        %3990 = vmatpush1.msra.mxu0 %v3902
        %3991 = vmatprep.subr.mxu0 0.0
        %3992 = vmatpush1.msra.mxu0 %v3901
        %3993 = vmatprep.subr.mxu0 0.0
        %3994 = vmatpush1.msra.mxu0 %v3900
        %3995 = vmatprep.subr.mxu0 0.0
        %3996 = vmatpush1.msra.mxu0 %v3899
        %3997 = vmatprep.subr.mxu0 0.0
        %3998 = vmatpush2.msra.mxu0 %v3930
        %3999 = vmatprep.subr.mxu0 0.0
        %4000 = vmatpush2.msra.mxu0 %v3929
        %4001 = vmatprep.subr.mxu0 0.0
        %4002 = vmatpush2.msra.mxu0 %v3928
        %4003 = vmatprep.subr.mxu0 0.0
        %4004 = vmatpush2.msra.mxu0 %v3927
        %4005 = vmatprep.subr.mxu0 0.0
        %4006 = vmatpush2.msra.mxu0 %v3926
        %4007 = vmatprep.subr.mxu0 0.0
        %4008 = vmatpush2.msra.mxu0 %v3925
        %4009 = vmatprep.subr.mxu0 0.0
        %4010 = vmatpush2.msra.mxu0 %v3924
        %4011 = vmatprep.subr.mxu0 0.0
        %4012 = vmatpush2.msra.mxu0 %v3923
        %4013 = vmatprep.subr.mxu0 0.0
        %4014 = vmatpush2.msra.mxu0 %v3922
        %4015 = vmatprep.subr.mxu0 0.0
        %4016 = vmatpush2.msra.mxu0 %v3921
        %4017 = vmatprep.subr.mxu0 0.0
        %4018 = vmatpush2.msra.mxu0 %v3920
        %4019 = vmatprep.subr.mxu0 0.0
        %4020 = vmatpush2.msra.mxu0 %v3919
        %4021 = vmatprep.subr.mxu0 0.0
        %4022 = vmatpush2.msra.mxu0 %v3918
        %4023 = vmatprep.subr.mxu0 0.0
        %4024 = vmatpush2.msra.mxu0 %v3917
        %4025 = vmatprep.subr.mxu0 0.0
        %4026 = vmatpush2.msra.mxu0 %v3916
        %4027 = vmatprep.subr.mxu0 0.0
        %4028 = vmatpush2.msra.mxu0 %v3915
        %4029 = vmatprep.mubr.f32.mxu0 %v3952
        %4030 = vmatmul.mubr.f32.gmra.mxu0 %v3951
        %v4031 = vpop.f32.mrf.mxu0
        %v4032 = vadd.f32 %v3949, %v4031
        %v4033 = vpop.f32.mrf.mxu0
        %4034 = vmatprep.mubr.f32.mxu0 %v3955
        %4035 = vmatmul.mubr.f32.gmra.mxu0 %v3954
        %v4036 = vpop.f32.mrf.mxu0
        %v4037 = vadd.f32 %v3949, %v4036
        %v4038 = vpop.f32.mrf.mxu0
        %4039 = vdwg.mxu0
        %4040 = vmatprep.subr.mxu0 0.0
        %4041 = vmatpush1.msra.mxu0 0.0
        %4042 = vmatprep.subr.mxu0 0.0
        %4043 = vmatpush1.msra.mxu0 0.0
        %4044 = vmatprep.subr.mxu0 0.0
        %4045 = vmatpush1.msra.mxu0 0.0
        %4046 = vmatprep.subr.mxu0 0.0
        %4047 = vmatpush1.msra.mxu0 %v3943
        %4048 = vmatprep.subr.mxu0 0.0
        %4049 = vmatpush1.msra.mxu0 %v3942
        %4050 = vmatprep.subr.mxu0 0.0
        %4051 = vmatpush1.msra.mxu0 %v3941
        %4052 = vmatprep.subr.mxu0 0.0
        %4053 = vmatpush1.msra.mxu0 %v3940
        %4054 = vmatprep.subr.mxu0 0.0
        %4055 = vmatpush1.msra.mxu0 %v3939
        %4056 = vmatprep.subr.mxu0 0.0
        %4057 = vmatpush1.msra.mxu0 %v3938
        %4058 = vmatprep.subr.mxu0 0.0
        %4059 = vmatpush1.msra.mxu0 %v3937
        %4060 = vmatprep.subr.mxu0 0.0
        %4061 = vmatpush1.msra.mxu0 %v3936
        %4062 = vmatprep.subr.mxu0 0.0
        %4063 = vmatpush1.msra.mxu0 %v3935
        %4064 = vmatprep.subr.mxu0 0.0
        %4065 = vmatpush1.msra.mxu0 %v3934
        %4066 = vmatprep.subr.mxu0 0.0
        %4067 = vmatpush1.msra.mxu0 %v3933
        %4068 = vmatprep.subr.mxu0 0.0
        %4069 = vmatpush1.msra.mxu0 %v3932
        %4070 = vmatprep.subr.mxu0 0.0
        %4071 = vmatpush1.msra.mxu0 %v3931
        %4072 = vmatprep.subr.mxu0 0.0
        %4073 = vmatpush2.msra.mxu0 0.0
        %4074 = vmatprep.subr.mxu0 0.0
        %4075 = vmatpush2.msra.mxu0 0.0
        %4076 = vmatprep.subr.mxu0 0.0
        %4077 = vmatpush2.msra.mxu0 0.0
        %4078 = vmatprep.subr.mxu0 0.0
        %4079 = vmatpush2.msra.mxu0 0.0
        %4080 = vmatprep.subr.mxu0 0.0
        %4081 = vmatpush2.msra.mxu0 0.0
        %4082 = vmatprep.subr.mxu0 0.0
        %4083 = vmatpush2.msra.mxu0 0.0
        %4084 = vmatprep.subr.mxu0 0.0
        %4085 = vmatpush2.msra.mxu0 0.0
        %4086 = vmatprep.subr.mxu0 0.0
        %4087 = vmatpush2.msra.mxu0 0.0
        %4088 = vmatprep.subr.mxu0 0.0
        %4089 = vmatpush2.msra.mxu0 0.0
        %4090 = vmatprep.subr.mxu0 0.0
        %4091 = vmatpush2.msra.mxu0 0.0
        %4092 = vmatprep.subr.mxu0 0.0
        %4093 = vmatpush2.msra.mxu0 0.0
        %4094 = vmatprep.subr.mxu0 0.0
        %4095 = vmatpush2.msra.mxu0 0.0
        %4096 = vmatprep.subr.mxu0 0.0
        %4097 = vmatpush2.msra.mxu0 0.0
        %4098 = vmatprep.subr.mxu0 0.0
        %4099 = vmatpush2.msra.mxu0 0.0
        %4100 = vmatprep.subr.mxu0 0.0
        %4101 = vmatpush2.msra.mxu0 0.0
        %4102 = vmatprep.subr.mxu0 0.0
        %4103 = vmatpush2.msra.mxu0 0.0
        %4104 = vmatprep.mubr.f32.mxu0 0.0
        %4105 = vmatmul.mubr.f32.gmra.mxu0 %v3961
        %v4106 = vpop.f32.mrf.mxu0
        %v4107 = vadd.f32 %v4032, %v4106
        %v4108 = vpop.f32.mrf.mxu0
        %4109 = vmatprep.mubr.f32.mxu0 0.0
        %4110 = vmatmul.mubr.f32.gmra.mxu0 %v3963
        %v4111 = vpop.f32.mrf.mxu0
        %v4112 = vadd.f32 %v4037, %v4111
        %v4113 = vpop.f32.mrf.mxu0
        %4114 = vdwg.mxu0
        %v4115 = vxor.u32 %v4107, 2147483648
        %v4116 = vxor.u32 %v4112, 2147483648
        %v4117 = vmul.f32 %v4115, 1.442695
        %v4118 = vpow.pop %v4117
        %v4119 = vmul.f32 %v4116, 1.442695
        %v4120 = vpow.pop %v4119
        %v4121 = vadd.f32 %v4118, 1.0
        %v4122 = vadd.f32 %v4120, 1.0
        %v4123 = vrcp.pop %v4121
        %v4124 = vmul.f32 1.0, %v4123
        %v4125 = vrcp.pop %v4122
        %v4126 = vmul.f32 1.0, %v4125
        %v4127 = vtanh.pop %v4107
        %v4128 = vtanh.pop %v4112
        %v4129 = vmul.f32 %v4124, %v3033
        %v4130 = vmul.f32 %v4126, %v3034
        %4133 = vrot.lane.b32.xlu0 %v4127, 104
        %v4134 = vpop.permute.xlu0 %4133
        %4135 = vrot.lane.b32.xlu0 %v4128, 104
        %v4136 = vpop.permute.xlu0 %4135
        %v4139 = vmul.f32 %v4124, %v4134
        %v4140 = vmul.f32 %v4126, %v4136
        %4143 = vrot.lane.b32.xlu0 %v4139, 8
        %v4144 = vpop.permute.xlu0 %4143
        %4145 = vrot.lane.b32.xlu0 %v4140, 8
        %v4146 = vpop.permute.xlu0 %4145
        %v4149 = vadd.f32 %v4129, %v4144
        %v4150 = vadd.f32 %v4130, %v4146
        %v4151 = vtanh.pop %v4149
        %v4152 = vtanh.pop %v4150
        %4155 = vrot.lane.b32.xlu0 %v4151, 8
        %v4156 = vpop.permute.xlu0 %4155
        %4157 = vrot.lane.b32.xlu0 %v4152, 8
        %v4158 = vpop.permute.xlu0 %4157
        %v4161 = vmul.f32 %v4124, %v4156
        %v4162 = vmul.f32 %v4126, %v4158
        %v4165 = vcombine.high %v4161, %v4161
        %v4166 = vcombine.high %v4162, %v4162
        %4167 = vrot.lane.b32.xlu0 %v4161, 112
        %v4168 = vpop.permute.xlu0 %4167
        %4169 = vrot.lane.b32.xlu0 %v4165, 112
        %v4170 = vpop.permute.xlu0 %4169
        %4171 = vrot.lane.b32.xlu0 %v4162, 112
        %v4172 = vpop.permute.xlu0 %4171
        %4173 = vrot.lane.b32.xlu0 %v4166, 112
        %v4174 = vpop.permute.xlu0 %4173
        %4179 = vst.msk [vmem:[%s310 + $0x1] sm:$0xf] %vm822, %v4168
        %4180 = vst.msk [vmem:[%s310 + $0x9] sm:$0xf] %vm822, %v4170
        %4181 = vst.msk [vmem:[%s310 + $0x11] sm:$0xf] %vm822, %v4172
        %4182 = vst.msk [vmem:[%s310 + $0x19] sm:$0xf] %vm822, %v4174
        %v4183 = vld [vmem:[#allocation2] sm:$0xf]
        %v4184 = vld [vmem:[#allocation2 + $0x8] sm:$0xf]
        %v4185 = vld [vmem:[#allocation2 + $0x10] sm:$0xf]
        %v4186 = vld [vmem:[#allocation2 + $0x18] sm:$0xf]
        %v4187 = vld [vmem:[#allocation2 + $0x1] sm:$0xf]
        %v4188 = vld [vmem:[#allocation2 + $0x9] sm:$0xf]
        %v4189 = vld [vmem:[#allocation2 + $0x11] sm:$0xf]
        %v4190 = vld [vmem:[#allocation2 + $0x19] sm:$0xf]
        %v4191 = vld [vmem:[#allocation2 + $0x2] sm:$0xf]
        %v4192 = vld [vmem:[#allocation2 + $0xa] sm:$0xf]
        %v4193 = vld [vmem:[#allocation2 + $0x12] sm:$0xf]
        %v4194 = vld [vmem:[#allocation2 + $0x1a] sm:$0xf]
        %v4195 = vld [vmem:[%s310] sm:$0xf]
        %v4196 = vld [vmem:[%s310 + $0x8] sm:$0xf]
        %v4197 = vld [vmem:[%s310 + $0x10] sm:$0xf]
        %v4198 = vld [vmem:[%s310 + $0x18] sm:$0xf]
        %v4199 = vld [vmem:[%s310 + $0x1] sm:$0xf]
        %v4200 = vld [vmem:[%s310 + $0x9] sm:$0xf]
        %v4201 = vld [vmem:[%s310 + $0x11] sm:$0xf]
        %v4202 = vld [vmem:[%s310 + $0x19] sm:$0xf]
        %v4203 = vld [vmem:[%s310 + $0x2] sm:$0xf]
        %v4204 = vld [vmem:[%s310 + $0xa] sm:$0xf]
        %v4205 = vld [vmem:[%s310 + $0x12] sm:$0xf]
        %v4206 = vld [vmem:[%s310 + $0x1a] sm:$0xf]
        %v4207 = vld [vmem:[%s323] sm:$0xf]
        %v4208 = vld [vmem:[%s323 + $0x8] sm:$0xf]
        %v4209 = vld [vmem:[%s323 + $0x10] sm:$0xf]
        %v4210 = vld [vmem:[%s323 + $0x18] sm:$0xf]
        %v4211 = vld [vmem:[%s323 + $0x1] sm:$0xf]
        %v4212 = vld [vmem:[%s323 + $0x9] sm:$0xf]
        %v4213 = vld [vmem:[%s323 + $0x11] sm:$0xf]
        %v4214 = vld [vmem:[%s323 + $0x19] sm:$0xf]
        %v4215 = vld [vmem:[%s323 + $0x2] sm:$0xf]
        %v4216 = vld [vmem:[%s323 + $0xa] sm:$0xf]
        %v4217 = vld [vmem:[%s323 + $0x12] sm:$0xf]
        %v4218 = vld [vmem:[%s323 + $0x1a] sm:$0xf]
        %v4219 = vld [vmem:[#allocation3] sm:$0xf]
        %v4220 = vld [vmem:[#allocation3 + $0x8] sm:$0xf]
        %v4221 = vld [vmem:[#allocation3 + $0x10] sm:$0xf]
        %v4222 = vld [vmem:[#allocation3 + $0x18] sm:$0xf]
        %v4223 = vld [vmem:[#allocation3 + $0x1] sm:$0xf]
        %v4224 = vld [vmem:[#allocation3 + $0x9] sm:$0xf]
        %v4225 = vld [vmem:[#allocation3 + $0x11] sm:$0xf]
        %v4226 = vld [vmem:[#allocation3 + $0x19] sm:$0xf]
        %v4227 = vld [vmem:[#allocation3 + $0x2] sm:$0xf]
        %v4228 = vld [vmem:[#allocation3 + $0xa] sm:$0xf]
        %v4229 = vld [vmem:[#allocation3 + $0x12] sm:$0xf]
        %v4230 = vld [vmem:[#allocation3 + $0x1a] sm:$0xf]
        %v4231 = vld [vmem:[%s875] sm:$0xf]
        %v4232 = vld [vmem:[%s875 + $0x8] sm:$0xf]
        %v4233 = vld [vmem:[%s875 + $0x10] sm:$0xf]
        %v4234 = vld [vmem:[%s875 + $0x18] sm:$0xf]
        %v4235 = vld [vmem:[%s875 + $0x1] sm:$0xf]
        %v4236 = vld [vmem:[%s875 + $0x9] sm:$0xf]
        %v4237 = vld [vmem:[%s875 + $0x11] sm:$0xf]
        %v4238 = vld [vmem:[%s875 + $0x19] sm:$0xf]
        %v4239 = vld [vmem:[%s875 + $0x2] sm:$0xf]
        %v4240 = vld [vmem:[%s875 + $0xa] sm:$0xf]
        %v4241 = vld [vmem:[%s875 + $0x12] sm:$0xf]
        %v4242 = vld [vmem:[%s875 + $0x1a] sm:$0xf]
        %v4243 = vld [vmem:[%s888] sm:$0xf]
        %v4244 = vld [vmem:[%s888 + $0x8] sm:$0xf]
        %v4245 = vld [vmem:[%s888 + $0x10] sm:$0xf]
        %v4246 = vld [vmem:[%s888 + $0x18] sm:$0xf]
        %v4247 = vld [vmem:[%s888 + $0x1] sm:$0xf]
        %v4248 = vld [vmem:[%s888 + $0x9] sm:$0xf]
        %v4249 = vld [vmem:[%s888 + $0x11] sm:$0xf]
        %v4250 = vld [vmem:[%s888 + $0x19] sm:$0xf]
        %v4251 = vld [vmem:[%s888 + $0x2] sm:$0xf]
        %v4252 = vld [vmem:[%s888 + $0xa] sm:$0xf]
        %v4253 = vld [vmem:[%s888 + $0x12] sm:$0xf]
        %v4254 = vld [vmem:[%s888 + $0x1a] sm:$0xf]
        %4259 = vrot.lane.b32.xlu0 %v4187, 8
        %v4260 = vpop.permute.xlu0 %4259
        %4261 = vrot.lane.b32.xlu0 %v4188, 8
        %v4262 = vpop.permute.xlu0 %4261
        %4263 = vrot.lane.b32.xlu0 %v4189, 8
        %v4264 = vpop.permute.xlu0 %4263
        %4265 = vrot.lane.b32.xlu0 %v4190, 8
        %v4266 = vpop.permute.xlu0 %4265
        %4275 = vrot.lane.b32.xlu0 %v4191, 16
        %v4276 = vpop.permute.xlu0 %4275
        %4277 = vrot.lane.b32.xlu0 %v4192, 16
        %v4278 = vpop.permute.xlu0 %4277
        %4279 = vrot.lane.b32.xlu0 %v4193, 16
        %v4280 = vpop.permute.xlu0 %4279
        %4281 = vrot.lane.b32.xlu0 %v4194, 16
        %v4282 = vpop.permute.xlu0 %4281
        %4291 = vrot.lane.b32.xlu0 %v4195, 24
        %v4292 = vpop.permute.xlu0 %4291
        %4293 = vrot.lane.b32.xlu0 %v4196, 24
        %v4294 = vpop.permute.xlu0 %4293
        %4295 = vrot.lane.b32.xlu0 %v4197, 24
        %v4296 = vpop.permute.xlu0 %4295
        %4297 = vrot.lane.b32.xlu0 %v4198, 24
        %v4298 = vpop.permute.xlu0 %4297
        %4307 = vrot.lane.b32.xlu0 %v4199, 32
        %v4308 = vpop.permute.xlu0 %4307
        %4309 = vrot.lane.b32.xlu0 %v4200, 32
        %v4310 = vpop.permute.xlu0 %4309
        %4311 = vrot.lane.b32.xlu0 %v4201, 32
        %v4312 = vpop.permute.xlu0 %4311
        %4313 = vrot.lane.b32.xlu0 %v4202, 32
        %v4314 = vpop.permute.xlu0 %4313
        %4323 = vrot.lane.b32.xlu0 %v4203, 40
        %v4324 = vpop.permute.xlu0 %4323
        %4325 = vrot.lane.b32.xlu0 %v4204, 40
        %v4326 = vpop.permute.xlu0 %4325
        %4327 = vrot.lane.b32.xlu0 %v4205, 40
        %v4328 = vpop.permute.xlu0 %4327
        %4329 = vrot.lane.b32.xlu0 %v4206, 40
        %v4330 = vpop.permute.xlu0 %4329
        %4339 = vrot.lane.b32.xlu0 %v4207, 48
        %v4340 = vpop.permute.xlu0 %4339
        %4341 = vrot.lane.b32.xlu0 %v4208, 48
        %v4342 = vpop.permute.xlu0 %4341
        %4343 = vrot.lane.b32.xlu0 %v4209, 48
        %v4344 = vpop.permute.xlu0 %4343
        %4345 = vrot.lane.b32.xlu0 %v4210, 48
        %v4346 = vpop.permute.xlu0 %4345
        %4355 = vrot.lane.b32.xlu0 %v4211, 56
        %v4356 = vpop.permute.xlu0 %4355
        %4357 = vrot.lane.b32.xlu0 %v4212, 56
        %v4358 = vpop.permute.xlu0 %4357
        %4359 = vrot.lane.b32.xlu0 %v4213, 56
        %v4360 = vpop.permute.xlu0 %4359
        %4361 = vrot.lane.b32.xlu0 %v4214, 56
        %v4362 = vpop.permute.xlu0 %4361
        %4371 = vrot.lane.b32.xlu0 %v4215, 64
        %v4372 = vpop.permute.xlu0 %4371
        %4373 = vrot.lane.b32.xlu0 %v4216, 64
        %v4374 = vpop.permute.xlu0 %4373
        %4375 = vrot.lane.b32.xlu0 %v4217, 64
        %v4376 = vpop.permute.xlu0 %4375
        %4377 = vrot.lane.b32.xlu0 %v4218, 64
        %v4378 = vpop.permute.xlu0 %4377
        %4387 = vrot.lane.b32.xlu0 %v4219, 72
        %v4388 = vpop.permute.xlu0 %4387
        %4389 = vrot.lane.b32.xlu0 %v4220, 72
        %v4390 = vpop.permute.xlu0 %4389
        %4391 = vrot.lane.b32.xlu0 %v4221, 72
        %v4392 = vpop.permute.xlu0 %4391
        %4393 = vrot.lane.b32.xlu0 %v4222, 72
        %v4394 = vpop.permute.xlu0 %4393
        %4403 = vrot.lane.b32.xlu0 %v4223, 80
        %v4404 = vpop.permute.xlu0 %4403
        %4405 = vrot.lane.b32.xlu0 %v4224, 80
        %v4406 = vpop.permute.xlu0 %4405
        %4407 = vrot.lane.b32.xlu0 %v4225, 80
        %v4408 = vpop.permute.xlu0 %4407
        %4409 = vrot.lane.b32.xlu0 %v4226, 80
        %v4410 = vpop.permute.xlu0 %4409
        %4419 = vrot.lane.b32.xlu0 %v4227, 88
        %v4420 = vpop.permute.xlu0 %4419
        %4421 = vrot.lane.b32.xlu0 %v4228, 88
        %v4422 = vpop.permute.xlu0 %4421
        %4423 = vrot.lane.b32.xlu0 %v4229, 88
        %v4424 = vpop.permute.xlu0 %4423
        %4425 = vrot.lane.b32.xlu0 %v4230, 88
        %v4426 = vpop.permute.xlu0 %4425
        %4435 = vrot.lane.b32.xlu0 %v4231, 96
        %v4436 = vpop.permute.xlu0 %4435
        %4437 = vrot.lane.b32.xlu0 %v4232, 96
        %v4438 = vpop.permute.xlu0 %4437
        %4439 = vrot.lane.b32.xlu0 %v4233, 96
        %v4440 = vpop.permute.xlu0 %4439
        %4441 = vrot.lane.b32.xlu0 %v4234, 96
        %v4442 = vpop.permute.xlu0 %4441
        %4451 = vrot.lane.b32.xlu0 %v4235, 104
        %v4452 = vpop.permute.xlu0 %4451
        %4453 = vrot.lane.b32.xlu0 %v4236, 104
        %v4454 = vpop.permute.xlu0 %4453
        %4455 = vrot.lane.b32.xlu0 %v4237, 104
        %v4456 = vpop.permute.xlu0 %4455
        %4457 = vrot.lane.b32.xlu0 %v4238, 104
        %v4458 = vpop.permute.xlu0 %4457
        %4467 = vrot.lane.b32.xlu0 %v4239, 112
        %v4468 = vpop.permute.xlu0 %4467
        %4469 = vrot.lane.b32.xlu0 %v4240, 112
        %v4470 = vpop.permute.xlu0 %4469
        %4471 = vrot.lane.b32.xlu0 %v4241, 112
        %v4472 = vpop.permute.xlu0 %4471
        %4473 = vrot.lane.b32.xlu0 %v4242, 112
        %v4474 = vpop.permute.xlu0 %4473
        %4483 = vrot.lane.b32.xlu0 %v4243, 120
        %v4484 = vpop.permute.xlu0 %4483
        %4485 = vrot.lane.b32.xlu0 %v4244, 120
        %v4486 = vpop.permute.xlu0 %4485
        %4487 = vrot.lane.b32.xlu0 %v4245, 120
        %v4488 = vpop.permute.xlu0 %4487
        %4489 = vrot.lane.b32.xlu0 %v4246, 120
        %v4490 = vpop.permute.xlu0 %4489
        %v4495 = vsel %vm1141, %v4183, %v4260
        %v4496 = vsel %vm1141, %v4184, %v4262
        %v4497 = vsel %vm1141, %v4185, %v4264
        %v4498 = vsel %vm1141, %v4186, %v4266
        %v4499 = vsel %vm1146, %v4495, %v4276
        %v4500 = vsel %vm1146, %v4496, %v4278
        %v4501 = vsel %vm1146, %v4497, %v4280
        %v4502 = vsel %vm1146, %v4498, %v4282
        %v4503 = vsel %vm1151, %v4499, %v4292
        %v4504 = vsel %vm1151, %v4500, %v4294
        %v4505 = vsel %vm1151, %v4501, %v4296
        %v4506 = vsel %vm1151, %v4502, %v4298
        %v4507 = vsel %vm488, %v4503, %v4308
        %v4508 = vsel %vm488, %v4504, %v4310
        %v4509 = vsel %vm488, %v4505, %v4312
        %v4510 = vsel %vm488, %v4506, %v4314
        %v4511 = vsel %vm493, %v4507, %v4324
        %v4512 = vsel %vm493, %v4508, %v4326
        %v4513 = vsel %vm493, %v4509, %v4328
        %v4514 = vsel %vm493, %v4510, %v4330
        %v4515 = vsel %vm498, %v4511, %v4340
        %v4516 = vsel %vm498, %v4512, %v4342
        %v4517 = vsel %vm498, %v4513, %v4344
        %v4518 = vsel %vm498, %v4514, %v4346
        %v4519 = vsel %vm503, %v4515, %v4356
        %v4520 = vsel %vm503, %v4516, %v4358
        %v4521 = vsel %vm503, %v4517, %v4360
        %v4522 = vsel %vm503, %v4518, %v4362
        %v4523 = vsel %vm508, %v4519, %v4372
        %v4524 = vsel %vm508, %v4520, %v4374
        %v4525 = vsel %vm508, %v4521, %v4376
        %v4526 = vsel %vm508, %v4522, %v4378
        %v4527 = vsel %vm513, %v4523, %v4388
        %v4528 = vsel %vm513, %v4524, %v4390
        %v4529 = vsel %vm513, %v4525, %v4392
        %v4530 = vsel %vm513, %v4526, %v4394
        %v4531 = vsel %vm518, %v4527, %v4404
        %v4532 = vsel %vm518, %v4528, %v4406
        %v4533 = vsel %vm518, %v4529, %v4408
        %v4534 = vsel %vm518, %v4530, %v4410
        %v4535 = vsel %vm523, %v4531, %v4420
        %v4536 = vsel %vm523, %v4532, %v4422
        %v4537 = vsel %vm523, %v4533, %v4424
        %v4538 = vsel %vm523, %v4534, %v4426
        %v4539 = vsel %vm528, %v4535, %v4436
        %v4540 = vsel %vm528, %v4536, %v4438
        %v4541 = vsel %vm528, %v4537, %v4440
        %v4542 = vsel %vm528, %v4538, %v4442
        %v4543 = vsel %vm603, %v4539, %v4452
        %v4544 = vsel %vm603, %v4540, %v4454
        %v4545 = vsel %vm603, %v4541, %v4456
        %v4546 = vsel %vm603, %v4542, %v4458
        %v4547 = vsel %vm1196, %v4543, %v4468
        %v4548 = vsel %vm1196, %v4544, %v4470
        %v4549 = vsel %vm1196, %v4545, %v4472
        %v4550 = vsel %vm1196, %v4546, %v4474
        %v4551 = vsel %vm1201, %v4547, %v4484
        %v4552 = vsel %vm1201, %v4548, %v4486
        %v4553 = vsel %vm1201, %v4549, %v4488
        %v4554 = vsel %vm1201, %v4550, %v4490
        %4559 = vrot.lane.b32.xlu0 %v4251, 8
        %v4560 = vpop.permute.xlu0 %4559
        %4561 = vrot.lane.b32.xlu0 %v4252, 8
        %v4562 = vpop.permute.xlu0 %4561
        %4563 = vrot.lane.b32.xlu0 %v4253, 8
        %v4564 = vpop.permute.xlu0 %4563
        %4565 = vrot.lane.b32.xlu0 %v4254, 8
        %v4566 = vpop.permute.xlu0 %4565
        %v4571 = vsel %vm1141, %v4247, %v4560
        %v4572 = vsel %vm1141, %v4248, %v4562
        %v4573 = vsel %vm1141, %v4249, %v4564
        %v4574 = vsel %vm1141, %v4250, %v4566
        %v4583 = vcombine.low %v4551, %v4571
        %v4584 = vcombine.low %v4552, %v4572
        %v4585 = vcombine.low %v4553, %v4573
        %v4586 = vcombine.low %v4554, %v4574
        %v4587 = vld [vmem:[%s3] sm:$0xff]
        %v4588 = vld [vmem:[%s3 + $0x8] sm:$0xff]
        %v4589 = vld [vmem:[%s3 + $0x10] sm:$0xff]
        %v4590 = vld [vmem:[%s3 + $0x18] sm:$0xff]
        %v4591 = vld [vmem:[%s3 + $0x20] sm:$0xff]
        %v4592 = vld [vmem:[%s3 + $0x28] sm:$0xff]
        %v4593 = vld [vmem:[%s3 + $0x30] sm:$0xff]
        %v4594 = vld [vmem:[%s3 + $0x38] sm:$0xff]
        %v4595 = vld [vmem:[%s3 + $0x40] sm:$0xff]
        %v4596 = vld [vmem:[%s3 + $0x48] sm:$0xff]
        %v4597 = vld [vmem:[%s3 + $0x50] sm:$0xff]
        %v4598 = vld [vmem:[%s3 + $0x58] sm:$0xff]
        %v4599 = vld [vmem:[%s3 + $0x60] sm:$0xff]
        %v4600 = vld [vmem:[%s3 + $0x68] sm:$0xff]
        %v4601 = vld [vmem:[%s3 + $0x70] sm:$0xff]
        %v4602 = vld [vmem:[%s3 + $0x78] sm:$0xff]
        %v4603 = vld [vmem:[%s3 + $0x80] sm:$0xff]
        %v4604 = vld [vmem:[%s3 + $0x88] sm:$0xff]
        %v4605 = vld [vmem:[%s4] sm:$0x1]
        %v4607 = vlaneseq
        %v4608 = vshrl.u32 %v4607, 7
        %v4609 = vsub.s32 0, %v4608
        %v4610 = vrot.slane %v4605, %v4609
        %v4612 = vcombine.low %v4583, %v4584
        %v4613 = vcombine.high %v4583, %v4584
        %v4614 = vcombine.low %v4585, %v4586
        %v4615 = vcombine.high %v4585, %v4586
        %v4618 = vsel %vm1146, %v4613, 0
        %v4620 = vsel %vm1146, %v4615, 0
        %4622 = vmatprep.subr.mxu0 0.0
        %4623 = vmatpush1.msra.mxu0 %v4602
        %4624 = vmatprep.subr.mxu0 0.0
        %4625 = vmatpush1.msra.mxu0 %v4601
        %4626 = vmatprep.subr.mxu0 0.0
        %4627 = vmatpush1.msra.mxu0 %v4600
        %4628 = vmatprep.subr.mxu0 0.0
        %4629 = vmatpush1.msra.mxu0 %v4599
        %4630 = vmatprep.subr.mxu0 0.0
        %4631 = vmatpush1.msra.mxu0 %v4598
        %4632 = vmatprep.subr.mxu0 0.0
        %4633 = vmatpush1.msra.mxu0 %v4597
        %4634 = vmatprep.subr.mxu0 0.0
        %4635 = vmatpush1.msra.mxu0 %v4596
        %4636 = vmatprep.subr.mxu0 0.0
        %4637 = vmatpush1.msra.mxu0 %v4595
        %4638 = vmatprep.subr.mxu0 0.0
        %4639 = vmatpush1.msra.mxu0 %v4594
        %4640 = vmatprep.subr.mxu0 0.0
        %4641 = vmatpush1.msra.mxu0 %v4593
        %4642 = vmatprep.subr.mxu0 0.0
        %4643 = vmatpush1.msra.mxu0 %v4592
        %4644 = vmatprep.subr.mxu0 0.0
        %4645 = vmatpush1.msra.mxu0 %v4591
        %4646 = vmatprep.subr.mxu0 0.0
        %4647 = vmatpush1.msra.mxu0 %v4590
        %4648 = vmatprep.subr.mxu0 0.0
        %4649 = vmatpush1.msra.mxu0 %v4589
        %4650 = vmatprep.subr.mxu0 0.0
        %4651 = vmatpush1.msra.mxu0 %v4588
        %4652 = vmatprep.subr.mxu0 0.0
        %4653 = vmatpush1.msra.mxu0 %v4587
        %4654 = vmatprep.subr.mxu0 0.0
        %4655 = vmatpush2.msra.mxu0 0.0
        %4656 = vmatprep.subr.mxu0 0.0
        %4657 = vmatpush2.msra.mxu0 0.0
        %4658 = vmatprep.subr.mxu0 0.0
        %4659 = vmatpush2.msra.mxu0 0.0
        %4660 = vmatprep.subr.mxu0 0.0
        %4661 = vmatpush2.msra.mxu0 0.0
        %4662 = vmatprep.subr.mxu0 0.0
        %4663 = vmatpush2.msra.mxu0 0.0
        %4664 = vmatprep.subr.mxu0 0.0
        %4665 = vmatpush2.msra.mxu0 0.0
        %4666 = vmatprep.subr.mxu0 0.0
        %4667 = vmatpush2.msra.mxu0 0.0
        %4668 = vmatprep.subr.mxu0 0.0
        %4669 = vmatpush2.msra.mxu0 0.0
        %4670 = vmatprep.subr.mxu0 0.0
        %4671 = vmatpush2.msra.mxu0 0.0
        %4672 = vmatprep.subr.mxu0 0.0
        %4673 = vmatpush2.msra.mxu0 0.0
        %4674 = vmatprep.subr.mxu0 0.0
        %4675 = vmatpush2.msra.mxu0 0.0
        %4676 = vmatprep.subr.mxu0 0.0
        %4677 = vmatpush2.msra.mxu0 0.0
        %4678 = vmatprep.subr.mxu0 0.0
        %4679 = vmatpush2.msra.mxu0 0.0
        %4680 = vmatprep.subr.mxu0 0.0
        %4681 = vmatpush2.msra.mxu0 0.0
        %4682 = vmatprep.subr.mxu0 0.0
        %4683 = vmatpush2.msra.mxu0 %v4604
        %4684 = vmatprep.subr.mxu0 0.0
        %4685 = vmatpush2.msra.mxu0 %v4603
        %4686 = vmatprep.mubr.f32.mxu0 %v4618
        %4687 = vmatmul.mubr.f32.gmra.mxu0 %v4612
        %v4688 = vpop.f32.mrf.mxu0
        %v4689 = vadd.f32 %v4610, %v4688
        %v4690 = vpop.f32.mrf.mxu0
        %4691 = vmatprep.mubr.f32.mxu0 %v4620
        %4692 = vmatmul.mubr.f32.gmra.mxu0 %v4614
        %v4693 = vpop.f32.mrf.mxu0
        %v4694 = vadd.f32 %v4610, %v4693
        %v4695 = vpop.f32.mrf.mxu0
        %4696 = vdwg.mxu0
        %v4697 = vxor.u32 %v4689, 2147483648
        %v4698 = vxor.u32 %v4694, 2147483648
        %v4699 = vmul.f32 %v4697, 1.442695
        %v4700 = vpow.pop %v4699
        %v4701 = vmul.f32 %v4698, 1.442695
        %v4702 = vpow.pop %v4701
        %v4703 = vadd.f32 %v4700, 1.0
        %v4704 = vadd.f32 %v4702, 1.0
        %v4705 = vrcp.pop %v4703
        %v4706 = vmul.f32 1.0, %v4705
        %v4707 = vrcp.pop %v4704
        %v4708 = vmul.f32 1.0, %v4707
        %v4709 = vtanh.pop %v4689
        %v4710 = vtanh.pop %v4694
        %v4711 = vmul.f32 %v4706, %v3615
        %v4712 = vmul.f32 %v4708, %v3616
        %4715 = vrot.lane.b32.xlu0 %v4709, 104
        %v4716 = vpop.permute.xlu0 %4715
        %4717 = vrot.lane.b32.xlu0 %v4710, 104
        %v4718 = vpop.permute.xlu0 %4717
        %v4721 = vmul.f32 %v4706, %v4716
        %v4722 = vmul.f32 %v4708, %v4718
        %4725 = vrot.lane.b32.xlu0 %v4721, 8
        %v4726 = vpop.permute.xlu0 %4725
        %4727 = vrot.lane.b32.xlu0 %v4722, 8
        %v4728 = vpop.permute.xlu0 %4727
        %v4731 = vadd.f32 %v4711, %v4726
        %v4732 = vadd.f32 %v4712, %v4728
        %v4733 = vtanh.pop %v4731
        %v4734 = vtanh.pop %v4732
        %4737 = vrot.lane.b32.xlu0 %v4733, 8
        %v4738 = vpop.permute.xlu0 %4737
        %4739 = vrot.lane.b32.xlu0 %v4734, 8
        %v4740 = vpop.permute.xlu0 %4739
        %v4743 = vmul.f32 %v4706, %v4738
        %v4744 = vmul.f32 %v4708, %v4740
        %v4747 = vcombine.high %v4743, %v4743
        %v4748 = vcombine.high %v4744, %v4744
        %4749 = vrot.lane.b32.xlu0 %v4743, 112
        %v4750 = vpop.permute.xlu0 %4749
        %4751 = vrot.lane.b32.xlu0 %v4747, 112
        %v4752 = vpop.permute.xlu0 %4751
        %4753 = vrot.lane.b32.xlu0 %v4744, 112
        %v4754 = vpop.permute.xlu0 %4753
        %4755 = vrot.lane.b32.xlu0 %v4748, 112
        %v4756 = vpop.permute.xlu0 %4755
        %4761 = vst.msk [vmem:[%s875 + $0x1] sm:$0xf] %vm822, %v4750
        %4762 = vst.msk [vmem:[%s875 + $0x9] sm:$0xf] %vm822, %v4752
        %4763 = vst.msk [vmem:[%s875 + $0x11] sm:$0xf] %vm822, %v4754
        %4764 = vst.msk [vmem:[%s875 + $0x19] sm:$0xf] %vm822, %v4756
        %v4765 = vsel %vm1416, %v4743, 0.0
        %v4766 = vsel %vm1416, %v4744, 0.0
        %v4767 = vadd.f32 %v4765, %v4766
        %v4768 = vrot.slane %v4767, 4
        %v4769 = vadd.f32 %v4767, %v4768
        %v4770 = vrot.slane %v4769, 2
        %v4771 = vadd.f32 %v4769, %v4770
        %v4772 = vrot.slane %v4771, 1
        %v4773 = vadd.f32 %v4771, %v4772
        %s4774 = scalar_lea.vmem %s276, 192
        %v4775 = vld [vmem:[%s4774] sm:$0xff]
        %v4776 = vld [vmem:[%s4774 + $0x8] sm:$0xf]
        %v4777 = vld [vmem:[%s4774 + $0xc] sm:$0xff]
        %v4778 = vld [vmem:[%s4774 + $0x14] sm:$0xf]
        %v4779 = vld [vmem:[%s4774 + $0x18] sm:$0xff]
        %v4780 = vld [vmem:[%s4774 + $0x20] sm:$0xf]
        %v4781 = vld [vmem:[%s4774 + $0x24] sm:$0xff]
        %v4782 = vld [vmem:[%s4774 + $0x2c] sm:$0xf]
        %v4783 = vld [vmem:[#allocation2] sm:$0xf]
        %v4784 = vld [vmem:[#allocation2 + $0x8] sm:$0xf]
        %v4785 = vld [vmem:[#allocation2 + $0x10] sm:$0xf]
        %v4786 = vld [vmem:[#allocation2 + $0x18] sm:$0xf]
        %v4787 = vld [vmem:[#allocation2 + $0x1] sm:$0xf]
        %v4788 = vld [vmem:[#allocation2 + $0x9] sm:$0xf]
        %v4789 = vld [vmem:[#allocation2 + $0x11] sm:$0xf]
        %v4790 = vld [vmem:[#allocation2 + $0x19] sm:$0xf]
        %v4791 = vld [vmem:[#allocation2 + $0x2] sm:$0xf]
        %v4792 = vld [vmem:[#allocation2 + $0xa] sm:$0xf]
        %v4793 = vld [vmem:[#allocation2 + $0x12] sm:$0xf]
        %v4794 = vld [vmem:[#allocation2 + $0x1a] sm:$0xf]
        %v4795 = vld [vmem:[%s310] sm:$0xf]
        %v4796 = vld [vmem:[%s310 + $0x8] sm:$0xf]
        %v4797 = vld [vmem:[%s310 + $0x10] sm:$0xf]
        %v4798 = vld [vmem:[%s310 + $0x18] sm:$0xf]
        %v4799 = vld [vmem:[%s310 + $0x1] sm:$0xf]
        %v4800 = vld [vmem:[%s310 + $0x9] sm:$0xf]
        %v4801 = vld [vmem:[%s310 + $0x11] sm:$0xf]
        %v4802 = vld [vmem:[%s310 + $0x19] sm:$0xf]
        %v4803 = vld [vmem:[%s310 + $0x2] sm:$0xf]
        %v4804 = vld [vmem:[%s310 + $0xa] sm:$0xf]
        %v4805 = vld [vmem:[%s310 + $0x12] sm:$0xf]
        %v4806 = vld [vmem:[%s310 + $0x1a] sm:$0xf]
        %v4807 = vld [vmem:[%s323] sm:$0xf]
        %v4808 = vld [vmem:[%s323 + $0x8] sm:$0xf]
        %v4809 = vld [vmem:[%s323 + $0x10] sm:$0xf]
        %v4810 = vld [vmem:[%s323 + $0x18] sm:$0xf]
        %v4811 = vld [vmem:[%s323 + $0x1] sm:$0xf]
        %v4812 = vld [vmem:[%s323 + $0x9] sm:$0xf]
        %v4813 = vld [vmem:[%s323 + $0x11] sm:$0xf]
        %v4814 = vld [vmem:[%s323 + $0x19] sm:$0xf]
        %v4815 = vld [vmem:[%s323 + $0x2] sm:$0xf]
        %v4816 = vld [vmem:[%s323 + $0xa] sm:$0xf]
        %v4817 = vld [vmem:[%s323 + $0x12] sm:$0xf]
        %v4818 = vld [vmem:[%s323 + $0x1a] sm:$0xf]
        %v4823 = vcombine.high %v4775, %v4775
        %v4824 = vcombine.high %v4777, %v4777
        %v4825 = vcombine.high %v4779, %v4779
        %v4826 = vcombine.high %v4781, %v4781
        %4831 = vrot.lane.b32.xlu0 %v4783, 32
        %v4832 = vpop.permute.xlu0 %4831
        %4833 = vrot.lane.b32.xlu0 %v4784, 32
        %v4834 = vpop.permute.xlu0 %4833
        %4835 = vrot.lane.b32.xlu0 %v4785, 32
        %v4836 = vpop.permute.xlu0 %4835
        %4837 = vrot.lane.b32.xlu0 %v4786, 32
        %v4838 = vpop.permute.xlu0 %4837
        %4847 = vrot.lane.b32.xlu0 %v4787, 40
        %v4848 = vpop.permute.xlu0 %4847
        %4849 = vrot.lane.b32.xlu0 %v4788, 40
        %v4850 = vpop.permute.xlu0 %4849
        %4851 = vrot.lane.b32.xlu0 %v4789, 40
        %v4852 = vpop.permute.xlu0 %4851
        %4853 = vrot.lane.b32.xlu0 %v4790, 40
        %v4854 = vpop.permute.xlu0 %4853
        %4863 = vrot.lane.b32.xlu0 %v4791, 48
        %v4864 = vpop.permute.xlu0 %4863
        %4865 = vrot.lane.b32.xlu0 %v4792, 48
        %v4866 = vpop.permute.xlu0 %4865
        %4867 = vrot.lane.b32.xlu0 %v4793, 48
        %v4868 = vpop.permute.xlu0 %4867
        %4869 = vrot.lane.b32.xlu0 %v4794, 48
        %v4870 = vpop.permute.xlu0 %4869
        %4879 = vrot.lane.b32.xlu0 %v4795, 56
        %v4880 = vpop.permute.xlu0 %4879
        %4881 = vrot.lane.b32.xlu0 %v4796, 56
        %v4882 = vpop.permute.xlu0 %4881
        %4883 = vrot.lane.b32.xlu0 %v4797, 56
        %v4884 = vpop.permute.xlu0 %4883
        %4885 = vrot.lane.b32.xlu0 %v4798, 56
        %v4886 = vpop.permute.xlu0 %4885
        %4895 = vrot.lane.b32.xlu0 %v4799, 64
        %v4896 = vpop.permute.xlu0 %4895
        %4897 = vrot.lane.b32.xlu0 %v4800, 64
        %v4898 = vpop.permute.xlu0 %4897
        %4899 = vrot.lane.b32.xlu0 %v4801, 64
        %v4900 = vpop.permute.xlu0 %4899
        %4901 = vrot.lane.b32.xlu0 %v4802, 64
        %v4902 = vpop.permute.xlu0 %4901
        %4911 = vrot.lane.b32.xlu0 %v4803, 72
        %v4912 = vpop.permute.xlu0 %4911
        %4913 = vrot.lane.b32.xlu0 %v4804, 72
        %v4914 = vpop.permute.xlu0 %4913
        %4915 = vrot.lane.b32.xlu0 %v4805, 72
        %v4916 = vpop.permute.xlu0 %4915
        %4917 = vrot.lane.b32.xlu0 %v4806, 72
        %v4918 = vpop.permute.xlu0 %4917
        %4927 = vrot.lane.b32.xlu0 %v4807, 80
        %v4928 = vpop.permute.xlu0 %4927
        %4929 = vrot.lane.b32.xlu0 %v4808, 80
        %v4930 = vpop.permute.xlu0 %4929
        %4931 = vrot.lane.b32.xlu0 %v4809, 80
        %v4932 = vpop.permute.xlu0 %4931
        %4933 = vrot.lane.b32.xlu0 %v4810, 80
        %v4934 = vpop.permute.xlu0 %4933
        %4943 = vrot.lane.b32.xlu0 %v4811, 88
        %v4944 = vpop.permute.xlu0 %4943
        %4945 = vrot.lane.b32.xlu0 %v4812, 88
        %v4946 = vpop.permute.xlu0 %4945
        %4947 = vrot.lane.b32.xlu0 %v4813, 88
        %v4948 = vpop.permute.xlu0 %4947
        %4949 = vrot.lane.b32.xlu0 %v4814, 88
        %v4950 = vpop.permute.xlu0 %4949
        %4959 = vrot.lane.b32.xlu0 %v4815, 96
        %v4960 = vpop.permute.xlu0 %4959
        %4961 = vrot.lane.b32.xlu0 %v4816, 96
        %v4962 = vpop.permute.xlu0 %4961
        %4963 = vrot.lane.b32.xlu0 %v4817, 96
        %v4964 = vpop.permute.xlu0 %4963
        %4965 = vrot.lane.b32.xlu0 %v4818, 96
        %v4966 = vpop.permute.xlu0 %4965
        %v4971 = vsel %vm488, %v4776, %v4832
        %v4972 = vsel %vm488, %v4778, %v4834
        %v4973 = vsel %vm488, %v4780, %v4836
        %v4974 = vsel %vm488, %v4782, %v4838
        %v4975 = vsel %vm493, %v4971, %v4848
        %v4976 = vsel %vm493, %v4972, %v4850
        %v4977 = vsel %vm493, %v4973, %v4852
        %v4978 = vsel %vm493, %v4974, %v4854
        %v4979 = vsel %vm498, %v4975, %v4864
        %v4980 = vsel %vm498, %v4976, %v4866
        %v4981 = vsel %vm498, %v4977, %v4868
        %v4982 = vsel %vm498, %v4978, %v4870
        %v4983 = vsel %vm503, %v4979, %v4880
        %v4984 = vsel %vm503, %v4980, %v4882
        %v4985 = vsel %vm503, %v4981, %v4884
        %v4986 = vsel %vm503, %v4982, %v4886
        %v4987 = vsel %vm508, %v4983, %v4896
        %v4988 = vsel %vm508, %v4984, %v4898
        %v4989 = vsel %vm508, %v4985, %v4900
        %v4990 = vsel %vm508, %v4986, %v4902
        %v4991 = vsel %vm513, %v4987, %v4912
        %v4992 = vsel %vm513, %v4988, %v4914
        %v4993 = vsel %vm513, %v4989, %v4916
        %v4994 = vsel %vm513, %v4990, %v4918
        %v4995 = vsel %vm518, %v4991, %v4928
        %v4996 = vsel %vm518, %v4992, %v4930
        %v4997 = vsel %vm518, %v4993, %v4932
        %v4998 = vsel %vm518, %v4994, %v4934
        %v4999 = vsel %vm523, %v4995, %v4944
        %v5000 = vsel %vm523, %v4996, %v4946
        %v5001 = vsel %vm523, %v4997, %v4948
        %v5002 = vsel %vm523, %v4998, %v4950
        %v5003 = vsel %vm528, %v4999, %v4960
        %v5004 = vsel %vm528, %v5000, %v4962
        %v5005 = vsel %vm528, %v5001, %v4964
        %v5006 = vsel %vm528, %v5002, %v4966
        %v5011 = vcombine.low %v4775, %v4823
        %v5012 = vcombine.low %v4777, %v4824
        %v5013 = vcombine.low %v4779, %v4825
        %v5014 = vcombine.low %v4781, %v4826
        %v5015 = vld [vmem:[%s1] sm:$0xff]
        %v5016 = vld [vmem:[%s1 + $0x8] sm:$0xff]
        %v5017 = vld [vmem:[%s1 + $0x10] sm:$0xff]
        %v5018 = vld [vmem:[%s1 + $0x18] sm:$0xff]
        %v5019 = vld [vmem:[%s1 + $0x20] sm:$0xff]
        %v5020 = vld [vmem:[%s1 + $0x28] sm:$0xff]
        %v5021 = vld [vmem:[%s1 + $0x30] sm:$0xff]
        %v5022 = vld [vmem:[%s1 + $0x38] sm:$0xff]
        %v5023 = vld [vmem:[%s1 + $0x40] sm:$0xff]
        %v5024 = vld [vmem:[%s1 + $0x48] sm:$0xff]
        %v5025 = vld [vmem:[%s1 + $0x50] sm:$0xff]
        %v5026 = vld [vmem:[%s1 + $0x58] sm:$0xff]
        %v5027 = vld [vmem:[%s1 + $0x60] sm:$0xff]
        %v5028 = vld [vmem:[%s1 + $0x68] sm:$0xff]
        %v5029 = vld [vmem:[%s1 + $0x70] sm:$0xff]
        %v5030 = vld [vmem:[%s1 + $0x78] sm:$0xff]
        %v5031 = vld [vmem:[%s1 + $0x80] sm:$0xff]
        %v5032 = vld [vmem:[%s1 + $0x88] sm:$0xff]
        %v5033 = vld [vmem:[%s1 + $0x90] sm:$0xff]
        %v5034 = vld [vmem:[%s1 + $0x98] sm:$0xff]
        %v5035 = vld [vmem:[%s1 + $0xa0] sm:$0xff]
        %v5036 = vld [vmem:[%s1 + $0xa8] sm:$0xff]
        %v5037 = vld [vmem:[%s1 + $0xb0] sm:$0xff]
        %v5038 = vld [vmem:[%s1 + $0xb8] sm:$0xff]
        %v5039 = vld [vmem:[%s1 + $0xc0] sm:$0xff]
        %v5040 = vld [vmem:[%s1 + $0xc8] sm:$0xff]
        %v5041 = vld [vmem:[%s1 + $0xd0] sm:$0xff]
        %v5042 = vld [vmem:[%s1 + $0xd8] sm:$0xff]
        %v5043 = vld [vmem:[%s1 + $0xe0] sm:$0xff]
        %v5044 = vld [vmem:[%s1 + $0xe8] sm:$0xff]
        %v5045 = vld [vmem:[%s1 + $0xf0] sm:$0xff]
        %v5046 = vld [vmem:[%s1 + $0xf8] sm:$0xff]
        %v5047 = vld [vmem:[%s1 + $0x100] sm:$0xff]
        %v5048 = vld [vmem:[%s1 + $0x108] sm:$0xff]
        %v5049 = vld [vmem:[%s1 + $0x110] sm:$0xff]
        %v5050 = vld [vmem:[%s1 + $0x118] sm:$0xff]
        %v5051 = vld [vmem:[%s1 + $0x120] sm:$0xff]
        %v5052 = vld [vmem:[%s1 + $0x128] sm:$0xff]
        %v5053 = vld [vmem:[%s1 + $0x130] sm:$0xff]
        %v5054 = vld [vmem:[%s1 + $0x138] sm:$0xff]
        %v5055 = vld [vmem:[%s1 + $0x140] sm:$0xff]
        %v5056 = vld [vmem:[%s1 + $0x148] sm:$0xff]
        %v5057 = vld [vmem:[%s1 + $0x150] sm:$0xff]
        %v5058 = vld [vmem:[%s1 + $0x158] sm:$0xff]
        %v5059 = vld [vmem:[%s1 + $0x160] sm:$0xff]
        %v5060 = vld [vmem:[%s2] sm:$0x1]
        %v5062 = vlaneseq
        %v5063 = vshrl.u32 %v5062, 7
        %v5064 = vsub.s32 0, %v5063
        %v5065 = vrot.slane %v5060, %v5064
        %v5067 = vcombine.low %v5011, %v5012
        %v5068 = vcombine.high %v5011, %v5012
        %v5069 = vcombine.low %v5003, %v5004
        %v5070 = vcombine.low %v5013, %v5014
        %v5071 = vcombine.high %v5013, %v5014
        %v5072 = vcombine.low %v5005, %v5006
        %v5077 = vsel %vm603, %v5069, 0
        %v5079 = vsel %vm603, %v5072, 0
        %5081 = vmatprep.subr.mxu0 0.0
        %5082 = vmatpush1.msra.mxu0 %v5030
        %5083 = vmatprep.subr.mxu0 0.0
        %5084 = vmatpush1.msra.mxu0 %v5029
        %5085 = vmatprep.subr.mxu0 0.0
        %5086 = vmatpush1.msra.mxu0 %v5028
        %5087 = vmatprep.subr.mxu0 0.0
        %5088 = vmatpush1.msra.mxu0 %v5027
        %5089 = vmatprep.subr.mxu0 0.0
        %5090 = vmatpush1.msra.mxu0 %v5026
        %5091 = vmatprep.subr.mxu0 0.0
        %5092 = vmatpush1.msra.mxu0 %v5025
        %5093 = vmatprep.subr.mxu0 0.0
        %5094 = vmatpush1.msra.mxu0 %v5024
        %5095 = vmatprep.subr.mxu0 0.0
        %5096 = vmatpush1.msra.mxu0 %v5023
        %5097 = vmatprep.subr.mxu0 0.0
        %5098 = vmatpush1.msra.mxu0 %v5022
        %5099 = vmatprep.subr.mxu0 0.0
        %5100 = vmatpush1.msra.mxu0 %v5021
        %5101 = vmatprep.subr.mxu0 0.0
        %5102 = vmatpush1.msra.mxu0 %v5020
        %5103 = vmatprep.subr.mxu0 0.0
        %5104 = vmatpush1.msra.mxu0 %v5019
        %5105 = vmatprep.subr.mxu0 0.0
        %5106 = vmatpush1.msra.mxu0 %v5018
        %5107 = vmatprep.subr.mxu0 0.0
        %5108 = vmatpush1.msra.mxu0 %v5017
        %5109 = vmatprep.subr.mxu0 0.0
        %5110 = vmatpush1.msra.mxu0 %v5016
        %5111 = vmatprep.subr.mxu0 0.0
        %5112 = vmatpush1.msra.mxu0 %v5015
        %5113 = vmatprep.subr.mxu0 0.0
        %5114 = vmatpush2.msra.mxu0 %v5046
        %5115 = vmatprep.subr.mxu0 0.0
        %5116 = vmatpush2.msra.mxu0 %v5045
        %5117 = vmatprep.subr.mxu0 0.0
        %5118 = vmatpush2.msra.mxu0 %v5044
        %5119 = vmatprep.subr.mxu0 0.0
        %5120 = vmatpush2.msra.mxu0 %v5043
        %5121 = vmatprep.subr.mxu0 0.0
        %5122 = vmatpush2.msra.mxu0 %v5042
        %5123 = vmatprep.subr.mxu0 0.0
        %5124 = vmatpush2.msra.mxu0 %v5041
        %5125 = vmatprep.subr.mxu0 0.0
        %5126 = vmatpush2.msra.mxu0 %v5040
        %5127 = vmatprep.subr.mxu0 0.0
        %5128 = vmatpush2.msra.mxu0 %v5039
        %5129 = vmatprep.subr.mxu0 0.0
        %5130 = vmatpush2.msra.mxu0 %v5038
        %5131 = vmatprep.subr.mxu0 0.0
        %5132 = vmatpush2.msra.mxu0 %v5037
        %5133 = vmatprep.subr.mxu0 0.0
        %5134 = vmatpush2.msra.mxu0 %v5036
        %5135 = vmatprep.subr.mxu0 0.0
        %5136 = vmatpush2.msra.mxu0 %v5035
        %5137 = vmatprep.subr.mxu0 0.0
        %5138 = vmatpush2.msra.mxu0 %v5034
        %5139 = vmatprep.subr.mxu0 0.0
        %5140 = vmatpush2.msra.mxu0 %v5033
        %5141 = vmatprep.subr.mxu0 0.0
        %5142 = vmatpush2.msra.mxu0 %v5032
        %5143 = vmatprep.subr.mxu0 0.0
        %5144 = vmatpush2.msra.mxu0 %v5031
        %5145 = vmatprep.mubr.f32.mxu0 %v5068
        %5146 = vmatmul.mubr.f32.gmra.mxu0 %v5067
        %v5147 = vpop.f32.mrf.mxu0
        %v5148 = vadd.f32 %v5065, %v5147
        %v5149 = vpop.f32.mrf.mxu0
        %5150 = vmatprep.mubr.f32.mxu0 %v5071
        %5151 = vmatmul.mubr.f32.gmra.mxu0 %v5070
        %v5152 = vpop.f32.mrf.mxu0
        %v5153 = vadd.f32 %v5065, %v5152
        %v5154 = vpop.f32.mrf.mxu0
        %5155 = vdwg.mxu0
        %5156 = vmatprep.subr.mxu0 0.0
        %5157 = vmatpush1.msra.mxu0 0.0
        %5158 = vmatprep.subr.mxu0 0.0
        %5159 = vmatpush1.msra.mxu0 0.0
        %5160 = vmatprep.subr.mxu0 0.0
        %5161 = vmatpush1.msra.mxu0 0.0
        %5162 = vmatprep.subr.mxu0 0.0
        %5163 = vmatpush1.msra.mxu0 %v5059
        %5164 = vmatprep.subr.mxu0 0.0
        %5165 = vmatpush1.msra.mxu0 %v5058
        %5166 = vmatprep.subr.mxu0 0.0
        %5167 = vmatpush1.msra.mxu0 %v5057
        %5168 = vmatprep.subr.mxu0 0.0
        %5169 = vmatpush1.msra.mxu0 %v5056
        %5170 = vmatprep.subr.mxu0 0.0
        %5171 = vmatpush1.msra.mxu0 %v5055
        %5172 = vmatprep.subr.mxu0 0.0
        %5173 = vmatpush1.msra.mxu0 %v5054
        %5174 = vmatprep.subr.mxu0 0.0
        %5175 = vmatpush1.msra.mxu0 %v5053
        %5176 = vmatprep.subr.mxu0 0.0
        %5177 = vmatpush1.msra.mxu0 %v5052
        %5178 = vmatprep.subr.mxu0 0.0
        %5179 = vmatpush1.msra.mxu0 %v5051
        %5180 = vmatprep.subr.mxu0 0.0
        %5181 = vmatpush1.msra.mxu0 %v5050
        %5182 = vmatprep.subr.mxu0 0.0
        %5183 = vmatpush1.msra.mxu0 %v5049
        %5184 = vmatprep.subr.mxu0 0.0
        %5185 = vmatpush1.msra.mxu0 %v5048
        %5186 = vmatprep.subr.mxu0 0.0
        %5187 = vmatpush1.msra.mxu0 %v5047
        %5188 = vmatprep.subr.mxu0 0.0
        %5189 = vmatpush2.msra.mxu0 0.0
        %5190 = vmatprep.subr.mxu0 0.0
        %5191 = vmatpush2.msra.mxu0 0.0
        %5192 = vmatprep.subr.mxu0 0.0
        %5193 = vmatpush2.msra.mxu0 0.0
        %5194 = vmatprep.subr.mxu0 0.0
        %5195 = vmatpush2.msra.mxu0 0.0
        %5196 = vmatprep.subr.mxu0 0.0
        %5197 = vmatpush2.msra.mxu0 0.0
        %5198 = vmatprep.subr.mxu0 0.0
        %5199 = vmatpush2.msra.mxu0 0.0
        %5200 = vmatprep.subr.mxu0 0.0
        %5201 = vmatpush2.msra.mxu0 0.0
        %5202 = vmatprep.subr.mxu0 0.0
        %5203 = vmatpush2.msra.mxu0 0.0
        %5204 = vmatprep.subr.mxu0 0.0
        %5205 = vmatpush2.msra.mxu0 0.0
        %5206 = vmatprep.subr.mxu0 0.0
        %5207 = vmatpush2.msra.mxu0 0.0
        %5208 = vmatprep.subr.mxu0 0.0
        %5209 = vmatpush2.msra.mxu0 0.0
        %5210 = vmatprep.subr.mxu0 0.0
        %5211 = vmatpush2.msra.mxu0 0.0
        %5212 = vmatprep.subr.mxu0 0.0
        %5213 = vmatpush2.msra.mxu0 0.0
        %5214 = vmatprep.subr.mxu0 0.0
        %5215 = vmatpush2.msra.mxu0 0.0
        %5216 = vmatprep.subr.mxu0 0.0
        %5217 = vmatpush2.msra.mxu0 0.0
        %5218 = vmatprep.subr.mxu0 0.0
        %5219 = vmatpush2.msra.mxu0 0.0
        %5220 = vmatprep.mubr.f32.mxu0 0.0
        %5221 = vmatmul.mubr.f32.gmra.mxu0 %v5077
        %v5222 = vpop.f32.mrf.mxu0
        %v5223 = vadd.f32 %v5148, %v5222
        %v5224 = vpop.f32.mrf.mxu0
        %5225 = vmatprep.mubr.f32.mxu0 0.0
        %5226 = vmatmul.mubr.f32.gmra.mxu0 %v5079
        %v5227 = vpop.f32.mrf.mxu0
        %v5228 = vadd.f32 %v5153, %v5227
        %v5229 = vpop.f32.mrf.mxu0
        %5230 = vdwg.mxu0
        %v5231 = vxor.u32 %v5223, 2147483648
        %v5232 = vxor.u32 %v5228, 2147483648
        %v5233 = vmul.f32 %v5231, 1.442695
        %v5234 = vpow.pop %v5233
        %v5235 = vmul.f32 %v5232, 1.442695
        %v5236 = vpow.pop %v5235
        %v5237 = vadd.f32 %v5234, 1.0
        %v5238 = vadd.f32 %v5236, 1.0
        %v5239 = vrcp.pop %v5237
        %v5240 = vmul.f32 1.0, %v5239
        %v5241 = vrcp.pop %v5238
        %v5242 = vmul.f32 1.0, %v5241
        %v5243 = vtanh.pop %v5223
        %v5244 = vtanh.pop %v5228
        %v5245 = vmul.f32 %v5240, %v4149
        %v5246 = vmul.f32 %v5242, %v4150
        %5249 = vrot.lane.b32.xlu0 %v5243, 104
        %v5250 = vpop.permute.xlu0 %5249
        %5251 = vrot.lane.b32.xlu0 %v5244, 104
        %v5252 = vpop.permute.xlu0 %5251
        %v5255 = vmul.f32 %v5240, %v5250
        %v5256 = vmul.f32 %v5242, %v5252
        %5259 = vrot.lane.b32.xlu0 %v5255, 8
        %v5260 = vpop.permute.xlu0 %5259
        %5261 = vrot.lane.b32.xlu0 %v5256, 8
        %v5262 = vpop.permute.xlu0 %5261
        %v5265 = vadd.f32 %v5245, %v5260
        %v5266 = vadd.f32 %v5246, %v5262
        %v5267 = vtanh.pop %v5265
        %v5268 = vtanh.pop %v5266
        %5271 = vrot.lane.b32.xlu0 %v5267, 8
        %v5272 = vpop.permute.xlu0 %5271
        %5273 = vrot.lane.b32.xlu0 %v5268, 8
        %v5274 = vpop.permute.xlu0 %5273
        %v5277 = vmul.f32 %v5240, %v5272
        %v5278 = vmul.f32 %v5242, %v5274
        %v5281 = vcombine.high %v5277, %v5277
        %v5282 = vcombine.high %v5278, %v5278
        %5283 = vrot.lane.b32.xlu0 %v5277, 112
        %v5284 = vpop.permute.xlu0 %5283
        %5285 = vrot.lane.b32.xlu0 %v5281, 112
        %v5286 = vpop.permute.xlu0 %5285
        %5287 = vrot.lane.b32.xlu0 %v5278, 112
        %v5288 = vpop.permute.xlu0 %5287
        %5289 = vrot.lane.b32.xlu0 %v5282, 112
        %v5290 = vpop.permute.xlu0 %5289
        %5295 = vst.msk [vmem:[%s310 + $0x1] sm:$0xf] %vm822, %v5284
        %5296 = vst.msk [vmem:[%s310 + $0x9] sm:$0xf] %vm822, %v5286
        %5297 = vst.msk [vmem:[%s310 + $0x11] sm:$0xf] %vm822, %v5288
        %5298 = vst.msk [vmem:[%s310 + $0x19] sm:$0xf] %vm822, %v5290
        %v5299 = vld [vmem:[#allocation2] sm:$0xf]
        %v5300 = vld [vmem:[#allocation2 + $0x8] sm:$0xf]
        %v5301 = vld [vmem:[#allocation2 + $0x10] sm:$0xf]
        %v5302 = vld [vmem:[#allocation2 + $0x18] sm:$0xf]
        %v5303 = vld [vmem:[#allocation2 + $0x1] sm:$0xf]
        %v5304 = vld [vmem:[#allocation2 + $0x9] sm:$0xf]
        %v5305 = vld [vmem:[#allocation2 + $0x11] sm:$0xf]
        %v5306 = vld [vmem:[#allocation2 + $0x19] sm:$0xf]
        %v5307 = vld [vmem:[#allocation2 + $0x2] sm:$0xf]
        %v5308 = vld [vmem:[#allocation2 + $0xa] sm:$0xf]
        %v5309 = vld [vmem:[#allocation2 + $0x12] sm:$0xf]
        %v5310 = vld [vmem:[#allocation2 + $0x1a] sm:$0xf]
        %v5311 = vld [vmem:[%s310] sm:$0xf]
        %v5312 = vld [vmem:[%s310 + $0x8] sm:$0xf]
        %v5313 = vld [vmem:[%s310 + $0x10] sm:$0xf]
        %v5314 = vld [vmem:[%s310 + $0x18] sm:$0xf]
        %v5315 = vld [vmem:[%s310 + $0x1] sm:$0xf]
        %v5316 = vld [vmem:[%s310 + $0x9] sm:$0xf]
        %v5317 = vld [vmem:[%s310 + $0x11] sm:$0xf]
        %v5318 = vld [vmem:[%s310 + $0x19] sm:$0xf]
        %v5319 = vld [vmem:[%s310 + $0x2] sm:$0xf]
        %v5320 = vld [vmem:[%s310 + $0xa] sm:$0xf]
        %v5321 = vld [vmem:[%s310 + $0x12] sm:$0xf]
        %v5322 = vld [vmem:[%s310 + $0x1a] sm:$0xf]
        %v5323 = vld [vmem:[%s323] sm:$0xf]
        %v5324 = vld [vmem:[%s323 + $0x8] sm:$0xf]
        %v5325 = vld [vmem:[%s323 + $0x10] sm:$0xf]
        %v5326 = vld [vmem:[%s323 + $0x18] sm:$0xf]
        %v5327 = vld [vmem:[%s323 + $0x1] sm:$0xf]
        %v5328 = vld [vmem:[%s323 + $0x9] sm:$0xf]
        %v5329 = vld [vmem:[%s323 + $0x11] sm:$0xf]
        %v5330 = vld [vmem:[%s323 + $0x19] sm:$0xf]
        %v5331 = vld [vmem:[%s323 + $0x2] sm:$0xf]
        %v5332 = vld [vmem:[%s323 + $0xa] sm:$0xf]
        %v5333 = vld [vmem:[%s323 + $0x12] sm:$0xf]
        %v5334 = vld [vmem:[%s323 + $0x1a] sm:$0xf]
        %v5335 = vld [vmem:[#allocation3] sm:$0xf]
        %v5336 = vld [vmem:[#allocation3 + $0x8] sm:$0xf]
        %v5337 = vld [vmem:[#allocation3 + $0x10] sm:$0xf]
        %v5338 = vld [vmem:[#allocation3 + $0x18] sm:$0xf]
        %v5339 = vld [vmem:[#allocation3 + $0x1] sm:$0xf]
        %v5340 = vld [vmem:[#allocation3 + $0x9] sm:$0xf]
        %v5341 = vld [vmem:[#allocation3 + $0x11] sm:$0xf]
        %v5342 = vld [vmem:[#allocation3 + $0x19] sm:$0xf]
        %v5343 = vld [vmem:[#allocation3 + $0x2] sm:$0xf]
        %v5344 = vld [vmem:[#allocation3 + $0xa] sm:$0xf]
        %v5345 = vld [vmem:[#allocation3 + $0x12] sm:$0xf]
        %v5346 = vld [vmem:[#allocation3 + $0x1a] sm:$0xf]
        %v5347 = vld [vmem:[%s875] sm:$0xf]
        %v5348 = vld [vmem:[%s875 + $0x8] sm:$0xf]
        %v5349 = vld [vmem:[%s875 + $0x10] sm:$0xf]
        %v5350 = vld [vmem:[%s875 + $0x18] sm:$0xf]
        %v5351 = vld [vmem:[%s875 + $0x1] sm:$0xf]
        %v5352 = vld [vmem:[%s875 + $0x9] sm:$0xf]
        %v5353 = vld [vmem:[%s875 + $0x11] sm:$0xf]
        %v5354 = vld [vmem:[%s875 + $0x19] sm:$0xf]
        %v5355 = vld [vmem:[%s875 + $0x2] sm:$0xf]
        %v5356 = vld [vmem:[%s875 + $0xa] sm:$0xf]
        %v5357 = vld [vmem:[%s875 + $0x12] sm:$0xf]
        %v5358 = vld [vmem:[%s875 + $0x1a] sm:$0xf]
        %v5359 = vld [vmem:[%s888] sm:$0xf]
        %v5360 = vld [vmem:[%s888 + $0x8] sm:$0xf]
        %v5361 = vld [vmem:[%s888 + $0x10] sm:$0xf]
        %v5362 = vld [vmem:[%s888 + $0x18] sm:$0xf]
        %v5363 = vld [vmem:[%s888 + $0x1] sm:$0xf]
        %v5364 = vld [vmem:[%s888 + $0x9] sm:$0xf]
        %v5365 = vld [vmem:[%s888 + $0x11] sm:$0xf]
        %v5366 = vld [vmem:[%s888 + $0x19] sm:$0xf]
        %v5367 = vld [vmem:[%s888 + $0x2] sm:$0xf]
        %v5368 = vld [vmem:[%s888 + $0xa] sm:$0xf]
        %v5369 = vld [vmem:[%s888 + $0x12] sm:$0xf]
        %v5370 = vld [vmem:[%s888 + $0x1a] sm:$0xf]
        %5375 = vrot.lane.b32.xlu0 %v5303, 8
        %v5376 = vpop.permute.xlu0 %5375
        %5377 = vrot.lane.b32.xlu0 %v5304, 8
        %v5378 = vpop.permute.xlu0 %5377
        %5379 = vrot.lane.b32.xlu0 %v5305, 8
        %v5380 = vpop.permute.xlu0 %5379
        %5381 = vrot.lane.b32.xlu0 %v5306, 8
        %v5382 = vpop.permute.xlu0 %5381
        %5391 = vrot.lane.b32.xlu0 %v5307, 16
        %v5392 = vpop.permute.xlu0 %5391
        %5393 = vrot.lane.b32.xlu0 %v5308, 16
        %v5394 = vpop.permute.xlu0 %5393
        %5395 = vrot.lane.b32.xlu0 %v5309, 16
        %v5396 = vpop.permute.xlu0 %5395
        %5397 = vrot.lane.b32.xlu0 %v5310, 16
        %v5398 = vpop.permute.xlu0 %5397
        %5407 = vrot.lane.b32.xlu0 %v5311, 24
        %v5408 = vpop.permute.xlu0 %5407
        %5409 = vrot.lane.b32.xlu0 %v5312, 24
        %v5410 = vpop.permute.xlu0 %5409
        %5411 = vrot.lane.b32.xlu0 %v5313, 24
        %v5412 = vpop.permute.xlu0 %5411
        %5413 = vrot.lane.b32.xlu0 %v5314, 24
        %v5414 = vpop.permute.xlu0 %5413
        %5423 = vrot.lane.b32.xlu0 %v5315, 32
        %v5424 = vpop.permute.xlu0 %5423
        %5425 = vrot.lane.b32.xlu0 %v5316, 32
        %v5426 = vpop.permute.xlu0 %5425
        %5427 = vrot.lane.b32.xlu0 %v5317, 32
        %v5428 = vpop.permute.xlu0 %5427
        %5429 = vrot.lane.b32.xlu0 %v5318, 32
        %v5430 = vpop.permute.xlu0 %5429
        %5439 = vrot.lane.b32.xlu0 %v5319, 40
        %v5440 = vpop.permute.xlu0 %5439
        %5441 = vrot.lane.b32.xlu0 %v5320, 40
        %v5442 = vpop.permute.xlu0 %5441
        %5443 = vrot.lane.b32.xlu0 %v5321, 40
        %v5444 = vpop.permute.xlu0 %5443
        %5445 = vrot.lane.b32.xlu0 %v5322, 40
        %v5446 = vpop.permute.xlu0 %5445
        %5455 = vrot.lane.b32.xlu0 %v5323, 48
        %v5456 = vpop.permute.xlu0 %5455
        %5457 = vrot.lane.b32.xlu0 %v5324, 48
        %v5458 = vpop.permute.xlu0 %5457
        %5459 = vrot.lane.b32.xlu0 %v5325, 48
        %v5460 = vpop.permute.xlu0 %5459
        %5461 = vrot.lane.b32.xlu0 %v5326, 48
        %v5462 = vpop.permute.xlu0 %5461
        %5471 = vrot.lane.b32.xlu0 %v5327, 56
        %v5472 = vpop.permute.xlu0 %5471
        %5473 = vrot.lane.b32.xlu0 %v5328, 56
        %v5474 = vpop.permute.xlu0 %5473
        %5475 = vrot.lane.b32.xlu0 %v5329, 56
        %v5476 = vpop.permute.xlu0 %5475
        %5477 = vrot.lane.b32.xlu0 %v5330, 56
        %v5478 = vpop.permute.xlu0 %5477
        %5487 = vrot.lane.b32.xlu0 %v5331, 64
        %v5488 = vpop.permute.xlu0 %5487
        %5489 = vrot.lane.b32.xlu0 %v5332, 64
        %v5490 = vpop.permute.xlu0 %5489
        %5491 = vrot.lane.b32.xlu0 %v5333, 64
        %v5492 = vpop.permute.xlu0 %5491
        %5493 = vrot.lane.b32.xlu0 %v5334, 64
        %v5494 = vpop.permute.xlu0 %5493
        %5503 = vrot.lane.b32.xlu0 %v5335, 72
        %v5504 = vpop.permute.xlu0 %5503
        %5505 = vrot.lane.b32.xlu0 %v5336, 72
        %v5506 = vpop.permute.xlu0 %5505
        %5507 = vrot.lane.b32.xlu0 %v5337, 72
        %v5508 = vpop.permute.xlu0 %5507
        %5509 = vrot.lane.b32.xlu0 %v5338, 72
        %v5510 = vpop.permute.xlu0 %5509
        %5519 = vrot.lane.b32.xlu0 %v5339, 80
        %v5520 = vpop.permute.xlu0 %5519
        %5521 = vrot.lane.b32.xlu0 %v5340, 80
        %v5522 = vpop.permute.xlu0 %5521
        %5523 = vrot.lane.b32.xlu0 %v5341, 80
        %v5524 = vpop.permute.xlu0 %5523
        %5525 = vrot.lane.b32.xlu0 %v5342, 80
        %v5526 = vpop.permute.xlu0 %5525
        %5535 = vrot.lane.b32.xlu0 %v5343, 88
        %v5536 = vpop.permute.xlu0 %5535
        %5537 = vrot.lane.b32.xlu0 %v5344, 88
        %v5538 = vpop.permute.xlu0 %5537
        %5539 = vrot.lane.b32.xlu0 %v5345, 88
        %v5540 = vpop.permute.xlu0 %5539
        %5541 = vrot.lane.b32.xlu0 %v5346, 88
        %v5542 = vpop.permute.xlu0 %5541
        %5551 = vrot.lane.b32.xlu0 %v5347, 96
        %v5552 = vpop.permute.xlu0 %5551
        %5553 = vrot.lane.b32.xlu0 %v5348, 96
        %v5554 = vpop.permute.xlu0 %5553
        %5555 = vrot.lane.b32.xlu0 %v5349, 96
        %v5556 = vpop.permute.xlu0 %5555
        %5557 = vrot.lane.b32.xlu0 %v5350, 96
        %v5558 = vpop.permute.xlu0 %5557
        %5567 = vrot.lane.b32.xlu0 %v5351, 104
        %v5568 = vpop.permute.xlu0 %5567
        %5569 = vrot.lane.b32.xlu0 %v5352, 104
        %v5570 = vpop.permute.xlu0 %5569
        %5571 = vrot.lane.b32.xlu0 %v5353, 104
        %v5572 = vpop.permute.xlu0 %5571
        %5573 = vrot.lane.b32.xlu0 %v5354, 104
        %v5574 = vpop.permute.xlu0 %5573
        %5583 = vrot.lane.b32.xlu0 %v5355, 112
        %v5584 = vpop.permute.xlu0 %5583
        %5585 = vrot.lane.b32.xlu0 %v5356, 112
        %v5586 = vpop.permute.xlu0 %5585
        %5587 = vrot.lane.b32.xlu0 %v5357, 112
        %v5588 = vpop.permute.xlu0 %5587
        %5589 = vrot.lane.b32.xlu0 %v5358, 112
        %v5590 = vpop.permute.xlu0 %5589
        %5599 = vrot.lane.b32.xlu0 %v5359, 120
        %v5600 = vpop.permute.xlu0 %5599
        %5601 = vrot.lane.b32.xlu0 %v5360, 120
        %v5602 = vpop.permute.xlu0 %5601
        %5603 = vrot.lane.b32.xlu0 %v5361, 120
        %v5604 = vpop.permute.xlu0 %5603
        %5605 = vrot.lane.b32.xlu0 %v5362, 120
        %v5606 = vpop.permute.xlu0 %5605
        %v5611 = vsel %vm1141, %v5299, %v5376
        %v5612 = vsel %vm1141, %v5300, %v5378
        %v5613 = vsel %vm1141, %v5301, %v5380
        %v5614 = vsel %vm1141, %v5302, %v5382
        %v5615 = vsel %vm1146, %v5611, %v5392
        %v5616 = vsel %vm1146, %v5612, %v5394
        %v5617 = vsel %vm1146, %v5613, %v5396
        %v5618 = vsel %vm1146, %v5614, %v5398
        %v5619 = vsel %vm1151, %v5615, %v5408
        %v5620 = vsel %vm1151, %v5616, %v5410
        %v5621 = vsel %vm1151, %v5617, %v5412
        %v5622 = vsel %vm1151, %v5618, %v5414
        %v5623 = vsel %vm488, %v5619, %v5424
        %v5624 = vsel %vm488, %v5620, %v5426
        %v5625 = vsel %vm488, %v5621, %v5428
        %v5626 = vsel %vm488, %v5622, %v5430
        %v5627 = vsel %vm493, %v5623, %v5440
        %v5628 = vsel %vm493, %v5624, %v5442
        %v5629 = vsel %vm493, %v5625, %v5444
        %v5630 = vsel %vm493, %v5626, %v5446
        %v5631 = vsel %vm498, %v5627, %v5456
        %v5632 = vsel %vm498, %v5628, %v5458
        %v5633 = vsel %vm498, %v5629, %v5460
        %v5634 = vsel %vm498, %v5630, %v5462
        %v5635 = vsel %vm503, %v5631, %v5472
        %v5636 = vsel %vm503, %v5632, %v5474
        %v5637 = vsel %vm503, %v5633, %v5476
        %v5638 = vsel %vm503, %v5634, %v5478
        %v5639 = vsel %vm508, %v5635, %v5488
        %v5640 = vsel %vm508, %v5636, %v5490
        %v5641 = vsel %vm508, %v5637, %v5492
        %v5642 = vsel %vm508, %v5638, %v5494
        %v5643 = vsel %vm513, %v5639, %v5504
        %v5644 = vsel %vm513, %v5640, %v5506
        %v5645 = vsel %vm513, %v5641, %v5508
        %v5646 = vsel %vm513, %v5642, %v5510
        %v5647 = vsel %vm518, %v5643, %v5520
        %v5648 = vsel %vm518, %v5644, %v5522
        %v5649 = vsel %vm518, %v5645, %v5524
        %v5650 = vsel %vm518, %v5646, %v5526
        %v5651 = vsel %vm523, %v5647, %v5536
        %v5652 = vsel %vm523, %v5648, %v5538
        %v5653 = vsel %vm523, %v5649, %v5540
        %v5654 = vsel %vm523, %v5650, %v5542
        %v5655 = vsel %vm528, %v5651, %v5552
        %v5656 = vsel %vm528, %v5652, %v5554
        %v5657 = vsel %vm528, %v5653, %v5556
        %v5658 = vsel %vm528, %v5654, %v5558
        %v5659 = vsel %vm603, %v5655, %v5568
        %v5660 = vsel %vm603, %v5656, %v5570
        %v5661 = vsel %vm603, %v5657, %v5572
        %v5662 = vsel %vm603, %v5658, %v5574
        %v5663 = vsel %vm1196, %v5659, %v5584
        %v5664 = vsel %vm1196, %v5660, %v5586
        %v5665 = vsel %vm1196, %v5661, %v5588
        %v5666 = vsel %vm1196, %v5662, %v5590
        %v5667 = vsel %vm1201, %v5663, %v5600
        %v5668 = vsel %vm1201, %v5664, %v5602
        %v5669 = vsel %vm1201, %v5665, %v5604
        %v5670 = vsel %vm1201, %v5666, %v5606
        %5675 = vrot.lane.b32.xlu0 %v5367, 8
        %v5676 = vpop.permute.xlu0 %5675
        %5677 = vrot.lane.b32.xlu0 %v5368, 8
        %v5678 = vpop.permute.xlu0 %5677
        %5679 = vrot.lane.b32.xlu0 %v5369, 8
        %v5680 = vpop.permute.xlu0 %5679
        %5681 = vrot.lane.b32.xlu0 %v5370, 8
        %v5682 = vpop.permute.xlu0 %5681
        %v5687 = vsel %vm1141, %v5363, %v5676
        %v5688 = vsel %vm1141, %v5364, %v5678
        %v5689 = vsel %vm1141, %v5365, %v5680
        %v5690 = vsel %vm1141, %v5366, %v5682
        %v5699 = vcombine.low %v5667, %v5687
        %v5700 = vcombine.low %v5668, %v5688
        %v5701 = vcombine.low %v5669, %v5689
        %v5702 = vcombine.low %v5670, %v5690
        %v5703 = vld [vmem:[%s3] sm:$0xff]
        %v5704 = vld [vmem:[%s3 + $0x8] sm:$0xff]
        %v5705 = vld [vmem:[%s3 + $0x10] sm:$0xff]
        %v5706 = vld [vmem:[%s3 + $0x18] sm:$0xff]
        %v5707 = vld [vmem:[%s3 + $0x20] sm:$0xff]
        %v5708 = vld [vmem:[%s3 + $0x28] sm:$0xff]
        %v5709 = vld [vmem:[%s3 + $0x30] sm:$0xff]
        %v5710 = vld [vmem:[%s3 + $0x38] sm:$0xff]
        %v5711 = vld [vmem:[%s3 + $0x40] sm:$0xff]
        %v5712 = vld [vmem:[%s3 + $0x48] sm:$0xff]
        %v5713 = vld [vmem:[%s3 + $0x50] sm:$0xff]
        %v5714 = vld [vmem:[%s3 + $0x58] sm:$0xff]
        %v5715 = vld [vmem:[%s3 + $0x60] sm:$0xff]
        %v5716 = vld [vmem:[%s3 + $0x68] sm:$0xff]
        %v5717 = vld [vmem:[%s3 + $0x70] sm:$0xff]
        %v5718 = vld [vmem:[%s3 + $0x78] sm:$0xff]
        %v5719 = vld [vmem:[%s3 + $0x80] sm:$0xff]
        %v5720 = vld [vmem:[%s3 + $0x88] sm:$0xff]
        %v5721 = vld [vmem:[%s4] sm:$0x1]
        %v5723 = vlaneseq
        %v5724 = vshrl.u32 %v5723, 7
        %v5725 = vsub.s32 0, %v5724
        %v5726 = vrot.slane %v5721, %v5725
        %v5728 = vcombine.low %v5699, %v5700
        %v5729 = vcombine.high %v5699, %v5700
        %v5730 = vcombine.low %v5701, %v5702
        %v5731 = vcombine.high %v5701, %v5702
        %v5734 = vsel %vm1146, %v5729, 0
        %v5736 = vsel %vm1146, %v5731, 0
        %5738 = vmatprep.subr.mxu0 0.0
        %5739 = vmatpush1.msra.mxu0 %v5718
        %5740 = vmatprep.subr.mxu0 0.0
        %5741 = vmatpush1.msra.mxu0 %v5717
        %5742 = vmatprep.subr.mxu0 0.0
        %5743 = vmatpush1.msra.mxu0 %v5716
        %5744 = vmatprep.subr.mxu0 0.0
        %5745 = vmatpush1.msra.mxu0 %v5715
        %5746 = vmatprep.subr.mxu0 0.0
        %5747 = vmatpush1.msra.mxu0 %v5714
        %5748 = vmatprep.subr.mxu0 0.0
        %5749 = vmatpush1.msra.mxu0 %v5713
        %5750 = vmatprep.subr.mxu0 0.0
        %5751 = vmatpush1.msra.mxu0 %v5712
        %5752 = vmatprep.subr.mxu0 0.0
        %5753 = vmatpush1.msra.mxu0 %v5711
        %5754 = vmatprep.subr.mxu0 0.0
        %5755 = vmatpush1.msra.mxu0 %v5710
        %5756 = vmatprep.subr.mxu0 0.0
        %5757 = vmatpush1.msra.mxu0 %v5709
        %5758 = vmatprep.subr.mxu0 0.0
        %5759 = vmatpush1.msra.mxu0 %v5708
        %5760 = vmatprep.subr.mxu0 0.0
        %5761 = vmatpush1.msra.mxu0 %v5707
        %5762 = vmatprep.subr.mxu0 0.0
        %5763 = vmatpush1.msra.mxu0 %v5706
        %5764 = vmatprep.subr.mxu0 0.0
        %5765 = vmatpush1.msra.mxu0 %v5705
        %5766 = vmatprep.subr.mxu0 0.0
        %5767 = vmatpush1.msra.mxu0 %v5704
        %5768 = vmatprep.subr.mxu0 0.0
        %5769 = vmatpush1.msra.mxu0 %v5703
        %5770 = vmatprep.subr.mxu0 0.0
        %5771 = vmatpush2.msra.mxu0 0.0
        %5772 = vmatprep.subr.mxu0 0.0
        %5773 = vmatpush2.msra.mxu0 0.0
        %5774 = vmatprep.subr.mxu0 0.0
        %5775 = vmatpush2.msra.mxu0 0.0
        %5776 = vmatprep.subr.mxu0 0.0
        %5777 = vmatpush2.msra.mxu0 0.0
        %5778 = vmatprep.subr.mxu0 0.0
        %5779 = vmatpush2.msra.mxu0 0.0
        %5780 = vmatprep.subr.mxu0 0.0
        %5781 = vmatpush2.msra.mxu0 0.0
        %5782 = vmatprep.subr.mxu0 0.0
        %5783 = vmatpush2.msra.mxu0 0.0
        %5784 = vmatprep.subr.mxu0 0.0
        %5785 = vmatpush2.msra.mxu0 0.0
        %5786 = vmatprep.subr.mxu0 0.0
        %5787 = vmatpush2.msra.mxu0 0.0
        %5788 = vmatprep.subr.mxu0 0.0
        %5789 = vmatpush2.msra.mxu0 0.0
        %5790 = vmatprep.subr.mxu0 0.0
        %5791 = vmatpush2.msra.mxu0 0.0
        %5792 = vmatprep.subr.mxu0 0.0
        %5793 = vmatpush2.msra.mxu0 0.0
        %5794 = vmatprep.subr.mxu0 0.0
        %5795 = vmatpush2.msra.mxu0 0.0
        %5796 = vmatprep.subr.mxu0 0.0
        %5797 = vmatpush2.msra.mxu0 0.0
        %5798 = vmatprep.subr.mxu0 0.0
        %5799 = vmatpush2.msra.mxu0 %v5720
        %5800 = vmatprep.subr.mxu0 0.0
        %5801 = vmatpush2.msra.mxu0 %v5719
        %5802 = vmatprep.mubr.f32.mxu0 %v5734
        %5803 = vmatmul.mubr.f32.gmra.mxu0 %v5728
        %v5804 = vpop.f32.mrf.mxu0
        %v5805 = vadd.f32 %v5726, %v5804
        %v5806 = vpop.f32.mrf.mxu0
        %5807 = vmatprep.mubr.f32.mxu0 %v5736
        %5808 = vmatmul.mubr.f32.gmra.mxu0 %v5730
        %v5809 = vpop.f32.mrf.mxu0
        %v5810 = vadd.f32 %v5726, %v5809
        %v5811 = vpop.f32.mrf.mxu0
        %5812 = vdwg.mxu0
        %v5813 = vxor.u32 %v5805, 2147483648
        %v5814 = vxor.u32 %v5810, 2147483648
        %v5815 = vmul.f32 %v5813, 1.442695
        %v5816 = vpow.pop %v5815
        %v5817 = vmul.f32 %v5814, 1.442695
        %v5818 = vpow.pop %v5817
        %v5819 = vadd.f32 %v5816, 1.0
        %v5820 = vadd.f32 %v5818, 1.0
        %v5821 = vrcp.pop %v5819
        %v5822 = vmul.f32 1.0, %v5821
        %v5823 = vrcp.pop %v5820
        %v5824 = vmul.f32 1.0, %v5823
        %v5825 = vtanh.pop %v5805
        %v5826 = vtanh.pop %v5810
        %v5827 = vmul.f32 %v5822, %v4731
        %v5828 = vmul.f32 %v5824, %v4732
        %5831 = vrot.lane.b32.xlu0 %v5825, 104
        %v5832 = vpop.permute.xlu0 %5831
        %5833 = vrot.lane.b32.xlu0 %v5826, 104
        %v5834 = vpop.permute.xlu0 %5833
        %v5837 = vmul.f32 %v5822, %v5832
        %v5838 = vmul.f32 %v5824, %v5834
        %5841 = vrot.lane.b32.xlu0 %v5837, 8
        %v5842 = vpop.permute.xlu0 %5841
        %5843 = vrot.lane.b32.xlu0 %v5838, 8
        %v5844 = vpop.permute.xlu0 %5843
        %v5847 = vadd.f32 %v5827, %v5842
        %v5848 = vadd.f32 %v5828, %v5844
        %v5849 = vtanh.pop %v5847
        %v5850 = vtanh.pop %v5848
        %5853 = vrot.lane.b32.xlu0 %v5849, 8
        %v5854 = vpop.permute.xlu0 %5853
        %5855 = vrot.lane.b32.xlu0 %v5850, 8
        %v5856 = vpop.permute.xlu0 %5855
        %v5859 = vmul.f32 %v5822, %v5854
        %v5860 = vmul.f32 %v5824, %v5856
        %v5863 = vcombine.high %v5859, %v5859
        %v5864 = vcombine.high %v5860, %v5860
        %5865 = vrot.lane.b32.xlu0 %v5859, 112
        %v5866 = vpop.permute.xlu0 %5865
        %5867 = vrot.lane.b32.xlu0 %v5863, 112
        %v5868 = vpop.permute.xlu0 %5867
        %5869 = vrot.lane.b32.xlu0 %v5860, 112
        %v5870 = vpop.permute.xlu0 %5869
        %5871 = vrot.lane.b32.xlu0 %v5864, 112
        %v5872 = vpop.permute.xlu0 %5871
        %5877 = vst.msk [vmem:[%s875 + $0x1] sm:$0xf] %vm822, %v5866
        %5878 = vst.msk [vmem:[%s875 + $0x9] sm:$0xf] %vm822, %v5868
        %5879 = vst.msk [vmem:[%s875 + $0x11] sm:$0xf] %vm822, %v5870
        %5880 = vst.msk [vmem:[%s875 + $0x19] sm:$0xf] %vm822, %v5872
        %v5881 = vsel %vm1416, %v5859, 0.0
        %v5882 = vsel %vm1416, %v5860, 0.0
        %v5883 = vadd.f32 %v5881, %v5882
        %v5884 = vrot.slane %v5883, 4
        %v5885 = vadd.f32 %v5883, %v5884
        %v5886 = vrot.slane %v5885, 2
        %v5887 = vadd.f32 %v5885, %v5886
        %v5888 = vrot.slane %v5887, 1
        %v5889 = vadd.f32 %v5887, %v5888
        %s5890 = scalar_lea.vmem %s276, 240
        %v5891 = vld [vmem:[%s5890] sm:$0xff]
        %v5892 = vld [vmem:[%s5890 + $0x8] sm:$0xf]
        %v5893 = vld [vmem:[%s5890 + $0xc] sm:$0xff]
        %v5894 = vld [vmem:[%s5890 + $0x14] sm:$0xf]
        %v5895 = vld [vmem:[%s5890 + $0x18] sm:$0xff]
        %v5896 = vld [vmem:[%s5890 + $0x20] sm:$0xf]
        %v5897 = vld [vmem:[%s5890 + $0x24] sm:$0xff]
        %v5898 = vld [vmem:[%s5890 + $0x2c] sm:$0xf]
        %v5899 = vld [vmem:[#allocation2] sm:$0xf]
        %v5900 = vld [vmem:[#allocation2 + $0x8] sm:$0xf]
        %v5901 = vld [vmem:[#allocation2 + $0x10] sm:$0xf]
        %v5902 = vld [vmem:[#allocation2 + $0x18] sm:$0xf]
        %v5903 = vld [vmem:[#allocation2 + $0x1] sm:$0xf]
        %v5904 = vld [vmem:[#allocation2 + $0x9] sm:$0xf]
        %v5905 = vld [vmem:[#allocation2 + $0x11] sm:$0xf]
        %v5906 = vld [vmem:[#allocation2 + $0x19] sm:$0xf]
        %v5907 = vld [vmem:[#allocation2 + $0x2] sm:$0xf]
        %v5908 = vld [vmem:[#allocation2 + $0xa] sm:$0xf]
        %v5909 = vld [vmem:[#allocation2 + $0x12] sm:$0xf]
        %v5910 = vld [vmem:[#allocation2 + $0x1a] sm:$0xf]
        %v5911 = vld [vmem:[%s310] sm:$0xf]
        %v5912 = vld [vmem:[%s310 + $0x8] sm:$0xf]
        %v5913 = vld [vmem:[%s310 + $0x10] sm:$0xf]
        %v5914 = vld [vmem:[%s310 + $0x18] sm:$0xf]
        %v5915 = vld [vmem:[%s310 + $0x1] sm:$0xf]
        %v5916 = vld [vmem:[%s310 + $0x9] sm:$0xf]
        %v5917 = vld [vmem:[%s310 + $0x11] sm:$0xf]
        %v5918 = vld [vmem:[%s310 + $0x19] sm:$0xf]
        %v5919 = vld [vmem:[%s310 + $0x2] sm:$0xf]
        %v5920 = vld [vmem:[%s310 + $0xa] sm:$0xf]
        %v5921 = vld [vmem:[%s310 + $0x12] sm:$0xf]
        %v5922 = vld [vmem:[%s310 + $0x1a] sm:$0xf]
        %v5923 = vld [vmem:[%s323] sm:$0xf]
        %v5924 = vld [vmem:[%s323 + $0x8] sm:$0xf]
        %v5925 = vld [vmem:[%s323 + $0x10] sm:$0xf]
        %v5926 = vld [vmem:[%s323 + $0x18] sm:$0xf]
        %v5927 = vld [vmem:[%s323 + $0x1] sm:$0xf]
        %v5928 = vld [vmem:[%s323 + $0x9] sm:$0xf]
        %v5929 = vld [vmem:[%s323 + $0x11] sm:$0xf]
        %v5930 = vld [vmem:[%s323 + $0x19] sm:$0xf]
        %v5931 = vld [vmem:[%s323 + $0x2] sm:$0xf]
        %v5932 = vld [vmem:[%s323 + $0xa] sm:$0xf]
        %v5933 = vld [vmem:[%s323 + $0x12] sm:$0xf]
        %v5934 = vld [vmem:[%s323 + $0x1a] sm:$0xf]
        %v5939 = vcombine.high %v5891, %v5891
        %v5940 = vcombine.high %v5893, %v5893
        %v5941 = vcombine.high %v5895, %v5895
        %v5942 = vcombine.high %v5897, %v5897
        %5947 = vrot.lane.b32.xlu0 %v5899, 32
        %v5948 = vpop.permute.xlu0 %5947
        %5949 = vrot.lane.b32.xlu0 %v5900, 32
        %v5950 = vpop.permute.xlu0 %5949
        %5951 = vrot.lane.b32.xlu0 %v5901, 32
        %v5952 = vpop.permute.xlu0 %5951
        %5953 = vrot.lane.b32.xlu0 %v5902, 32
        %v5954 = vpop.permute.xlu0 %5953
        %5963 = vrot.lane.b32.xlu0 %v5903, 40
        %v5964 = vpop.permute.xlu0 %5963
        %5965 = vrot.lane.b32.xlu0 %v5904, 40
        %v5966 = vpop.permute.xlu0 %5965
        %5967 = vrot.lane.b32.xlu0 %v5905, 40
        %v5968 = vpop.permute.xlu0 %5967
        %5969 = vrot.lane.b32.xlu0 %v5906, 40
        %v5970 = vpop.permute.xlu0 %5969
        %5979 = vrot.lane.b32.xlu0 %v5907, 48
        %v5980 = vpop.permute.xlu0 %5979
        %5981 = vrot.lane.b32.xlu0 %v5908, 48
        %v5982 = vpop.permute.xlu0 %5981
        %5983 = vrot.lane.b32.xlu0 %v5909, 48
        %v5984 = vpop.permute.xlu0 %5983
        %5985 = vrot.lane.b32.xlu0 %v5910, 48
        %v5986 = vpop.permute.xlu0 %5985
        %5995 = vrot.lane.b32.xlu0 %v5911, 56
        %v5996 = vpop.permute.xlu0 %5995
        %5997 = vrot.lane.b32.xlu0 %v5912, 56
        %v5998 = vpop.permute.xlu0 %5997
        %5999 = vrot.lane.b32.xlu0 %v5913, 56
        %v6000 = vpop.permute.xlu0 %5999
        %6001 = vrot.lane.b32.xlu0 %v5914, 56
        %v6002 = vpop.permute.xlu0 %6001
        %6011 = vrot.lane.b32.xlu0 %v5915, 64
        %v6012 = vpop.permute.xlu0 %6011
        %6013 = vrot.lane.b32.xlu0 %v5916, 64
        %v6014 = vpop.permute.xlu0 %6013
        %6015 = vrot.lane.b32.xlu0 %v5917, 64
        %v6016 = vpop.permute.xlu0 %6015
        %6017 = vrot.lane.b32.xlu0 %v5918, 64
        %v6018 = vpop.permute.xlu0 %6017
        %6027 = vrot.lane.b32.xlu0 %v5919, 72
        %v6028 = vpop.permute.xlu0 %6027
        %6029 = vrot.lane.b32.xlu0 %v5920, 72
        %v6030 = vpop.permute.xlu0 %6029
        %6031 = vrot.lane.b32.xlu0 %v5921, 72
        %v6032 = vpop.permute.xlu0 %6031
        %6033 = vrot.lane.b32.xlu0 %v5922, 72
        %v6034 = vpop.permute.xlu0 %6033
        %6043 = vrot.lane.b32.xlu0 %v5923, 80
        %v6044 = vpop.permute.xlu0 %6043
        %6045 = vrot.lane.b32.xlu0 %v5924, 80
        %v6046 = vpop.permute.xlu0 %6045
        %6047 = vrot.lane.b32.xlu0 %v5925, 80
        %v6048 = vpop.permute.xlu0 %6047
        %6049 = vrot.lane.b32.xlu0 %v5926, 80
        %v6050 = vpop.permute.xlu0 %6049
        %6059 = vrot.lane.b32.xlu0 %v5927, 88
        %v6060 = vpop.permute.xlu0 %6059
        %6061 = vrot.lane.b32.xlu0 %v5928, 88
        %v6062 = vpop.permute.xlu0 %6061
        %6063 = vrot.lane.b32.xlu0 %v5929, 88
        %v6064 = vpop.permute.xlu0 %6063
        %6065 = vrot.lane.b32.xlu0 %v5930, 88
        %v6066 = vpop.permute.xlu0 %6065
        %6075 = vrot.lane.b32.xlu0 %v5931, 96
        %v6076 = vpop.permute.xlu0 %6075
        %6077 = vrot.lane.b32.xlu0 %v5932, 96
        %v6078 = vpop.permute.xlu0 %6077
        %6079 = vrot.lane.b32.xlu0 %v5933, 96
        %v6080 = vpop.permute.xlu0 %6079
        %6081 = vrot.lane.b32.xlu0 %v5934, 96
        %v6082 = vpop.permute.xlu0 %6081
        %v6087 = vsel %vm488, %v5892, %v5948
        %v6088 = vsel %vm488, %v5894, %v5950
        %v6089 = vsel %vm488, %v5896, %v5952
        %v6090 = vsel %vm488, %v5898, %v5954
        %v6091 = vsel %vm493, %v6087, %v5964
        %v6092 = vsel %vm493, %v6088, %v5966
        %v6093 = vsel %vm493, %v6089, %v5968
        %v6094 = vsel %vm493, %v6090, %v5970
        %v6095 = vsel %vm498, %v6091, %v5980
        %v6096 = vsel %vm498, %v6092, %v5982
        %v6097 = vsel %vm498, %v6093, %v5984
        %v6098 = vsel %vm498, %v6094, %v5986
        %v6099 = vsel %vm503, %v6095, %v5996
        %v6100 = vsel %vm503, %v6096, %v5998
        %v6101 = vsel %vm503, %v6097, %v6000
        %v6102 = vsel %vm503, %v6098, %v6002
        %v6103 = vsel %vm508, %v6099, %v6012
        %v6104 = vsel %vm508, %v6100, %v6014
        %v6105 = vsel %vm508, %v6101, %v6016
        %v6106 = vsel %vm508, %v6102, %v6018
        %v6107 = vsel %vm513, %v6103, %v6028
        %v6108 = vsel %vm513, %v6104, %v6030
        %v6109 = vsel %vm513, %v6105, %v6032
        %v6110 = vsel %vm513, %v6106, %v6034
        %v6111 = vsel %vm518, %v6107, %v6044
        %v6112 = vsel %vm518, %v6108, %v6046
        %v6113 = vsel %vm518, %v6109, %v6048
        %v6114 = vsel %vm518, %v6110, %v6050
        %v6115 = vsel %vm523, %v6111, %v6060
        %v6116 = vsel %vm523, %v6112, %v6062
        %v6117 = vsel %vm523, %v6113, %v6064
        %v6118 = vsel %vm523, %v6114, %v6066
        %v6119 = vsel %vm528, %v6115, %v6076
        %v6120 = vsel %vm528, %v6116, %v6078
        %v6121 = vsel %vm528, %v6117, %v6080
        %v6122 = vsel %vm528, %v6118, %v6082
        %v6127 = vcombine.low %v5891, %v5939
        %v6128 = vcombine.low %v5893, %v5940
        %v6129 = vcombine.low %v5895, %v5941
        %v6130 = vcombine.low %v5897, %v5942
        %v6131 = vld [vmem:[%s1] sm:$0xff]
        %v6132 = vld [vmem:[%s1 + $0x8] sm:$0xff]
        %v6133 = vld [vmem:[%s1 + $0x10] sm:$0xff]
        %v6134 = vld [vmem:[%s1 + $0x18] sm:$0xff]
        %v6135 = vld [vmem:[%s1 + $0x20] sm:$0xff]
        %v6136 = vld [vmem:[%s1 + $0x28] sm:$0xff]
        %v6137 = vld [vmem:[%s1 + $0x30] sm:$0xff]
        %v6138 = vld [vmem:[%s1 + $0x38] sm:$0xff]
        %v6139 = vld [vmem:[%s1 + $0x40] sm:$0xff]
        %v6140 = vld [vmem:[%s1 + $0x48] sm:$0xff]
        %v6141 = vld [vmem:[%s1 + $0x50] sm:$0xff]
        %v6142 = vld [vmem:[%s1 + $0x58] sm:$0xff]
        %v6143 = vld [vmem:[%s1 + $0x60] sm:$0xff]
        %v6144 = vld [vmem:[%s1 + $0x68] sm:$0xff]
        %v6145 = vld [vmem:[%s1 + $0x70] sm:$0xff]
        %v6146 = vld [vmem:[%s1 + $0x78] sm:$0xff]
        %v6147 = vld [vmem:[%s1 + $0x80] sm:$0xff]
        %v6148 = vld [vmem:[%s1 + $0x88] sm:$0xff]
        %v6149 = vld [vmem:[%s1 + $0x90] sm:$0xff]
        %v6150 = vld [vmem:[%s1 + $0x98] sm:$0xff]
        %v6151 = vld [vmem:[%s1 + $0xa0] sm:$0xff]
        %v6152 = vld [vmem:[%s1 + $0xa8] sm:$0xff]
        %v6153 = vld [vmem:[%s1 + $0xb0] sm:$0xff]
        %v6154 = vld [vmem:[%s1 + $0xb8] sm:$0xff]
        %v6155 = vld [vmem:[%s1 + $0xc0] sm:$0xff]
        %v6156 = vld [vmem:[%s1 + $0xc8] sm:$0xff]
        %v6157 = vld [vmem:[%s1 + $0xd0] sm:$0xff]
        %v6158 = vld [vmem:[%s1 + $0xd8] sm:$0xff]
        %v6159 = vld [vmem:[%s1 + $0xe0] sm:$0xff]
        %v6160 = vld [vmem:[%s1 + $0xe8] sm:$0xff]
        %v6161 = vld [vmem:[%s1 + $0xf0] sm:$0xff]
        %v6162 = vld [vmem:[%s1 + $0xf8] sm:$0xff]
        %v6163 = vld [vmem:[%s1 + $0x100] sm:$0xff]
        %v6164 = vld [vmem:[%s1 + $0x108] sm:$0xff]
        %v6165 = vld [vmem:[%s1 + $0x110] sm:$0xff]
        %v6166 = vld [vmem:[%s1 + $0x118] sm:$0xff]
        %v6167 = vld [vmem:[%s1 + $0x120] sm:$0xff]
        %v6168 = vld [vmem:[%s1 + $0x128] sm:$0xff]
        %v6169 = vld [vmem:[%s1 + $0x130] sm:$0xff]
        %v6170 = vld [vmem:[%s1 + $0x138] sm:$0xff]
        %v6171 = vld [vmem:[%s1 + $0x140] sm:$0xff]
        %v6172 = vld [vmem:[%s1 + $0x148] sm:$0xff]
        %v6173 = vld [vmem:[%s1 + $0x150] sm:$0xff]
        %v6174 = vld [vmem:[%s1 + $0x158] sm:$0xff]
        %v6175 = vld [vmem:[%s1 + $0x160] sm:$0xff]
        %v6176 = vld [vmem:[%s2] sm:$0x1]
        %v6178 = vlaneseq
        %v6179 = vshrl.u32 %v6178, 7
        %v6180 = vsub.s32 0, %v6179
        %v6181 = vrot.slane %v6176, %v6180
        %v6183 = vcombine.low %v6127, %v6128
        %v6184 = vcombine.high %v6127, %v6128
        %v6185 = vcombine.low %v6119, %v6120
        %v6186 = vcombine.low %v6129, %v6130
        %v6187 = vcombine.high %v6129, %v6130
        %v6188 = vcombine.low %v6121, %v6122
        %v6193 = vsel %vm603, %v6185, 0
        %v6195 = vsel %vm603, %v6188, 0
        %6197 = vmatprep.subr.mxu0 0.0
        %6198 = vmatpush1.msra.mxu0 %v6146
        %6199 = vmatprep.subr.mxu0 0.0
        %6200 = vmatpush1.msra.mxu0 %v6145
        %6201 = vmatprep.subr.mxu0 0.0
        %6202 = vmatpush1.msra.mxu0 %v6144
        %6203 = vmatprep.subr.mxu0 0.0
        %6204 = vmatpush1.msra.mxu0 %v6143
        %6205 = vmatprep.subr.mxu0 0.0
        %6206 = vmatpush1.msra.mxu0 %v6142
        %6207 = vmatprep.subr.mxu0 0.0
        %6208 = vmatpush1.msra.mxu0 %v6141
        %6209 = vmatprep.subr.mxu0 0.0
        %6210 = vmatpush1.msra.mxu0 %v6140
        %6211 = vmatprep.subr.mxu0 0.0
        %6212 = vmatpush1.msra.mxu0 %v6139
        %6213 = vmatprep.subr.mxu0 0.0
        %6214 = vmatpush1.msra.mxu0 %v6138
        %6215 = vmatprep.subr.mxu0 0.0
        %6216 = vmatpush1.msra.mxu0 %v6137
        %6217 = vmatprep.subr.mxu0 0.0
        %6218 = vmatpush1.msra.mxu0 %v6136
        %6219 = vmatprep.subr.mxu0 0.0
        %6220 = vmatpush1.msra.mxu0 %v6135
        %6221 = vmatprep.subr.mxu0 0.0
        %6222 = vmatpush1.msra.mxu0 %v6134
        %6223 = vmatprep.subr.mxu0 0.0
        %6224 = vmatpush1.msra.mxu0 %v6133
        %6225 = vmatprep.subr.mxu0 0.0
        %6226 = vmatpush1.msra.mxu0 %v6132
        %6227 = vmatprep.subr.mxu0 0.0
        %6228 = vmatpush1.msra.mxu0 %v6131
        %6229 = vmatprep.subr.mxu0 0.0
        %6230 = vmatpush2.msra.mxu0 %v6162
        %6231 = vmatprep.subr.mxu0 0.0
        %6232 = vmatpush2.msra.mxu0 %v6161
        %6233 = vmatprep.subr.mxu0 0.0
        %6234 = vmatpush2.msra.mxu0 %v6160
        %6235 = vmatprep.subr.mxu0 0.0
        %6236 = vmatpush2.msra.mxu0 %v6159
        %6237 = vmatprep.subr.mxu0 0.0
        %6238 = vmatpush2.msra.mxu0 %v6158
        %6239 = vmatprep.subr.mxu0 0.0
        %6240 = vmatpush2.msra.mxu0 %v6157
        %6241 = vmatprep.subr.mxu0 0.0
        %6242 = vmatpush2.msra.mxu0 %v6156
        %6243 = vmatprep.subr.mxu0 0.0
        %6244 = vmatpush2.msra.mxu0 %v6155
        %6245 = vmatprep.subr.mxu0 0.0
        %6246 = vmatpush2.msra.mxu0 %v6154
        %6247 = vmatprep.subr.mxu0 0.0
        %6248 = vmatpush2.msra.mxu0 %v6153
        %6249 = vmatprep.subr.mxu0 0.0
        %6250 = vmatpush2.msra.mxu0 %v6152
        %6251 = vmatprep.subr.mxu0 0.0
        %6252 = vmatpush2.msra.mxu0 %v6151
        %6253 = vmatprep.subr.mxu0 0.0
        %6254 = vmatpush2.msra.mxu0 %v6150
        %6255 = vmatprep.subr.mxu0 0.0
        %6256 = vmatpush2.msra.mxu0 %v6149
        %6257 = vmatprep.subr.mxu0 0.0
        %6258 = vmatpush2.msra.mxu0 %v6148
        %6259 = vmatprep.subr.mxu0 0.0
        %6260 = vmatpush2.msra.mxu0 %v6147
        %6261 = vmatprep.mubr.f32.mxu0 %v6184
        %6262 = vmatmul.mubr.f32.gmra.mxu0 %v6183
        %v6263 = vpop.f32.mrf.mxu0
        %v6264 = vadd.f32 %v6181, %v6263
        %v6265 = vpop.f32.mrf.mxu0
        %6266 = vmatprep.mubr.f32.mxu0 %v6187
        %6267 = vmatmul.mubr.f32.gmra.mxu0 %v6186
        %v6268 = vpop.f32.mrf.mxu0
        %v6269 = vadd.f32 %v6181, %v6268
        %v6270 = vpop.f32.mrf.mxu0
        %6271 = vdwg.mxu0
        %6272 = vmatprep.subr.mxu0 0.0
        %6273 = vmatpush1.msra.mxu0 0.0
        %6274 = vmatprep.subr.mxu0 0.0
        %6275 = vmatpush1.msra.mxu0 0.0
        %6276 = vmatprep.subr.mxu0 0.0
        %6277 = vmatpush1.msra.mxu0 0.0
        %6278 = vmatprep.subr.mxu0 0.0
        %6279 = vmatpush1.msra.mxu0 %v6175
        %6280 = vmatprep.subr.mxu0 0.0
        %6281 = vmatpush1.msra.mxu0 %v6174
        %6282 = vmatprep.subr.mxu0 0.0
        %6283 = vmatpush1.msra.mxu0 %v6173
        %6284 = vmatprep.subr.mxu0 0.0
        %6285 = vmatpush1.msra.mxu0 %v6172
        %6286 = vmatprep.subr.mxu0 0.0
        %6287 = vmatpush1.msra.mxu0 %v6171
        %6288 = vmatprep.subr.mxu0 0.0
        %6289 = vmatpush1.msra.mxu0 %v6170
        %6290 = vmatprep.subr.mxu0 0.0
        %6291 = vmatpush1.msra.mxu0 %v6169
        %6292 = vmatprep.subr.mxu0 0.0
        %6293 = vmatpush1.msra.mxu0 %v6168
        %6294 = vmatprep.subr.mxu0 0.0
        %6295 = vmatpush1.msra.mxu0 %v6167
        %6296 = vmatprep.subr.mxu0 0.0
        %6297 = vmatpush1.msra.mxu0 %v6166
        %6298 = vmatprep.subr.mxu0 0.0
        %6299 = vmatpush1.msra.mxu0 %v6165
        %6300 = vmatprep.subr.mxu0 0.0
        %6301 = vmatpush1.msra.mxu0 %v6164
        %6302 = vmatprep.subr.mxu0 0.0
        %6303 = vmatpush1.msra.mxu0 %v6163
        %6304 = vmatprep.subr.mxu0 0.0
        %6305 = vmatpush2.msra.mxu0 0.0
        %6306 = vmatprep.subr.mxu0 0.0
        %6307 = vmatpush2.msra.mxu0 0.0
        %6308 = vmatprep.subr.mxu0 0.0
        %6309 = vmatpush2.msra.mxu0 0.0
        %6310 = vmatprep.subr.mxu0 0.0
        %6311 = vmatpush2.msra.mxu0 0.0
        %6312 = vmatprep.subr.mxu0 0.0
        %6313 = vmatpush2.msra.mxu0 0.0
        %6314 = vmatprep.subr.mxu0 0.0
        %6315 = vmatpush2.msra.mxu0 0.0
        %6316 = vmatprep.subr.mxu0 0.0
        %6317 = vmatpush2.msra.mxu0 0.0
        %6318 = vmatprep.subr.mxu0 0.0
        %6319 = vmatpush2.msra.mxu0 0.0
        %6320 = vmatprep.subr.mxu0 0.0
        %6321 = vmatpush2.msra.mxu0 0.0
        %6322 = vmatprep.subr.mxu0 0.0
        %6323 = vmatpush2.msra.mxu0 0.0
        %6324 = vmatprep.subr.mxu0 0.0
        %6325 = vmatpush2.msra.mxu0 0.0
        %6326 = vmatprep.subr.mxu0 0.0
        %6327 = vmatpush2.msra.mxu0 0.0
        %6328 = vmatprep.subr.mxu0 0.0
        %6329 = vmatpush2.msra.mxu0 0.0
        %6330 = vmatprep.subr.mxu0 0.0
        %6331 = vmatpush2.msra.mxu0 0.0
        %6332 = vmatprep.subr.mxu0 0.0
        %6333 = vmatpush2.msra.mxu0 0.0
        %6334 = vmatprep.subr.mxu0 0.0
        %6335 = vmatpush2.msra.mxu0 0.0
        %6336 = vmatprep.mubr.f32.mxu0 0.0
        %6337 = vmatmul.mubr.f32.gmra.mxu0 %v6193
        %v6338 = vpop.f32.mrf.mxu0
        %v6339 = vadd.f32 %v6264, %v6338
        %v6340 = vpop.f32.mrf.mxu0
        %6341 = vmatprep.mubr.f32.mxu0 0.0
        %6342 = vmatmul.mubr.f32.gmra.mxu0 %v6195
        %v6343 = vpop.f32.mrf.mxu0
        %v6344 = vadd.f32 %v6269, %v6343
        %v6345 = vpop.f32.mrf.mxu0
        %6346 = vdwg.mxu0
        %v6347 = vxor.u32 %v6339, 2147483648
        %v6348 = vxor.u32 %v6344, 2147483648
        %v6349 = vmul.f32 %v6347, 1.442695
        %v6350 = vpow.pop %v6349
        %v6351 = vmul.f32 %v6348, 1.442695
        %v6352 = vpow.pop %v6351
        %v6353 = vadd.f32 %v6350, 1.0
        %v6354 = vadd.f32 %v6352, 1.0
        %v6355 = vrcp.pop %v6353
        %v6356 = vmul.f32 1.0, %v6355
        %v6357 = vrcp.pop %v6354
        %v6358 = vmul.f32 1.0, %v6357
        %v6359 = vtanh.pop %v6339
        %v6360 = vtanh.pop %v6344
        %v6361 = vmul.f32 %v6356, %v5265
        %v6362 = vmul.f32 %v6358, %v5266
        %6365 = vrot.lane.b32.xlu0 %v6359, 104
        %v6366 = vpop.permute.xlu0 %6365
        %6367 = vrot.lane.b32.xlu0 %v6360, 104
        %v6368 = vpop.permute.xlu0 %6367
        %v6371 = vmul.f32 %v6356, %v6366
        %v6372 = vmul.f32 %v6358, %v6368
        %6375 = vrot.lane.b32.xlu0 %v6371, 8
        %v6376 = vpop.permute.xlu0 %6375
        %6377 = vrot.lane.b32.xlu0 %v6372, 8
        %v6378 = vpop.permute.xlu0 %6377
        %v6381 = vadd.f32 %v6361, %v6376
        %v6382 = vadd.f32 %v6362, %v6378
        %v6383 = vtanh.pop %v6381
        %v6384 = vtanh.pop %v6382
        %6387 = vrot.lane.b32.xlu0 %v6383, 8
        %v6388 = vpop.permute.xlu0 %6387
        %6389 = vrot.lane.b32.xlu0 %v6384, 8
        %v6390 = vpop.permute.xlu0 %6389
        %v6393 = vmul.f32 %v6356, %v6388
        %v6394 = vmul.f32 %v6358, %v6390
        %v6397 = vcombine.high %v6393, %v6393
        %v6398 = vcombine.high %v6394, %v6394
        %6399 = vrot.lane.b32.xlu0 %v6393, 112
        %v6400 = vpop.permute.xlu0 %6399
        %6401 = vrot.lane.b32.xlu0 %v6397, 112
        %v6402 = vpop.permute.xlu0 %6401
        %6403 = vrot.lane.b32.xlu0 %v6394, 112
        %v6404 = vpop.permute.xlu0 %6403
        %6405 = vrot.lane.b32.xlu0 %v6398, 112
        %v6406 = vpop.permute.xlu0 %6405
        %6411 = vst.msk [vmem:[%s310 + $0x1] sm:$0xf] %vm822, %v6400
        %6412 = vst.msk [vmem:[%s310 + $0x9] sm:$0xf] %vm822, %v6402
        %6413 = vst.msk [vmem:[%s310 + $0x11] sm:$0xf] %vm822, %v6404
        %6414 = vst.msk [vmem:[%s310 + $0x19] sm:$0xf] %vm822, %v6406
        %v6415 = vld [vmem:[#allocation2] sm:$0xf]
        %v6416 = vld [vmem:[#allocation2 + $0x8] sm:$0xf]
        %v6417 = vld [vmem:[#allocation2 + $0x10] sm:$0xf]
        %v6418 = vld [vmem:[#allocation2 + $0x18] sm:$0xf]
        %v6419 = vld [vmem:[#allocation2 + $0x1] sm:$0xf]
        %v6420 = vld [vmem:[#allocation2 + $0x9] sm:$0xf]
        %v6421 = vld [vmem:[#allocation2 + $0x11] sm:$0xf]
        %v6422 = vld [vmem:[#allocation2 + $0x19] sm:$0xf]
        %v6423 = vld [vmem:[#allocation2 + $0x2] sm:$0xf]
        %v6424 = vld [vmem:[#allocation2 + $0xa] sm:$0xf]
        %v6425 = vld [vmem:[#allocation2 + $0x12] sm:$0xf]
        %v6426 = vld [vmem:[#allocation2 + $0x1a] sm:$0xf]
        %v6427 = vld [vmem:[%s310] sm:$0xf]
        %v6428 = vld [vmem:[%s310 + $0x8] sm:$0xf]
        %v6429 = vld [vmem:[%s310 + $0x10] sm:$0xf]
        %v6430 = vld [vmem:[%s310 + $0x18] sm:$0xf]
        %v6431 = vld [vmem:[%s310 + $0x1] sm:$0xf]
        %v6432 = vld [vmem:[%s310 + $0x9] sm:$0xf]
        %v6433 = vld [vmem:[%s310 + $0x11] sm:$0xf]
        %v6434 = vld [vmem:[%s310 + $0x19] sm:$0xf]
        %v6435 = vld [vmem:[%s310 + $0x2] sm:$0xf]
        %v6436 = vld [vmem:[%s310 + $0xa] sm:$0xf]
        %v6437 = vld [vmem:[%s310 + $0x12] sm:$0xf]
        %v6438 = vld [vmem:[%s310 + $0x1a] sm:$0xf]
        %v6439 = vld [vmem:[%s323] sm:$0xf]
        %v6440 = vld [vmem:[%s323 + $0x8] sm:$0xf]
        %v6441 = vld [vmem:[%s323 + $0x10] sm:$0xf]
        %v6442 = vld [vmem:[%s323 + $0x18] sm:$0xf]
        %v6443 = vld [vmem:[%s323 + $0x1] sm:$0xf]
        %v6444 = vld [vmem:[%s323 + $0x9] sm:$0xf]
        %v6445 = vld [vmem:[%s323 + $0x11] sm:$0xf]
        %v6446 = vld [vmem:[%s323 + $0x19] sm:$0xf]
        %v6447 = vld [vmem:[%s323 + $0x2] sm:$0xf]
        %v6448 = vld [vmem:[%s323 + $0xa] sm:$0xf]
        %v6449 = vld [vmem:[%s323 + $0x12] sm:$0xf]
        %v6450 = vld [vmem:[%s323 + $0x1a] sm:$0xf]
        %v6451 = vld [vmem:[#allocation3] sm:$0xf]
        %v6452 = vld [vmem:[#allocation3 + $0x8] sm:$0xf]
        %v6453 = vld [vmem:[#allocation3 + $0x10] sm:$0xf]
        %v6454 = vld [vmem:[#allocation3 + $0x18] sm:$0xf]
        %v6455 = vld [vmem:[#allocation3 + $0x1] sm:$0xf]
        %v6456 = vld [vmem:[#allocation3 + $0x9] sm:$0xf]
        %v6457 = vld [vmem:[#allocation3 + $0x11] sm:$0xf]
        %v6458 = vld [vmem:[#allocation3 + $0x19] sm:$0xf]
        %v6459 = vld [vmem:[#allocation3 + $0x2] sm:$0xf]
        %v6460 = vld [vmem:[#allocation3 + $0xa] sm:$0xf]
        %v6461 = vld [vmem:[#allocation3 + $0x12] sm:$0xf]
        %v6462 = vld [vmem:[#allocation3 + $0x1a] sm:$0xf]
        %v6463 = vld [vmem:[%s875] sm:$0xf]
        %v6464 = vld [vmem:[%s875 + $0x8] sm:$0xf]
        %v6465 = vld [vmem:[%s875 + $0x10] sm:$0xf]
        %v6466 = vld [vmem:[%s875 + $0x18] sm:$0xf]
        %v6467 = vld [vmem:[%s875 + $0x1] sm:$0xf]
        %v6468 = vld [vmem:[%s875 + $0x9] sm:$0xf]
        %v6469 = vld [vmem:[%s875 + $0x11] sm:$0xf]
        %v6470 = vld [vmem:[%s875 + $0x19] sm:$0xf]
        %v6471 = vld [vmem:[%s875 + $0x2] sm:$0xf]
        %v6472 = vld [vmem:[%s875 + $0xa] sm:$0xf]
        %v6473 = vld [vmem:[%s875 + $0x12] sm:$0xf]
        %v6474 = vld [vmem:[%s875 + $0x1a] sm:$0xf]
        %v6475 = vld [vmem:[%s888] sm:$0xf]
        %v6476 = vld [vmem:[%s888 + $0x8] sm:$0xf]
        %v6477 = vld [vmem:[%s888 + $0x10] sm:$0xf]
        %v6478 = vld [vmem:[%s888 + $0x18] sm:$0xf]
        %v6479 = vld [vmem:[%s888 + $0x1] sm:$0xf]
        %v6480 = vld [vmem:[%s888 + $0x9] sm:$0xf]
        %v6481 = vld [vmem:[%s888 + $0x11] sm:$0xf]
        %v6482 = vld [vmem:[%s888 + $0x19] sm:$0xf]
        %v6483 = vld [vmem:[%s888 + $0x2] sm:$0xf]
        %v6484 = vld [vmem:[%s888 + $0xa] sm:$0xf]
        %v6485 = vld [vmem:[%s888 + $0x12] sm:$0xf]
        %v6486 = vld [vmem:[%s888 + $0x1a] sm:$0xf]
        %6491 = vrot.lane.b32.xlu0 %v6419, 8
        %v6492 = vpop.permute.xlu0 %6491
        %6493 = vrot.lane.b32.xlu0 %v6420, 8
        %v6494 = vpop.permute.xlu0 %6493
        %6495 = vrot.lane.b32.xlu0 %v6421, 8
        %v6496 = vpop.permute.xlu0 %6495
        %6497 = vrot.lane.b32.xlu0 %v6422, 8
        %v6498 = vpop.permute.xlu0 %6497
        %6507 = vrot.lane.b32.xlu0 %v6423, 16
        %v6508 = vpop.permute.xlu0 %6507
        %6509 = vrot.lane.b32.xlu0 %v6424, 16
        %v6510 = vpop.permute.xlu0 %6509
        %6511 = vrot.lane.b32.xlu0 %v6425, 16
        %v6512 = vpop.permute.xlu0 %6511
        %6513 = vrot.lane.b32.xlu0 %v6426, 16
        %v6514 = vpop.permute.xlu0 %6513
        %6523 = vrot.lane.b32.xlu0 %v6427, 24
        %v6524 = vpop.permute.xlu0 %6523
        %6525 = vrot.lane.b32.xlu0 %v6428, 24
        %v6526 = vpop.permute.xlu0 %6525
        %6527 = vrot.lane.b32.xlu0 %v6429, 24
        %v6528 = vpop.permute.xlu0 %6527
        %6529 = vrot.lane.b32.xlu0 %v6430, 24
        %v6530 = vpop.permute.xlu0 %6529
        %6539 = vrot.lane.b32.xlu0 %v6431, 32
        %v6540 = vpop.permute.xlu0 %6539
        %6541 = vrot.lane.b32.xlu0 %v6432, 32
        %v6542 = vpop.permute.xlu0 %6541
        %6543 = vrot.lane.b32.xlu0 %v6433, 32
        %v6544 = vpop.permute.xlu0 %6543
        %6545 = vrot.lane.b32.xlu0 %v6434, 32
        %v6546 = vpop.permute.xlu0 %6545
        %6555 = vrot.lane.b32.xlu0 %v6435, 40
        %v6556 = vpop.permute.xlu0 %6555
        %6557 = vrot.lane.b32.xlu0 %v6436, 40
        %v6558 = vpop.permute.xlu0 %6557
        %6559 = vrot.lane.b32.xlu0 %v6437, 40
        %v6560 = vpop.permute.xlu0 %6559
        %6561 = vrot.lane.b32.xlu0 %v6438, 40
        %v6562 = vpop.permute.xlu0 %6561
        %6571 = vrot.lane.b32.xlu0 %v6439, 48
        %v6572 = vpop.permute.xlu0 %6571
        %6573 = vrot.lane.b32.xlu0 %v6440, 48
        %v6574 = vpop.permute.xlu0 %6573
        %6575 = vrot.lane.b32.xlu0 %v6441, 48
        %v6576 = vpop.permute.xlu0 %6575
        %6577 = vrot.lane.b32.xlu0 %v6442, 48
        %v6578 = vpop.permute.xlu0 %6577
        %6587 = vrot.lane.b32.xlu0 %v6443, 56
        %v6588 = vpop.permute.xlu0 %6587
        %6589 = vrot.lane.b32.xlu0 %v6444, 56
        %v6590 = vpop.permute.xlu0 %6589
        %6591 = vrot.lane.b32.xlu0 %v6445, 56
        %v6592 = vpop.permute.xlu0 %6591
        %6593 = vrot.lane.b32.xlu0 %v6446, 56
        %v6594 = vpop.permute.xlu0 %6593
        %6603 = vrot.lane.b32.xlu0 %v6447, 64
        %v6604 = vpop.permute.xlu0 %6603
        %6605 = vrot.lane.b32.xlu0 %v6448, 64
        %v6606 = vpop.permute.xlu0 %6605
        %6607 = vrot.lane.b32.xlu0 %v6449, 64
        %v6608 = vpop.permute.xlu0 %6607
        %6609 = vrot.lane.b32.xlu0 %v6450, 64
        %v6610 = vpop.permute.xlu0 %6609
        %6619 = vrot.lane.b32.xlu0 %v6451, 72
        %v6620 = vpop.permute.xlu0 %6619
        %6621 = vrot.lane.b32.xlu0 %v6452, 72
        %v6622 = vpop.permute.xlu0 %6621
        %6623 = vrot.lane.b32.xlu0 %v6453, 72
        %v6624 = vpop.permute.xlu0 %6623
        %6625 = vrot.lane.b32.xlu0 %v6454, 72
        %v6626 = vpop.permute.xlu0 %6625
        %6635 = vrot.lane.b32.xlu0 %v6455, 80
        %v6636 = vpop.permute.xlu0 %6635
        %6637 = vrot.lane.b32.xlu0 %v6456, 80
        %v6638 = vpop.permute.xlu0 %6637
        %6639 = vrot.lane.b32.xlu0 %v6457, 80
        %v6640 = vpop.permute.xlu0 %6639
        %6641 = vrot.lane.b32.xlu0 %v6458, 80
        %v6642 = vpop.permute.xlu0 %6641
        %6651 = vrot.lane.b32.xlu0 %v6459, 88
        %v6652 = vpop.permute.xlu0 %6651
        %6653 = vrot.lane.b32.xlu0 %v6460, 88
        %v6654 = vpop.permute.xlu0 %6653
        %6655 = vrot.lane.b32.xlu0 %v6461, 88
        %v6656 = vpop.permute.xlu0 %6655
        %6657 = vrot.lane.b32.xlu0 %v6462, 88
        %v6658 = vpop.permute.xlu0 %6657
        %6667 = vrot.lane.b32.xlu0 %v6463, 96
        %v6668 = vpop.permute.xlu0 %6667
        %6669 = vrot.lane.b32.xlu0 %v6464, 96
        %v6670 = vpop.permute.xlu0 %6669
        %6671 = vrot.lane.b32.xlu0 %v6465, 96
        %v6672 = vpop.permute.xlu0 %6671
        %6673 = vrot.lane.b32.xlu0 %v6466, 96
        %v6674 = vpop.permute.xlu0 %6673
        %6683 = vrot.lane.b32.xlu0 %v6467, 104
        %v6684 = vpop.permute.xlu0 %6683
        %6685 = vrot.lane.b32.xlu0 %v6468, 104
        %v6686 = vpop.permute.xlu0 %6685
        %6687 = vrot.lane.b32.xlu0 %v6469, 104
        %v6688 = vpop.permute.xlu0 %6687
        %6689 = vrot.lane.b32.xlu0 %v6470, 104
        %v6690 = vpop.permute.xlu0 %6689
        %6699 = vrot.lane.b32.xlu0 %v6471, 112
        %v6700 = vpop.permute.xlu0 %6699
        %6701 = vrot.lane.b32.xlu0 %v6472, 112
        %v6702 = vpop.permute.xlu0 %6701
        %6703 = vrot.lane.b32.xlu0 %v6473, 112
        %v6704 = vpop.permute.xlu0 %6703
        %6705 = vrot.lane.b32.xlu0 %v6474, 112
        %v6706 = vpop.permute.xlu0 %6705
        %6715 = vrot.lane.b32.xlu0 %v6475, 120
        %v6716 = vpop.permute.xlu0 %6715
        %6717 = vrot.lane.b32.xlu0 %v6476, 120
        %v6718 = vpop.permute.xlu0 %6717
        %6719 = vrot.lane.b32.xlu0 %v6477, 120
        %v6720 = vpop.permute.xlu0 %6719
        %6721 = vrot.lane.b32.xlu0 %v6478, 120
        %v6722 = vpop.permute.xlu0 %6721
        %v6727 = vsel %vm1141, %v6415, %v6492
        %v6728 = vsel %vm1141, %v6416, %v6494
        %v6729 = vsel %vm1141, %v6417, %v6496
        %v6730 = vsel %vm1141, %v6418, %v6498
        %v6731 = vsel %vm1146, %v6727, %v6508
        %v6732 = vsel %vm1146, %v6728, %v6510
        %v6733 = vsel %vm1146, %v6729, %v6512
        %v6734 = vsel %vm1146, %v6730, %v6514
        %v6735 = vsel %vm1151, %v6731, %v6524
        %v6736 = vsel %vm1151, %v6732, %v6526
        %v6737 = vsel %vm1151, %v6733, %v6528
        %v6738 = vsel %vm1151, %v6734, %v6530
        %v6739 = vsel %vm488, %v6735, %v6540
        %v6740 = vsel %vm488, %v6736, %v6542
        %v6741 = vsel %vm488, %v6737, %v6544
        %v6742 = vsel %vm488, %v6738, %v6546
        %v6743 = vsel %vm493, %v6739, %v6556
        %v6744 = vsel %vm493, %v6740, %v6558
        %v6745 = vsel %vm493, %v6741, %v6560
        %v6746 = vsel %vm493, %v6742, %v6562
        %v6747 = vsel %vm498, %v6743, %v6572
        %v6748 = vsel %vm498, %v6744, %v6574
        %v6749 = vsel %vm498, %v6745, %v6576
        %v6750 = vsel %vm498, %v6746, %v6578
        %v6751 = vsel %vm503, %v6747, %v6588
        %v6752 = vsel %vm503, %v6748, %v6590
        %v6753 = vsel %vm503, %v6749, %v6592
        %v6754 = vsel %vm503, %v6750, %v6594
        %v6755 = vsel %vm508, %v6751, %v6604
        %v6756 = vsel %vm508, %v6752, %v6606
        %v6757 = vsel %vm508, %v6753, %v6608
        %v6758 = vsel %vm508, %v6754, %v6610
        %v6759 = vsel %vm513, %v6755, %v6620
        %v6760 = vsel %vm513, %v6756, %v6622
        %v6761 = vsel %vm513, %v6757, %v6624
        %v6762 = vsel %vm513, %v6758, %v6626
        %v6763 = vsel %vm518, %v6759, %v6636
        %v6764 = vsel %vm518, %v6760, %v6638
        %v6765 = vsel %vm518, %v6761, %v6640
        %v6766 = vsel %vm518, %v6762, %v6642
        %v6767 = vsel %vm523, %v6763, %v6652
        %v6768 = vsel %vm523, %v6764, %v6654
        %v6769 = vsel %vm523, %v6765, %v6656
        %v6770 = vsel %vm523, %v6766, %v6658
        %v6771 = vsel %vm528, %v6767, %v6668
        %v6772 = vsel %vm528, %v6768, %v6670
        %v6773 = vsel %vm528, %v6769, %v6672
        %v6774 = vsel %vm528, %v6770, %v6674
        %v6775 = vsel %vm603, %v6771, %v6684
        %v6776 = vsel %vm603, %v6772, %v6686
        %v6777 = vsel %vm603, %v6773, %v6688
        %v6778 = vsel %vm603, %v6774, %v6690
        %v6779 = vsel %vm1196, %v6775, %v6700
        %v6780 = vsel %vm1196, %v6776, %v6702
        %v6781 = vsel %vm1196, %v6777, %v6704
        %v6782 = vsel %vm1196, %v6778, %v6706
        %v6783 = vsel %vm1201, %v6779, %v6716
        %v6784 = vsel %vm1201, %v6780, %v6718
        %v6785 = vsel %vm1201, %v6781, %v6720
        %v6786 = vsel %vm1201, %v6782, %v6722
        %6791 = vrot.lane.b32.xlu0 %v6483, 8
        %v6792 = vpop.permute.xlu0 %6791
        %6793 = vrot.lane.b32.xlu0 %v6484, 8
        %v6794 = vpop.permute.xlu0 %6793
        %6795 = vrot.lane.b32.xlu0 %v6485, 8
        %v6796 = vpop.permute.xlu0 %6795
        %6797 = vrot.lane.b32.xlu0 %v6486, 8
        %v6798 = vpop.permute.xlu0 %6797
        %v6803 = vsel %vm1141, %v6479, %v6792
        %v6804 = vsel %vm1141, %v6480, %v6794
        %v6805 = vsel %vm1141, %v6481, %v6796
        %v6806 = vsel %vm1141, %v6482, %v6798
        %v6815 = vcombine.low %v6783, %v6803
        %v6816 = vcombine.low %v6784, %v6804
        %v6817 = vcombine.low %v6785, %v6805
        %v6818 = vcombine.low %v6786, %v6806
        %v6819 = vld [vmem:[%s3] sm:$0xff]
        %v6820 = vld [vmem:[%s3 + $0x8] sm:$0xff]
        %v6821 = vld [vmem:[%s3 + $0x10] sm:$0xff]
        %v6822 = vld [vmem:[%s3 + $0x18] sm:$0xff]
        %v6823 = vld [vmem:[%s3 + $0x20] sm:$0xff]
        %v6824 = vld [vmem:[%s3 + $0x28] sm:$0xff]
        %v6825 = vld [vmem:[%s3 + $0x30] sm:$0xff]
        %v6826 = vld [vmem:[%s3 + $0x38] sm:$0xff]
        %v6827 = vld [vmem:[%s3 + $0x40] sm:$0xff]
        %v6828 = vld [vmem:[%s3 + $0x48] sm:$0xff]
        %v6829 = vld [vmem:[%s3 + $0x50] sm:$0xff]
        %v6830 = vld [vmem:[%s3 + $0x58] sm:$0xff]
        %v6831 = vld [vmem:[%s3 + $0x60] sm:$0xff]
        %v6832 = vld [vmem:[%s3 + $0x68] sm:$0xff]
        %v6833 = vld [vmem:[%s3 + $0x70] sm:$0xff]
        %v6834 = vld [vmem:[%s3 + $0x78] sm:$0xff]
        %v6835 = vld [vmem:[%s3 + $0x80] sm:$0xff]
        %v6836 = vld [vmem:[%s3 + $0x88] sm:$0xff]
        %v6837 = vld [vmem:[%s4] sm:$0x1]
        %v6839 = vlaneseq
        %v6840 = vshrl.u32 %v6839, 7
        %v6841 = vsub.s32 0, %v6840
        %v6842 = vrot.slane %v6837, %v6841
        %v6844 = vcombine.low %v6815, %v6816
        %v6845 = vcombine.high %v6815, %v6816
        %v6846 = vcombine.low %v6817, %v6818
        %v6847 = vcombine.high %v6817, %v6818
        %v6850 = vsel %vm1146, %v6845, 0
        %v6852 = vsel %vm1146, %v6847, 0
        %6854 = vmatprep.subr.mxu0 0.0
        %6855 = vmatpush1.msra.mxu0 %v6834
        %6856 = vmatprep.subr.mxu0 0.0
        %6857 = vmatpush1.msra.mxu0 %v6833
        %6858 = vmatprep.subr.mxu0 0.0
        %6859 = vmatpush1.msra.mxu0 %v6832
        %6860 = vmatprep.subr.mxu0 0.0
        %6861 = vmatpush1.msra.mxu0 %v6831
        %6862 = vmatprep.subr.mxu0 0.0
        %6863 = vmatpush1.msra.mxu0 %v6830
        %6864 = vmatprep.subr.mxu0 0.0
        %6865 = vmatpush1.msra.mxu0 %v6829
        %6866 = vmatprep.subr.mxu0 0.0
        %6867 = vmatpush1.msra.mxu0 %v6828
        %6868 = vmatprep.subr.mxu0 0.0
        %6869 = vmatpush1.msra.mxu0 %v6827
        %6870 = vmatprep.subr.mxu0 0.0
        %6871 = vmatpush1.msra.mxu0 %v6826
        %6872 = vmatprep.subr.mxu0 0.0
        %6873 = vmatpush1.msra.mxu0 %v6825
        %6874 = vmatprep.subr.mxu0 0.0
        %6875 = vmatpush1.msra.mxu0 %v6824
        %6876 = vmatprep.subr.mxu0 0.0
        %6877 = vmatpush1.msra.mxu0 %v6823
        %6878 = vmatprep.subr.mxu0 0.0
        %6879 = vmatpush1.msra.mxu0 %v6822
        %6880 = vmatprep.subr.mxu0 0.0
        %6881 = vmatpush1.msra.mxu0 %v6821
        %6882 = vmatprep.subr.mxu0 0.0
        %6883 = vmatpush1.msra.mxu0 %v6820
        %6884 = vmatprep.subr.mxu0 0.0
        %6885 = vmatpush1.msra.mxu0 %v6819
        %6886 = vmatprep.subr.mxu0 0.0
        %6887 = vmatpush2.msra.mxu0 0.0
        %6888 = vmatprep.subr.mxu0 0.0
        %6889 = vmatpush2.msra.mxu0 0.0
        %6890 = vmatprep.subr.mxu0 0.0
        %6891 = vmatpush2.msra.mxu0 0.0
        %6892 = vmatprep.subr.mxu0 0.0
        %6893 = vmatpush2.msra.mxu0 0.0
        %6894 = vmatprep.subr.mxu0 0.0
        %6895 = vmatpush2.msra.mxu0 0.0
        %6896 = vmatprep.subr.mxu0 0.0
        %6897 = vmatpush2.msra.mxu0 0.0
        %6898 = vmatprep.subr.mxu0 0.0
        %6899 = vmatpush2.msra.mxu0 0.0
        %6900 = vmatprep.subr.mxu0 0.0
        %6901 = vmatpush2.msra.mxu0 0.0
        %6902 = vmatprep.subr.mxu0 0.0
        %6903 = vmatpush2.msra.mxu0 0.0
        %6904 = vmatprep.subr.mxu0 0.0
        %6905 = vmatpush2.msra.mxu0 0.0
        %6906 = vmatprep.subr.mxu0 0.0
        %6907 = vmatpush2.msra.mxu0 0.0
        %6908 = vmatprep.subr.mxu0 0.0
        %6909 = vmatpush2.msra.mxu0 0.0
        %6910 = vmatprep.subr.mxu0 0.0
        %6911 = vmatpush2.msra.mxu0 0.0
        %6912 = vmatprep.subr.mxu0 0.0
        %6913 = vmatpush2.msra.mxu0 0.0
        %6914 = vmatprep.subr.mxu0 0.0
        %6915 = vmatpush2.msra.mxu0 %v6836
        %6916 = vmatprep.subr.mxu0 0.0
        %6917 = vmatpush2.msra.mxu0 %v6835
        %6918 = vmatprep.mubr.f32.mxu0 %v6850
        %6919 = vmatmul.mubr.f32.gmra.mxu0 %v6844
        %v6920 = vpop.f32.mrf.mxu0
        %v6921 = vadd.f32 %v6842, %v6920
        %v6922 = vpop.f32.mrf.mxu0
        %6923 = vmatprep.mubr.f32.mxu0 %v6852
        %6924 = vmatmul.mubr.f32.gmra.mxu0 %v6846
        %v6925 = vpop.f32.mrf.mxu0
        %v6926 = vadd.f32 %v6842, %v6925
        %v6927 = vpop.f32.mrf.mxu0
        %6928 = vdwg.mxu0
        %v6929 = vxor.u32 %v6921, 2147483648
        %v6930 = vxor.u32 %v6926, 2147483648
        %v6931 = vmul.f32 %v6929, 1.442695
        %v6932 = vpow.pop %v6931
        %v6933 = vmul.f32 %v6930, 1.442695
        %v6934 = vpow.pop %v6933
        %v6935 = vadd.f32 %v6932, 1.0
        %v6936 = vadd.f32 %v6934, 1.0
        %v6937 = vrcp.pop %v6935
        %v6938 = vmul.f32 1.0, %v6937
        %v6939 = vrcp.pop %v6936
        %v6940 = vmul.f32 1.0, %v6939
        %v6941 = vtanh.pop %v6921
        %v6942 = vtanh.pop %v6926
        %v6943 = vmul.f32 %v6938, %v5847
        %v6944 = vmul.f32 %v6940, %v5848
        %6947 = vrot.lane.b32.xlu0 %v6941, 104
        %v6948 = vpop.permute.xlu0 %6947
        %6949 = vrot.lane.b32.xlu0 %v6942, 104
        %v6950 = vpop.permute.xlu0 %6949
        %v6953 = vmul.f32 %v6938, %v6948
        %v6954 = vmul.f32 %v6940, %v6950
        %6957 = vrot.lane.b32.xlu0 %v6953, 8
        %v6958 = vpop.permute.xlu0 %6957
        %6959 = vrot.lane.b32.xlu0 %v6954, 8
        %v6960 = vpop.permute.xlu0 %6959
        %v6963 = vadd.f32 %v6943, %v6958
        %v6964 = vadd.f32 %v6944, %v6960
        %v6965 = vtanh.pop %v6963
        %v6966 = vtanh.pop %v6964
        %6969 = vrot.lane.b32.xlu0 %v6965, 8
        %v6970 = vpop.permute.xlu0 %6969
        %6971 = vrot.lane.b32.xlu0 %v6966, 8
        %v6972 = vpop.permute.xlu0 %6971
        %v6975 = vmul.f32 %v6938, %v6970
        %v6976 = vmul.f32 %v6940, %v6972
        %v6979 = vcombine.high %v6975, %v6975
        %v6980 = vcombine.high %v6976, %v6976
        %6981 = vrot.lane.b32.xlu0 %v6975, 112
        %v6982 = vpop.permute.xlu0 %6981
        %6983 = vrot.lane.b32.xlu0 %v6979, 112
        %v6984 = vpop.permute.xlu0 %6983
        %6985 = vrot.lane.b32.xlu0 %v6976, 112
        %v6986 = vpop.permute.xlu0 %6985
        %6987 = vrot.lane.b32.xlu0 %v6980, 112
        %v6988 = vpop.permute.xlu0 %6987
        %6993 = vst.msk [vmem:[%s875 + $0x1] sm:$0xf] %vm822, %v6982
        %6994 = vst.msk [vmem:[%s875 + $0x9] sm:$0xf] %vm822, %v6984
        %6995 = vst.msk [vmem:[%s875 + $0x11] sm:$0xf] %vm822, %v6986
        %6996 = vst.msk [vmem:[%s875 + $0x19] sm:$0xf] %vm822, %v6988
        %v6997 = vsel %vm1416, %v6975, 0.0
        %v6998 = vsel %vm1416, %v6976, 0.0
        %v6999 = vadd.f32 %v6997, %v6998
        %v7000 = vrot.slane %v6999, 4
        %v7001 = vadd.f32 %v6999, %v7000
        %v7002 = vrot.slane %v7001, 2
        %v7003 = vadd.f32 %v7001, %v7002
        %v7004 = vrot.slane %v7003, 1
        %v7005 = vadd.f32 %v7003, %v7004
        %s7006 = scalar_lea.vmem %s276, 288
        %v7007 = vld [vmem:[%s7006] sm:$0xff]
        %v7008 = vld [vmem:[%s7006 + $0x8] sm:$0xf]
        %v7009 = vld [vmem:[%s7006 + $0xc] sm:$0xff]
        %v7010 = vld [vmem:[%s7006 + $0x14] sm:$0xf]
        %v7011 = vld [vmem:[%s7006 + $0x18] sm:$0xff]
        %v7012 = vld [vmem:[%s7006 + $0x20] sm:$0xf]
        %v7013 = vld [vmem:[%s7006 + $0x24] sm:$0xff]
        %v7014 = vld [vmem:[%s7006 + $0x2c] sm:$0xf]
        %v7015 = vld [vmem:[#allocation2] sm:$0xf]
        %v7016 = vld [vmem:[#allocation2 + $0x8] sm:$0xf]
        %v7017 = vld [vmem:[#allocation2 + $0x10] sm:$0xf]
        %v7018 = vld [vmem:[#allocation2 + $0x18] sm:$0xf]
        %v7019 = vld [vmem:[#allocation2 + $0x1] sm:$0xf]
        %v7020 = vld [vmem:[#allocation2 + $0x9] sm:$0xf]
        %v7021 = vld [vmem:[#allocation2 + $0x11] sm:$0xf]
        %v7022 = vld [vmem:[#allocation2 + $0x19] sm:$0xf]
        %v7023 = vld [vmem:[#allocation2 + $0x2] sm:$0xf]
        %v7024 = vld [vmem:[#allocation2 + $0xa] sm:$0xf]
        %v7025 = vld [vmem:[#allocation2 + $0x12] sm:$0xf]
        %v7026 = vld [vmem:[#allocation2 + $0x1a] sm:$0xf]
        %v7027 = vld [vmem:[%s310] sm:$0xf]
        %v7028 = vld [vmem:[%s310 + $0x8] sm:$0xf]
        %v7029 = vld [vmem:[%s310 + $0x10] sm:$0xf]
        %v7030 = vld [vmem:[%s310 + $0x18] sm:$0xf]
        %v7031 = vld [vmem:[%s310 + $0x1] sm:$0xf]
        %v7032 = vld [vmem:[%s310 + $0x9] sm:$0xf]
        %v7033 = vld [vmem:[%s310 + $0x11] sm:$0xf]
        %v7034 = vld [vmem:[%s310 + $0x19] sm:$0xf]
        %v7035 = vld [vmem:[%s310 + $0x2] sm:$0xf]
        %v7036 = vld [vmem:[%s310 + $0xa] sm:$0xf]
        %v7037 = vld [vmem:[%s310 + $0x12] sm:$0xf]
        %v7038 = vld [vmem:[%s310 + $0x1a] sm:$0xf]
        %v7039 = vld [vmem:[%s323] sm:$0xf]
        %v7040 = vld [vmem:[%s323 + $0x8] sm:$0xf]
        %v7041 = vld [vmem:[%s323 + $0x10] sm:$0xf]
        %v7042 = vld [vmem:[%s323 + $0x18] sm:$0xf]
        %v7043 = vld [vmem:[%s323 + $0x1] sm:$0xf]
        %v7044 = vld [vmem:[%s323 + $0x9] sm:$0xf]
        %v7045 = vld [vmem:[%s323 + $0x11] sm:$0xf]
        %v7046 = vld [vmem:[%s323 + $0x19] sm:$0xf]
        %v7047 = vld [vmem:[%s323 + $0x2] sm:$0xf]
        %v7048 = vld [vmem:[%s323 + $0xa] sm:$0xf]
        %v7049 = vld [vmem:[%s323 + $0x12] sm:$0xf]
        %v7050 = vld [vmem:[%s323 + $0x1a] sm:$0xf]
        %v7055 = vcombine.high %v7007, %v7007
        %v7056 = vcombine.high %v7009, %v7009
        %v7057 = vcombine.high %v7011, %v7011
        %v7058 = vcombine.high %v7013, %v7013
        %7063 = vrot.lane.b32.xlu0 %v7015, 32
        %v7064 = vpop.permute.xlu0 %7063
        %7065 = vrot.lane.b32.xlu0 %v7016, 32
        %v7066 = vpop.permute.xlu0 %7065
        %7067 = vrot.lane.b32.xlu0 %v7017, 32
        %v7068 = vpop.permute.xlu0 %7067
        %7069 = vrot.lane.b32.xlu0 %v7018, 32
        %v7070 = vpop.permute.xlu0 %7069
        %7079 = vrot.lane.b32.xlu0 %v7019, 40
        %v7080 = vpop.permute.xlu0 %7079
        %7081 = vrot.lane.b32.xlu0 %v7020, 40
        %v7082 = vpop.permute.xlu0 %7081
        %7083 = vrot.lane.b32.xlu0 %v7021, 40
        %v7084 = vpop.permute.xlu0 %7083
        %7085 = vrot.lane.b32.xlu0 %v7022, 40
        %v7086 = vpop.permute.xlu0 %7085
        %7095 = vrot.lane.b32.xlu0 %v7023, 48
        %v7096 = vpop.permute.xlu0 %7095
        %7097 = vrot.lane.b32.xlu0 %v7024, 48
        %v7098 = vpop.permute.xlu0 %7097
        %7099 = vrot.lane.b32.xlu0 %v7025, 48
        %v7100 = vpop.permute.xlu0 %7099
        %7101 = vrot.lane.b32.xlu0 %v7026, 48
        %v7102 = vpop.permute.xlu0 %7101
        %7111 = vrot.lane.b32.xlu0 %v7027, 56
        %v7112 = vpop.permute.xlu0 %7111
        %7113 = vrot.lane.b32.xlu0 %v7028, 56
        %v7114 = vpop.permute.xlu0 %7113
        %7115 = vrot.lane.b32.xlu0 %v7029, 56
        %v7116 = vpop.permute.xlu0 %7115
        %7117 = vrot.lane.b32.xlu0 %v7030, 56
        %v7118 = vpop.permute.xlu0 %7117
        %7127 = vrot.lane.b32.xlu0 %v7031, 64
        %v7128 = vpop.permute.xlu0 %7127
        %7129 = vrot.lane.b32.xlu0 %v7032, 64
        %v7130 = vpop.permute.xlu0 %7129
        %7131 = vrot.lane.b32.xlu0 %v7033, 64
        %v7132 = vpop.permute.xlu0 %7131
        %7133 = vrot.lane.b32.xlu0 %v7034, 64
        %v7134 = vpop.permute.xlu0 %7133
        %7143 = vrot.lane.b32.xlu0 %v7035, 72
        %v7144 = vpop.permute.xlu0 %7143
        %7145 = vrot.lane.b32.xlu0 %v7036, 72
        %v7146 = vpop.permute.xlu0 %7145
        %7147 = vrot.lane.b32.xlu0 %v7037, 72
        %v7148 = vpop.permute.xlu0 %7147
        %7149 = vrot.lane.b32.xlu0 %v7038, 72
        %v7150 = vpop.permute.xlu0 %7149
        %7159 = vrot.lane.b32.xlu0 %v7039, 80
        %v7160 = vpop.permute.xlu0 %7159
        %7161 = vrot.lane.b32.xlu0 %v7040, 80
        %v7162 = vpop.permute.xlu0 %7161
        %7163 = vrot.lane.b32.xlu0 %v7041, 80
        %v7164 = vpop.permute.xlu0 %7163
        %7165 = vrot.lane.b32.xlu0 %v7042, 80
        %v7166 = vpop.permute.xlu0 %7165
        %7175 = vrot.lane.b32.xlu0 %v7043, 88
        %v7176 = vpop.permute.xlu0 %7175
        %7177 = vrot.lane.b32.xlu0 %v7044, 88
        %v7178 = vpop.permute.xlu0 %7177
        %7179 = vrot.lane.b32.xlu0 %v7045, 88
        %v7180 = vpop.permute.xlu0 %7179
        %7181 = vrot.lane.b32.xlu0 %v7046, 88
        %v7182 = vpop.permute.xlu0 %7181
        %7191 = vrot.lane.b32.xlu0 %v7047, 96
        %v7192 = vpop.permute.xlu0 %7191
        %7193 = vrot.lane.b32.xlu0 %v7048, 96
        %v7194 = vpop.permute.xlu0 %7193
        %7195 = vrot.lane.b32.xlu0 %v7049, 96
        %v7196 = vpop.permute.xlu0 %7195
        %7197 = vrot.lane.b32.xlu0 %v7050, 96
        %v7198 = vpop.permute.xlu0 %7197
        %v7203 = vsel %vm488, %v7008, %v7064
        %v7204 = vsel %vm488, %v7010, %v7066
        %v7205 = vsel %vm488, %v7012, %v7068
        %v7206 = vsel %vm488, %v7014, %v7070
        %v7207 = vsel %vm493, %v7203, %v7080
        %v7208 = vsel %vm493, %v7204, %v7082
        %v7209 = vsel %vm493, %v7205, %v7084
        %v7210 = vsel %vm493, %v7206, %v7086
        %v7211 = vsel %vm498, %v7207, %v7096
        %v7212 = vsel %vm498, %v7208, %v7098
        %v7213 = vsel %vm498, %v7209, %v7100
        %v7214 = vsel %vm498, %v7210, %v7102
        %v7215 = vsel %vm503, %v7211, %v7112
        %v7216 = vsel %vm503, %v7212, %v7114
        %v7217 = vsel %vm503, %v7213, %v7116
        %v7218 = vsel %vm503, %v7214, %v7118
        %v7219 = vsel %vm508, %v7215, %v7128
        %v7220 = vsel %vm508, %v7216, %v7130
        %v7221 = vsel %vm508, %v7217, %v7132
        %v7222 = vsel %vm508, %v7218, %v7134
        %v7223 = vsel %vm513, %v7219, %v7144
        %v7224 = vsel %vm513, %v7220, %v7146
        %v7225 = vsel %vm513, %v7221, %v7148
        %v7226 = vsel %vm513, %v7222, %v7150
        %v7227 = vsel %vm518, %v7223, %v7160
        %v7228 = vsel %vm518, %v7224, %v7162
        %v7229 = vsel %vm518, %v7225, %v7164
        %v7230 = vsel %vm518, %v7226, %v7166
        %v7231 = vsel %vm523, %v7227, %v7176
        %v7232 = vsel %vm523, %v7228, %v7178
        %v7233 = vsel %vm523, %v7229, %v7180
        %v7234 = vsel %vm523, %v7230, %v7182
        %v7235 = vsel %vm528, %v7231, %v7192
        %v7236 = vsel %vm528, %v7232, %v7194
        %v7237 = vsel %vm528, %v7233, %v7196
        %v7238 = vsel %vm528, %v7234, %v7198
        %v7243 = vcombine.low %v7007, %v7055
        %v7244 = vcombine.low %v7009, %v7056
        %v7245 = vcombine.low %v7011, %v7057
        %v7246 = vcombine.low %v7013, %v7058
        %v7247 = vld [vmem:[%s1] sm:$0xff]
        %v7248 = vld [vmem:[%s1 + $0x8] sm:$0xff]
        %v7249 = vld [vmem:[%s1 + $0x10] sm:$0xff]
        %v7250 = vld [vmem:[%s1 + $0x18] sm:$0xff]
        %v7251 = vld [vmem:[%s1 + $0x20] sm:$0xff]
        %v7252 = vld [vmem:[%s1 + $0x28] sm:$0xff]
        %v7253 = vld [vmem:[%s1 + $0x30] sm:$0xff]
        %v7254 = vld [vmem:[%s1 + $0x38] sm:$0xff]
        %v7255 = vld [vmem:[%s1 + $0x40] sm:$0xff]
        %v7256 = vld [vmem:[%s1 + $0x48] sm:$0xff]
        %v7257 = vld [vmem:[%s1 + $0x50] sm:$0xff]
        %v7258 = vld [vmem:[%s1 + $0x58] sm:$0xff]
        %v7259 = vld [vmem:[%s1 + $0x60] sm:$0xff]
        %v7260 = vld [vmem:[%s1 + $0x68] sm:$0xff]
        %v7261 = vld [vmem:[%s1 + $0x70] sm:$0xff]
        %v7262 = vld [vmem:[%s1 + $0x78] sm:$0xff]
        %v7263 = vld [vmem:[%s1 + $0x80] sm:$0xff]
        %v7264 = vld [vmem:[%s1 + $0x88] sm:$0xff]
        %v7265 = vld [vmem:[%s1 + $0x90] sm:$0xff]
        %v7266 = vld [vmem:[%s1 + $0x98] sm:$0xff]
        %v7267 = vld [vmem:[%s1 + $0xa0] sm:$0xff]
        %v7268 = vld [vmem:[%s1 + $0xa8] sm:$0xff]
        %v7269 = vld [vmem:[%s1 + $0xb0] sm:$0xff]
        %v7270 = vld [vmem:[%s1 + $0xb8] sm:$0xff]
        %v7271 = vld [vmem:[%s1 + $0xc0] sm:$0xff]
        %v7272 = vld [vmem:[%s1 + $0xc8] sm:$0xff]
        %v7273 = vld [vmem:[%s1 + $0xd0] sm:$0xff]
        %v7274 = vld [vmem:[%s1 + $0xd8] sm:$0xff]
        %v7275 = vld [vmem:[%s1 + $0xe0] sm:$0xff]
        %v7276 = vld [vmem:[%s1 + $0xe8] sm:$0xff]
        %v7277 = vld [vmem:[%s1 + $0xf0] sm:$0xff]
        %v7278 = vld [vmem:[%s1 + $0xf8] sm:$0xff]
        %v7279 = vld [vmem:[%s1 + $0x100] sm:$0xff]
        %v7280 = vld [vmem:[%s1 + $0x108] sm:$0xff]
        %v7281 = vld [vmem:[%s1 + $0x110] sm:$0xff]
        %v7282 = vld [vmem:[%s1 + $0x118] sm:$0xff]
        %v7283 = vld [vmem:[%s1 + $0x120] sm:$0xff]
        %v7284 = vld [vmem:[%s1 + $0x128] sm:$0xff]
        %v7285 = vld [vmem:[%s1 + $0x130] sm:$0xff]
        %v7286 = vld [vmem:[%s1 + $0x138] sm:$0xff]
        %v7287 = vld [vmem:[%s1 + $0x140] sm:$0xff]
        %v7288 = vld [vmem:[%s1 + $0x148] sm:$0xff]
        %v7289 = vld [vmem:[%s1 + $0x150] sm:$0xff]
        %v7290 = vld [vmem:[%s1 + $0x158] sm:$0xff]
        %v7291 = vld [vmem:[%s1 + $0x160] sm:$0xff]
        %v7292 = vld [vmem:[%s2] sm:$0x1]
        %v7294 = vlaneseq
        %v7295 = vshrl.u32 %v7294, 7
        %v7296 = vsub.s32 0, %v7295
        %v7297 = vrot.slane %v7292, %v7296
        %v7299 = vcombine.low %v7243, %v7244
        %v7300 = vcombine.high %v7243, %v7244
        %v7301 = vcombine.low %v7235, %v7236
        %v7302 = vcombine.low %v7245, %v7246
        %v7303 = vcombine.high %v7245, %v7246
        %v7304 = vcombine.low %v7237, %v7238
        %v7309 = vsel %vm603, %v7301, 0
        %v7311 = vsel %vm603, %v7304, 0
        %7313 = vmatprep.subr.mxu0 0.0
        %7314 = vmatpush1.msra.mxu0 %v7262
        %7315 = vmatprep.subr.mxu0 0.0
        %7316 = vmatpush1.msra.mxu0 %v7261
        %7317 = vmatprep.subr.mxu0 0.0
        %7318 = vmatpush1.msra.mxu0 %v7260
        %7319 = vmatprep.subr.mxu0 0.0
        %7320 = vmatpush1.msra.mxu0 %v7259
        %7321 = vmatprep.subr.mxu0 0.0
        %7322 = vmatpush1.msra.mxu0 %v7258
        %7323 = vmatprep.subr.mxu0 0.0
        %7324 = vmatpush1.msra.mxu0 %v7257
        %7325 = vmatprep.subr.mxu0 0.0
        %7326 = vmatpush1.msra.mxu0 %v7256
        %7327 = vmatprep.subr.mxu0 0.0
        %7328 = vmatpush1.msra.mxu0 %v7255
        %7329 = vmatprep.subr.mxu0 0.0
        %7330 = vmatpush1.msra.mxu0 %v7254
        %7331 = vmatprep.subr.mxu0 0.0
        %7332 = vmatpush1.msra.mxu0 %v7253
        %7333 = vmatprep.subr.mxu0 0.0
        %7334 = vmatpush1.msra.mxu0 %v7252
        %7335 = vmatprep.subr.mxu0 0.0
        %7336 = vmatpush1.msra.mxu0 %v7251
        %7337 = vmatprep.subr.mxu0 0.0
        %7338 = vmatpush1.msra.mxu0 %v7250
        %7339 = vmatprep.subr.mxu0 0.0
        %7340 = vmatpush1.msra.mxu0 %v7249
        %7341 = vmatprep.subr.mxu0 0.0
        %7342 = vmatpush1.msra.mxu0 %v7248
        %7343 = vmatprep.subr.mxu0 0.0
        %7344 = vmatpush1.msra.mxu0 %v7247
        %7345 = vmatprep.subr.mxu0 0.0
        %7346 = vmatpush2.msra.mxu0 %v7278
        %7347 = vmatprep.subr.mxu0 0.0
        %7348 = vmatpush2.msra.mxu0 %v7277
        %7349 = vmatprep.subr.mxu0 0.0
        %7350 = vmatpush2.msra.mxu0 %v7276
        %7351 = vmatprep.subr.mxu0 0.0
        %7352 = vmatpush2.msra.mxu0 %v7275
        %7353 = vmatprep.subr.mxu0 0.0
        %7354 = vmatpush2.msra.mxu0 %v7274
        %7355 = vmatprep.subr.mxu0 0.0
        %7356 = vmatpush2.msra.mxu0 %v7273
        %7357 = vmatprep.subr.mxu0 0.0
        %7358 = vmatpush2.msra.mxu0 %v7272
        %7359 = vmatprep.subr.mxu0 0.0
        %7360 = vmatpush2.msra.mxu0 %v7271
        %7361 = vmatprep.subr.mxu0 0.0
        %7362 = vmatpush2.msra.mxu0 %v7270
        %7363 = vmatprep.subr.mxu0 0.0
        %7364 = vmatpush2.msra.mxu0 %v7269
        %7365 = vmatprep.subr.mxu0 0.0
        %7366 = vmatpush2.msra.mxu0 %v7268
        %7367 = vmatprep.subr.mxu0 0.0
        %7368 = vmatpush2.msra.mxu0 %v7267
        %7369 = vmatprep.subr.mxu0 0.0
        %7370 = vmatpush2.msra.mxu0 %v7266
        %7371 = vmatprep.subr.mxu0 0.0
        %7372 = vmatpush2.msra.mxu0 %v7265
        %7373 = vmatprep.subr.mxu0 0.0
        %7374 = vmatpush2.msra.mxu0 %v7264
        %7375 = vmatprep.subr.mxu0 0.0
        %7376 = vmatpush2.msra.mxu0 %v7263
        %7377 = vmatprep.mubr.f32.mxu0 %v7300
        %7378 = vmatmul.mubr.f32.gmra.mxu0 %v7299
        %v7379 = vpop.f32.mrf.mxu0
        %v7380 = vadd.f32 %v7297, %v7379
        %v7381 = vpop.f32.mrf.mxu0
        %7382 = vmatprep.mubr.f32.mxu0 %v7303
        %7383 = vmatmul.mubr.f32.gmra.mxu0 %v7302
        %v7384 = vpop.f32.mrf.mxu0
        %v7385 = vadd.f32 %v7297, %v7384
        %v7386 = vpop.f32.mrf.mxu0
        %7387 = vdwg.mxu0
        %7388 = vmatprep.subr.mxu0 0.0
        %7389 = vmatpush1.msra.mxu0 0.0
        %7390 = vmatprep.subr.mxu0 0.0
        %7391 = vmatpush1.msra.mxu0 0.0
        %7392 = vmatprep.subr.mxu0 0.0
        %7393 = vmatpush1.msra.mxu0 0.0
        %7394 = vmatprep.subr.mxu0 0.0
        %7395 = vmatpush1.msra.mxu0 %v7291
        %7396 = vmatprep.subr.mxu0 0.0
        %7397 = vmatpush1.msra.mxu0 %v7290
        %7398 = vmatprep.subr.mxu0 0.0
        %7399 = vmatpush1.msra.mxu0 %v7289
        %7400 = vmatprep.subr.mxu0 0.0
        %7401 = vmatpush1.msra.mxu0 %v7288
        %7402 = vmatprep.subr.mxu0 0.0
        %7403 = vmatpush1.msra.mxu0 %v7287
        %7404 = vmatprep.subr.mxu0 0.0
        %7405 = vmatpush1.msra.mxu0 %v7286
        %7406 = vmatprep.subr.mxu0 0.0
        %7407 = vmatpush1.msra.mxu0 %v7285
        %7408 = vmatprep.subr.mxu0 0.0
        %7409 = vmatpush1.msra.mxu0 %v7284
        %7410 = vmatprep.subr.mxu0 0.0
        %7411 = vmatpush1.msra.mxu0 %v7283
        %7412 = vmatprep.subr.mxu0 0.0
        %7413 = vmatpush1.msra.mxu0 %v7282
        %7414 = vmatprep.subr.mxu0 0.0
        %7415 = vmatpush1.msra.mxu0 %v7281
        %7416 = vmatprep.subr.mxu0 0.0
        %7417 = vmatpush1.msra.mxu0 %v7280
        %7418 = vmatprep.subr.mxu0 0.0
        %7419 = vmatpush1.msra.mxu0 %v7279
        %7420 = vmatprep.subr.mxu0 0.0
        %7421 = vmatpush2.msra.mxu0 0.0
        %7422 = vmatprep.subr.mxu0 0.0
        %7423 = vmatpush2.msra.mxu0 0.0
        %7424 = vmatprep.subr.mxu0 0.0
        %7425 = vmatpush2.msra.mxu0 0.0
        %7426 = vmatprep.subr.mxu0 0.0
        %7427 = vmatpush2.msra.mxu0 0.0
        %7428 = vmatprep.subr.mxu0 0.0
        %7429 = vmatpush2.msra.mxu0 0.0
        %7430 = vmatprep.subr.mxu0 0.0
        %7431 = vmatpush2.msra.mxu0 0.0
        %7432 = vmatprep.subr.mxu0 0.0
        %7433 = vmatpush2.msra.mxu0 0.0
        %7434 = vmatprep.subr.mxu0 0.0
        %7435 = vmatpush2.msra.mxu0 0.0
        %7436 = vmatprep.subr.mxu0 0.0
        %7437 = vmatpush2.msra.mxu0 0.0
        %7438 = vmatprep.subr.mxu0 0.0
        %7439 = vmatpush2.msra.mxu0 0.0
        %7440 = vmatprep.subr.mxu0 0.0
        %7441 = vmatpush2.msra.mxu0 0.0
        %7442 = vmatprep.subr.mxu0 0.0
        %7443 = vmatpush2.msra.mxu0 0.0
        %7444 = vmatprep.subr.mxu0 0.0
        %7445 = vmatpush2.msra.mxu0 0.0
        %7446 = vmatprep.subr.mxu0 0.0
        %7447 = vmatpush2.msra.mxu0 0.0
        %7448 = vmatprep.subr.mxu0 0.0
        %7449 = vmatpush2.msra.mxu0 0.0
        %7450 = vmatprep.subr.mxu0 0.0
        %7451 = vmatpush2.msra.mxu0 0.0
        %7452 = vmatprep.mubr.f32.mxu0 0.0
        %7453 = vmatmul.mubr.f32.gmra.mxu0 %v7309
        %v7454 = vpop.f32.mrf.mxu0
        %v7455 = vadd.f32 %v7380, %v7454
        %v7456 = vpop.f32.mrf.mxu0
        %7457 = vmatprep.mubr.f32.mxu0 0.0
        %7458 = vmatmul.mubr.f32.gmra.mxu0 %v7311
        %v7459 = vpop.f32.mrf.mxu0
        %v7460 = vadd.f32 %v7385, %v7459
        %v7461 = vpop.f32.mrf.mxu0
        %7462 = vdwg.mxu0
        %v7463 = vxor.u32 %v7455, 2147483648
        %v7464 = vxor.u32 %v7460, 2147483648
        %v7465 = vmul.f32 %v7463, 1.442695
        %v7466 = vpow.pop %v7465
        %v7467 = vmul.f32 %v7464, 1.442695
        %v7468 = vpow.pop %v7467
        %v7469 = vadd.f32 %v7466, 1.0
        %v7470 = vadd.f32 %v7468, 1.0
        %v7471 = vrcp.pop %v7469
        %v7472 = vmul.f32 1.0, %v7471
        %v7473 = vrcp.pop %v7470
        %v7474 = vmul.f32 1.0, %v7473
        %v7475 = vtanh.pop %v7455
        %v7476 = vtanh.pop %v7460
        %v7477 = vmul.f32 %v7472, %v6381
        %v7478 = vmul.f32 %v7474, %v6382
        %7481 = vrot.lane.b32.xlu0 %v7475, 104
        %v7482 = vpop.permute.xlu0 %7481
        %7483 = vrot.lane.b32.xlu0 %v7476, 104
        %v7484 = vpop.permute.xlu0 %7483
        %v7487 = vmul.f32 %v7472, %v7482
        %v7488 = vmul.f32 %v7474, %v7484
        %7491 = vrot.lane.b32.xlu0 %v7487, 8
        %v7492 = vpop.permute.xlu0 %7491
        %7493 = vrot.lane.b32.xlu0 %v7488, 8
        %v7494 = vpop.permute.xlu0 %7493
        %v7497 = vadd.f32 %v7477, %v7492
        %v7498 = vadd.f32 %v7478, %v7494
        %v7499 = vtanh.pop %v7497
        %v7500 = vtanh.pop %v7498
        %7503 = vrot.lane.b32.xlu0 %v7499, 8
        %v7504 = vpop.permute.xlu0 %7503
        %7505 = vrot.lane.b32.xlu0 %v7500, 8
        %v7506 = vpop.permute.xlu0 %7505
        %v7509 = vmul.f32 %v7472, %v7504
        %v7510 = vmul.f32 %v7474, %v7506
        %v7513 = vcombine.high %v7509, %v7509
        %v7514 = vcombine.high %v7510, %v7510
        %7515 = vrot.lane.b32.xlu0 %v7509, 112
        %v7516 = vpop.permute.xlu0 %7515
        %7517 = vrot.lane.b32.xlu0 %v7513, 112
        %v7518 = vpop.permute.xlu0 %7517
        %7519 = vrot.lane.b32.xlu0 %v7510, 112
        %v7520 = vpop.permute.xlu0 %7519
        %7521 = vrot.lane.b32.xlu0 %v7514, 112
        %v7522 = vpop.permute.xlu0 %7521
        %7527 = vst.msk [vmem:[%s310 + $0x1] sm:$0xf] %vm822, %v7516
        %7528 = vst.msk [vmem:[%s310 + $0x9] sm:$0xf] %vm822, %v7518
        %7529 = vst.msk [vmem:[%s310 + $0x11] sm:$0xf] %vm822, %v7520
        %7530 = vst.msk [vmem:[%s310 + $0x19] sm:$0xf] %vm822, %v7522
        %v7531 = vld [vmem:[#allocation2] sm:$0xf]
        %v7532 = vld [vmem:[#allocation2 + $0x8] sm:$0xf]
        %v7533 = vld [vmem:[#allocation2 + $0x10] sm:$0xf]
        %v7534 = vld [vmem:[#allocation2 + $0x18] sm:$0xf]
        %v7535 = vld [vmem:[#allocation2 + $0x1] sm:$0xf]
        %v7536 = vld [vmem:[#allocation2 + $0x9] sm:$0xf]
        %v7537 = vld [vmem:[#allocation2 + $0x11] sm:$0xf]
        %v7538 = vld [vmem:[#allocation2 + $0x19] sm:$0xf]
        %v7539 = vld [vmem:[#allocation2 + $0x2] sm:$0xf]
        %v7540 = vld [vmem:[#allocation2 + $0xa] sm:$0xf]
        %v7541 = vld [vmem:[#allocation2 + $0x12] sm:$0xf]
        %v7542 = vld [vmem:[#allocation2 + $0x1a] sm:$0xf]
        %v7543 = vld [vmem:[%s310] sm:$0xf]
        %v7544 = vld [vmem:[%s310 + $0x8] sm:$0xf]
        %v7545 = vld [vmem:[%s310 + $0x10] sm:$0xf]
        %v7546 = vld [vmem:[%s310 + $0x18] sm:$0xf]
        %v7547 = vld [vmem:[%s310 + $0x1] sm:$0xf]
        %v7548 = vld [vmem:[%s310 + $0x9] sm:$0xf]
        %v7549 = vld [vmem:[%s310 + $0x11] sm:$0xf]
        %v7550 = vld [vmem:[%s310 + $0x19] sm:$0xf]
        %v7551 = vld [vmem:[%s310 + $0x2] sm:$0xf]
        %v7552 = vld [vmem:[%s310 + $0xa] sm:$0xf]
        %v7553 = vld [vmem:[%s310 + $0x12] sm:$0xf]
        %v7554 = vld [vmem:[%s310 + $0x1a] sm:$0xf]
        %v7555 = vld [vmem:[%s323] sm:$0xf]
        %v7556 = vld [vmem:[%s323 + $0x8] sm:$0xf]
        %v7557 = vld [vmem:[%s323 + $0x10] sm:$0xf]
        %v7558 = vld [vmem:[%s323 + $0x18] sm:$0xf]
        %v7559 = vld [vmem:[%s323 + $0x1] sm:$0xf]
        %v7560 = vld [vmem:[%s323 + $0x9] sm:$0xf]
        %v7561 = vld [vmem:[%s323 + $0x11] sm:$0xf]
        %v7562 = vld [vmem:[%s323 + $0x19] sm:$0xf]
        %v7563 = vld [vmem:[%s323 + $0x2] sm:$0xf]
        %v7564 = vld [vmem:[%s323 + $0xa] sm:$0xf]
        %v7565 = vld [vmem:[%s323 + $0x12] sm:$0xf]
        %v7566 = vld [vmem:[%s323 + $0x1a] sm:$0xf]
        %v7567 = vld [vmem:[#allocation3] sm:$0xf]
        %v7568 = vld [vmem:[#allocation3 + $0x8] sm:$0xf]
        %v7569 = vld [vmem:[#allocation3 + $0x10] sm:$0xf]
        %v7570 = vld [vmem:[#allocation3 + $0x18] sm:$0xf]
        %v7571 = vld [vmem:[#allocation3 + $0x1] sm:$0xf]
        %v7572 = vld [vmem:[#allocation3 + $0x9] sm:$0xf]
        %v7573 = vld [vmem:[#allocation3 + $0x11] sm:$0xf]
        %v7574 = vld [vmem:[#allocation3 + $0x19] sm:$0xf]
        %v7575 = vld [vmem:[#allocation3 + $0x2] sm:$0xf]
        %v7576 = vld [vmem:[#allocation3 + $0xa] sm:$0xf]
        %v7577 = vld [vmem:[#allocation3 + $0x12] sm:$0xf]
        %v7578 = vld [vmem:[#allocation3 + $0x1a] sm:$0xf]
        %v7579 = vld [vmem:[%s875] sm:$0xf]
        %v7580 = vld [vmem:[%s875 + $0x8] sm:$0xf]
        %v7581 = vld [vmem:[%s875 + $0x10] sm:$0xf]
        %v7582 = vld [vmem:[%s875 + $0x18] sm:$0xf]
        %v7583 = vld [vmem:[%s875 + $0x1] sm:$0xf]
        %v7584 = vld [vmem:[%s875 + $0x9] sm:$0xf]
        %v7585 = vld [vmem:[%s875 + $0x11] sm:$0xf]
        %v7586 = vld [vmem:[%s875 + $0x19] sm:$0xf]
        %v7587 = vld [vmem:[%s875 + $0x2] sm:$0xf]
        %v7588 = vld [vmem:[%s875 + $0xa] sm:$0xf]
        %v7589 = vld [vmem:[%s875 + $0x12] sm:$0xf]
        %v7590 = vld [vmem:[%s875 + $0x1a] sm:$0xf]
        %v7591 = vld [vmem:[%s888] sm:$0xf]
        %v7592 = vld [vmem:[%s888 + $0x8] sm:$0xf]
        %v7593 = vld [vmem:[%s888 + $0x10] sm:$0xf]
        %v7594 = vld [vmem:[%s888 + $0x18] sm:$0xf]
        %v7595 = vld [vmem:[%s888 + $0x1] sm:$0xf]
        %v7596 = vld [vmem:[%s888 + $0x9] sm:$0xf]
        %v7597 = vld [vmem:[%s888 + $0x11] sm:$0xf]
        %v7598 = vld [vmem:[%s888 + $0x19] sm:$0xf]
        %v7599 = vld [vmem:[%s888 + $0x2] sm:$0xf]
        %v7600 = vld [vmem:[%s888 + $0xa] sm:$0xf]
        %v7601 = vld [vmem:[%s888 + $0x12] sm:$0xf]
        %v7602 = vld [vmem:[%s888 + $0x1a] sm:$0xf]
        %7607 = vrot.lane.b32.xlu0 %v7535, 8
        %v7608 = vpop.permute.xlu0 %7607
        %7609 = vrot.lane.b32.xlu0 %v7536, 8
        %v7610 = vpop.permute.xlu0 %7609
        %7611 = vrot.lane.b32.xlu0 %v7537, 8
        %v7612 = vpop.permute.xlu0 %7611
        %7613 = vrot.lane.b32.xlu0 %v7538, 8
        %v7614 = vpop.permute.xlu0 %7613
        %7623 = vrot.lane.b32.xlu0 %v7539, 16
        %v7624 = vpop.permute.xlu0 %7623
        %7625 = vrot.lane.b32.xlu0 %v7540, 16
        %v7626 = vpop.permute.xlu0 %7625
        %7627 = vrot.lane.b32.xlu0 %v7541, 16
        %v7628 = vpop.permute.xlu0 %7627
        %7629 = vrot.lane.b32.xlu0 %v7542, 16
        %v7630 = vpop.permute.xlu0 %7629
        %7639 = vrot.lane.b32.xlu0 %v7543, 24
        %v7640 = vpop.permute.xlu0 %7639
        %7641 = vrot.lane.b32.xlu0 %v7544, 24
        %v7642 = vpop.permute.xlu0 %7641
        %7643 = vrot.lane.b32.xlu0 %v7545, 24
        %v7644 = vpop.permute.xlu0 %7643
        %7645 = vrot.lane.b32.xlu0 %v7546, 24
        %v7646 = vpop.permute.xlu0 %7645
        %7655 = vrot.lane.b32.xlu0 %v7547, 32
        %v7656 = vpop.permute.xlu0 %7655
        %7657 = vrot.lane.b32.xlu0 %v7548, 32
        %v7658 = vpop.permute.xlu0 %7657
        %7659 = vrot.lane.b32.xlu0 %v7549, 32
        %v7660 = vpop.permute.xlu0 %7659
        %7661 = vrot.lane.b32.xlu0 %v7550, 32
        %v7662 = vpop.permute.xlu0 %7661
        %7671 = vrot.lane.b32.xlu0 %v7551, 40
        %v7672 = vpop.permute.xlu0 %7671
        %7673 = vrot.lane.b32.xlu0 %v7552, 40
        %v7674 = vpop.permute.xlu0 %7673
        %7675 = vrot.lane.b32.xlu0 %v7553, 40
        %v7676 = vpop.permute.xlu0 %7675
        %7677 = vrot.lane.b32.xlu0 %v7554, 40
        %v7678 = vpop.permute.xlu0 %7677
        %7687 = vrot.lane.b32.xlu0 %v7555, 48
        %v7688 = vpop.permute.xlu0 %7687
        %7689 = vrot.lane.b32.xlu0 %v7556, 48
        %v7690 = vpop.permute.xlu0 %7689
        %7691 = vrot.lane.b32.xlu0 %v7557, 48
        %v7692 = vpop.permute.xlu0 %7691
        %7693 = vrot.lane.b32.xlu0 %v7558, 48
        %v7694 = vpop.permute.xlu0 %7693
        %7703 = vrot.lane.b32.xlu0 %v7559, 56
        %v7704 = vpop.permute.xlu0 %7703
        %7705 = vrot.lane.b32.xlu0 %v7560, 56
        %v7706 = vpop.permute.xlu0 %7705
        %7707 = vrot.lane.b32.xlu0 %v7561, 56
        %v7708 = vpop.permute.xlu0 %7707
        %7709 = vrot.lane.b32.xlu0 %v7562, 56
        %v7710 = vpop.permute.xlu0 %7709
        %7719 = vrot.lane.b32.xlu0 %v7563, 64
        %v7720 = vpop.permute.xlu0 %7719
        %7721 = vrot.lane.b32.xlu0 %v7564, 64
        %v7722 = vpop.permute.xlu0 %7721
        %7723 = vrot.lane.b32.xlu0 %v7565, 64
        %v7724 = vpop.permute.xlu0 %7723
        %7725 = vrot.lane.b32.xlu0 %v7566, 64
        %v7726 = vpop.permute.xlu0 %7725
        %7735 = vrot.lane.b32.xlu0 %v7567, 72
        %v7736 = vpop.permute.xlu0 %7735
        %7737 = vrot.lane.b32.xlu0 %v7568, 72
        %v7738 = vpop.permute.xlu0 %7737
        %7739 = vrot.lane.b32.xlu0 %v7569, 72
        %v7740 = vpop.permute.xlu0 %7739
        %7741 = vrot.lane.b32.xlu0 %v7570, 72
        %v7742 = vpop.permute.xlu0 %7741
        %7751 = vrot.lane.b32.xlu0 %v7571, 80
        %v7752 = vpop.permute.xlu0 %7751
        %7753 = vrot.lane.b32.xlu0 %v7572, 80
        %v7754 = vpop.permute.xlu0 %7753
        %7755 = vrot.lane.b32.xlu0 %v7573, 80
        %v7756 = vpop.permute.xlu0 %7755
        %7757 = vrot.lane.b32.xlu0 %v7574, 80
        %v7758 = vpop.permute.xlu0 %7757
        %7767 = vrot.lane.b32.xlu0 %v7575, 88
        %v7768 = vpop.permute.xlu0 %7767
        %7769 = vrot.lane.b32.xlu0 %v7576, 88
        %v7770 = vpop.permute.xlu0 %7769
        %7771 = vrot.lane.b32.xlu0 %v7577, 88
        %v7772 = vpop.permute.xlu0 %7771
        %7773 = vrot.lane.b32.xlu0 %v7578, 88
        %v7774 = vpop.permute.xlu0 %7773
        %7783 = vrot.lane.b32.xlu0 %v7579, 96
        %v7784 = vpop.permute.xlu0 %7783
        %7785 = vrot.lane.b32.xlu0 %v7580, 96
        %v7786 = vpop.permute.xlu0 %7785
        %7787 = vrot.lane.b32.xlu0 %v7581, 96
        %v7788 = vpop.permute.xlu0 %7787
        %7789 = vrot.lane.b32.xlu0 %v7582, 96
        %v7790 = vpop.permute.xlu0 %7789
        %7799 = vrot.lane.b32.xlu0 %v7583, 104
        %v7800 = vpop.permute.xlu0 %7799
        %7801 = vrot.lane.b32.xlu0 %v7584, 104
        %v7802 = vpop.permute.xlu0 %7801
        %7803 = vrot.lane.b32.xlu0 %v7585, 104
        %v7804 = vpop.permute.xlu0 %7803
        %7805 = vrot.lane.b32.xlu0 %v7586, 104
        %v7806 = vpop.permute.xlu0 %7805
        %7815 = vrot.lane.b32.xlu0 %v7587, 112
        %v7816 = vpop.permute.xlu0 %7815
        %7817 = vrot.lane.b32.xlu0 %v7588, 112
        %v7818 = vpop.permute.xlu0 %7817
        %7819 = vrot.lane.b32.xlu0 %v7589, 112
        %v7820 = vpop.permute.xlu0 %7819
        %7821 = vrot.lane.b32.xlu0 %v7590, 112
        %v7822 = vpop.permute.xlu0 %7821
        %7831 = vrot.lane.b32.xlu0 %v7591, 120
        %v7832 = vpop.permute.xlu0 %7831
        %7833 = vrot.lane.b32.xlu0 %v7592, 120
        %v7834 = vpop.permute.xlu0 %7833
        %7835 = vrot.lane.b32.xlu0 %v7593, 120
        %v7836 = vpop.permute.xlu0 %7835
        %7837 = vrot.lane.b32.xlu0 %v7594, 120
        %v7838 = vpop.permute.xlu0 %7837
        %v7843 = vsel %vm1141, %v7531, %v7608
        %v7844 = vsel %vm1141, %v7532, %v7610
        %v7845 = vsel %vm1141, %v7533, %v7612
        %v7846 = vsel %vm1141, %v7534, %v7614
        %v7847 = vsel %vm1146, %v7843, %v7624
        %v7848 = vsel %vm1146, %v7844, %v7626
        %v7849 = vsel %vm1146, %v7845, %v7628
        %v7850 = vsel %vm1146, %v7846, %v7630
        %v7851 = vsel %vm1151, %v7847, %v7640
        %v7852 = vsel %vm1151, %v7848, %v7642
        %v7853 = vsel %vm1151, %v7849, %v7644
        %v7854 = vsel %vm1151, %v7850, %v7646
        %v7855 = vsel %vm488, %v7851, %v7656
        %v7856 = vsel %vm488, %v7852, %v7658
        %v7857 = vsel %vm488, %v7853, %v7660
        %v7858 = vsel %vm488, %v7854, %v7662
        %v7859 = vsel %vm493, %v7855, %v7672
        %v7860 = vsel %vm493, %v7856, %v7674
        %v7861 = vsel %vm493, %v7857, %v7676
        %v7862 = vsel %vm493, %v7858, %v7678
        %v7863 = vsel %vm498, %v7859, %v7688
        %v7864 = vsel %vm498, %v7860, %v7690
        %v7865 = vsel %vm498, %v7861, %v7692
        %v7866 = vsel %vm498, %v7862, %v7694
        %v7867 = vsel %vm503, %v7863, %v7704
        %v7868 = vsel %vm503, %v7864, %v7706
        %v7869 = vsel %vm503, %v7865, %v7708
        %v7870 = vsel %vm503, %v7866, %v7710
        %v7871 = vsel %vm508, %v7867, %v7720
        %v7872 = vsel %vm508, %v7868, %v7722
        %v7873 = vsel %vm508, %v7869, %v7724
        %v7874 = vsel %vm508, %v7870, %v7726
        %v7875 = vsel %vm513, %v7871, %v7736
        %v7876 = vsel %vm513, %v7872, %v7738
        %v7877 = vsel %vm513, %v7873, %v7740
        %v7878 = vsel %vm513, %v7874, %v7742
        %v7879 = vsel %vm518, %v7875, %v7752
        %v7880 = vsel %vm518, %v7876, %v7754
        %v7881 = vsel %vm518, %v7877, %v7756
        %v7882 = vsel %vm518, %v7878, %v7758
        %v7883 = vsel %vm523, %v7879, %v7768
        %v7884 = vsel %vm523, %v7880, %v7770
        %v7885 = vsel %vm523, %v7881, %v7772
        %v7886 = vsel %vm523, %v7882, %v7774
        %v7887 = vsel %vm528, %v7883, %v7784
        %v7888 = vsel %vm528, %v7884, %v7786
        %v7889 = vsel %vm528, %v7885, %v7788
        %v7890 = vsel %vm528, %v7886, %v7790
        %v7891 = vsel %vm603, %v7887, %v7800
        %v7892 = vsel %vm603, %v7888, %v7802
        %v7893 = vsel %vm603, %v7889, %v7804
        %v7894 = vsel %vm603, %v7890, %v7806
        %v7895 = vsel %vm1196, %v7891, %v7816
        %v7896 = vsel %vm1196, %v7892, %v7818
        %v7897 = vsel %vm1196, %v7893, %v7820
        %v7898 = vsel %vm1196, %v7894, %v7822
        %v7899 = vsel %vm1201, %v7895, %v7832
        %v7900 = vsel %vm1201, %v7896, %v7834
        %v7901 = vsel %vm1201, %v7897, %v7836
        %v7902 = vsel %vm1201, %v7898, %v7838
        %7907 = vrot.lane.b32.xlu0 %v7599, 8
        %v7908 = vpop.permute.xlu0 %7907
        %7909 = vrot.lane.b32.xlu0 %v7600, 8
        %v7910 = vpop.permute.xlu0 %7909
        %7911 = vrot.lane.b32.xlu0 %v7601, 8
        %v7912 = vpop.permute.xlu0 %7911
        %7913 = vrot.lane.b32.xlu0 %v7602, 8
        %v7914 = vpop.permute.xlu0 %7913
        %v7919 = vsel %vm1141, %v7595, %v7908
        %v7920 = vsel %vm1141, %v7596, %v7910
        %v7921 = vsel %vm1141, %v7597, %v7912
        %v7922 = vsel %vm1141, %v7598, %v7914
        %v7931 = vcombine.low %v7899, %v7919
        %v7932 = vcombine.low %v7900, %v7920
        %v7933 = vcombine.low %v7901, %v7921
        %v7934 = vcombine.low %v7902, %v7922
        %v7935 = vld [vmem:[%s3] sm:$0xff]
        %v7936 = vld [vmem:[%s3 + $0x8] sm:$0xff]
        %v7937 = vld [vmem:[%s3 + $0x10] sm:$0xff]
        %v7938 = vld [vmem:[%s3 + $0x18] sm:$0xff]
        %v7939 = vld [vmem:[%s3 + $0x20] sm:$0xff]
        %v7940 = vld [vmem:[%s3 + $0x28] sm:$0xff]
        %v7941 = vld [vmem:[%s3 + $0x30] sm:$0xff]
        %v7942 = vld [vmem:[%s3 + $0x38] sm:$0xff]
        %v7943 = vld [vmem:[%s3 + $0x40] sm:$0xff]
        %v7944 = vld [vmem:[%s3 + $0x48] sm:$0xff]
        %v7945 = vld [vmem:[%s3 + $0x50] sm:$0xff]
        %v7946 = vld [vmem:[%s3 + $0x58] sm:$0xff]
        %v7947 = vld [vmem:[%s3 + $0x60] sm:$0xff]
        %v7948 = vld [vmem:[%s3 + $0x68] sm:$0xff]
        %v7949 = vld [vmem:[%s3 + $0x70] sm:$0xff]
        %v7950 = vld [vmem:[%s3 + $0x78] sm:$0xff]
        %v7951 = vld [vmem:[%s3 + $0x80] sm:$0xff]
        %v7952 = vld [vmem:[%s3 + $0x88] sm:$0xff]
        %v7953 = vld [vmem:[%s4] sm:$0x1]
        %v7955 = vlaneseq
        %v7956 = vshrl.u32 %v7955, 7
        %v7957 = vsub.s32 0, %v7956
        %v7958 = vrot.slane %v7953, %v7957
        %v7960 = vcombine.low %v7931, %v7932
        %v7961 = vcombine.high %v7931, %v7932
        %v7962 = vcombine.low %v7933, %v7934
        %v7963 = vcombine.high %v7933, %v7934
        %v7966 = vsel %vm1146, %v7961, 0
        %v7968 = vsel %vm1146, %v7963, 0
        %7970 = vmatprep.subr.mxu0 0.0
        %7971 = vmatpush1.msra.mxu0 %v7950
        %7972 = vmatprep.subr.mxu0 0.0
        %7973 = vmatpush1.msra.mxu0 %v7949
        %7974 = vmatprep.subr.mxu0 0.0
        %7975 = vmatpush1.msra.mxu0 %v7948
        %7976 = vmatprep.subr.mxu0 0.0
        %7977 = vmatpush1.msra.mxu0 %v7947
        %7978 = vmatprep.subr.mxu0 0.0
        %7979 = vmatpush1.msra.mxu0 %v7946
        %7980 = vmatprep.subr.mxu0 0.0
        %7981 = vmatpush1.msra.mxu0 %v7945
        %7982 = vmatprep.subr.mxu0 0.0
        %7983 = vmatpush1.msra.mxu0 %v7944
        %7984 = vmatprep.subr.mxu0 0.0
        %7985 = vmatpush1.msra.mxu0 %v7943
        %7986 = vmatprep.subr.mxu0 0.0
        %7987 = vmatpush1.msra.mxu0 %v7942
        %7988 = vmatprep.subr.mxu0 0.0
        %7989 = vmatpush1.msra.mxu0 %v7941
        %7990 = vmatprep.subr.mxu0 0.0
        %7991 = vmatpush1.msra.mxu0 %v7940
        %7992 = vmatprep.subr.mxu0 0.0
        %7993 = vmatpush1.msra.mxu0 %v7939
        %7994 = vmatprep.subr.mxu0 0.0
        %7995 = vmatpush1.msra.mxu0 %v7938
        %7996 = vmatprep.subr.mxu0 0.0
        %7997 = vmatpush1.msra.mxu0 %v7937
        %7998 = vmatprep.subr.mxu0 0.0
        %7999 = vmatpush1.msra.mxu0 %v7936
        %8000 = vmatprep.subr.mxu0 0.0
        %8001 = vmatpush1.msra.mxu0 %v7935
        %8002 = vmatprep.subr.mxu0 0.0
        %8003 = vmatpush2.msra.mxu0 0.0
        %8004 = vmatprep.subr.mxu0 0.0
        %8005 = vmatpush2.msra.mxu0 0.0
        %8006 = vmatprep.subr.mxu0 0.0
        %8007 = vmatpush2.msra.mxu0 0.0
        %8008 = vmatprep.subr.mxu0 0.0
        %8009 = vmatpush2.msra.mxu0 0.0
        %8010 = vmatprep.subr.mxu0 0.0
        %8011 = vmatpush2.msra.mxu0 0.0
        %8012 = vmatprep.subr.mxu0 0.0
        %8013 = vmatpush2.msra.mxu0 0.0
        %8014 = vmatprep.subr.mxu0 0.0
        %8015 = vmatpush2.msra.mxu0 0.0
        %8016 = vmatprep.subr.mxu0 0.0
        %8017 = vmatpush2.msra.mxu0 0.0
        %8018 = vmatprep.subr.mxu0 0.0
        %8019 = vmatpush2.msra.mxu0 0.0
        %8020 = vmatprep.subr.mxu0 0.0
        %8021 = vmatpush2.msra.mxu0 0.0
        %8022 = vmatprep.subr.mxu0 0.0
        %8023 = vmatpush2.msra.mxu0 0.0
        %8024 = vmatprep.subr.mxu0 0.0
        %8025 = vmatpush2.msra.mxu0 0.0
        %8026 = vmatprep.subr.mxu0 0.0
        %8027 = vmatpush2.msra.mxu0 0.0
        %8028 = vmatprep.subr.mxu0 0.0
        %8029 = vmatpush2.msra.mxu0 0.0
        %8030 = vmatprep.subr.mxu0 0.0
        %8031 = vmatpush2.msra.mxu0 %v7952
        %8032 = vmatprep.subr.mxu0 0.0
        %8033 = vmatpush2.msra.mxu0 %v7951
        %8034 = vmatprep.mubr.f32.mxu0 %v7966
        %8035 = vmatmul.mubr.f32.gmra.mxu0 %v7960
        %v8036 = vpop.f32.mrf.mxu0
        %v8037 = vadd.f32 %v7958, %v8036
        %v8038 = vpop.f32.mrf.mxu0
        %8039 = vmatprep.mubr.f32.mxu0 %v7968
        %8040 = vmatmul.mubr.f32.gmra.mxu0 %v7962
        %v8041 = vpop.f32.mrf.mxu0
        %v8042 = vadd.f32 %v7958, %v8041
        %v8043 = vpop.f32.mrf.mxu0
        %8044 = vdwg.mxu0
        %v8045 = vxor.u32 %v8037, 2147483648
        %v8046 = vxor.u32 %v8042, 2147483648
        %v8047 = vmul.f32 %v8045, 1.442695
        %v8048 = vpow.pop %v8047
        %v8049 = vmul.f32 %v8046, 1.442695
        %v8050 = vpow.pop %v8049
        %v8051 = vadd.f32 %v8048, 1.0
        %v8052 = vadd.f32 %v8050, 1.0
        %v8053 = vrcp.pop %v8051
        %v8054 = vmul.f32 1.0, %v8053
        %v8055 = vrcp.pop %v8052
        %v8056 = vmul.f32 1.0, %v8055
        %v8057 = vtanh.pop %v8037
        %v8058 = vtanh.pop %v8042
        %v8059 = vmul.f32 %v8054, %v6963
        %v8060 = vmul.f32 %v8056, %v6964
        %8063 = vrot.lane.b32.xlu0 %v8057, 104
        %v8064 = vpop.permute.xlu0 %8063
        %8065 = vrot.lane.b32.xlu0 %v8058, 104
        %v8066 = vpop.permute.xlu0 %8065
        %v8069 = vmul.f32 %v8054, %v8064
        %v8070 = vmul.f32 %v8056, %v8066
        %8073 = vrot.lane.b32.xlu0 %v8069, 8
        %v8074 = vpop.permute.xlu0 %8073
        %8075 = vrot.lane.b32.xlu0 %v8070, 8
        %v8076 = vpop.permute.xlu0 %8075
        %v8079 = vadd.f32 %v8059, %v8074
        %v8080 = vadd.f32 %v8060, %v8076
        %v8081 = vtanh.pop %v8079
        %v8082 = vtanh.pop %v8080
        %8085 = vrot.lane.b32.xlu0 %v8081, 8
        %v8086 = vpop.permute.xlu0 %8085
        %8087 = vrot.lane.b32.xlu0 %v8082, 8
        %v8088 = vpop.permute.xlu0 %8087
        %v8091 = vmul.f32 %v8054, %v8086
        %v8092 = vmul.f32 %v8056, %v8088
        %v8095 = vcombine.high %v8091, %v8091
        %v8096 = vcombine.high %v8092, %v8092
        %8097 = vrot.lane.b32.xlu0 %v8091, 112
        %v8098 = vpop.permute.xlu0 %8097
        %8099 = vrot.lane.b32.xlu0 %v8095, 112
        %v8100 = vpop.permute.xlu0 %8099
        %8101 = vrot.lane.b32.xlu0 %v8092, 112
        %v8102 = vpop.permute.xlu0 %8101
        %8103 = vrot.lane.b32.xlu0 %v8096, 112
        %v8104 = vpop.permute.xlu0 %8103
        %8109 = vst.msk [vmem:[%s875 + $0x1] sm:$0xf] %vm822, %v8098
        %8110 = vst.msk [vmem:[%s875 + $0x9] sm:$0xf] %vm822, %v8100
        %8111 = vst.msk [vmem:[%s875 + $0x11] sm:$0xf] %vm822, %v8102
        %8112 = vst.msk [vmem:[%s875 + $0x19] sm:$0xf] %vm822, %v8104
        %v8113 = vsel %vm1416, %v8091, 0.0
        %v8114 = vsel %vm1416, %v8092, 0.0
        %v8115 = vadd.f32 %v8113, %v8114
        %v8116 = vrot.slane %v8115, 4
        %v8117 = vadd.f32 %v8115, %v8116
        %v8118 = vrot.slane %v8117, 2
        %v8119 = vadd.f32 %v8117, %v8118
        %v8120 = vrot.slane %v8119, 1
        %v8121 = vadd.f32 %v8119, %v8120
        %s8122 = scalar_lea.vmem %s276, 336
        %v8123 = vld [vmem:[%s8122] sm:$0xff]
        %v8124 = vld [vmem:[%s8122 + $0x8] sm:$0xf]
        %v8125 = vld [vmem:[%s8122 + $0xc] sm:$0xff]
        %v8126 = vld [vmem:[%s8122 + $0x14] sm:$0xf]
        %v8127 = vld [vmem:[%s8122 + $0x18] sm:$0xff]
        %v8128 = vld [vmem:[%s8122 + $0x20] sm:$0xf]
        %v8129 = vld [vmem:[%s8122 + $0x24] sm:$0xff]
        %v8130 = vld [vmem:[%s8122 + $0x2c] sm:$0xf]
        %v8131 = vld [vmem:[#allocation2] sm:$0xf]
        %v8132 = vld [vmem:[#allocation2 + $0x8] sm:$0xf]
        %v8133 = vld [vmem:[#allocation2 + $0x10] sm:$0xf]
        %v8134 = vld [vmem:[#allocation2 + $0x18] sm:$0xf]
        %v8135 = vld [vmem:[#allocation2 + $0x1] sm:$0xf]
        %v8136 = vld [vmem:[#allocation2 + $0x9] sm:$0xf]
        %v8137 = vld [vmem:[#allocation2 + $0x11] sm:$0xf]
        %v8138 = vld [vmem:[#allocation2 + $0x19] sm:$0xf]
        %v8139 = vld [vmem:[#allocation2 + $0x2] sm:$0xf]
        %v8140 = vld [vmem:[#allocation2 + $0xa] sm:$0xf]
        %v8141 = vld [vmem:[#allocation2 + $0x12] sm:$0xf]
        %v8142 = vld [vmem:[#allocation2 + $0x1a] sm:$0xf]
        %v8143 = vld [vmem:[%s310] sm:$0xf]
        %v8144 = vld [vmem:[%s310 + $0x8] sm:$0xf]
        %v8145 = vld [vmem:[%s310 + $0x10] sm:$0xf]
        %v8146 = vld [vmem:[%s310 + $0x18] sm:$0xf]
        %v8147 = vld [vmem:[%s310 + $0x1] sm:$0xf]
        %v8148 = vld [vmem:[%s310 + $0x9] sm:$0xf]
        %v8149 = vld [vmem:[%s310 + $0x11] sm:$0xf]
        %v8150 = vld [vmem:[%s310 + $0x19] sm:$0xf]
        %v8151 = vld [vmem:[%s310 + $0x2] sm:$0xf]
        %v8152 = vld [vmem:[%s310 + $0xa] sm:$0xf]
        %v8153 = vld [vmem:[%s310 + $0x12] sm:$0xf]
        %v8154 = vld [vmem:[%s310 + $0x1a] sm:$0xf]
        %v8155 = vld [vmem:[%s323] sm:$0xf]
        %v8156 = vld [vmem:[%s323 + $0x8] sm:$0xf]
        %v8157 = vld [vmem:[%s323 + $0x10] sm:$0xf]
        %v8158 = vld [vmem:[%s323 + $0x18] sm:$0xf]
        %v8159 = vld [vmem:[%s323 + $0x1] sm:$0xf]
        %v8160 = vld [vmem:[%s323 + $0x9] sm:$0xf]
        %v8161 = vld [vmem:[%s323 + $0x11] sm:$0xf]
        %v8162 = vld [vmem:[%s323 + $0x19] sm:$0xf]
        %v8163 = vld [vmem:[%s323 + $0x2] sm:$0xf]
        %v8164 = vld [vmem:[%s323 + $0xa] sm:$0xf]
        %v8165 = vld [vmem:[%s323 + $0x12] sm:$0xf]
        %v8166 = vld [vmem:[%s323 + $0x1a] sm:$0xf]
        %v8171 = vcombine.high %v8123, %v8123
        %v8172 = vcombine.high %v8125, %v8125
        %v8173 = vcombine.high %v8127, %v8127
        %v8174 = vcombine.high %v8129, %v8129
        %8179 = vrot.lane.b32.xlu0 %v8131, 32
        %v8180 = vpop.permute.xlu0 %8179
        %8181 = vrot.lane.b32.xlu0 %v8132, 32
        %v8182 = vpop.permute.xlu0 %8181
        %8183 = vrot.lane.b32.xlu0 %v8133, 32
        %v8184 = vpop.permute.xlu0 %8183
        %8185 = vrot.lane.b32.xlu0 %v8134, 32
        %v8186 = vpop.permute.xlu0 %8185
        %8195 = vrot.lane.b32.xlu0 %v8135, 40
        %v8196 = vpop.permute.xlu0 %8195
        %8197 = vrot.lane.b32.xlu0 %v8136, 40
        %v8198 = vpop.permute.xlu0 %8197
        %8199 = vrot.lane.b32.xlu0 %v8137, 40
        %v8200 = vpop.permute.xlu0 %8199
        %8201 = vrot.lane.b32.xlu0 %v8138, 40
        %v8202 = vpop.permute.xlu0 %8201
        %8211 = vrot.lane.b32.xlu0 %v8139, 48
        %v8212 = vpop.permute.xlu0 %8211
        %8213 = vrot.lane.b32.xlu0 %v8140, 48
        %v8214 = vpop.permute.xlu0 %8213
        %8215 = vrot.lane.b32.xlu0 %v8141, 48
        %v8216 = vpop.permute.xlu0 %8215
        %8217 = vrot.lane.b32.xlu0 %v8142, 48
        %v8218 = vpop.permute.xlu0 %8217
        %8227 = vrot.lane.b32.xlu0 %v8143, 56
        %v8228 = vpop.permute.xlu0 %8227
        %8229 = vrot.lane.b32.xlu0 %v8144, 56
        %v8230 = vpop.permute.xlu0 %8229
        %8231 = vrot.lane.b32.xlu0 %v8145, 56
        %v8232 = vpop.permute.xlu0 %8231
        %8233 = vrot.lane.b32.xlu0 %v8146, 56
        %v8234 = vpop.permute.xlu0 %8233
        %8243 = vrot.lane.b32.xlu0 %v8147, 64
        %v8244 = vpop.permute.xlu0 %8243
        %8245 = vrot.lane.b32.xlu0 %v8148, 64
        %v8246 = vpop.permute.xlu0 %8245
        %8247 = vrot.lane.b32.xlu0 %v8149, 64
        %v8248 = vpop.permute.xlu0 %8247
        %8249 = vrot.lane.b32.xlu0 %v8150, 64
        %v8250 = vpop.permute.xlu0 %8249
        %8259 = vrot.lane.b32.xlu0 %v8151, 72
        %v8260 = vpop.permute.xlu0 %8259
        %8261 = vrot.lane.b32.xlu0 %v8152, 72
        %v8262 = vpop.permute.xlu0 %8261
        %8263 = vrot.lane.b32.xlu0 %v8153, 72
        %v8264 = vpop.permute.xlu0 %8263
        %8265 = vrot.lane.b32.xlu0 %v8154, 72
        %v8266 = vpop.permute.xlu0 %8265
        %8275 = vrot.lane.b32.xlu0 %v8155, 80
        %v8276 = vpop.permute.xlu0 %8275
        %8277 = vrot.lane.b32.xlu0 %v8156, 80
        %v8278 = vpop.permute.xlu0 %8277
        %8279 = vrot.lane.b32.xlu0 %v8157, 80
        %v8280 = vpop.permute.xlu0 %8279
        %8281 = vrot.lane.b32.xlu0 %v8158, 80
        %v8282 = vpop.permute.xlu0 %8281
        %8291 = vrot.lane.b32.xlu0 %v8159, 88
        %v8292 = vpop.permute.xlu0 %8291
        %8293 = vrot.lane.b32.xlu0 %v8160, 88
        %v8294 = vpop.permute.xlu0 %8293
        %8295 = vrot.lane.b32.xlu0 %v8161, 88
        %v8296 = vpop.permute.xlu0 %8295
        %8297 = vrot.lane.b32.xlu0 %v8162, 88
        %v8298 = vpop.permute.xlu0 %8297
        %8307 = vrot.lane.b32.xlu0 %v8163, 96
        %v8308 = vpop.permute.xlu0 %8307
        %8309 = vrot.lane.b32.xlu0 %v8164, 96
        %v8310 = vpop.permute.xlu0 %8309
        %8311 = vrot.lane.b32.xlu0 %v8165, 96
        %v8312 = vpop.permute.xlu0 %8311
        %8313 = vrot.lane.b32.xlu0 %v8166, 96
        %v8314 = vpop.permute.xlu0 %8313
        %v8319 = vsel %vm488, %v8124, %v8180
        %v8320 = vsel %vm488, %v8126, %v8182
        %v8321 = vsel %vm488, %v8128, %v8184
        %v8322 = vsel %vm488, %v8130, %v8186
        %v8323 = vsel %vm493, %v8319, %v8196
        %v8324 = vsel %vm493, %v8320, %v8198
        %v8325 = vsel %vm493, %v8321, %v8200
        %v8326 = vsel %vm493, %v8322, %v8202
        %v8327 = vsel %vm498, %v8323, %v8212
        %v8328 = vsel %vm498, %v8324, %v8214
        %v8329 = vsel %vm498, %v8325, %v8216
        %v8330 = vsel %vm498, %v8326, %v8218
        %v8331 = vsel %vm503, %v8327, %v8228
        %v8332 = vsel %vm503, %v8328, %v8230
        %v8333 = vsel %vm503, %v8329, %v8232
        %v8334 = vsel %vm503, %v8330, %v8234
        %v8335 = vsel %vm508, %v8331, %v8244
        %v8336 = vsel %vm508, %v8332, %v8246
        %v8337 = vsel %vm508, %v8333, %v8248
        %v8338 = vsel %vm508, %v8334, %v8250
        %v8339 = vsel %vm513, %v8335, %v8260
        %v8340 = vsel %vm513, %v8336, %v8262
        %v8341 = vsel %vm513, %v8337, %v8264
        %v8342 = vsel %vm513, %v8338, %v8266
        %v8343 = vsel %vm518, %v8339, %v8276
        %v8344 = vsel %vm518, %v8340, %v8278
        %v8345 = vsel %vm518, %v8341, %v8280
        %v8346 = vsel %vm518, %v8342, %v8282
        %v8347 = vsel %vm523, %v8343, %v8292
        %v8348 = vsel %vm523, %v8344, %v8294
        %v8349 = vsel %vm523, %v8345, %v8296
        %v8350 = vsel %vm523, %v8346, %v8298
        %v8351 = vsel %vm528, %v8347, %v8308
        %v8352 = vsel %vm528, %v8348, %v8310
        %v8353 = vsel %vm528, %v8349, %v8312
        %v8354 = vsel %vm528, %v8350, %v8314
        %v8359 = vcombine.low %v8123, %v8171
        %v8360 = vcombine.low %v8125, %v8172
        %v8361 = vcombine.low %v8127, %v8173
        %v8362 = vcombine.low %v8129, %v8174
        %v8363 = vld [vmem:[%s1] sm:$0xff]
        %v8364 = vld [vmem:[%s1 + $0x8] sm:$0xff]
        %v8365 = vld [vmem:[%s1 + $0x10] sm:$0xff]
        %v8366 = vld [vmem:[%s1 + $0x18] sm:$0xff]
        %v8367 = vld [vmem:[%s1 + $0x20] sm:$0xff]
        %v8368 = vld [vmem:[%s1 + $0x28] sm:$0xff]
        %v8369 = vld [vmem:[%s1 + $0x30] sm:$0xff]
        %v8370 = vld [vmem:[%s1 + $0x38] sm:$0xff]
        %v8371 = vld [vmem:[%s1 + $0x40] sm:$0xff]
        %v8372 = vld [vmem:[%s1 + $0x48] sm:$0xff]
        %v8373 = vld [vmem:[%s1 + $0x50] sm:$0xff]
        %v8374 = vld [vmem:[%s1 + $0x58] sm:$0xff]
        %v8375 = vld [vmem:[%s1 + $0x60] sm:$0xff]
        %v8376 = vld [vmem:[%s1 + $0x68] sm:$0xff]
        %v8377 = vld [vmem:[%s1 + $0x70] sm:$0xff]
        %v8378 = vld [vmem:[%s1 + $0x78] sm:$0xff]
        %v8379 = vld [vmem:[%s1 + $0x80] sm:$0xff]
        %v8380 = vld [vmem:[%s1 + $0x88] sm:$0xff]
        %v8381 = vld [vmem:[%s1 + $0x90] sm:$0xff]
        %v8382 = vld [vmem:[%s1 + $0x98] sm:$0xff]
        %v8383 = vld [vmem:[%s1 + $0xa0] sm:$0xff]
        %v8384 = vld [vmem:[%s1 + $0xa8] sm:$0xff]
        %v8385 = vld [vmem:[%s1 + $0xb0] sm:$0xff]
        %v8386 = vld [vmem:[%s1 + $0xb8] sm:$0xff]
        %v8387 = vld [vmem:[%s1 + $0xc0] sm:$0xff]
        %v8388 = vld [vmem:[%s1 + $0xc8] sm:$0xff]
        %v8389 = vld [vmem:[%s1 + $0xd0] sm:$0xff]
        %v8390 = vld [vmem:[%s1 + $0xd8] sm:$0xff]
        %v8391 = vld [vmem:[%s1 + $0xe0] sm:$0xff]
        %v8392 = vld [vmem:[%s1 + $0xe8] sm:$0xff]
        %v8393 = vld [vmem:[%s1 + $0xf0] sm:$0xff]
        %v8394 = vld [vmem:[%s1 + $0xf8] sm:$0xff]
        %v8395 = vld [vmem:[%s1 + $0x100] sm:$0xff]
        %v8396 = vld [vmem:[%s1 + $0x108] sm:$0xff]
        %v8397 = vld [vmem:[%s1 + $0x110] sm:$0xff]
        %v8398 = vld [vmem:[%s1 + $0x118] sm:$0xff]
        %v8399 = vld [vmem:[%s1 + $0x120] sm:$0xff]
        %v8400 = vld [vmem:[%s1 + $0x128] sm:$0xff]
        %v8401 = vld [vmem:[%s1 + $0x130] sm:$0xff]
        %v8402 = vld [vmem:[%s1 + $0x138] sm:$0xff]
        %v8403 = vld [vmem:[%s1 + $0x140] sm:$0xff]
        %v8404 = vld [vmem:[%s1 + $0x148] sm:$0xff]
        %v8405 = vld [vmem:[%s1 + $0x150] sm:$0xff]
        %v8406 = vld [vmem:[%s1 + $0x158] sm:$0xff]
        %v8407 = vld [vmem:[%s1 + $0x160] sm:$0xff]
        %v8408 = vld [vmem:[%s2] sm:$0x1]
        %v8410 = vlaneseq
        %v8411 = vshrl.u32 %v8410, 7
        %v8412 = vsub.s32 0, %v8411
        %v8413 = vrot.slane %v8408, %v8412
        %v8415 = vcombine.low %v8359, %v8360
        %v8416 = vcombine.high %v8359, %v8360
        %v8417 = vcombine.low %v8351, %v8352
        %v8418 = vcombine.low %v8361, %v8362
        %v8419 = vcombine.high %v8361, %v8362
        %v8420 = vcombine.low %v8353, %v8354
        %v8425 = vsel %vm603, %v8417, 0
        %v8427 = vsel %vm603, %v8420, 0
        %8429 = vmatprep.subr.mxu0 0.0
        %8430 = vmatpush1.msra.mxu0 %v8378
        %8431 = vmatprep.subr.mxu0 0.0
        %8432 = vmatpush1.msra.mxu0 %v8377
        %8433 = vmatprep.subr.mxu0 0.0
        %8434 = vmatpush1.msra.mxu0 %v8376
        %8435 = vmatprep.subr.mxu0 0.0
        %8436 = vmatpush1.msra.mxu0 %v8375
        %8437 = vmatprep.subr.mxu0 0.0
        %8438 = vmatpush1.msra.mxu0 %v8374
        %8439 = vmatprep.subr.mxu0 0.0
        %8440 = vmatpush1.msra.mxu0 %v8373
        %8441 = vmatprep.subr.mxu0 0.0
        %8442 = vmatpush1.msra.mxu0 %v8372
        %8443 = vmatprep.subr.mxu0 0.0
        %8444 = vmatpush1.msra.mxu0 %v8371
        %8445 = vmatprep.subr.mxu0 0.0
        %8446 = vmatpush1.msra.mxu0 %v8370
        %8447 = vmatprep.subr.mxu0 0.0
        %8448 = vmatpush1.msra.mxu0 %v8369
        %8449 = vmatprep.subr.mxu0 0.0
        %8450 = vmatpush1.msra.mxu0 %v8368
        %8451 = vmatprep.subr.mxu0 0.0
        %8452 = vmatpush1.msra.mxu0 %v8367
        %8453 = vmatprep.subr.mxu0 0.0
        %8454 = vmatpush1.msra.mxu0 %v8366
        %8455 = vmatprep.subr.mxu0 0.0
        %8456 = vmatpush1.msra.mxu0 %v8365
        %8457 = vmatprep.subr.mxu0 0.0
        %8458 = vmatpush1.msra.mxu0 %v8364
        %8459 = vmatprep.subr.mxu0 0.0
        %8460 = vmatpush1.msra.mxu0 %v8363
        %8461 = vmatprep.subr.mxu0 0.0
        %8462 = vmatpush2.msra.mxu0 %v8394
        %8463 = vmatprep.subr.mxu0 0.0
        %8464 = vmatpush2.msra.mxu0 %v8393
        %8465 = vmatprep.subr.mxu0 0.0
        %8466 = vmatpush2.msra.mxu0 %v8392
        %8467 = vmatprep.subr.mxu0 0.0
        %8468 = vmatpush2.msra.mxu0 %v8391
        %8469 = vmatprep.subr.mxu0 0.0
        %8470 = vmatpush2.msra.mxu0 %v8390
        %8471 = vmatprep.subr.mxu0 0.0
        %8472 = vmatpush2.msra.mxu0 %v8389
        %8473 = vmatprep.subr.mxu0 0.0
        %8474 = vmatpush2.msra.mxu0 %v8388
        %8475 = vmatprep.subr.mxu0 0.0
        %8476 = vmatpush2.msra.mxu0 %v8387
        %8477 = vmatprep.subr.mxu0 0.0
        %8478 = vmatpush2.msra.mxu0 %v8386
        %8479 = vmatprep.subr.mxu0 0.0
        %8480 = vmatpush2.msra.mxu0 %v8385
        %8481 = vmatprep.subr.mxu0 0.0
        %8482 = vmatpush2.msra.mxu0 %v8384
        %8483 = vmatprep.subr.mxu0 0.0
        %8484 = vmatpush2.msra.mxu0 %v8383
        %8485 = vmatprep.subr.mxu0 0.0
        %8486 = vmatpush2.msra.mxu0 %v8382
        %8487 = vmatprep.subr.mxu0 0.0
        %8488 = vmatpush2.msra.mxu0 %v8381
        %8489 = vmatprep.subr.mxu0 0.0
        %8490 = vmatpush2.msra.mxu0 %v8380
        %8491 = vmatprep.subr.mxu0 0.0
        %8492 = vmatpush2.msra.mxu0 %v8379
        %8493 = vmatprep.mubr.f32.mxu0 %v8416
        %8494 = vmatmul.mubr.f32.gmra.mxu0 %v8415
        %v8495 = vpop.f32.mrf.mxu0
        %v8496 = vadd.f32 %v8413, %v8495
        %v8497 = vpop.f32.mrf.mxu0
        %8498 = vmatprep.mubr.f32.mxu0 %v8419
        %8499 = vmatmul.mubr.f32.gmra.mxu0 %v8418
        %v8500 = vpop.f32.mrf.mxu0
        %v8501 = vadd.f32 %v8413, %v8500
        %v8502 = vpop.f32.mrf.mxu0
        %8503 = vdwg.mxu0
        %8504 = vmatprep.subr.mxu0 0.0
        %8505 = vmatpush1.msra.mxu0 0.0
        %8506 = vmatprep.subr.mxu0 0.0
        %8507 = vmatpush1.msra.mxu0 0.0
        %8508 = vmatprep.subr.mxu0 0.0
        %8509 = vmatpush1.msra.mxu0 0.0
        %8510 = vmatprep.subr.mxu0 0.0
        %8511 = vmatpush1.msra.mxu0 %v8407
        %8512 = vmatprep.subr.mxu0 0.0
        %8513 = vmatpush1.msra.mxu0 %v8406
        %8514 = vmatprep.subr.mxu0 0.0
        %8515 = vmatpush1.msra.mxu0 %v8405
        %8516 = vmatprep.subr.mxu0 0.0
        %8517 = vmatpush1.msra.mxu0 %v8404
        %8518 = vmatprep.subr.mxu0 0.0
        %8519 = vmatpush1.msra.mxu0 %v8403
        %8520 = vmatprep.subr.mxu0 0.0
        %8521 = vmatpush1.msra.mxu0 %v8402
        %8522 = vmatprep.subr.mxu0 0.0
        %8523 = vmatpush1.msra.mxu0 %v8401
        %8524 = vmatprep.subr.mxu0 0.0
        %8525 = vmatpush1.msra.mxu0 %v8400
        %8526 = vmatprep.subr.mxu0 0.0
        %8527 = vmatpush1.msra.mxu0 %v8399
        %8528 = vmatprep.subr.mxu0 0.0
        %8529 = vmatpush1.msra.mxu0 %v8398
        %8530 = vmatprep.subr.mxu0 0.0
        %8531 = vmatpush1.msra.mxu0 %v8397
        %8532 = vmatprep.subr.mxu0 0.0
        %8533 = vmatpush1.msra.mxu0 %v8396
        %8534 = vmatprep.subr.mxu0 0.0
        %8535 = vmatpush1.msra.mxu0 %v8395
        %8536 = vmatprep.subr.mxu0 0.0
        %8537 = vmatpush2.msra.mxu0 0.0
        %8538 = vmatprep.subr.mxu0 0.0
        %8539 = vmatpush2.msra.mxu0 0.0
        %8540 = vmatprep.subr.mxu0 0.0
        %8541 = vmatpush2.msra.mxu0 0.0
        %8542 = vmatprep.subr.mxu0 0.0
        %8543 = vmatpush2.msra.mxu0 0.0
        %8544 = vmatprep.subr.mxu0 0.0
        %8545 = vmatpush2.msra.mxu0 0.0
        %8546 = vmatprep.subr.mxu0 0.0
        %8547 = vmatpush2.msra.mxu0 0.0
        %8548 = vmatprep.subr.mxu0 0.0
        %8549 = vmatpush2.msra.mxu0 0.0
        %8550 = vmatprep.subr.mxu0 0.0
        %8551 = vmatpush2.msra.mxu0 0.0
        %8552 = vmatprep.subr.mxu0 0.0
        %8553 = vmatpush2.msra.mxu0 0.0
        %8554 = vmatprep.subr.mxu0 0.0
        %8555 = vmatpush2.msra.mxu0 0.0
        %8556 = vmatprep.subr.mxu0 0.0
        %8557 = vmatpush2.msra.mxu0 0.0
        %8558 = vmatprep.subr.mxu0 0.0
        %8559 = vmatpush2.msra.mxu0 0.0
        %8560 = vmatprep.subr.mxu0 0.0
        %8561 = vmatpush2.msra.mxu0 0.0
        %8562 = vmatprep.subr.mxu0 0.0
        %8563 = vmatpush2.msra.mxu0 0.0
        %8564 = vmatprep.subr.mxu0 0.0
        %8565 = vmatpush2.msra.mxu0 0.0
        %8566 = vmatprep.subr.mxu0 0.0
        %8567 = vmatpush2.msra.mxu0 0.0
        %8568 = vmatprep.mubr.f32.mxu0 0.0
        %8569 = vmatmul.mubr.f32.gmra.mxu0 %v8425
        %v8570 = vpop.f32.mrf.mxu0
        %v8571 = vadd.f32 %v8496, %v8570
        %v8572 = vpop.f32.mrf.mxu0
        %8573 = vmatprep.mubr.f32.mxu0 0.0
        %8574 = vmatmul.mubr.f32.gmra.mxu0 %v8427
        %v8575 = vpop.f32.mrf.mxu0
        %v8576 = vadd.f32 %v8501, %v8575
        %v8577 = vpop.f32.mrf.mxu0
        %8578 = vdwg.mxu0
        %v8579 = vxor.u32 %v8571, 2147483648
        %v8580 = vxor.u32 %v8576, 2147483648
        %v8581 = vmul.f32 %v8579, 1.442695
        %v8582 = vpow.pop %v8581
        %v8583 = vmul.f32 %v8580, 1.442695
        %v8584 = vpow.pop %v8583
        %v8585 = vadd.f32 %v8582, 1.0
        %v8586 = vadd.f32 %v8584, 1.0
        %v8587 = vrcp.pop %v8585
        %v8588 = vmul.f32 1.0, %v8587
        %v8589 = vrcp.pop %v8586
        %v8590 = vmul.f32 1.0, %v8589
        %v8591 = vtanh.pop %v8571
        %v8592 = vtanh.pop %v8576
        %v8593 = vmul.f32 %v8588, %v7497
        %v8594 = vmul.f32 %v8590, %v7498
        %8597 = vrot.lane.b32.xlu0 %v8591, 104
        %v8598 = vpop.permute.xlu0 %8597
        %8599 = vrot.lane.b32.xlu0 %v8592, 104
        %v8600 = vpop.permute.xlu0 %8599
        %v8603 = vmul.f32 %v8588, %v8598
        %v8604 = vmul.f32 %v8590, %v8600
        %8607 = vrot.lane.b32.xlu0 %v8603, 8
        %v8608 = vpop.permute.xlu0 %8607
        %8609 = vrot.lane.b32.xlu0 %v8604, 8
        %v8610 = vpop.permute.xlu0 %8609
        %v8613 = vadd.f32 %v8593, %v8608
        %v8614 = vadd.f32 %v8594, %v8610
        %v8615 = vtanh.pop %v8613
        %v8616 = vtanh.pop %v8614
        %8619 = vrot.lane.b32.xlu0 %v8615, 8
        %v8620 = vpop.permute.xlu0 %8619
        %8621 = vrot.lane.b32.xlu0 %v8616, 8
        %v8622 = vpop.permute.xlu0 %8621
        %v8625 = vmul.f32 %v8588, %v8620
        %v8626 = vmul.f32 %v8590, %v8622
        %v8629 = vcombine.high %v8625, %v8625
        %v8630 = vcombine.high %v8626, %v8626
        %8631 = vrot.lane.b32.xlu0 %v8625, 112
        %v8632 = vpop.permute.xlu0 %8631
        %8633 = vrot.lane.b32.xlu0 %v8629, 112
        %v8634 = vpop.permute.xlu0 %8633
        %8635 = vrot.lane.b32.xlu0 %v8626, 112
        %v8636 = vpop.permute.xlu0 %8635
        %8637 = vrot.lane.b32.xlu0 %v8630, 112
        %v8638 = vpop.permute.xlu0 %8637
        %8643 = vst.msk [vmem:[%s310 + $0x1] sm:$0xf] %vm822, %v8632
        %8644 = vst.msk [vmem:[%s310 + $0x9] sm:$0xf] %vm822, %v8634
        %8645 = vst.msk [vmem:[%s310 + $0x11] sm:$0xf] %vm822, %v8636
        %8646 = vst.msk [vmem:[%s310 + $0x19] sm:$0xf] %vm822, %v8638
        %v8647 = vld [vmem:[#allocation2] sm:$0xf]
        %v8648 = vld [vmem:[#allocation2 + $0x8] sm:$0xf]
        %v8649 = vld [vmem:[#allocation2 + $0x10] sm:$0xf]
        %v8650 = vld [vmem:[#allocation2 + $0x18] sm:$0xf]
        %v8651 = vld [vmem:[#allocation2 + $0x1] sm:$0xf]
        %v8652 = vld [vmem:[#allocation2 + $0x9] sm:$0xf]
        %v8653 = vld [vmem:[#allocation2 + $0x11] sm:$0xf]
        %v8654 = vld [vmem:[#allocation2 + $0x19] sm:$0xf]
        %v8655 = vld [vmem:[#allocation2 + $0x2] sm:$0xf]
        %v8656 = vld [vmem:[#allocation2 + $0xa] sm:$0xf]
        %v8657 = vld [vmem:[#allocation2 + $0x12] sm:$0xf]
        %v8658 = vld [vmem:[#allocation2 + $0x1a] sm:$0xf]
        %v8659 = vld [vmem:[%s310] sm:$0xf]
        %v8660 = vld [vmem:[%s310 + $0x8] sm:$0xf]
        %v8661 = vld [vmem:[%s310 + $0x10] sm:$0xf]
        %v8662 = vld [vmem:[%s310 + $0x18] sm:$0xf]
        %v8663 = vld [vmem:[%s310 + $0x1] sm:$0xf]
        %v8664 = vld [vmem:[%s310 + $0x9] sm:$0xf]
        %v8665 = vld [vmem:[%s310 + $0x11] sm:$0xf]
        %v8666 = vld [vmem:[%s310 + $0x19] sm:$0xf]
        %v8667 = vld [vmem:[%s310 + $0x2] sm:$0xf]
        %v8668 = vld [vmem:[%s310 + $0xa] sm:$0xf]
        %v8669 = vld [vmem:[%s310 + $0x12] sm:$0xf]
        %v8670 = vld [vmem:[%s310 + $0x1a] sm:$0xf]
        %v8671 = vld [vmem:[%s323] sm:$0xf]
        %v8672 = vld [vmem:[%s323 + $0x8] sm:$0xf]
        %v8673 = vld [vmem:[%s323 + $0x10] sm:$0xf]
        %v8674 = vld [vmem:[%s323 + $0x18] sm:$0xf]
        %v8675 = vld [vmem:[%s323 + $0x1] sm:$0xf]
        %v8676 = vld [vmem:[%s323 + $0x9] sm:$0xf]
        %v8677 = vld [vmem:[%s323 + $0x11] sm:$0xf]
        %v8678 = vld [vmem:[%s323 + $0x19] sm:$0xf]
        %v8679 = vld [vmem:[%s323 + $0x2] sm:$0xf]
        %v8680 = vld [vmem:[%s323 + $0xa] sm:$0xf]
        %v8681 = vld [vmem:[%s323 + $0x12] sm:$0xf]
        %v8682 = vld [vmem:[%s323 + $0x1a] sm:$0xf]
        %v8683 = vld [vmem:[#allocation3] sm:$0xf]
        %v8684 = vld [vmem:[#allocation3 + $0x8] sm:$0xf]
        %v8685 = vld [vmem:[#allocation3 + $0x10] sm:$0xf]
        %v8686 = vld [vmem:[#allocation3 + $0x18] sm:$0xf]
        %v8687 = vld [vmem:[#allocation3 + $0x1] sm:$0xf]
        %v8688 = vld [vmem:[#allocation3 + $0x9] sm:$0xf]
        %v8689 = vld [vmem:[#allocation3 + $0x11] sm:$0xf]
        %v8690 = vld [vmem:[#allocation3 + $0x19] sm:$0xf]
        %v8691 = vld [vmem:[#allocation3 + $0x2] sm:$0xf]
        %v8692 = vld [vmem:[#allocation3 + $0xa] sm:$0xf]
        %v8693 = vld [vmem:[#allocation3 + $0x12] sm:$0xf]
        %v8694 = vld [vmem:[#allocation3 + $0x1a] sm:$0xf]
        %v8695 = vld [vmem:[%s875] sm:$0xf]
        %v8696 = vld [vmem:[%s875 + $0x8] sm:$0xf]
        %v8697 = vld [vmem:[%s875 + $0x10] sm:$0xf]
        %v8698 = vld [vmem:[%s875 + $0x18] sm:$0xf]
        %v8699 = vld [vmem:[%s875 + $0x1] sm:$0xf]
        %v8700 = vld [vmem:[%s875 + $0x9] sm:$0xf]
        %v8701 = vld [vmem:[%s875 + $0x11] sm:$0xf]
        %v8702 = vld [vmem:[%s875 + $0x19] sm:$0xf]
        %v8703 = vld [vmem:[%s875 + $0x2] sm:$0xf]
        %v8704 = vld [vmem:[%s875 + $0xa] sm:$0xf]
        %v8705 = vld [vmem:[%s875 + $0x12] sm:$0xf]
        %v8706 = vld [vmem:[%s875 + $0x1a] sm:$0xf]
        %v8707 = vld [vmem:[%s888] sm:$0xf]
        %v8708 = vld [vmem:[%s888 + $0x8] sm:$0xf]
        %v8709 = vld [vmem:[%s888 + $0x10] sm:$0xf]
        %v8710 = vld [vmem:[%s888 + $0x18] sm:$0xf]
        %v8711 = vld [vmem:[%s888 + $0x1] sm:$0xf]
        %v8712 = vld [vmem:[%s888 + $0x9] sm:$0xf]
        %v8713 = vld [vmem:[%s888 + $0x11] sm:$0xf]
        %v8714 = vld [vmem:[%s888 + $0x19] sm:$0xf]
        %v8715 = vld [vmem:[%s888 + $0x2] sm:$0xf]
        %v8716 = vld [vmem:[%s888 + $0xa] sm:$0xf]
        %v8717 = vld [vmem:[%s888 + $0x12] sm:$0xf]
        %v8718 = vld [vmem:[%s888 + $0x1a] sm:$0xf]
        %8723 = vrot.lane.b32.xlu0 %v8651, 8
        %v8724 = vpop.permute.xlu0 %8723
        %8725 = vrot.lane.b32.xlu0 %v8652, 8
        %v8726 = vpop.permute.xlu0 %8725
        %8727 = vrot.lane.b32.xlu0 %v8653, 8
        %v8728 = vpop.permute.xlu0 %8727
        %8729 = vrot.lane.b32.xlu0 %v8654, 8
        %v8730 = vpop.permute.xlu0 %8729
        %8739 = vrot.lane.b32.xlu0 %v8655, 16
        %v8740 = vpop.permute.xlu0 %8739
        %8741 = vrot.lane.b32.xlu0 %v8656, 16
        %v8742 = vpop.permute.xlu0 %8741
        %8743 = vrot.lane.b32.xlu0 %v8657, 16
        %v8744 = vpop.permute.xlu0 %8743
        %8745 = vrot.lane.b32.xlu0 %v8658, 16
        %v8746 = vpop.permute.xlu0 %8745
        %8755 = vrot.lane.b32.xlu0 %v8659, 24
        %v8756 = vpop.permute.xlu0 %8755
        %8757 = vrot.lane.b32.xlu0 %v8660, 24
        %v8758 = vpop.permute.xlu0 %8757
        %8759 = vrot.lane.b32.xlu0 %v8661, 24
        %v8760 = vpop.permute.xlu0 %8759
        %8761 = vrot.lane.b32.xlu0 %v8662, 24
        %v8762 = vpop.permute.xlu0 %8761
        %8771 = vrot.lane.b32.xlu0 %v8663, 32
        %v8772 = vpop.permute.xlu0 %8771
        %8773 = vrot.lane.b32.xlu0 %v8664, 32
        %v8774 = vpop.permute.xlu0 %8773
        %8775 = vrot.lane.b32.xlu0 %v8665, 32
        %v8776 = vpop.permute.xlu0 %8775
        %8777 = vrot.lane.b32.xlu0 %v8666, 32
        %v8778 = vpop.permute.xlu0 %8777
        %8787 = vrot.lane.b32.xlu0 %v8667, 40
        %v8788 = vpop.permute.xlu0 %8787
        %8789 = vrot.lane.b32.xlu0 %v8668, 40
        %v8790 = vpop.permute.xlu0 %8789
        %8791 = vrot.lane.b32.xlu0 %v8669, 40
        %v8792 = vpop.permute.xlu0 %8791
        %8793 = vrot.lane.b32.xlu0 %v8670, 40
        %v8794 = vpop.permute.xlu0 %8793
        %8803 = vrot.lane.b32.xlu0 %v8671, 48
        %v8804 = vpop.permute.xlu0 %8803
        %8805 = vrot.lane.b32.xlu0 %v8672, 48
        %v8806 = vpop.permute.xlu0 %8805
        %8807 = vrot.lane.b32.xlu0 %v8673, 48
        %v8808 = vpop.permute.xlu0 %8807
        %8809 = vrot.lane.b32.xlu0 %v8674, 48
        %v8810 = vpop.permute.xlu0 %8809
        %8819 = vrot.lane.b32.xlu0 %v8675, 56
        %v8820 = vpop.permute.xlu0 %8819
        %8821 = vrot.lane.b32.xlu0 %v8676, 56
        %v8822 = vpop.permute.xlu0 %8821
        %8823 = vrot.lane.b32.xlu0 %v8677, 56
        %v8824 = vpop.permute.xlu0 %8823
        %8825 = vrot.lane.b32.xlu0 %v8678, 56
        %v8826 = vpop.permute.xlu0 %8825
        %8835 = vrot.lane.b32.xlu0 %v8679, 64
        %v8836 = vpop.permute.xlu0 %8835
        %8837 = vrot.lane.b32.xlu0 %v8680, 64
        %v8838 = vpop.permute.xlu0 %8837
        %8839 = vrot.lane.b32.xlu0 %v8681, 64
        %v8840 = vpop.permute.xlu0 %8839
        %8841 = vrot.lane.b32.xlu0 %v8682, 64
        %v8842 = vpop.permute.xlu0 %8841
        %8851 = vrot.lane.b32.xlu0 %v8683, 72
        %v8852 = vpop.permute.xlu0 %8851
        %8853 = vrot.lane.b32.xlu0 %v8684, 72
        %v8854 = vpop.permute.xlu0 %8853
        %8855 = vrot.lane.b32.xlu0 %v8685, 72
        %v8856 = vpop.permute.xlu0 %8855
        %8857 = vrot.lane.b32.xlu0 %v8686, 72
        %v8858 = vpop.permute.xlu0 %8857
        %8867 = vrot.lane.b32.xlu0 %v8687, 80
        %v8868 = vpop.permute.xlu0 %8867
        %8869 = vrot.lane.b32.xlu0 %v8688, 80
        %v8870 = vpop.permute.xlu0 %8869
        %8871 = vrot.lane.b32.xlu0 %v8689, 80
        %v8872 = vpop.permute.xlu0 %8871
        %8873 = vrot.lane.b32.xlu0 %v8690, 80
        %v8874 = vpop.permute.xlu0 %8873
        %8883 = vrot.lane.b32.xlu0 %v8691, 88
        %v8884 = vpop.permute.xlu0 %8883
        %8885 = vrot.lane.b32.xlu0 %v8692, 88
        %v8886 = vpop.permute.xlu0 %8885
        %8887 = vrot.lane.b32.xlu0 %v8693, 88
        %v8888 = vpop.permute.xlu0 %8887
        %8889 = vrot.lane.b32.xlu0 %v8694, 88
        %v8890 = vpop.permute.xlu0 %8889
        %8899 = vrot.lane.b32.xlu0 %v8695, 96
        %v8900 = vpop.permute.xlu0 %8899
        %8901 = vrot.lane.b32.xlu0 %v8696, 96
        %v8902 = vpop.permute.xlu0 %8901
        %8903 = vrot.lane.b32.xlu0 %v8697, 96
        %v8904 = vpop.permute.xlu0 %8903
        %8905 = vrot.lane.b32.xlu0 %v8698, 96
        %v8906 = vpop.permute.xlu0 %8905
        %8915 = vrot.lane.b32.xlu0 %v8699, 104
        %v8916 = vpop.permute.xlu0 %8915
        %8917 = vrot.lane.b32.xlu0 %v8700, 104
        %v8918 = vpop.permute.xlu0 %8917
        %8919 = vrot.lane.b32.xlu0 %v8701, 104
        %v8920 = vpop.permute.xlu0 %8919
        %8921 = vrot.lane.b32.xlu0 %v8702, 104
        %v8922 = vpop.permute.xlu0 %8921
        %8931 = vrot.lane.b32.xlu0 %v8703, 112
        %v8932 = vpop.permute.xlu0 %8931
        %8933 = vrot.lane.b32.xlu0 %v8704, 112
        %v8934 = vpop.permute.xlu0 %8933
        %8935 = vrot.lane.b32.xlu0 %v8705, 112
        %v8936 = vpop.permute.xlu0 %8935
        %8937 = vrot.lane.b32.xlu0 %v8706, 112
        %v8938 = vpop.permute.xlu0 %8937
        %8947 = vrot.lane.b32.xlu0 %v8707, 120
        %v8948 = vpop.permute.xlu0 %8947
        %8949 = vrot.lane.b32.xlu0 %v8708, 120
        %v8950 = vpop.permute.xlu0 %8949
        %8951 = vrot.lane.b32.xlu0 %v8709, 120
        %v8952 = vpop.permute.xlu0 %8951
        %8953 = vrot.lane.b32.xlu0 %v8710, 120
        %v8954 = vpop.permute.xlu0 %8953
        %v8959 = vsel %vm1141, %v8647, %v8724
        %v8960 = vsel %vm1141, %v8648, %v8726
        %v8961 = vsel %vm1141, %v8649, %v8728
        %v8962 = vsel %vm1141, %v8650, %v8730
        %v8963 = vsel %vm1146, %v8959, %v8740
        %v8964 = vsel %vm1146, %v8960, %v8742
        %v8965 = vsel %vm1146, %v8961, %v8744
        %v8966 = vsel %vm1146, %v8962, %v8746
        %v8967 = vsel %vm1151, %v8963, %v8756
        %v8968 = vsel %vm1151, %v8964, %v8758
        %v8969 = vsel %vm1151, %v8965, %v8760
        %v8970 = vsel %vm1151, %v8966, %v8762
        %v8971 = vsel %vm488, %v8967, %v8772
        %v8972 = vsel %vm488, %v8968, %v8774
        %v8973 = vsel %vm488, %v8969, %v8776
        %v8974 = vsel %vm488, %v8970, %v8778
        %v8975 = vsel %vm493, %v8971, %v8788
        %v8976 = vsel %vm493, %v8972, %v8790
        %v8977 = vsel %vm493, %v8973, %v8792
        %v8978 = vsel %vm493, %v8974, %v8794
        %v8979 = vsel %vm498, %v8975, %v8804
        %v8980 = vsel %vm498, %v8976, %v8806
        %v8981 = vsel %vm498, %v8977, %v8808
        %v8982 = vsel %vm498, %v8978, %v8810
        %v8983 = vsel %vm503, %v8979, %v8820
        %v8984 = vsel %vm503, %v8980, %v8822
        %v8985 = vsel %vm503, %v8981, %v8824
        %v8986 = vsel %vm503, %v8982, %v8826
        %v8987 = vsel %vm508, %v8983, %v8836
        %v8988 = vsel %vm508, %v8984, %v8838
        %v8989 = vsel %vm508, %v8985, %v8840
        %v8990 = vsel %vm508, %v8986, %v8842
        %v8991 = vsel %vm513, %v8987, %v8852
        %v8992 = vsel %vm513, %v8988, %v8854
        %v8993 = vsel %vm513, %v8989, %v8856
        %v8994 = vsel %vm513, %v8990, %v8858
        %v8995 = vsel %vm518, %v8991, %v8868
        %v8996 = vsel %vm518, %v8992, %v8870
        %v8997 = vsel %vm518, %v8993, %v8872
        %v8998 = vsel %vm518, %v8994, %v8874
        %v8999 = vsel %vm523, %v8995, %v8884
        %v9000 = vsel %vm523, %v8996, %v8886
        %v9001 = vsel %vm523, %v8997, %v8888
        %v9002 = vsel %vm523, %v8998, %v8890
        %v9003 = vsel %vm528, %v8999, %v8900
        %v9004 = vsel %vm528, %v9000, %v8902
        %v9005 = vsel %vm528, %v9001, %v8904
        %v9006 = vsel %vm528, %v9002, %v8906
        %v9007 = vsel %vm603, %v9003, %v8916
        %v9008 = vsel %vm603, %v9004, %v8918
        %v9009 = vsel %vm603, %v9005, %v8920
        %v9010 = vsel %vm603, %v9006, %v8922
        %v9011 = vsel %vm1196, %v9007, %v8932
        %v9012 = vsel %vm1196, %v9008, %v8934
        %v9013 = vsel %vm1196, %v9009, %v8936
        %v9014 = vsel %vm1196, %v9010, %v8938
        %v9015 = vsel %vm1201, %v9011, %v8948
        %v9016 = vsel %vm1201, %v9012, %v8950
        %v9017 = vsel %vm1201, %v9013, %v8952
        %v9018 = vsel %vm1201, %v9014, %v8954
        %9023 = vrot.lane.b32.xlu0 %v8715, 8
        %v9024 = vpop.permute.xlu0 %9023
        %9025 = vrot.lane.b32.xlu0 %v8716, 8
        %v9026 = vpop.permute.xlu0 %9025
        %9027 = vrot.lane.b32.xlu0 %v8717, 8
        %v9028 = vpop.permute.xlu0 %9027
        %9029 = vrot.lane.b32.xlu0 %v8718, 8
        %v9030 = vpop.permute.xlu0 %9029
        %v9035 = vsel %vm1141, %v8711, %v9024
        %v9036 = vsel %vm1141, %v8712, %v9026
        %v9037 = vsel %vm1141, %v8713, %v9028
        %v9038 = vsel %vm1141, %v8714, %v9030
        %v9047 = vcombine.low %v9015, %v9035
        %v9048 = vcombine.low %v9016, %v9036
        %v9049 = vcombine.low %v9017, %v9037
        %v9050 = vcombine.low %v9018, %v9038
        %v9051 = vld [vmem:[%s3] sm:$0xff]
        %v9052 = vld [vmem:[%s3 + $0x8] sm:$0xff]
        %v9053 = vld [vmem:[%s3 + $0x10] sm:$0xff]
        %v9054 = vld [vmem:[%s3 + $0x18] sm:$0xff]
        %v9055 = vld [vmem:[%s3 + $0x20] sm:$0xff]
        %v9056 = vld [vmem:[%s3 + $0x28] sm:$0xff]
        %v9057 = vld [vmem:[%s3 + $0x30] sm:$0xff]
        %v9058 = vld [vmem:[%s3 + $0x38] sm:$0xff]
        %v9059 = vld [vmem:[%s3 + $0x40] sm:$0xff]
        %v9060 = vld [vmem:[%s3 + $0x48] sm:$0xff]
        %v9061 = vld [vmem:[%s3 + $0x50] sm:$0xff]
        %v9062 = vld [vmem:[%s3 + $0x58] sm:$0xff]
        %v9063 = vld [vmem:[%s3 + $0x60] sm:$0xff]
        %v9064 = vld [vmem:[%s3 + $0x68] sm:$0xff]
        %v9065 = vld [vmem:[%s3 + $0x70] sm:$0xff]
        %v9066 = vld [vmem:[%s3 + $0x78] sm:$0xff]
        %v9067 = vld [vmem:[%s3 + $0x80] sm:$0xff]
        %v9068 = vld [vmem:[%s3 + $0x88] sm:$0xff]
        %v9069 = vld [vmem:[%s4] sm:$0x1]
        %v9071 = vlaneseq
        %v9072 = vshrl.u32 %v9071, 7
        %v9073 = vsub.s32 0, %v9072
        %v9074 = vrot.slane %v9069, %v9073
        %v9076 = vcombine.low %v9047, %v9048
        %v9077 = vcombine.high %v9047, %v9048
        %v9078 = vcombine.low %v9049, %v9050
        %v9079 = vcombine.high %v9049, %v9050
        %v9082 = vsel %vm1146, %v9077, 0
        %v9084 = vsel %vm1146, %v9079, 0
        %9086 = vmatprep.subr.mxu0 0.0
        %9087 = vmatpush1.msra.mxu0 %v9066
        %9088 = vmatprep.subr.mxu0 0.0
        %9089 = vmatpush1.msra.mxu0 %v9065
        %9090 = vmatprep.subr.mxu0 0.0
        %9091 = vmatpush1.msra.mxu0 %v9064
        %9092 = vmatprep.subr.mxu0 0.0
        %9093 = vmatpush1.msra.mxu0 %v9063
        %9094 = vmatprep.subr.mxu0 0.0
        %9095 = vmatpush1.msra.mxu0 %v9062
        %9096 = vmatprep.subr.mxu0 0.0
        %9097 = vmatpush1.msra.mxu0 %v9061
        %9098 = vmatprep.subr.mxu0 0.0
        %9099 = vmatpush1.msra.mxu0 %v9060
        %9100 = vmatprep.subr.mxu0 0.0
        %9101 = vmatpush1.msra.mxu0 %v9059
        %9102 = vmatprep.subr.mxu0 0.0
        %9103 = vmatpush1.msra.mxu0 %v9058
        %9104 = vmatprep.subr.mxu0 0.0
        %9105 = vmatpush1.msra.mxu0 %v9057
        %9106 = vmatprep.subr.mxu0 0.0
        %9107 = vmatpush1.msra.mxu0 %v9056
        %9108 = vmatprep.subr.mxu0 0.0
        %9109 = vmatpush1.msra.mxu0 %v9055
        %9110 = vmatprep.subr.mxu0 0.0
        %9111 = vmatpush1.msra.mxu0 %v9054
        %9112 = vmatprep.subr.mxu0 0.0
        %9113 = vmatpush1.msra.mxu0 %v9053
        %9114 = vmatprep.subr.mxu0 0.0
        %9115 = vmatpush1.msra.mxu0 %v9052
        %9116 = vmatprep.subr.mxu0 0.0
        %9117 = vmatpush1.msra.mxu0 %v9051
        %9118 = vmatprep.subr.mxu0 0.0
        %9119 = vmatpush2.msra.mxu0 0.0
        %9120 = vmatprep.subr.mxu0 0.0
        %9121 = vmatpush2.msra.mxu0 0.0
        %9122 = vmatprep.subr.mxu0 0.0
        %9123 = vmatpush2.msra.mxu0 0.0
        %9124 = vmatprep.subr.mxu0 0.0
        %9125 = vmatpush2.msra.mxu0 0.0
        %9126 = vmatprep.subr.mxu0 0.0
        %9127 = vmatpush2.msra.mxu0 0.0
        %9128 = vmatprep.subr.mxu0 0.0
        %9129 = vmatpush2.msra.mxu0 0.0
        %9130 = vmatprep.subr.mxu0 0.0
        %9131 = vmatpush2.msra.mxu0 0.0
        %9132 = vmatprep.subr.mxu0 0.0
        %9133 = vmatpush2.msra.mxu0 0.0
        %9134 = vmatprep.subr.mxu0 0.0
        %9135 = vmatpush2.msra.mxu0 0.0
        %9136 = vmatprep.subr.mxu0 0.0
        %9137 = vmatpush2.msra.mxu0 0.0
        %9138 = vmatprep.subr.mxu0 0.0
        %9139 = vmatpush2.msra.mxu0 0.0
        %9140 = vmatprep.subr.mxu0 0.0
        %9141 = vmatpush2.msra.mxu0 0.0
        %9142 = vmatprep.subr.mxu0 0.0
        %9143 = vmatpush2.msra.mxu0 0.0
        %9144 = vmatprep.subr.mxu0 0.0
        %9145 = vmatpush2.msra.mxu0 0.0
        %9146 = vmatprep.subr.mxu0 0.0
        %9147 = vmatpush2.msra.mxu0 %v9068
        %9148 = vmatprep.subr.mxu0 0.0
        %9149 = vmatpush2.msra.mxu0 %v9067
        %9150 = vmatprep.mubr.f32.mxu0 %v9082
        %9151 = vmatmul.mubr.f32.gmra.mxu0 %v9076
        %v9152 = vpop.f32.mrf.mxu0
        %v9153 = vadd.f32 %v9074, %v9152
        %v9154 = vpop.f32.mrf.mxu0
        %9155 = vmatprep.mubr.f32.mxu0 %v9084
        %9156 = vmatmul.mubr.f32.gmra.mxu0 %v9078
        %v9157 = vpop.f32.mrf.mxu0
        %v9158 = vadd.f32 %v9074, %v9157
        %v9159 = vpop.f32.mrf.mxu0
        %9160 = vdwg.mxu0
        %v9161 = vxor.u32 %v9153, 2147483648
        %v9162 = vxor.u32 %v9158, 2147483648
        %v9163 = vmul.f32 %v9161, 1.442695
        %v9164 = vpow.pop %v9163
        %v9165 = vmul.f32 %v9162, 1.442695
        %v9166 = vpow.pop %v9165
        %v9167 = vadd.f32 %v9164, 1.0
        %v9168 = vadd.f32 %v9166, 1.0
        %v9169 = vrcp.pop %v9167
        %v9170 = vmul.f32 1.0, %v9169
        %v9171 = vrcp.pop %v9168
        %v9172 = vmul.f32 1.0, %v9171
        %v9173 = vtanh.pop %v9153
        %v9174 = vtanh.pop %v9158
        %v9175 = vmul.f32 %v9170, %v8079
        %v9176 = vmul.f32 %v9172, %v8080
        %9179 = vrot.lane.b32.xlu0 %v9173, 104
        %v9180 = vpop.permute.xlu0 %9179
        %9181 = vrot.lane.b32.xlu0 %v9174, 104
        %v9182 = vpop.permute.xlu0 %9181
        %v9185 = vmul.f32 %v9170, %v9180
        %v9186 = vmul.f32 %v9172, %v9182
        %9189 = vrot.lane.b32.xlu0 %v9185, 8
        %v9190 = vpop.permute.xlu0 %9189
        %9191 = vrot.lane.b32.xlu0 %v9186, 8
        %v9192 = vpop.permute.xlu0 %9191
        %v9195 = vadd.f32 %v9175, %v9190
        %v9196 = vadd.f32 %v9176, %v9192
        %v9197 = vtanh.pop %v9195
        %v9198 = vtanh.pop %v9196
        %9201 = vrot.lane.b32.xlu0 %v9197, 8
        %v9202 = vpop.permute.xlu0 %9201
        %9203 = vrot.lane.b32.xlu0 %v9198, 8
        %v9204 = vpop.permute.xlu0 %9203
        %v9207 = vmul.f32 %v9170, %v9202
        %v9208 = vmul.f32 %v9172, %v9204
        %v9211 = vcombine.high %v9207, %v9207
        %v9212 = vcombine.high %v9208, %v9208
        %9213 = vrot.lane.b32.xlu0 %v9207, 112
        %v9214 = vpop.permute.xlu0 %9213
        %9215 = vrot.lane.b32.xlu0 %v9211, 112
        %v9216 = vpop.permute.xlu0 %9215
        %9217 = vrot.lane.b32.xlu0 %v9208, 112
        %v9218 = vpop.permute.xlu0 %9217
        %9219 = vrot.lane.b32.xlu0 %v9212, 112
        %v9220 = vpop.permute.xlu0 %9219
        %9225 = vst.msk [vmem:[%s875 + $0x1] sm:$0xf] %vm822, %v9214
        %9226 = vst.msk [vmem:[%s875 + $0x9] sm:$0xf] %vm822, %v9216
        %9227 = vst.msk [vmem:[%s875 + $0x11] sm:$0xf] %vm822, %v9218
        %9228 = vst.msk [vmem:[%s875 + $0x19] sm:$0xf] %vm822, %v9220
        %v9229 = vsel %vm1416, %v9207, 0.0
        %v9230 = vsel %vm1416, %v9208, 0.0
        %v9231 = vadd.f32 %v9229, %v9230
        %v9232 = vrot.slane %v9231, 4
        %v9233 = vadd.f32 %v9231, %v9232
        %v9234 = vrot.slane %v9233, 2
        %v9235 = vadd.f32 %v9233, %v9234
        %v9236 = vrot.slane %v9235, 1
        %v9237 = vadd.f32 %v9235, %v9236
        %vm9238 = vcmask 1040384
        %v9239 = vsel %vm9238, %v1425, %v2541
        %vm9240 = vcmask 1041408
        %v9241 = vsel %vm9240, %v9239, %v3657
        %vm9242 = vcmask 1042432
        %v9243 = vsel %vm9242, %v9241, %v4773
        %vm9244 = vcmask 1043456
        %v9245 = vsel %vm9244, %v9243, %v5889
        %vm9246 = vcmask 1044480
        %v9247 = vsel %vm9246, %v9245, %v7005
        %vm9248 = vcmask 1045504
        %v9249 = vsel %vm9248, %v9247, %v8121
        %vm9250 = vcmask 1046528
        %v9251 = vsel %vm9250, %v9249, %v9237
        %v9252 = vld [vmem:[%s5] sm:$0xff]
        %v9253 = vld [vmem:[%s6] sm:$0x1]
        %v9255 = vlaneseq
        %v9256 = vshrl.u32 %v9255, 7
        %v9257 = vsub.s32 0, %v9256
        %v9258 = vrot.slane %v9253, %v9257
        %9261 = vrot.lane.b32.xlu0 %v9251, 112
        %v9262 = vpop.permute.xlu0 %9261
        %v9263 = vsel %vm1141, %v9262, 0
        %9265 = vmatprep.subr.mxu0 0.0
        %9266 = vmatpush1.msra.mxu0 0.0
        %9267 = vmatprep.subr.mxu0 0.0
        %9268 = vmatpush1.msra.mxu0 0.0
        %9269 = vmatprep.subr.mxu0 0.0
        %9270 = vmatpush1.msra.mxu0 0.0
        %9271 = vmatprep.subr.mxu0 0.0
        %9272 = vmatpush1.msra.mxu0 0.0
        %9273 = vmatprep.subr.mxu0 0.0
        %9274 = vmatpush1.msra.mxu0 0.0
        %9275 = vmatprep.subr.mxu0 0.0
        %9276 = vmatpush1.msra.mxu0 0.0
        %9277 = vmatprep.subr.mxu0 0.0
        %9278 = vmatpush1.msra.mxu0 0.0
        %9279 = vmatprep.subr.mxu0 0.0
        %9280 = vmatpush1.msra.mxu0 0.0
        %9281 = vmatprep.subr.mxu0 0.0
        %9282 = vmatpush1.msra.mxu0 0.0
        %9283 = vmatprep.subr.mxu0 0.0
        %9284 = vmatpush1.msra.mxu0 0.0
        %9285 = vmatprep.subr.mxu0 0.0
        %9286 = vmatpush1.msra.mxu0 0.0
        %9287 = vmatprep.subr.mxu0 0.0
        %9288 = vmatpush1.msra.mxu0 0.0
        %9289 = vmatprep.subr.mxu0 0.0
        %9290 = vmatpush1.msra.mxu0 0.0
        %9291 = vmatprep.subr.mxu0 0.0
        %9292 = vmatpush1.msra.mxu0 0.0
        %9293 = vmatprep.subr.mxu0 0.0
        %9294 = vmatpush1.msra.mxu0 0.0
        %9295 = vmatprep.subr.mxu0 0.0
        %9296 = vmatpush1.msra.mxu0 %v9252
        %9297 = vmatprep.subr.mxu0 0.0
        %9298 = vmatpush2.msra.mxu0 0.0
        %9299 = vmatprep.subr.mxu0 0.0
        %9300 = vmatpush2.msra.mxu0 0.0
        %9301 = vmatprep.subr.mxu0 0.0
        %9302 = vmatpush2.msra.mxu0 0.0
        %9303 = vmatprep.subr.mxu0 0.0
        %9304 = vmatpush2.msra.mxu0 0.0
        %9305 = vmatprep.subr.mxu0 0.0
        %9306 = vmatpush2.msra.mxu0 0.0
        %9307 = vmatprep.subr.mxu0 0.0
        %9308 = vmatpush2.msra.mxu0 0.0
        %9309 = vmatprep.subr.mxu0 0.0
        %9310 = vmatpush2.msra.mxu0 0.0
        %9311 = vmatprep.subr.mxu0 0.0
        %9312 = vmatpush2.msra.mxu0 0.0
        %9313 = vmatprep.subr.mxu0 0.0
        %9314 = vmatpush2.msra.mxu0 0.0
        %9315 = vmatprep.subr.mxu0 0.0
        %9316 = vmatpush2.msra.mxu0 0.0
        %9317 = vmatprep.subr.mxu0 0.0
        %9318 = vmatpush2.msra.mxu0 0.0
        %9319 = vmatprep.subr.mxu0 0.0
        %9320 = vmatpush2.msra.mxu0 0.0
        %9321 = vmatprep.subr.mxu0 0.0
        %9322 = vmatpush2.msra.mxu0 0.0
        %9323 = vmatprep.subr.mxu0 0.0
        %9324 = vmatpush2.msra.mxu0 0.0
        %9325 = vmatprep.subr.mxu0 0.0
        %9326 = vmatpush2.msra.mxu0 0.0
        %9327 = vmatprep.subr.mxu0 0.0
        %9328 = vmatpush2.msra.mxu0 0.0
        %9329 = vmatprep.mubr.f32.mxu0 0.0
        %9330 = vmatmul.mubr.f32.gmra.mxu0 %v9263
        %v9331 = vpop.f32.mrf.mxu0
        %v9332 = vadd.f32 %v9258, %v9331
        %v9333 = vpop.f32.mrf.mxu0
        %9334 = vdwg.mxu0
        %vm9335 = vcmask 80896
        %9336 = vst.msk [vmem:[%s271] sm:$0xff] %vm9335, %v9332
        %s9337 = sand.u32 %s181, 1
        %s9338 = scalar_lea.sflag [#allocation5], %s9337
        %s9339 = sand.u32 %s181, 1
        %s9340 = smul.addr %s9339, 8
        %s9341 = scalar_lea.vmem [#allocation4], %s9340
        // Predicated region
        $region49: #{conv_decoder.1} parent=47 // pred_check
          %p9342 = pneg %p191
        $region50: #{conv_decoder.1} parent=47 // pred_check_branch
          %9344 = sbr.rel (%p9342) target = $region52
        $region51: #{conv_decoder.1} parent=47 // pred_region
          %s9346 = ssub.s32 128, 128
          %9347 = vsyncadd %s9338, %s9346
          %s9348 = smul.addr %s21, 128
          %s9349 = scalar_lea.hbm %s7, %s9348
          %s9351 = sshll.u32 %s9341, 4
          %s9352 = int_to_ptr.vmem [resolvable:$true] %s9351
          %9354 = dma.vmem_to_hbm [thread:$0]  %s9352, 128, %s9349, %s9338
        $region52: #{conv_decoder.1} parent=47 // pred_fallthru
          _
      $region48: #{conv_decoder.1} parent=5 // pred_fallthru
        _
      %p9355 = scmp.le.s32.totalorder 2, %s16
      // Predicated region
      $region53: #{conv_decoder.1} parent=5 // pred_check
        %p9356 = pneg %p9355
      $region54: #{conv_decoder.1} parent=5 // pred_check_branch
        %9358 = sbr.rel (%p9356) target = $region56
      $region55: #{conv_decoder.1} parent=5 // pred_region
        %s9359 = ssub.s32 %s16, 2
        // Predicated region
        $region57: #{conv_decoder.1} parent=55 // pred_check
          %p9360 = pneg %p197
        $region58: #{conv_decoder.1} parent=55 // pred_check_branch
          %9362 = sbr.rel (%p9360) target = $region60
        $region59: #{conv_decoder.1} parent=55 // pred_region
          %s9363 = sand.u32 %s182, 1
          %s9364 = scalar_lea.sflag [#allocation5], %s9363
          %s9365 = sand.u32 %s182, 1
          %s9366 = smul.addr %s9365, 8
          %s9367 = scalar_lea.vmem [#allocation4], %s9366
          %9368 = dma.done %s9364, 128
        $region60: #{conv_decoder.1} parent=55 // pred_fallthru
          _
      $region56: #{conv_decoder.1} parent=5 // pred_fallthru
        _
    $region6: #{conv_decoder.1} parent=1 // loop_footer
      %s20 = sadd.s32 1, %s16
    $region7: #{conv_decoder.1} parent=1 // loop_footer_branch
      %15 = sbr.rel target = $region3
    $region8: #{conv_decoder.1} parent=1 // loop_exit
      _
    %9369 = vsyncpa [#allocation5], 1
    %s9370 = scalar_lea.sflag [#allocation5], 1
    %9371 = vsyncpa %s9370, 1

</llo_original>
